<compile_context>
chip_gen: v7x
topology: tpu7x:2x2x1
jax: 0.10.0
libtpu: 0.0.40
codegen_flags: <defaults>
</compile_context>

<pallas_src>
import jax
import jax.numpy as jnp
import numpy as np
from jax.experimental import pallas as pl
from jax.experimental.pallas import tpu as pltpu


# --------------------------------------------------------------------------- #
# Pallas kernel: direction-stacked, masked, 2-layer bi-LSTM + fused head.
# Single invocation (no grid); everything fits comfortably in VMEM (~1 MiB).
# --------------------------------------------------------------------------- #
def pmr_clf_kernel(xx_ref, m_ref,
                   w0x_ref, b0_ref, whh0_ref,
                   w1x_hbm, whh1_hbm, b1_ref,
                   wfc_hbm, bfc_ref, whead_hbm, bhead_ref,
                   o_ref,
                   w1x_vmem, whh1_vmem, wfc_vmem, whead_vmem,
                   ab_scratch, gx_scratch, sems):
    T, B, Hcat = m_ref.shape               # B is the sublane-padded batch; Hcat = 2*Hd

    # ---- Kick off DMAs for late-use weights; they complete under the layer-0
    # recurrence (manual overlap, P4-style). Everything else is auto-copied.
    cp_w1x = pltpu.make_async_copy(w1x_hbm, w1x_vmem, sems.at[0]); cp_w1x.start()
    cp_whh1 = pltpu.make_async_copy(whh1_hbm, whh1_vmem, sems.at[1]); cp_whh1.start()
    cp_wfc = pltpu.make_async_copy(wfc_hbm, wfc_vmem, sems.at[2]); cp_wfc.start()
    cp_whd = pltpu.make_async_copy(whead_hbm, whead_vmem, sems.at[3]); cp_whd.start()

    # ---- Hoisted layer-0 input projection: ONE (T*B, 2E)@(2E, 4*Hcat) bf16 MXU
    # matmul with f32 accumulation; result parked in VMEM scratch (not vregs).
    gx_scratch[...] = (jnp.dot(xx_ref[...], w0x_ref[...],
                               preferred_element_type=jnp.float32) + b0_ref[...])

    def scan_layer(whh_ref, store_h=None):
        # Masked scan == pack_padded_sequence semantics: state only advances on
        # valid timesteps, so the final h matches the packed LSTM's hidden state.
        # (Zero-length sequences would give h = 0 here; PyTorch's
        #  pack_padded_sequence errors on them instead.)
        h = jnp.zeros((B, Hcat), jnp.float32)
        c = jnp.zeros((B, Hcat), jnp.float32)
        # TODO(synk): switch to lax.fori_loop(+unroll) over VMEM-held state and
        # bound the trip count by max(sentence_len) (scalar prefetch) once T is
        # non-trivial.
        for s in range(T):
            # 8-row-aligned slice from VMEM scratch + recurrent bf16 matmul;
            # whh is read at the dot site (not held live across the loop).
            gates = (gx_scratch[s * B:(s + 1) * B, :]
                     + jnp.dot(h.astype(jnp.bfloat16), whh_ref[...],
                               preferred_element_type=jnp.float32))
            # All four gate slices are 128-lane aligned (gate pairs span a vreg).
            i = jax.nn.sigmoid(gates[:, 0 * Hcat:1 * Hcat])
            f = jax.nn.sigmoid(gates[:, 1 * Hcat:2 * Hcat])
            g = jnp.tanh(gates[:, 2 * Hcat:3 * Hcat])
            o = jax.nn.sigmoid(gates[:, 3 * Hcat:4 * Hcat])
            c_new = f * c + i * g
            h_new = o * jnp.tanh(c_new)
            # Per-step validity, loaded from VMEM (fwd lanes use t=s, bwd lanes
            # t=T-1-s; the lane layout is baked into the mask by the wrapper).
            valid = m_ref[s] > 0.5
            h = jnp.where(valid, h_new, h)
            c = jnp.where(valid, c_new, c)
            if store_h is not None:
                store_h(s, h)
        return h

    def store_l0(s, h):
        # Build the layer-1 input in place: row-block s gets [h0[s] | h0[T-1-s]].
        hb = h.astype(jnp.bfloat16)
        ab_scratch[s * B:(s + 1) * B, 0:Hcat] = hb
        ab_scratch[(T - 1 - s) * B:(T - s) * B, Hcat:2 * Hcat] = hb

    # Layer 0 (directions stacked along lanes); fills ab_scratch as it goes.
    scan_layer(whh0_ref, store_l0)

    # ---- Hoisted layer-1 input projection (time-reversal / direction coupling
    # is folded into the packed w1x). Reuses gx_scratch.
    cp_w1x.wait()
    gx_scratch[...] = (jnp.dot(ab_scratch[...], w1x_vmem[...],
                               preferred_element_type=jnp.float32) + b1_ref[...])

    # Layer 1; only the final stacked hidden state is needed.
    cp_whh1.wait()
    h1 = scan_layer(whh1_vmem)             # == cat([hid[-2], hid[-1]], dim=1)

    # ---- Head (lane-padded to 128 columns; stays f32, off the critical path).
    cp_wfc.wait()
    hid = jnp.tanh(jnp.dot(h1, wfc_vmem[...],
                           preferred_element_type=jnp.float32) + bfc_ref[...])
    cp_whd.wait()
    o_ref[...] = (jnp.dot(hid, whead_vmem[...],
                          preferred_element_type=jnp.float32) + bhead_ref[...])


# --------------------------------------------------------------------------- #
# Weight re-packing: gate-reordered, direction-stacked weights (bf16 for the
# recurrence path, lane-padded f32 head).  Hoisted out of the per-call path.
# --------------------------------------------------------------------------- #
def prepare_kernel_params(p):
    Hd = p["whh_l0_f"].shape[0]            # per-direction hidden (= 2*hidden_size)
    Hcat = 2 * Hd
    H = p["w_fc_hid"].shape[1]             # classifier hidden_size

    def stack_w(wf, wb):
        rf, rb = wf.shape[0], wb.shape[0]
        w = jnp.zeros((rf + rb, 4 * Hcat), jnp.float32)
        for g in range(4):
            w = w.at[:rf, g * Hcat:g * Hcat + Hd].set(wf[:, g * Hd:(g + 1) * Hd])
            w = w.at[rf:, g * Hcat + Hd:(g + 1) * Hcat].set(wb[:, g * Hd:(g + 1) * Hd])
        return w

    def stack_b(bf, bb):
        b = jnp.zeros((1, 4 * Hcat), jnp.float32)
        for g in range(4):
            b = b.at[:, g * Hcat:g * Hcat + Hd].set(bf[:, g * Hd:(g + 1) * Hd])
            b = b.at[:, g * Hcat + Hd:(g + 1) * Hcat].set(bb[:, g * Hd:(g + 1) * Hd])
        return b

    kp = {"embed": p["embed"]}
    kp["w0x"] = stack_w(p["wih_l0_f"], p["wih_l0_b"]).astype(jnp.bfloat16)
    kp["b0"] = stack_b(p["b_l0_f"], p["b_l0_b"])
    kp["whh0"] = stack_w(p["whh_l0_f"], p["whh_l0_b"]).astype(jnp.bfloat16)
    kp["whh1"] = stack_w(p["whh_l1_f"], p["whh_l1_b"]).astype(jnp.bfloat16)
    kp["b1"] = stack_b(p["b_l1_f"], p["b_l1_b"])

    # Layer-1 input weight acting on ab_s = [h0[s] | h0[T-1-s]]:
    #   h0[s]     = [l0f[s]     | l0b[T-1-s]]
    #   h0[T-1-s] = [l0f[T-1-s] | l0b[s]    ]
    wf, wb = p["wih_l1_f"], p["wih_l1_b"]                   # each (2*Hd, 4*Hd)
    w1 = jnp.zeros((2 * Hcat, 4 * Hcat), jnp.float32)
    for g in range(4):
        fcol = slice(g * Hcat, g * Hcat + Hd)
        bcol = slice(g * Hcat + Hd, (g + 1) * Hcat)
        gsl = slice(g * Hd, (g + 1) * Hd)
        w1 = w1.at[0:Hd, fcol].set(wf[0:Hd, gsl])                     # l0f[s]
        w1 = w1.at[Hd:Hcat, bcol].set(wb[Hd:2 * Hd, gsl])             # l0b[T-1-s]
        w1 = w1.at[Hcat:Hcat + Hd, bcol].set(wb[0:Hd, gsl])           # l0f[T-1-s]
        w1 = w1.at[Hcat + Hd:2 * Hcat, fcol].set(wf[Hd:2 * Hd, gsl])  # l0b[s]
    kp["w1x"] = w1.astype(jnp.bfloat16)

    # Lane-dense head: fc_hid padded (Hcat,128); out1(out(.)) fused (f32) then
    # padded (128,128).  Padded hid columns are tanh(0)=0 so zero-pad is exact.
    kp["w_fc"] = jnp.zeros((Hcat, 128), jnp.float32).at[:, :H].set(p["w_fc_hid"])
    kp["b_fc"] = jnp.zeros((1, 128), jnp.float32).at[:, :H].set(p["b_fc_hid"])
    w_head = p["w_out"] @ p["w_out1"]                       # (H, 9), fused in f32
    b_head = p["b_out"] @ p["w_out1"] + p["b_out1"]         # (1, 9)
    kp["w_head"] = jnp.zeros((128, 128), jnp.float32).at[:H, :9].set(w_head)
    kp["b_head"] = jnp.zeros((1, 128), jnp.float32).at[:, :9].set(b_head)
    return kp


# --------------------------------------------------------------------------- #
# Glue: embedding lookup, batch padding, mask/layout, pallas_call plumbing.
# (Jitted; weight repacking is done once outside.)
# --------------------------------------------------------------------------- #
def pmr_clf_forward(kp, sentence, sentence_len):
    B, T = sentence.shape
    E = kp["embed"].shape[1]
    Hcat = kp["whh0"].shape[0]
    Hd = Hcat // 2
    Bp = ((B + 7) // 8) * 8                # pad batch to a full sublane tile
    # TODO(synk): for large deployed batches use the real batch as M (up to
    # ~128/256 rows) instead of padding to 8 — the recurrent matmul is
    # fill-dominated so bigger M is nearly free.

    # Embedding lookup (gather) in plain JAX glue; nn.Dropout(eval) == identity.
    emb = jnp.take(kp["embed"], sentence, axis=0).astype(jnp.float32)      # (B,T,E)
    x = jnp.transpose(emb, (1, 0, 2))                                      # (T,B,E)
    x = jnp.pad(x, ((0, 0), (0, Bp - B), (0, 0)))                          # (T,Bp,E)
    # Stacked-direction input: row-block s is [x[s] | x[T-1-s]]; bf16 for MXU.
    xx = jnp.concatenate([x, x[::-1]], axis=-1).reshape(T * Bp, 2 * E)
    xx = xx.astype(jnp.bfloat16)

    # Combined validity mask, already laid out per lane: fwd lanes [0,Hd) use
    # t=s, bwd lanes [Hd,Hcat) use t=T-1-s.  Padded batch rows are never valid.
    maskf = (jnp.arange(T)[:, None] < sentence_len[None, :]).astype(jnp.float32)
    maskf = jnp.pad(maskf, ((0, 0), (0, Bp - B)))                          # (T,Bp)
    mask = jnp.concatenate(
        [jnp.broadcast_to(maskf[:, :, None], (T, Bp, Hd)),
         jnp.broadcast_to(maskf[::-1][:, :, None], (T, Bp, Hd))], axis=-1)  # (T,Bp,Hcat)

    vm = pltpu.MemorySpace.VMEM
    out = pl.pallas_call(
        pmr_clf_kernel,
        out_shape=jax.ShapeDtypeStruct((Bp, 128), jnp.float32),
        in_specs=[pl.BlockSpec(memory_space=vm),        # xx
                  pl.BlockSpec(memory_space=vm),        # mask
                  pl.BlockSpec(memory_space=vm),        # w0x
                  pl.BlockSpec(memory_space=vm),        # b0
                  pl.BlockSpec(memory_space=vm),        # whh0
                  pl.BlockSpec(memory_space=pl.ANY),    # w1x   (late use, manual DMA)
                  pl.BlockSpec(memory_space=pl.ANY),    # whh1  (late use, manual DMA)
                  pl.BlockSpec(memory_space=vm),        # b1
                  pl.BlockSpec(memory_space=pl.ANY),    # w_fc  (late use, manual DMA)
                  pl.BlockSpec(memory_space=vm),        # b_fc
                  pl.BlockSpec(memory_space=pl.ANY),    # w_head (late use, manual DMA)
                  pl.BlockSpec(memory_space=vm)],       # b_head
        out_specs=pl.BlockSpec(memory_space=vm),
        scratch_shapes=[
            pltpu.VMEM((2 * Hcat, 4 * Hcat), jnp.bfloat16),   # w1x   staging
            pltpu.VMEM((Hcat, 4 * Hcat), jnp.bfloat16),       # whh1  staging
            pltpu.VMEM((Hcat, 128), jnp.float32),             # w_fc  staging
            pltpu.VMEM((128, 128), jnp.float32),              # w_head staging
            pltpu.VMEM((T * Bp, 2 * Hcat), jnp.bfloat16),     # ab (layer-1 input)
            pltpu.VMEM((T * Bp, 4 * Hcat), jnp.float32),      # gate pre-activations
            pltpu.SemaphoreType.DMA((4,)),
        ],
    )(xx, mask,
      kp["w0x"], kp["b0"], kp["whh0"],
      kp["w1x"], kp["whh1"], kp["b1"],
      kp["w_fc"], kp["b_fc"], kp["w_head"], kp["b_head"])
    return out[:B, :9]


# --------------------------------------------------------------------------- #
# Deterministic synthetic parameters (no .pt/.pth / glove file loads).
# --------------------------------------------------------------------------- #
def init_params(key, vocab, E, H):
    Hd = 2 * H                      # per-direction LSTM hidden size
    ks = jax.random.split(key, 24)

    def u(k, shape, fan_in):
        bound = 1.0 / np.sqrt(fan_in)
        return jax.random.uniform(k, shape, jnp.float32, -bound, bound)

    p = {}
    # TODO(synk): glove-pretrained embedding replaced by deterministic random init.
    p["embed"] = jax.random.normal(ks[0], (vocab, E), jnp.float32) * 0.1
    ki = 1
    for layer, in_dim in ((0, E), (1, 2 * Hd)):
        for d in ("f", "b"):
            p[f"wih_l{layer}_{d}"] = u(ks[ki], (in_dim, 4 * Hd), Hd); ki += 1
            p[f"whh_l{layer}_{d}"] = u(ks[ki], (Hd, 4 * Hd), Hd);     ki += 1
            # combined b_ih + b_hh, kept 2-D for TPU layout
            p[f"b_l{layer}_{d}"] = u(ks[ki], (1, 4 * Hd), Hd);        ki += 1
    p["w_fc_hid"] = u(ks[ki], (4 * H, H), 4 * H); ki += 1
    p["b_fc_hid"] = u(ks[ki], (1, H), 4 * H);     ki += 1
    p["w_out"] = u(ks[ki], (H, 128), H);          ki += 1
    p["b_out"] = u(ks[ki], (1, 128), H);          ki += 1
    p["w_out1"] = u(ks[ki], (128, 9), 128);       ki += 1
    p["b_out1"] = u(ks[ki], (1, 9), 128);         ki += 1
    return p


# Pure-JAX f32 reference (original weight layout) used as a correctness check.
def pmr_clf_reference(params, sentence, sentence_len):
    B, T = sentence.shape
    Hd = params["whh_l0_f"].shape[0]
    emb = jnp.take(params["embed"], sentence, axis=0)
    x = jnp.transpose(emb, (1, 0, 2)).astype(jnp.float32)
    mask = (jnp.arange(T)[:, None] < sentence_len[None, :]).astype(jnp.float32)

    def cell(x_t, h, c, w_ih, w_hh, b):
        g = x_t @ w_ih + h @ w_hh + b
        i = jax.nn.sigmoid(g[:, :Hd]); f = jax.nn.sigmoid(g[:, Hd:2 * Hd])
        gg = jnp.tanh(g[:, 2 * Hd:3 * Hd]); o = jax.nn.sigmoid(g[:, 3 * Hd:])
        c_new = f * c + i * gg
        return o * jnp.tanh(c_new), c_new

    def run(inputs, w_ih, w_hh, b, reverse):
        h = jnp.zeros((B, Hd)); c = jnp.zeros((B, Hd))
        outs = [None] * T
        order = range(T - 1, -1, -1) if reverse else range(T)
        for t in order:
            hn, cn = cell(inputs[t], h, c, w_ih, w_hh, b)
            mt = mask[t][:, None]
            h = mt * hn + (1 - mt) * h
            c = mt * cn + (1 - mt) * c
            outs[t] = h
        return outs, h

    xs = [x[t] for t in range(T)]
    l0f, _ = run(xs, params["wih_l0_f"], params["whh_l0_f"], params["b_l0_f"], False)
    l0b, _ = run(xs, params["wih_l0_b"], params["whh_l0_b"], params["b_l0_b"], True)
    l1in = [jnp.concatenate([l0f[t], l0b[t]], -1) for t in range(T)]
    _, h1f = run(l1in, params["wih_l1_f"], params["whh_l1_f"], params["b_l1_f"], False)
    _, h1b = run(l1in, params["wih_l1_b"], params["whh_l1_b"], params["b_l1_b"], True)
    hid = jnp.tanh(jnp.concatenate([h1f, h1b], -1) @ params["w_fc_hid"] + params["b_fc_hid"])
    z = hid @ params["w_out"] + params["b_out"]
    return z @ params["w_out1"] + params["b_out1"]


if __name__ == "__main__":
    B, T, VOCAB, E, H = 2, 8, 40, 64, 32   # batch, seq, vocab, embedding_dim, hidden_size
    key = jax.random.PRNGKey(0)
    kp_key, ks = jax.random.split(key)
    params = init_params(kp_key, VOCAB, E, H)

    sentence_len = jnp.array([8, 5], dtype=jnp.int32)
    tokens = jax.random.randint(ks, (B, T), 5, VOCAB, dtype=jnp.int32)
    valid = jnp.arange(T)[None, :] < sentence_len[:, None]
    sentence = jnp.where(valid, tokens, 0)          # pad positions -> <pad> (idx 0)
    y = jnp.zeros((B,), jnp.int32)                  # unused by forward, kept for parity
    del y

    # One-time weight repacking, hoisted out of the call path; jitted forward.
    kernel_params = prepare_kernel_params(params)
    forward = jax.jit(pmr_clf_forward)

    pre_y = jax.block_until_ready(forward(kernel_params, sentence, sentence_len))
    ref = pmr_clf_reference(params, sentence, sentence_len)

    assert pre_y.shape == (B, 9), pre_y.shape
    # Tolerance loosened vs the pure-f32 version: MXU operands on the 16-step
    # serial recurrence are bf16 (f32 accumulation), the reference is full f32.
    if not jnp.allclose(pre_y, ref, atol=2e-2, rtol=2e-2):
        raise AssertionError("Pallas kernel does not match pure-JAX reference")
    print("KERNEL_OK")
</pallas_src>

<mosaic_0001>
module attributes {stable_mosaic.version = 11 : i64} {
  func.func @pmr_clf_kernel(%arg0: memref<64x128xbf16, #tpu.memory_space<vmem>>, %arg1: memref<8x8x128xf32, #tpu.memory_space<vmem>>, %arg2: memref<128x512xbf16, #tpu.memory_space<vmem>>, %arg3: memref<1x512xf32, #tpu.memory_space<vmem>>, %arg4: memref<128x512xbf16, #tpu.memory_space<vmem>>, %arg5: memref<256x512xbf16, #tpu.memory_space<any>>, %arg6: memref<128x512xbf16, #tpu.memory_space<any>>, %arg7: memref<1x512xf32, #tpu.memory_space<vmem>>, %arg8: memref<128x128xf32, #tpu.memory_space<any>>, %arg9: memref<1x128xf32, #tpu.memory_space<vmem>>, %arg10: memref<128x128xf32, #tpu.memory_space<any>>, %arg11: memref<1x128xf32, #tpu.memory_space<vmem>>, %arg12: memref<8x128xf32, #tpu.memory_space<vmem>>, %arg13: memref<256x512xbf16, #tpu.memory_space<vmem>>, %arg14: memref<128x512xbf16, #tpu.memory_space<vmem>>, %arg15: memref<128x128xf32, #tpu.memory_space<vmem>>, %arg16: memref<128x128xf32, #tpu.memory_space<vmem>>, %arg17: memref<64x256xbf16, #tpu.memory_space<vmem>>, %arg18: memref<64x512xf32, #tpu.memory_space<vmem>>, %arg19: memref<4x!tpu.dma_semaphore, #tpu.memory_space<semaphore_mem>>) attributes {dimension_semantics = [], scalar_prefetch = 0 : i64, scratch_operands = 7 : i64, tpu.core_type = #tpu.core_type<tc>} {
    %c0_i32 = arith.constant 0 : i32
    %0 = tpu.memref_slice %arg19[%c0_i32] : memref<4x!tpu.dma_semaphore, #tpu.memory_space<semaphore_mem>> -> memref<1x!tpu.dma_semaphore, #tpu.memory_space<semaphore_mem>>
    %1 = tpu.memref_squeeze %0 : memref<1x!tpu.dma_semaphore, #tpu.memory_space<semaphore_mem>> -> memref<!tpu.dma_semaphore, #tpu.memory_space<semaphore_mem>>
    tpu.enqueue_dma source(%arg5 : memref<256x512xbf16, #tpu.memory_space<any>>) target(%arg13 : memref<256x512xbf16, #tpu.memory_space<vmem>>) target_semaphore(%1 : memref<!tpu.dma_semaphore, #tpu.memory_space<semaphore_mem>>)
    %c1_i32 = arith.constant 1 : i32
    %2 = tpu.memref_slice %arg19[%c1_i32] : memref<4x!tpu.dma_semaphore, #tpu.memory_space<semaphore_mem>> -> memref<1x!tpu.dma_semaphore, #tpu.memory_space<semaphore_mem>>
    %3 = tpu.memref_squeeze %2 : memref<1x!tpu.dma_semaphore, #tpu.memory_space<semaphore_mem>> -> memref<!tpu.dma_semaphore, #tpu.memory_space<semaphore_mem>>
    tpu.enqueue_dma source(%arg6 : memref<128x512xbf16, #tpu.memory_space<any>>) target(%arg14 : memref<128x512xbf16, #tpu.memory_space<vmem>>) target_semaphore(%3 : memref<!tpu.dma_semaphore, #tpu.memory_space<semaphore_mem>>)
    %c2_i32 = arith.constant 2 : i32
    %4 = tpu.memref_slice %arg19[%c2_i32] : memref<4x!tpu.dma_semaphore, #tpu.memory_space<semaphore_mem>> -> memref<1x!tpu.dma_semaphore, #tpu.memory_space<semaphore_mem>>
    %5 = tpu.memref_squeeze %4 : memref<1x!tpu.dma_semaphore, #tpu.memory_space<semaphore_mem>> -> memref<!tpu.dma_semaphore, #tpu.memory_space<semaphore_mem>>
    tpu.enqueue_dma source(%arg8 : memref<128x128xf32, #tpu.memory_space<any>>) target(%arg15 : memref<128x128xf32, #tpu.memory_space<vmem>>) target_semaphore(%5 : memref<!tpu.dma_semaphore, #tpu.memory_space<semaphore_mem>>)
    %c3_i32 = arith.constant 3 : i32
    %6 = tpu.memref_slice %arg19[%c3_i32] : memref<4x!tpu.dma_semaphore, #tpu.memory_space<semaphore_mem>> -> memref<1x!tpu.dma_semaphore, #tpu.memory_space<semaphore_mem>>
    %7 = tpu.memref_squeeze %6 : memref<1x!tpu.dma_semaphore, #tpu.memory_space<semaphore_mem>> -> memref<!tpu.dma_semaphore, #tpu.memory_space<semaphore_mem>>
    tpu.enqueue_dma source(%arg10 : memref<128x128xf32, #tpu.memory_space<any>>) target(%arg16 : memref<128x128xf32, #tpu.memory_space<vmem>>) target_semaphore(%7 : memref<!tpu.dma_semaphore, #tpu.memory_space<semaphore_mem>>)
    %c0 = arith.constant 0 : index
    %c0_0 = arith.constant 0 : index
    %8 = vector.load %arg0[%c0, %c0_0] : memref<64x128xbf16, #tpu.memory_space<vmem>>, vector<64x128xbf16>
    %c0_1 = arith.constant 0 : index
    %c0_2 = arith.constant 0 : index
    %9 = vector.load %arg2[%c0_1, %c0_2] : memref<128x512xbf16, #tpu.memory_space<vmem>>, vector<128x512xbf16>
    %cst = arith.constant dense<0.000000e+00> : vector<64x512xf32>
    %10 = tpu.matmul %8, %9, %cst {dimension_numbers = #tpu.dot_dimension_numbers<[1], [0], [0], [1], [0, 0, 1, 1], [], []>} : vector<64x128xbf16>, vector<128x512xbf16>, vector<64x512xf32> -> vector<64x512xf32>
    %c0_3 = arith.constant 0 : index
    %c0_4 = arith.constant 0 : index
    %11 = vector.load %arg3[%c0_3, %c0_4] : memref<1x512xf32, #tpu.memory_space<vmem>>, vector<1x512xf32>
    %12 = vector.broadcast %11 : vector<1x512xf32> to vector<64x512xf32>
    %13 = arith.addf %10, %12 : vector<64x512xf32>
    %c0_5 = arith.constant 0 : index
    %c0_6 = arith.constant 0 : index
    %14 = vector.load %arg18[%c0_5, %c0_6] : memref<64x512xf32, #tpu.memory_space<vmem>>, vector<64x512xf32>
    tpu.vector_store %arg18[%c0_5, %c0_6], %13 {strides = array<i32>} : memref<64x512xf32, #tpu.memory_space<vmem>>, vector<64x512xf32>,
    %cst_7 = arith.constant 0.000000e+00 : f32
    %15 = vector.broadcast %cst_7 : f32 to vector<8x128xf32>
    %cst_8 = arith.constant 0.000000e+00 : f32
    %16 = vector.broadcast %cst_8 : f32 to vector<8x128xf32>
    %c0_9 = arith.constant 0 : index
    %c0_10 = arith.constant 0 : index
    %17 = vector.load %arg18[%c0_9, %c0_10] : memref<64x512xf32, #tpu.memory_space<vmem>>, vector<8x512xf32>
    %18 = arith.truncf %15 : vector<8x128xf32> to vector<8x128xbf16>
    %c0_11 = arith.constant 0 : index
    %c0_12 = arith.constant 0 : index
    %19 = vector.load %arg4[%c0_11, %c0_12] : memref<128x512xbf16, #tpu.memory_space<vmem>>, vector<128x512xbf16>
    %cst_13 = arith.constant dense<0.000000e+00> : vector<8x512xf32>
    %20 = tpu.matmul %18, %19, %cst_13 {dimension_numbers = #tpu.dot_dimension_numbers<[1], [0], [0], [1], [0, 0, 1, 1], [], []>} : vector<8x128xbf16>, vector<128x512xbf16>, vector<8x512xf32> -> vector<8x512xf32>
    %21 = arith.addf %17, %20 : vector<8x512xf32>
    %22 = vector.extract_strided_slice %21 {offsets = [0, 0], sizes = [8, 128], strides = [1, 1]} : vector<8x512xf32> to vector<8x128xf32>
    %23 = arith.negf %22 : vector<8x128xf32>
    %24 = math.exp %23 : vector<8x128xf32>
    %cst_14 = arith.constant 1.000000e+00 : f32
    %25 = vector.broadcast %cst_14 : f32 to vector<8x128xf32>
    %26 = arith.addf %25, %24 : vector<8x128xf32>
    %27 = arith.divf %25, %26 : vector<8x128xf32>
    %28 = vector.extract_strided_slice %21 {offsets = [0, 128], sizes = [8, 128], strides = [1, 1]} : vector<8x512xf32> to vector<8x128xf32>
    %29 = arith.negf %28 : vector<8x128xf32>
    %30 = math.exp %29 : vector<8x128xf32>
    %cst_15 = arith.constant 1.000000e+00 : f32
    %31 = vector.broadcast %cst_15 : f32 to vector<8x128xf32>
    %32 = arith.addf %31, %30 : vector<8x128xf32>
    %33 = arith.divf %31, %32 : vector<8x128xf32>
    %34 = vector.extract_strided_slice %21 {offsets = [0, 256], sizes = [8, 128], strides = [1, 1]} : vector<8x512xf32> to vector<8x128xf32>
    %35 = math.tanh %34 : vector<8x128xf32>
    %36 = vector.extract_strided_slice %21 {offsets = [0, 384], sizes = [8, 128], strides = [1, 1]} : vector<8x512xf32> to vector<8x128xf32>
    %37 = arith.negf %36 : vector<8x128xf32>
    %38 = math.exp %37 : vector<8x128xf32>
    %cst_16 = arith.constant 1.000000e+00 : f32
    %39 = vector.broadcast %cst_16 : f32 to vector<8x128xf32>
    %40 = arith.addf %39, %38 : vector<8x128xf32>
    %41 = arith.divf %39, %40 : vector<8x128xf32>
    %42 = arith.mulf %33, %16 : vector<8x128xf32>
    %43 = arith.mulf %27, %35 : vector<8x128xf32>
    %44 = arith.addf %42, %43 : vector<8x128xf32>
    %45 = math.tanh %44 : vector<8x128xf32>
    %46 = arith.mulf %41, %45 : vector<8x128xf32>
    %c0_17 = arith.constant 0 : index
    %c0_18 = arith.constant 0 : index
    %c0_19 = arith.constant 0 : index
    %47 = vector.load %arg1[%c0_17, %c0_18, %c0_19] : memref<8x8x128xf32, #tpu.memory_space<vmem>>, vector<1x8x128xf32>
    %48 = vector.shape_cast %47 : vector<1x8x128xf32> to vector<8x128xf32>
    %cst_20 = arith.constant 5.000000e-01 : f32
    %49 = vector.broadcast %cst_20 : f32 to vector<8x128xf32>
    %50 = arith.cmpf ogt, %48, %49 : vector<8x128xf32>
    %51 = arith.select %50, %46, %15 : vector<8x128xi1>, vector<8x128xf32>
    %52 = arith.select %50, %44, %16 : vector<8x128xi1>, vector<8x128xf32>
    %53 = arith.truncf %51 : vector<8x128xf32> to vector<8x128xbf16>
    %c0_21 = arith.constant 0 : index
    %c0_22 = arith.constant 0 : index
    %54 = vector.load %arg17[%c0_21, %c0_22] : memref<64x256xbf16, #tpu.memory_space<vmem>>, vector<8x128xbf16>
    tpu.vector_store %arg17[%c0_21, %c0_22], %53 {strides = array<i32>} : memref<64x256xbf16, #tpu.memory_space<vmem>>, vector<8x128xbf16>,
    %c56 = arith.constant 56 : index
    %c128 = arith.constant 128 : index
    %55 = vector.load %arg17[%c56, %c128] : memref<64x256xbf16, #tpu.memory_space<vmem>>, vector<8x128xbf16>
    tpu.vector_store %arg17[%c56, %c128], %53 {strides = array<i32>} : memref<64x256xbf16, #tpu.memory_space<vmem>>, vector<8x128xbf16>,
    %c8 = arith.constant 8 : index
    %c0_23 = arith.constant 0 : index
    %56 = vector.load %arg18[%c8, %c0_23] : memref<64x512xf32, #tpu.memory_space<vmem>>, vector<8x512xf32>
    %57 = arith.truncf %51 : vector<8x128xf32> to vector<8x128xbf16>
    %c0_24 = arith.constant 0 : index
    %c0_25 = arith.constant 0 : index
    %58 = vector.load %arg4[%c0_24, %c0_25] : memref<128x512xbf16, #tpu.memory_space<vmem>>, vector<128x512xbf16>
    %cst_26 = arith.constant dense<0.000000e+00> : vector<8x512xf32>
    %59 = tpu.matmul %57, %58, %cst_26 {dimension_numbers = #tpu.dot_dimension_numbers<[1], [0], [0], [1], [0, 0, 1, 1], [], []>} : vector<8x128xbf16>, vector<128x512xbf16>, vector<8x512xf32> -> vector<8x512xf32>
    %60 = arith.addf %56, %59 : vector<8x512xf32>
    %61 = vector.extract_strided_slice %60 {offsets = [0, 0], sizes = [8, 128], strides = [1, 1]} : vector<8x512xf32> to vector<8x128xf32>
    %62 = arith.negf %61 : vector<8x128xf32>
    %63 = math.exp %62 : vector<8x128xf32>
    %cst_27 = arith.constant 1.000000e+00 : f32
    %64 = vector.broadcast %cst_27 : f32 to vector<8x128xf32>
    %65 = arith.addf %64, %63 : vector<8x128xf32>
    %66 = arith.divf %64, %65 : vector<8x128xf32>
    %67 = vector.extract_strided_slice %60 {offsets = [0, 128], sizes = [8, 128], strides = [1, 1]} : vector<8x512xf32> to vector<8x128xf32>
    %68 = arith.negf %67 : vector<8x128xf32>
    %69 = math.exp %68 : vector<8x128xf32>
    %cst_28 = arith.constant 1.000000e+00 : f32
    %70 = vector.broadcast %cst_28 : f32 to vector<8x128xf32>
    %71 = arith.addf %70, %69 : vector<8x128xf32>
    %72 = arith.divf %70, %71 : vector<8x128xf32>
    %73 = vector.extract_strided_slice %60 {offsets = [0, 256], sizes = [8, 128], strides = [1, 1]} : vector<8x512xf32> to vector<8x128xf32>
    %74 = math.tanh %73 : vector<8x128xf32>
    %75 = vector.extract_strided_slice %60 {offsets = [0, 384], sizes = [8, 128], strides = [1, 1]} : vector<8x512xf32> to vector<8x128xf32>
    %76 = arith.negf %75 : vector<8x128xf32>
    %77 = math.exp %76 : vector<8x128xf32>
    %cst_29 = arith.constant 1.000000e+00 : f32
    %78 = vector.broadcast %cst_29 : f32 to vector<8x128xf32>
    %79 = arith.addf %78, %77 : vector<8x128xf32>
    %80 = arith.divf %78, %79 : vector<8x128xf32>
    %81 = arith.mulf %72, %52 : vector<8x128xf32>
    %82 = arith.mulf %66, %74 : vector<8x128xf32>
    %83 = arith.addf %81, %82 : vector<8x128xf32>
    %84 = math.tanh %83 : vector<8x128xf32>
    %85 = arith.mulf %80, %84 : vector<8x128xf32>
    %c1 = arith.constant 1 : index
    %c0_30 = arith.constant 0 : index
    %c0_31 = arith.constant 0 : index
    %86 = vector.load %arg1[%c1, %c0_30, %c0_31] : memref<8x8x128xf32, #tpu.memory_space<vmem>>, vector<1x8x128xf32>
    %87 = vector.shape_cast %86 : vector<1x8x128xf32> to vector<8x128xf32>
    %cst_32 = arith.constant 5.000000e-01 : f32
    %88 = vector.broadcast %cst_32 : f32 to vector<8x128xf32>
    %89 = arith.cmpf ogt, %87, %88 : vector<8x128xf32>
    %90 = arith.select %89, %85, %51 : vector<8x128xi1>, vector<8x128xf32>
    %91 = arith.select %89, %83, %52 : vector<8x128xi1>, vector<8x128xf32>
    %92 = arith.truncf %90 : vector<8x128xf32> to vector<8x128xbf16>
    %c8_33 = arith.constant 8 : index
    %c0_34 = arith.constant 0 : index
    %93 = vector.load %arg17[%c8_33, %c0_34] : memref<64x256xbf16, #tpu.memory_space<vmem>>, vector<8x128xbf16>
    tpu.vector_store %arg17[%c8_33, %c0_34], %92 {strides = array<i32>} : memref<64x256xbf16, #tpu.memory_space<vmem>>, vector<8x128xbf16>,
    %c48 = arith.constant 48 : index
    %c128_35 = arith.constant 128 : index
    %94 = vector.load %arg17[%c48, %c128_35] : memref<64x256xbf16, #tpu.memory_space<vmem>>, vector<8x128xbf16>
    tpu.vector_store %arg17[%c48, %c128_35], %92 {strides = array<i32>} : memref<64x256xbf16, #tpu.memory_space<vmem>>, vector<8x128xbf16>,
    %c16 = arith.constant 16 : index
    %c0_36 = arith.constant 0 : index
    %95 = vector.load %arg18[%c16, %c0_36] : memref<64x512xf32, #tpu.memory_space<vmem>>, vector<8x512xf32>
    %96 = arith.truncf %90 : vector<8x128xf32> to vector<8x128xbf16>
    %c0_37 = arith.constant 0 : index
    %c0_38 = arith.constant 0 : index
    %97 = vector.load %arg4[%c0_37, %c0_38] : memref<128x512xbf16, #tpu.memory_space<vmem>>, vector<128x512xbf16>
    %cst_39 = arith.constant dense<0.000000e+00> : vector<8x512xf32>
    %98 = tpu.matmul %96, %97, %cst_39 {dimension_numbers = #tpu.dot_dimension_numbers<[1], [0], [0], [1], [0, 0, 1, 1], [], []>} : vector<8x128xbf16>, vector<128x512xbf16>, vector<8x512xf32> -> vector<8x512xf32>
    %99 = arith.addf %95, %98 : vector<8x512xf32>
    %100 = vector.extract_strided_slice %99 {offsets = [0, 0], sizes = [8, 128], strides = [1, 1]} : vector<8x512xf32> to vector<8x128xf32>
    %101 = arith.negf %100 : vector<8x128xf32>
    %102 = math.exp %101 : vector<8x128xf32>
    %cst_40 = arith.constant 1.000000e+00 : f32
    %103 = vector.broadcast %cst_40 : f32 to vector<8x128xf32>
    %104 = arith.addf %103, %102 : vector<8x128xf32>
    %105 = arith.divf %103, %104 : vector<8x128xf32>
    %106 = vector.extract_strided_slice %99 {offsets = [0, 128], sizes = [8, 128], strides = [1, 1]} : vector<8x512xf32> to vector<8x128xf32>
    %107 = arith.negf %106 : vector<8x128xf32>
    %108 = math.exp %107 : vector<8x128xf32>
    %cst_41 = arith.constant 1.000000e+00 : f32
    %109 = vector.broadcast %cst_41 : f32 to vector<8x128xf32>
    %110 = arith.addf %109, %108 : vector<8x128xf32>
    %111 = arith.divf %109, %110 : vector<8x128xf32>
    %112 = vector.extract_strided_slice %99 {offsets = [0, 256], sizes = [8, 128], strides = [1, 1]} : vector<8x512xf32> to vector<8x128xf32>
    %113 = math.tanh %112 : vector<8x128xf32>
    %114 = vector.extract_strided_slice %99 {offsets = [0, 384], sizes = [8, 128], strides = [1, 1]} : vector<8x512xf32> to vector<8x128xf32>
    %115 = arith.negf %114 : vector<8x128xf32>
    %116 = math.exp %115 : vector<8x128xf32>
    %cst_42 = arith.constant 1.000000e+00 : f32
    %117 = vector.broadcast %cst_42 : f32 to vector<8x128xf32>
    %118 = arith.addf %117, %116 : vector<8x128xf32>
    %119 = arith.divf %117, %118 : vector<8x128xf32>
    %120 = arith.mulf %111, %91 : vector<8x128xf32>
    %121 = arith.mulf %105, %113 : vector<8x128xf32>
    %122 = arith.addf %120, %121 : vector<8x128xf32>
    %123 = math.tanh %122 : vector<8x128xf32>
    %124 = arith.mulf %119, %123 : vector<8x128xf32>
    %c2 = arith.constant 2 : index
    %c0_43 = arith.constant 0 : index
    %c0_44 = arith.constant 0 : index
    %125 = vector.load %arg1[%c2, %c0_43, %c0_44] : memref<8x8x128xf32, #tpu.memory_space<vmem>>, vector<1x8x128xf32>
    %126 = vector.shape_cast %125 : vector<1x8x128xf32> to vector<8x128xf32>
    %cst_45 = arith.constant 5.000000e-01 : f32
    %127 = vector.broadcast %cst_45 : f32 to vector<8x128xf32>
    %128 = arith.cmpf ogt, %126, %127 : vector<8x128xf32>
    %129 = arith.select %128, %124, %90 : vector<8x128xi1>, vector<8x128xf32>
    %130 = arith.select %128, %122, %91 : vector<8x128xi1>, vector<8x128xf32>
    %131 = arith.truncf %129 : vector<8x128xf32> to vector<8x128xbf16>
    %c16_46 = arith.constant 16 : index
    %c0_47 = arith.constant 0 : index
    %132 = vector.load %arg17[%c16_46, %c0_47] : memref<64x256xbf16, #tpu.memory_space<vmem>>, vector<8x128xbf16>
    tpu.vector_store %arg17[%c16_46, %c0_47], %131 {strides = array<i32>} : memref<64x256xbf16, #tpu.memory_space<vmem>>, vector<8x128xbf16>,
    %c40 = arith.constant 40 : index
    %c128_48 = arith.constant 128 : index
    %133 = vector.load %arg17[%c40, %c128_48] : memref<64x256xbf16, #tpu.memory_space<vmem>>, vector<8x128xbf16>
    tpu.vector_store %arg17[%c40, %c128_48], %131 {strides = array<i32>} : memref<64x256xbf16, #tpu.memory_space<vmem>>, vector<8x128xbf16>,
    %c24 = arith.constant 24 : index
    %c0_49 = arith.constant 0 : index
    %134 = vector.load %arg18[%c24, %c0_49] : memref<64x512xf32, #tpu.memory_space<vmem>>, vector<8x512xf32>
    %135 = arith.truncf %129 : vector<8x128xf32> to vector<8x128xbf16>
    %c0_50 = arith.constant 0 : index
    %c0_51 = arith.constant 0 : index
    %136 = vector.load %arg4[%c0_50, %c0_51] : memref<128x512xbf16, #tpu.memory_space<vmem>>, vector<128x512xbf16>
    %cst_52 = arith.constant dense<0.000000e+00> : vector<8x512xf32>
    %137 = tpu.matmul %135, %136, %cst_52 {dimension_numbers = #tpu.dot_dimension_numbers<[1], [0], [0], [1], [0, 0, 1, 1], [], []>} : vector<8x128xbf16>, vector<128x512xbf16>, vector<8x512xf32> -> vector<8x512xf32>
    %138 = arith.addf %134, %137 : vector<8x512xf32>
    %139 = vector.extract_strided_slice %138 {offsets = [0, 0], sizes = [8, 128], strides = [1, 1]} : vector<8x512xf32> to vector<8x128xf32>
    %140 = arith.negf %139 : vector<8x128xf32>
    %141 = math.exp %140 : vector<8x128xf32>
    %cst_53 = arith.constant 1.000000e+00 : f32
    %142 = vector.broadcast %cst_53 : f32 to vector<8x128xf32>
    %143 = arith.addf %142, %141 : vector<8x128xf32>
    %144 = arith.divf %142, %143 : vector<8x128xf32>
    %145 = vector.extract_strided_slice %138 {offsets = [0, 128], sizes = [8, 128], strides = [1, 1]} : vector<8x512xf32> to vector<8x128xf32>
    %146 = arith.negf %145 : vector<8x128xf32>
    %147 = math.exp %146 : vector<8x128xf32>
    %cst_54 = arith.constant 1.000000e+00 : f32
    %148 = vector.broadcast %cst_54 : f32 to vector<8x128xf32>
    %149 = arith.addf %148, %147 : vector<8x128xf32>
    %150 = arith.divf %148, %149 : vector<8x128xf32>
    %151 = vector.extract_strided_slice %138 {offsets = [0, 256], sizes = [8, 128], strides = [1, 1]} : vector<8x512xf32> to vector<8x128xf32>
    %152 = math.tanh %151 : vector<8x128xf32>
    %153 = vector.extract_strided_slice %138 {offsets = [0, 384], sizes = [8, 128], strides = [1, 1]} : vector<8x512xf32> to vector<8x128xf32>
    %154 = arith.negf %153 : vector<8x128xf32>
    %155 = math.exp %154 : vector<8x128xf32>
    %cst_55 = arith.constant 1.000000e+00 : f32
    %156 = vector.broadcast %cst_55 : f32 to vector<8x128xf32>
    %157 = arith.addf %156, %155 : vector<8x128xf32>
    %158 = arith.divf %156, %157 : vector<8x128xf32>
    %159 = arith.mulf %150, %130 : vector<8x128xf32>
    %160 = arith.mulf %144, %152 : vector<8x128xf32>
    %161 = arith.addf %159, %160 : vector<8x128xf32>
    %162 = math.tanh %161 : vector<8x128xf32>
    %163 = arith.mulf %158, %162 : vector<8x128xf32>
    %c3 = arith.constant 3 : index
    %c0_56 = arith.constant 0 : index
    %c0_57 = arith.constant 0 : index
    %164 = vector.load %arg1[%c3, %c0_56, %c0_57] : memref<8x8x128xf32, #tpu.memory_space<vmem>>, vector<1x8x128xf32>
    %165 = vector.shape_cast %164 : vector<1x8x128xf32> to vector<8x128xf32>
    %cst_58 = arith.constant 5.000000e-01 : f32
    %166 = vector.broadcast %cst_58 : f32 to vector<8x128xf32>
    %167 = arith.cmpf ogt, %165, %166 : vector<8x128xf32>
    %168 = arith.select %167, %163, %129 : vector<8x128xi1>, vector<8x128xf32>
    %169 = arith.select %167, %161, %130 : vector<8x128xi1>, vector<8x128xf32>
    %170 = arith.truncf %168 : vector<8x128xf32> to vector<8x128xbf16>
    %c24_59 = arith.constant 24 : index
    %c0_60 = arith.constant 0 : index
    %171 = vector.load %arg17[%c24_59, %c0_60] : memref<64x256xbf16, #tpu.memory_space<vmem>>, vector<8x128xbf16>
    tpu.vector_store %arg17[%c24_59, %c0_60], %170 {strides = array<i32>} : memref<64x256xbf16, #tpu.memory_space<vmem>>, vector<8x128xbf16>,
    %c32 = arith.constant 32 : index
    %c128_61 = arith.constant 128 : index
    %172 = vector.load %arg17[%c32, %c128_61] : memref<64x256xbf16, #tpu.memory_space<vmem>>, vector<8x128xbf16>
    tpu.vector_store %arg17[%c32, %c128_61], %170 {strides = array<i32>} : memref<64x256xbf16, #tpu.memory_space<vmem>>, vector<8x128xbf16>,
    %c32_62 = arith.constant 32 : index
    %c0_63 = arith.constant 0 : index
    %173 = vector.load %arg18[%c32_62, %c0_63] : memref<64x512xf32, #tpu.memory_space<vmem>>, vector<8x512xf32>
    %174 = arith.truncf %168 : vector<8x128xf32> to vector<8x128xbf16>
    %c0_64 = arith.constant 0 : index
    %c0_65 = arith.constant 0 : index
    %175 = vector.load %arg4[%c0_64, %c0_65] : memref<128x512xbf16, #tpu.memory_space<vmem>>, vector<128x512xbf16>
    %cst_66 = arith.constant dense<0.000000e+00> : vector<8x512xf32>
    %176 = tpu.matmul %174, %175, %cst_66 {dimension_numbers = #tpu.dot_dimension_numbers<[1], [0], [0], [1], [0, 0, 1, 1], [], []>} : vector<8x128xbf16>, vector<128x512xbf16>, vector<8x512xf32> -> vector<8x512xf32>
    %177 = arith.addf %173, %176 : vector<8x512xf32>
    %178 = vector.extract_strided_slice %177 {offsets = [0, 0], sizes = [8, 128], strides = [1, 1]} : vector<8x512xf32> to vector<8x128xf32>
    %179 = arith.negf %178 : vector<8x128xf32>
    %180 = math.exp %179 : vector<8x128xf32>
    %cst_67 = arith.constant 1.000000e+00 : f32
    %181 = vector.broadcast %cst_67 : f32 to vector<8x128xf32>
    %182 = arith.addf %181, %180 : vector<8x128xf32>
    %183 = arith.divf %181, %182 : vector<8x128xf32>
    %184 = vector.extract_strided_slice %177 {offsets = [0, 128], sizes = [8, 128], strides = [1, 1]} : vector<8x512xf32> to vector<8x128xf32>
    %185 = arith.negf %184 : vector<8x128xf32>
    %186 = math.exp %185 : vector<8x128xf32>
    %cst_68 = arith.constant 1.000000e+00 : f32
    %187 = vector.broadcast %cst_68 : f32 to vector<8x128xf32>
    %188 = arith.addf %187, %186 : vector<8x128xf32>
    %189 = arith.divf %187, %188 : vector<8x128xf32>
    %190 = vector.extract_strided_slice %177 {offsets = [0, 256], sizes = [8, 128], strides = [1, 1]} : vector<8x512xf32> to vector<8x128xf32>
    %191 = math.tanh %190 : vector<8x128xf32>
    %192 = vector.extract_strided_slice %177 {offsets = [0, 384], sizes = [8, 128], strides = [1, 1]} : vector<8x512xf32> to vector<8x128xf32>
    %193 = arith.negf %192 : vector<8x128xf32>
    %194 = math.exp %193 : vector<8x128xf32>
    %cst_69 = arith.constant 1.000000e+00 : f32
    %195 = vector.broadcast %cst_69 : f32 to vector<8x128xf32>
    %196 = arith.addf %195, %194 : vector<8x128xf32>
    %197 = arith.divf %195, %196 : vector<8x128xf32>
    %198 = arith.mulf %189, %169 : vector<8x128xf32>
    %199 = arith.mulf %183, %191 : vector<8x128xf32>
    %200 = arith.addf %198, %199 : vector<8x128xf32>
    %201 = math.tanh %200 : vector<8x128xf32>
    %202 = arith.mulf %197, %201 : vector<8x128xf32>
    %c4 = arith.constant 4 : index
    %c0_70 = arith.constant 0 : index
    %c0_71 = arith.constant 0 : index
    %203 = vector.load %arg1[%c4, %c0_70, %c0_71] : memref<8x8x128xf32, #tpu.memory_space<vmem>>, vector<1x8x128xf32>
    %204 = vector.shape_cast %203 : vector<1x8x128xf32> to vector<8x128xf32>
    %cst_72 = arith.constant 5.000000e-01 : f32
    %205 = vector.broadcast %cst_72 : f32 to vector<8x128xf32>
    %206 = arith.cmpf ogt, %204, %205 : vector<8x128xf32>
    %207 = arith.select %206, %202, %168 : vector<8x128xi1>, vector<8x128xf32>
    %208 = arith.select %206, %200, %169 : vector<8x128xi1>, vector<8x128xf32>
    %209 = arith.truncf %207 : vector<8x128xf32> to vector<8x128xbf16>
    %c32_73 = arith.constant 32 : index
    %c0_74 = arith.constant 0 : index
    %210 = vector.load %arg17[%c32_73, %c0_74] : memref<64x256xbf16, #tpu.memory_space<vmem>>, vector<8x128xbf16>
    tpu.vector_store %arg17[%c32_73, %c0_74], %209 {strides = array<i32>} : memref<64x256xbf16, #tpu.memory_space<vmem>>, vector<8x128xbf16>,
    %c24_75 = arith.constant 24 : index
    %c128_76 = arith.constant 128 : index
    %211 = vector.load %arg17[%c24_75, %c128_76] : memref<64x256xbf16, #tpu.memory_space<vmem>>, vector<8x128xbf16>
    tpu.vector_store %arg17[%c24_75, %c128_76], %209 {strides = array<i32>} : memref<64x256xbf16, #tpu.memory_space<vmem>>, vector<8x128xbf16>,
    %c40_77 = arith.constant 40 : index
    %c0_78 = arith.constant 0 : index
    %212 = vector.load %arg18[%c40_77, %c0_78] : memref<64x512xf32, #tpu.memory_space<vmem>>, vector<8x512xf32>
    %213 = arith.truncf %207 : vector<8x128xf32> to vector<8x128xbf16>
    %c0_79 = arith.constant 0 : index
    %c0_80 = arith.constant 0 : index
    %214 = vector.load %arg4[%c0_79, %c0_80] : memref<128x512xbf16, #tpu.memory_space<vmem>>, vector<128x512xbf16>
    %cst_81 = arith.constant dense<0.000000e+00> : vector<8x512xf32>
    %215 = tpu.matmul %213, %214, %cst_81 {dimension_numbers = #tpu.dot_dimension_numbers<[1], [0], [0], [1], [0, 0, 1, 1], [], []>} : vector<8x128xbf16>, vector<128x512xbf16>, vector<8x512xf32> -> vector<8x512xf32>
    %216 = arith.addf %212, %215 : vector<8x512xf32>
    %217 = vector.extract_strided_slice %216 {offsets = [0, 0], sizes = [8, 128], strides = [1, 1]} : vector<8x512xf32> to vector<8x128xf32>
    %218 = arith.negf %217 : vector<8x128xf32>
    %219 = math.exp %218 : vector<8x128xf32>
    %cst_82 = arith.constant 1.000000e+00 : f32
    %220 = vector.broadcast %cst_82 : f32 to vector<8x128xf32>
    %221 = arith.addf %220, %219 : vector<8x128xf32>
    %222 = arith.divf %220, %221 : vector<8x128xf32>
    %223 = vector.extract_strided_slice %216 {offsets = [0, 128], sizes = [8, 128], strides = [1, 1]} : vector<8x512xf32> to vector<8x128xf32>
    %224 = arith.negf %223 : vector<8x128xf32>
    %225 = math.exp %224 : vector<8x128xf32>
    %cst_83 = arith.constant 1.000000e+00 : f32
    %226 = vector.broadcast %cst_83 : f32 to vector<8x128xf32>
    %227 = arith.addf %226, %225 : vector<8x128xf32>
    %228 = arith.divf %226, %227 : vector<8x128xf32>
    %229 = vector.extract_strided_slice %216 {offsets = [0, 256], sizes = [8, 128], strides = [1, 1]} : vector<8x512xf32> to vector<8x128xf32>
    %230 = math.tanh %229 : vector<8x128xf32>
    %231 = vector.extract_strided_slice %216 {offsets = [0, 384], sizes = [8, 128], strides = [1, 1]} : vector<8x512xf32> to vector<8x128xf32>
    %232 = arith.negf %231 : vector<8x128xf32>
    %233 = math.exp %232 : vector<8x128xf32>
    %cst_84 = arith.constant 1.000000e+00 : f32
    %234 = vector.broadcast %cst_84 : f32 to vector<8x128xf32>
    %235 = arith.addf %234, %233 : vector<8x128xf32>
    %236 = arith.divf %234, %235 : vector<8x128xf32>
    %237 = arith.mulf %228, %208 : vector<8x128xf32>
    %238 = arith.mulf %222, %230 : vector<8x128xf32>
    %239 = arith.addf %237, %238 : vector<8x128xf32>
    %240 = math.tanh %239 : vector<8x128xf32>
    %241 = arith.mulf %236, %240 : vector<8x128xf32>
    %c5 = arith.constant 5 : index
    %c0_85 = arith.constant 0 : index
    %c0_86 = arith.constant 0 : index
    %242 = vector.load %arg1[%c5, %c0_85, %c0_86] : memref<8x8x128xf32, #tpu.memory_space<vmem>>, vector<1x8x128xf32>
    %243 = vector.shape_cast %242 : vector<1x8x128xf32> to vector<8x128xf32>
    %cst_87 = arith.constant 5.000000e-01 : f32
    %244 = vector.broadcast %cst_87 : f32 to vector<8x128xf32>
    %245 = arith.cmpf ogt, %243, %244 : vector<8x128xf32>
    %246 = arith.select %245, %241, %207 : vector<8x128xi1>, vector<8x128xf32>
    %247 = arith.select %245, %239, %208 : vector<8x128xi1>, vector<8x128xf32>
    %248 = arith.truncf %246 : vector<8x128xf32> to vector<8x128xbf16>
    %c40_88 = arith.constant 40 : index
    %c0_89 = arith.constant 0 : index
    %249 = vector.load %arg17[%c40_88, %c0_89] : memref<64x256xbf16, #tpu.memory_space<vmem>>, vector<8x128xbf16>
    tpu.vector_store %arg17[%c40_88, %c0_89], %248 {strides = array<i32>} : memref<64x256xbf16, #tpu.memory_space<vmem>>, vector<8x128xbf16>,
    %c16_90 = arith.constant 16 : index
    %c128_91 = arith.constant 128 : index
    %250 = vector.load %arg17[%c16_90, %c128_91] : memref<64x256xbf16, #tpu.memory_space<vmem>>, vector<8x128xbf16>
    tpu.vector_store %arg17[%c16_90, %c128_91], %248 {strides = array<i32>} : memref<64x256xbf16, #tpu.memory_space<vmem>>, vector<8x128xbf16>,
    %c48_92 = arith.constant 48 : index
    %c0_93 = arith.constant 0 : index
    %251 = vector.load %arg18[%c48_92, %c0_93] : memref<64x512xf32, #tpu.memory_space<vmem>>, vector<8x512xf32>
    %252 = arith.truncf %246 : vector<8x128xf32> to vector<8x128xbf16>
    %c0_94 = arith.constant 0 : index
    %c0_95 = arith.constant 0 : index
    %253 = vector.load %arg4[%c0_94, %c0_95] : memref<128x512xbf16, #tpu.memory_space<vmem>>, vector<128x512xbf16>
    %cst_96 = arith.constant dense<0.000000e+00> : vector<8x512xf32>
    %254 = tpu.matmul %252, %253, %cst_96 {dimension_numbers = #tpu.dot_dimension_numbers<[1], [0], [0], [1], [0, 0, 1, 1], [], []>} : vector<8x128xbf16>, vector<128x512xbf16>, vector<8x512xf32> -> vector<8x512xf32>
    %255 = arith.addf %251, %254 : vector<8x512xf32>
    %256 = vector.extract_strided_slice %255 {offsets = [0, 0], sizes = [8, 128], strides = [1, 1]} : vector<8x512xf32> to vector<8x128xf32>
    %257 = arith.negf %256 : vector<8x128xf32>
    %258 = math.exp %257 : vector<8x128xf32>
    %cst_97 = arith.constant 1.000000e+00 : f32
    %259 = vector.broadcast %cst_97 : f32 to vector<8x128xf32>
    %260 = arith.addf %259, %258 : vector<8x128xf32>
    %261 = arith.divf %259, %260 : vector<8x128xf32>
    %262 = vector.extract_strided_slice %255 {offsets = [0, 128], sizes = [8, 128], strides = [1, 1]} : vector<8x512xf32> to vector<8x128xf32>
    %263 = arith.negf %262 : vector<8x128xf32>
    %264 = math.exp %263 : vector<8x128xf32>
    %cst_98 = arith.constant 1.000000e+00 : f32
    %265 = vector.broadcast %cst_98 : f32 to vector<8x128xf32>
    %266 = arith.addf %265, %264 : vector<8x128xf32>
    %267 = arith.divf %265, %266 : vector<8x128xf32>
    %268 = vector.extract_strided_slice %255 {offsets = [0, 256], sizes = [8, 128], strides = [1, 1]} : vector<8x512xf32> to vector<8x128xf32>
    %269 = math.tanh %268 : vector<8x128xf32>
    %270 = vector.extract_strided_slice %255 {offsets = [0, 384], sizes = [8, 128], strides = [1, 1]} : vector<8x512xf32> to vector<8x128xf32>
    %271 = arith.negf %270 : vector<8x128xf32>
    %272 = math.exp %271 : vector<8x128xf32>
    %cst_99 = arith.constant 1.000000e+00 : f32
    %273 = vector.broadcast %cst_99 : f32 to vector<8x128xf32>
    %274 = arith.addf %273, %272 : vector<8x128xf32>
    %275 = arith.divf %273, %274 : vector<8x128xf32>
    %276 = arith.mulf %267, %247 : vector<8x128xf32>
    %277 = arith.mulf %261, %269 : vector<8x128xf32>
    %278 = arith.addf %276, %277 : vector<8x128xf32>
    %279 = math.tanh %278 : vector<8x128xf32>
    %280 = arith.mulf %275, %279 : vector<8x128xf32>
    %c6 = arith.constant 6 : index
    %c0_100 = arith.constant 0 : index
    %c0_101 = arith.constant 0 : index
    %281 = vector.load %arg1[%c6, %c0_100, %c0_101] : memref<8x8x128xf32, #tpu.memory_space<vmem>>, vector<1x8x128xf32>
    %282 = vector.shape_cast %281 : vector<1x8x128xf32> to vector<8x128xf32>
    %cst_102 = arith.constant 5.000000e-01 : f32
    %283 = vector.broadcast %cst_102 : f32 to vector<8x128xf32>
    %284 = arith.cmpf ogt, %282, %283 : vector<8x128xf32>
    %285 = arith.select %284, %280, %246 : vector<8x128xi1>, vector<8x128xf32>
    %286 = arith.select %284, %278, %247 : vector<8x128xi1>, vector<8x128xf32>
    %287 = arith.truncf %285 : vector<8x128xf32> to vector<8x128xbf16>
    %c48_103 = arith.constant 48 : index
    %c0_104 = arith.constant 0 : index
    %288 = vector.load %arg17[%c48_103, %c0_104] : memref<64x256xbf16, #tpu.memory_space<vmem>>, vector<8x128xbf16>
    tpu.vector_store %arg17[%c48_103, %c0_104], %287 {strides = array<i32>} : memref<64x256xbf16, #tpu.memory_space<vmem>>, vector<8x128xbf16>,
    %c8_105 = arith.constant 8 : index
    %c128_106 = arith.constant 128 : index
    %289 = vector.load %arg17[%c8_105, %c128_106] : memref<64x256xbf16, #tpu.memory_space<vmem>>, vector<8x128xbf16>
    tpu.vector_store %arg17[%c8_105, %c128_106], %287 {strides = array<i32>} : memref<64x256xbf16, #tpu.memory_space<vmem>>, vector<8x128xbf16>,
    %c56_107 = arith.constant 56 : index
    %c0_108 = arith.constant 0 : index
    %290 = vector.load %arg18[%c56_107, %c0_108] : memref<64x512xf32, #tpu.memory_space<vmem>>, vector<8x512xf32>
    %291 = arith.truncf %285 : vector<8x128xf32> to vector<8x128xbf16>
    %c0_109 = arith.constant 0 : index
    %c0_110 = arith.constant 0 : index
    %292 = vector.load %arg4[%c0_109, %c0_110] : memref<128x512xbf16, #tpu.memory_space<vmem>>, vector<128x512xbf16>
    %cst_111 = arith.constant dense<0.000000e+00> : vector<8x512xf32>
    %293 = tpu.matmul %291, %292, %cst_111 {dimension_numbers = #tpu.dot_dimension_numbers<[1], [0], [0], [1], [0, 0, 1, 1], [], []>} : vector<8x128xbf16>, vector<128x512xbf16>, vector<8x512xf32> -> vector<8x512xf32>
    %294 = arith.addf %290, %293 : vector<8x512xf32>
    %295 = vector.extract_strided_slice %294 {offsets = [0, 0], sizes = [8, 128], strides = [1, 1]} : vector<8x512xf32> to vector<8x128xf32>
    %296 = arith.negf %295 : vector<8x128xf32>
    %297 = math.exp %296 : vector<8x128xf32>
    %cst_112 = arith.constant 1.000000e+00 : f32
    %298 = vector.broadcast %cst_112 : f32 to vector<8x128xf32>
    %299 = arith.addf %298, %297 : vector<8x128xf32>
    %300 = arith.divf %298, %299 : vector<8x128xf32>
    %301 = vector.extract_strided_slice %294 {offsets = [0, 128], sizes = [8, 128], strides = [1, 1]} : vector<8x512xf32> to vector<8x128xf32>
    %302 = arith.negf %301 : vector<8x128xf32>
    %303 = math.exp %302 : vector<8x128xf32>
    %cst_113 = arith.constant 1.000000e+00 : f32
    %304 = vector.broadcast %cst_113 : f32 to vector<8x128xf32>
    %305 = arith.addf %304, %303 : vector<8x128xf32>
    %306 = arith.divf %304, %305 : vector<8x128xf32>
    %307 = vector.extract_strided_slice %294 {offsets = [0, 256], sizes = [8, 128], strides = [1, 1]} : vector<8x512xf32> to vector<8x128xf32>
    %308 = math.tanh %307 : vector<8x128xf32>
    %309 = vector.extract_strided_slice %294 {offsets = [0, 384], sizes = [8, 128], strides = [1, 1]} : vector<8x512xf32> to vector<8x128xf32>
    %310 = arith.negf %309 : vector<8x128xf32>
    %311 = math.exp %310 : vector<8x128xf32>
    %cst_114 = arith.constant 1.000000e+00 : f32
    %312 = vector.broadcast %cst_114 : f32 to vector<8x128xf32>
    %313 = arith.addf %312, %311 : vector<8x128xf32>
    %314 = arith.divf %312, %313 : vector<8x128xf32>
    %315 = arith.mulf %306, %286 : vector<8x128xf32>
    %316 = arith.mulf %300, %308 : vector<8x128xf32>
    %317 = arith.addf %315, %316 : vector<8x128xf32>
    %318 = math.tanh %317 : vector<8x128xf32>
    %319 = arith.mulf %314, %318 : vector<8x128xf32>
    %c7 = arith.constant 7 : index
    %c0_115 = arith.constant 0 : index
    %c0_116 = arith.constant 0 : index
    %320 = vector.load %arg1[%c7, %c0_115, %c0_116] : memref<8x8x128xf32, #tpu.memory_space<vmem>>, vector<1x8x128xf32>
    %321 = vector.shape_cast %320 : vector<1x8x128xf32> to vector<8x128xf32>
    %cst_117 = arith.constant 5.000000e-01 : f32
    %322 = vector.broadcast %cst_117 : f32 to vector<8x128xf32>
    %323 = arith.cmpf ogt, %321, %322 : vector<8x128xf32>
    %324 = arith.select %323, %319, %285 : vector<8x128xi1>, vector<8x128xf32>
    %325 = arith.truncf %324 : vector<8x128xf32> to vector<8x128xbf16>
    %c56_118 = arith.constant 56 : index
    %c0_119 = arith.constant 0 : index
    %326 = vector.load %arg17[%c56_118, %c0_119] : memref<64x256xbf16, #tpu.memory_space<vmem>>, vector<8x128xbf16>
    tpu.vector_store %arg17[%c56_118, %c0_119], %325 {strides = array<i32>} : memref<64x256xbf16, #tpu.memory_space<vmem>>, vector<8x128xbf16>,
    %c0_120 = arith.constant 0 : index
    %c128_121 = arith.constant 128 : index
    %327 = vector.load %arg17[%c0_120, %c128_121] : memref<64x256xbf16, #tpu.memory_space<vmem>>, vector<8x128xbf16>
    tpu.vector_store %arg17[%c0_120, %c128_121], %325 {strides = array<i32>} : memref<64x256xbf16, #tpu.memory_space<vmem>>, vector<8x128xbf16>,
    %c0_i32_122 = arith.constant 0 : i32
    %328 = tpu.memref_slice %arg19[%c0_i32_122] : memref<4x!tpu.dma_semaphore, #tpu.memory_space<semaphore_mem>> -> memref<1x!tpu.dma_semaphore, #tpu.memory_space<semaphore_mem>>
    %329 = tpu.memref_squeeze %328 : memref<1x!tpu.dma_semaphore, #tpu.memory_space<semaphore_mem>> -> memref<!tpu.dma_semaphore, #tpu.memory_space<semaphore_mem>>
    tpu.wait_dma2 semaphore(%329 : memref<!tpu.dma_semaphore, #tpu.memory_space<semaphore_mem>>) src(%arg5 : memref<256x512xbf16, #tpu.memory_space<any>>) dst(%arg13 : memref<256x512xbf16, #tpu.memory_space<vmem>>)
    %c0_123 = arith.constant 0 : index
    %c0_124 = arith.constant 0 : index
    %330 = vector.load %arg17[%c0_123, %c0_124] : memref<64x256xbf16, #tpu.memory_space<vmem>>, vector<64x256xbf16>
    %c0_125 = arith.constant 0 : index
    %c0_126 = arith.constant 0 : index
    %331 = vector.load %arg13[%c0_125, %c0_126] : memref<256x512xbf16, #tpu.memory_space<vmem>>, vector<256x512xbf16>
    %cst_127 = arith.constant dense<0.000000e+00> : vector<64x512xf32>
    %332 = tpu.matmul %330, %331, %cst_127 {dimension_numbers = #tpu.dot_dimension_numbers<[1], [0], [0], [1], [0, 0, 1, 1], [], []>} : vector<64x256xbf16>, vector<256x512xbf16>, vector<64x512xf32> -> vector<64x512xf32>
    %c0_128 = arith.constant 0 : index
    %c0_129 = arith.constant 0 : index
    %333 = vector.load %arg7[%c0_128, %c0_129] : memref<1x512xf32, #tpu.memory_space<vmem>>, vector<1x512xf32>
    %334 = vector.broadcast %333 : vector<1x512xf32> to vector<64x512xf32>
    %335 = arith.addf %332, %334 : vector<64x512xf32>
    %c0_130 = arith.constant 0 : index
    %c0_131 = arith.constant 0 : index
    %336 = vector.load %arg18[%c0_130, %c0_131] : memref<64x512xf32, #tpu.memory_space<vmem>>, vector<64x512xf32>
    tpu.vector_store %arg18[%c0_130, %c0_131], %335 {strides = array<i32>} : memref<64x512xf32, #tpu.memory_space<vmem>>, vector<64x512xf32>,
    %c1_i32_132 = arith.constant 1 : i32
    %337 = tpu.memref_slice %arg19[%c1_i32_132] : memref<4x!tpu.dma_semaphore, #tpu.memory_space<semaphore_mem>> -> memref<1x!tpu.dma_semaphore, #tpu.memory_space<semaphore_mem>>
    %338 = tpu.memref_squeeze %337 : memref<1x!tpu.dma_semaphore, #tpu.memory_space<semaphore_mem>> -> memref<!tpu.dma_semaphore, #tpu.memory_space<semaphore_mem>>
    tpu.wait_dma2 semaphore(%338 : memref<!tpu.dma_semaphore, #tpu.memory_space<semaphore_mem>>) src(%arg6 : memref<128x512xbf16, #tpu.memory_space<any>>) dst(%arg14 : memref<128x512xbf16, #tpu.memory_space<vmem>>)
    %cst_133 = arith.constant 0.000000e+00 : f32
    %339 = vector.broadcast %cst_133 : f32 to vector<8x128xf32>
    %cst_134 = arith.constant 0.000000e+00 : f32
    %340 = vector.broadcast %cst_134 : f32 to vector<8x128xf32>
    %c0_135 = arith.constant 0 : index
    %c0_136 = arith.constant 0 : index
    %341 = vector.load %arg18[%c0_135, %c0_136] : memref<64x512xf32, #tpu.memory_space<vmem>>, vector<8x512xf32>
    %342 = arith.truncf %339 : vector<8x128xf32> to vector<8x128xbf16>
    %c0_137 = arith.constant 0 : index
    %c0_138 = arith.constant 0 : index
    %343 = vector.load %arg14[%c0_137, %c0_138] : memref<128x512xbf16, #tpu.memory_space<vmem>>, vector<128x512xbf16>
    %cst_139 = arith.constant dense<0.000000e+00> : vector<8x512xf32>
    %344 = tpu.matmul %342, %343, %cst_139 {dimension_numbers = #tpu.dot_dimension_numbers<[1], [0], [0], [1], [0, 0, 1, 1], [], []>} : vector<8x128xbf16>, vector<128x512xbf16>, vector<8x512xf32> -> vector<8x512xf32>
    %345 = arith.addf %341, %344 : vector<8x512xf32>
    %346 = vector.extract_strided_slice %345 {offsets = [0, 0], sizes = [8, 128], strides = [1, 1]} : vector<8x512xf32> to vector<8x128xf32>
    %347 = arith.negf %346 : vector<8x128xf32>
    %348 = math.exp %347 : vector<8x128xf32>
    %cst_140 = arith.constant 1.000000e+00 : f32
    %349 = vector.broadcast %cst_140 : f32 to vector<8x128xf32>
    %350 = arith.addf %349, %348 : vector<8x128xf32>
    %351 = arith.divf %349, %350 : vector<8x128xf32>
    %352 = vector.extract_strided_slice %345 {offsets = [0, 128], sizes = [8, 128], strides = [1, 1]} : vector<8x512xf32> to vector<8x128xf32>
    %353 = arith.negf %352 : vector<8x128xf32>
    %354 = math.exp %353 : vector<8x128xf32>
    %cst_141 = arith.constant 1.000000e+00 : f32
    %355 = vector.broadcast %cst_141 : f32 to vector<8x128xf32>
    %356 = arith.addf %355, %354 : vector<8x128xf32>
    %357 = arith.divf %355, %356 : vector<8x128xf32>
    %358 = vector.extract_strided_slice %345 {offsets = [0, 256], sizes = [8, 128], strides = [1, 1]} : vector<8x512xf32> to vector<8x128xf32>
    %359 = math.tanh %358 : vector<8x128xf32>
    %360 = vector.extract_strided_slice %345 {offsets = [0, 384], sizes = [8, 128], strides = [1, 1]} : vector<8x512xf32> to vector<8x128xf32>
    %361 = arith.negf %360 : vector<8x128xf32>
    %362 = math.exp %361 : vector<8x128xf32>
    %cst_142 = arith.constant 1.000000e+00 : f32
    %363 = vector.broadcast %cst_142 : f32 to vector<8x128xf32>
    %364 = arith.addf %363, %362 : vector<8x128xf32>
    %365 = arith.divf %363, %364 : vector<8x128xf32>
    %366 = arith.mulf %357, %340 : vector<8x128xf32>
    %367 = arith.mulf %351, %359 : vector<8x128xf32>
    %368 = arith.addf %366, %367 : vector<8x128xf32>
    %369 = math.tanh %368 : vector<8x128xf32>
    %370 = arith.mulf %365, %369 : vector<8x128xf32>
    %c0_143 = arith.constant 0 : index
    %c0_144 = arith.constant 0 : index
    %c0_145 = arith.constant 0 : index
    %371 = vector.load %arg1[%c0_143, %c0_144, %c0_145] : memref<8x8x128xf32, #tpu.memory_space<vmem>>, vector<1x8x128xf32>
    %372 = vector.shape_cast %371 : vector<1x8x128xf32> to vector<8x128xf32>
    %cst_146 = arith.constant 5.000000e-01 : f32
    %373 = vector.broadcast %cst_146 : f32 to vector<8x128xf32>
    %374 = arith.cmpf ogt, %372, %373 : vector<8x128xf32>
    %375 = arith.select %374, %370, %339 : vector<8x128xi1>, vector<8x128xf32>
    %376 = arith.select %374, %368, %340 : vector<8x128xi1>, vector<8x128xf32>
    %c8_147 = arith.constant 8 : index
    %c0_148 = arith.constant 0 : index
    %377 = vector.load %arg18[%c8_147, %c0_148] : memref<64x512xf32, #tpu.memory_space<vmem>>, vector<8x512xf32>
    %378 = arith.truncf %375 : vector<8x128xf32> to vector<8x128xbf16>
    %c0_149 = arith.constant 0 : index
    %c0_150 = arith.constant 0 : index
    %379 = vector.load %arg14[%c0_149, %c0_150] : memref<128x512xbf16, #tpu.memory_space<vmem>>, vector<128x512xbf16>
    %cst_151 = arith.constant dense<0.000000e+00> : vector<8x512xf32>
    %380 = tpu.matmul %378, %379, %cst_151 {dimension_numbers = #tpu.dot_dimension_numbers<[1], [0], [0], [1], [0, 0, 1, 1], [], []>} : vector<8x128xbf16>, vector<128x512xbf16>, vector<8x512xf32> -> vector<8x512xf32>
    %381 = arith.addf %377, %380 : vector<8x512xf32>
    %382 = vector.extract_strided_slice %381 {offsets = [0, 0], sizes = [8, 128], strides = [1, 1]} : vector<8x512xf32> to vector<8x128xf32>
    %383 = arith.negf %382 : vector<8x128xf32>
    %384 = math.exp %383 : vector<8x128xf32>
    %cst_152 = arith.constant 1.000000e+00 : f32
    %385 = vector.broadcast %cst_152 : f32 to vector<8x128xf32>
    %386 = arith.addf %385, %384 : vector<8x128xf32>
    %387 = arith.divf %385, %386 : vector<8x128xf32>
    %388 = vector.extract_strided_slice %381 {offsets = [0, 128], sizes = [8, 128], strides = [1, 1]} : vector<8x512xf32> to vector<8x128xf32>
    %389 = arith.negf %388 : vector<8x128xf32>
    %390 = math.exp %389 : vector<8x128xf32>
    %cst_153 = arith.constant 1.000000e+00 : f32
    %391 = vector.broadcast %cst_153 : f32 to vector<8x128xf32>
    %392 = arith.addf %391, %390 : vector<8x128xf32>
    %393 = arith.divf %391, %392 : vector<8x128xf32>
    %394 = vector.extract_strided_slice %381 {offsets = [0, 256], sizes = [8, 128], strides = [1, 1]} : vector<8x512xf32> to vector<8x128xf32>
    %395 = math.tanh %394 : vector<8x128xf32>
    %396 = vector.extract_strided_slice %381 {offsets = [0, 384], sizes = [8, 128], strides = [1, 1]} : vector<8x512xf32> to vector<8x128xf32>
    %397 = arith.negf %396 : vector<8x128xf32>
    %398 = math.exp %397 : vector<8x128xf32>
    %cst_154 = arith.constant 1.000000e+00 : f32
    %399 = vector.broadcast %cst_154 : f32 to vector<8x128xf32>
    %400 = arith.addf %399, %398 : vector<8x128xf32>
    %401 = arith.divf %399, %400 : vector<8x128xf32>
    %402 = arith.mulf %393, %376 : vector<8x128xf32>
    %403 = arith.mulf %387, %395 : vector<8x128xf32>
    %404 = arith.addf %402, %403 : vector<8x128xf32>
    %405 = math.tanh %404 : vector<8x128xf32>
    %406 = arith.mulf %401, %405 : vector<8x128xf32>
    %c1_155 = arith.constant 1 : index
    %c0_156 = arith.constant 0 : index
    %c0_157 = arith.constant 0 : index
    %407 = vector.load %arg1[%c1_155, %c0_156, %c0_157] : memref<8x8x128xf32, #tpu.memory_space<vmem>>, vector<1x8x128xf32>
    %408 = vector.shape_cast %407 : vector<1x8x128xf32> to vector<8x128xf32>
    %cst_158 = arith.constant 5.000000e-01 : f32
    %409 = vector.broadcast %cst_158 : f32 to vector<8x128xf32>
    %410 = arith.cmpf ogt, %408, %409 : vector<8x128xf32>
    %411 = arith.select %410, %406, %375 : vector<8x128xi1>, vector<8x128xf32>
    %412 = arith.select %410, %404, %376 : vector<8x128xi1>, vector<8x128xf32>
    %c16_159 = arith.constant 16 : index
    %c0_160 = arith.constant 0 : index
    %413 = vector.load %arg18[%c16_159, %c0_160] : memref<64x512xf32, #tpu.memory_space<vmem>>, vector<8x512xf32>
    %414 = arith.truncf %411 : vector<8x128xf32> to vector<8x128xbf16>
    %c0_161 = arith.constant 0 : index
    %c0_162 = arith.constant 0 : index
    %415 = vector.load %arg14[%c0_161, %c0_162] : memref<128x512xbf16, #tpu.memory_space<vmem>>, vector<128x512xbf16>
    %cst_163 = arith.constant dense<0.000000e+00> : vector<8x512xf32>
    %416 = tpu.matmul %414, %415, %cst_163 {dimension_numbers = #tpu.dot_dimension_numbers<[1], [0], [0], [1], [0, 0, 1, 1], [], []>} : vector<8x128xbf16>, vector<128x512xbf16>, vector<8x512xf32> -> vector<8x512xf32>
    %417 = arith.addf %413, %416 : vector<8x512xf32>
    %418 = vector.extract_strided_slice %417 {offsets = [0, 0], sizes = [8, 128], strides = [1, 1]} : vector<8x512xf32> to vector<8x128xf32>
    %419 = arith.negf %418 : vector<8x128xf32>
    %420 = math.exp %419 : vector<8x128xf32>
    %cst_164 = arith.constant 1.000000e+00 : f32
    %421 = vector.broadcast %cst_164 : f32 to vector<8x128xf32>
    %422 = arith.addf %421, %420 : vector<8x128xf32>
    %423 = arith.divf %421, %422 : vector<8x128xf32>
    %424 = vector.extract_strided_slice %417 {offsets = [0, 128], sizes = [8, 128], strides = [1, 1]} : vector<8x512xf32> to vector<8x128xf32>
    %425 = arith.negf %424 : vector<8x128xf32>
    %426 = math.exp %425 : vector<8x128xf32>
    %cst_165 = arith.constant 1.000000e+00 : f32
    %427 = vector.broadcast %cst_165 : f32 to vector<8x128xf32>
    %428 = arith.addf %427, %426 : vector<8x128xf32>
    %429 = arith.divf %427, %428 : vector<8x128xf32>
    %430 = vector.extract_strided_slice %417 {offsets = [0, 256], sizes = [8, 128], strides = [1, 1]} : vector<8x512xf32> to vector<8x128xf32>
    %431 = math.tanh %430 : vector<8x128xf32>
    %432 = vector.extract_strided_slice %417 {offsets = [0, 384], sizes = [8, 128], strides = [1, 1]} : vector<8x512xf32> to vector<8x128xf32>
    %433 = arith.negf %432 : vector<8x128xf32>
    %434 = math.exp %433 : vector<8x128xf32>
    %cst_166 = arith.constant 1.000000e+00 : f32
    %435 = vector.broadcast %cst_166 : f32 to vector<8x128xf32>
    %436 = arith.addf %435, %434 : vector<8x128xf32>
    %437 = arith.divf %435, %436 : vector<8x128xf32>
    %438 = arith.mulf %429, %412 : vector<8x128xf32>
    %439 = arith.mulf %423, %431 : vector<8x128xf32>
    %440 = arith.addf %438, %439 : vector<8x128xf32>
    %441 = math.tanh %440 : vector<8x128xf32>
    %442 = arith.mulf %437, %441 : vector<8x128xf32>
    %c2_167 = arith.constant 2 : index
    %c0_168 = arith.constant 0 : index
    %c0_169 = arith.constant 0 : index
    %443 = vector.load %arg1[%c2_167, %c0_168, %c0_169] : memref<8x8x128xf32, #tpu.memory_space<vmem>>, vector<1x8x128xf32>
    %444 = vector.shape_cast %443 : vector<1x8x128xf32> to vector<8x128xf32>
    %cst_170 = arith.constant 5.000000e-01 : f32
    %445 = vector.broadcast %cst_170 : f32 to vector<8x128xf32>
    %446 = arith.cmpf ogt, %444, %445 : vector<8x128xf32>
    %447 = arith.select %446, %442, %411 : vector<8x128xi1>, vector<8x128xf32>
    %448 = arith.select %446, %440, %412 : vector<8x128xi1>, vector<8x128xf32>
    %c24_171 = arith.constant 24 : index
    %c0_172 = arith.constant 0 : index
    %449 = vector.load %arg18[%c24_171, %c0_172] : memref<64x512xf32, #tpu.memory_space<vmem>>, vector<8x512xf32>
    %450 = arith.truncf %447 : vector<8x128xf32> to vector<8x128xbf16>
    %c0_173 = arith.constant 0 : index
    %c0_174 = arith.constant 0 : index
    %451 = vector.load %arg14[%c0_173, %c0_174] : memref<128x512xbf16, #tpu.memory_space<vmem>>, vector<128x512xbf16>
    %cst_175 = arith.constant dense<0.000000e+00> : vector<8x512xf32>
    %452 = tpu.matmul %450, %451, %cst_175 {dimension_numbers = #tpu.dot_dimension_numbers<[1], [0], [0], [1], [0, 0, 1, 1], [], []>} : vector<8x128xbf16>, vector<128x512xbf16>, vector<8x512xf32> -> vector<8x512xf32>
    %453 = arith.addf %449, %452 : vector<8x512xf32>
    %454 = vector.extract_strided_slice %453 {offsets = [0, 0], sizes = [8, 128], strides = [1, 1]} : vector<8x512xf32> to vector<8x128xf32>
    %455 = arith.negf %454 : vector<8x128xf32>
    %456 = math.exp %455 : vector<8x128xf32>
    %cst_176 = arith.constant 1.000000e+00 : f32
    %457 = vector.broadcast %cst_176 : f32 to vector<8x128xf32>
    %458 = arith.addf %457, %456 : vector<8x128xf32>
    %459 = arith.divf %457, %458 : vector<8x128xf32>
    %460 = vector.extract_strided_slice %453 {offsets = [0, 128], sizes = [8, 128], strides = [1, 1]} : vector<8x512xf32> to vector<8x128xf32>
    %461 = arith.negf %460 : vector<8x128xf32>
    %462 = math.exp %461 : vector<8x128xf32>
    %cst_177 = arith.constant 1.000000e+00 : f32
    %463 = vector.broadcast %cst_177 : f32 to vector<8x128xf32>
    %464 = arith.addf %463, %462 : vector<8x128xf32>
    %465 = arith.divf %463, %464 : vector<8x128xf32>
    %466 = vector.extract_strided_slice %453 {offsets = [0, 256], sizes = [8, 128], strides = [1, 1]} : vector<8x512xf32> to vector<8x128xf32>
    %467 = math.tanh %466 : vector<8x128xf32>
    %468 = vector.extract_strided_slice %453 {offsets = [0, 384], sizes = [8, 128], strides = [1, 1]} : vector<8x512xf32> to vector<8x128xf32>
    %469 = arith.negf %468 : vector<8x128xf32>
    %470 = math.exp %469 : vector<8x128xf32>
    %cst_178 = arith.constant 1.000000e+00 : f32
    %471 = vector.broadcast %cst_178 : f32 to vector<8x128xf32>
    %472 = arith.addf %471, %470 : vector<8x128xf32>
    %473 = arith.divf %471, %472 : vector<8x128xf32>
    %474 = arith.mulf %465, %448 : vector<8x128xf32>
    %475 = arith.mulf %459, %467 : vector<8x128xf32>
    %476 = arith.addf %474, %475 : vector<8x128xf32>
    %477 = math.tanh %476 : vector<8x128xf32>
    %478 = arith.mulf %473, %477 : vector<8x128xf32>
    %c3_179 = arith.constant 3 : index
    %c0_180 = arith.constant 0 : index
    %c0_181 = arith.constant 0 : index
    %479 = vector.load %arg1[%c3_179, %c0_180, %c0_181] : memref<8x8x128xf32, #tpu.memory_space<vmem>>, vector<1x8x128xf32>
    %480 = vector.shape_cast %479 : vector<1x8x128xf32> to vector<8x128xf32>
    %cst_182 = arith.constant 5.000000e-01 : f32
    %481 = vector.broadcast %cst_182 : f32 to vector<8x128xf32>
    %482 = arith.cmpf ogt, %480, %481 : vector<8x128xf32>
    %483 = arith.select %482, %478, %447 : vector<8x128xi1>, vector<8x128xf32>
    %484 = arith.select %482, %476, %448 : vector<8x128xi1>, vector<8x128xf32>
    %c32_183 = arith.constant 32 : index
    %c0_184 = arith.constant 0 : index
    %485 = vector.load %arg18[%c32_183, %c0_184] : memref<64x512xf32, #tpu.memory_space<vmem>>, vector<8x512xf32>
    %486 = arith.truncf %483 : vector<8x128xf32> to vector<8x128xbf16>
    %c0_185 = arith.constant 0 : index
    %c0_186 = arith.constant 0 : index
    %487 = vector.load %arg14[%c0_185, %c0_186] : memref<128x512xbf16, #tpu.memory_space<vmem>>, vector<128x512xbf16>
    %cst_187 = arith.constant dense<0.000000e+00> : vector<8x512xf32>
    %488 = tpu.matmul %486, %487, %cst_187 {dimension_numbers = #tpu.dot_dimension_numbers<[1], [0], [0], [1], [0, 0, 1, 1], [], []>} : vector<8x128xbf16>, vector<128x512xbf16>, vector<8x512xf32> -> vector<8x512xf32>
    %489 = arith.addf %485, %488 : vector<8x512xf32>
    %490 = vector.extract_strided_slice %489 {offsets = [0, 0], sizes = [8, 128], strides = [1, 1]} : vector<8x512xf32> to vector<8x128xf32>
    %491 = arith.negf %490 : vector<8x128xf32>
    %492 = math.exp %491 : vector<8x128xf32>
    %cst_188 = arith.constant 1.000000e+00 : f32
    %493 = vector.broadcast %cst_188 : f32 to vector<8x128xf32>
    %494 = arith.addf %493, %492 : vector<8x128xf32>
    %495 = arith.divf %493, %494 : vector<8x128xf32>
    %496 = vector.extract_strided_slice %489 {offsets = [0, 128], sizes = [8, 128], strides = [1, 1]} : vector<8x512xf32> to vector<8x128xf32>
    %497 = arith.negf %496 : vector<8x128xf32>
    %498 = math.exp %497 : vector<8x128xf32>
    %cst_189 = arith.constant 1.000000e+00 : f32
    %499 = vector.broadcast %cst_189 : f32 to vector<8x128xf32>
    %500 = arith.addf %499, %498 : vector<8x128xf32>
    %501 = arith.divf %499, %500 : vector<8x128xf32>
    %502 = vector.extract_strided_slice %489 {offsets = [0, 256], sizes = [8, 128], strides = [1, 1]} : vector<8x512xf32> to vector<8x128xf32>
    %503 = math.tanh %502 : vector<8x128xf32>
    %504 = vector.extract_strided_slice %489 {offsets = [0, 384], sizes = [8, 128], strides = [1, 1]} : vector<8x512xf32> to vector<8x128xf32>
    %505 = arith.negf %504 : vector<8x128xf32>
    %506 = math.exp %505 : vector<8x128xf32>
    %cst_190 = arith.constant 1.000000e+00 : f32
    %507 = vector.broadcast %cst_190 : f32 to vector<8x128xf32>
    %508 = arith.addf %507, %506 : vector<8x128xf32>
    %509 = arith.divf %507, %508 : vector<8x128xf32>
    %510 = arith.mulf %501, %484 : vector<8x128xf32>
    %511 = arith.mulf %495, %503 : vector<8x128xf32>
    %512 = arith.addf %510, %511 : vector<8x128xf32>
    %513 = math.tanh %512 : vector<8x128xf32>
    %514 = arith.mulf %509, %513 : vector<8x128xf32>
    %c4_191 = arith.constant 4 : index
    %c0_192 = arith.constant 0 : index
    %c0_193 = arith.constant 0 : index
    %515 = vector.load %arg1[%c4_191, %c0_192, %c0_193] : memref<8x8x128xf32, #tpu.memory_space<vmem>>, vector<1x8x128xf32>
    %516 = vector.shape_cast %515 : vector<1x8x128xf32> to vector<8x128xf32>
    %cst_194 = arith.constant 5.000000e-01 : f32
    %517 = vector.broadcast %cst_194 : f32 to vector<8x128xf32>
    %518 = arith.cmpf ogt, %516, %517 : vector<8x128xf32>
    %519 = arith.select %518, %514, %483 : vector<8x128xi1>, vector<8x128xf32>
    %520 = arith.select %518, %512, %484 : vector<8x128xi1>, vector<8x128xf32>
    %c40_195 = arith.constant 40 : index
    %c0_196 = arith.constant 0 : index
    %521 = vector.load %arg18[%c40_195, %c0_196] : memref<64x512xf32, #tpu.memory_space<vmem>>, vector<8x512xf32>
    %522 = arith.truncf %519 : vector<8x128xf32> to vector<8x128xbf16>
    %c0_197 = arith.constant 0 : index
    %c0_198 = arith.constant 0 : index
    %523 = vector.load %arg14[%c0_197, %c0_198] : memref<128x512xbf16, #tpu.memory_space<vmem>>, vector<128x512xbf16>
    %cst_199 = arith.constant dense<0.000000e+00> : vector<8x512xf32>
    %524 = tpu.matmul %522, %523, %cst_199 {dimension_numbers = #tpu.dot_dimension_numbers<[1], [0], [0], [1], [0, 0, 1, 1], [], []>} : vector<8x128xbf16>, vector<128x512xbf16>, vector<8x512xf32> -> vector<8x512xf32>
    %525 = arith.addf %521, %524 : vector<8x512xf32>
    %526 = vector.extract_strided_slice %525 {offsets = [0, 0], sizes = [8, 128], strides = [1, 1]} : vector<8x512xf32> to vector<8x128xf32>
    %527 = arith.negf %526 : vector<8x128xf32>
    %528 = math.exp %527 : vector<8x128xf32>
    %cst_200 = arith.constant 1.000000e+00 : f32
    %529 = vector.broadcast %cst_200 : f32 to vector<8x128xf32>
    %530 = arith.addf %529, %528 : vector<8x128xf32>
    %531 = arith.divf %529, %530 : vector<8x128xf32>
    %532 = vector.extract_strided_slice %525 {offsets = [0, 128], sizes = [8, 128], strides = [1, 1]} : vector<8x512xf32> to vector<8x128xf32>
    %533 = arith.negf %532 : vector<8x128xf32>
    %534 = math.exp %533 : vector<8x128xf32>
    %cst_201 = arith.constant 1.000000e+00 : f32
    %535 = vector.broadcast %cst_201 : f32 to vector<8x128xf32>
    %536 = arith.addf %535, %534 : vector<8x128xf32>
    %537 = arith.divf %535, %536 : vector<8x128xf32>
    %538 = vector.extract_strided_slice %525 {offsets = [0, 256], sizes = [8, 128], strides = [1, 1]} : vector<8x512xf32> to vector<8x128xf32>
    %539 = math.tanh %538 : vector<8x128xf32>
    %540 = vector.extract_strided_slice %525 {offsets = [0, 384], sizes = [8, 128], strides = [1, 1]} : vector<8x512xf32> to vector<8x128xf32>
    %541 = arith.negf %540 : vector<8x128xf32>
    %542 = math.exp %541 : vector<8x128xf32>
    %cst_202 = arith.constant 1.000000e+00 : f32
    %543 = vector.broadcast %cst_202 : f32 to vector<8x128xf32>
    %544 = arith.addf %543, %542 : vector<8x128xf32>
    %545 = arith.divf %543, %544 : vector<8x128xf32>
    %546 = arith.mulf %537, %520 : vector<8x128xf32>
    %547 = arith.mulf %531, %539 : vector<8x128xf32>
    %548 = arith.addf %546, %547 : vector<8x128xf32>
    %549 = math.tanh %548 : vector<8x128xf32>
    %550 = arith.mulf %545, %549 : vector<8x128xf32>
    %c5_203 = arith.constant 5 : index
    %c0_204 = arith.constant 0 : index
    %c0_205 = arith.constant 0 : index
    %551 = vector.load %arg1[%c5_203, %c0_204, %c0_205] : memref<8x8x128xf32, #tpu.memory_space<vmem>>, vector<1x8x128xf32>
    %552 = vector.shape_cast %551 : vector<1x8x128xf32> to vector<8x128xf32>
    %cst_206 = arith.constant 5.000000e-01 : f32
    %553 = vector.broadcast %cst_206 : f32 to vector<8x128xf32>
    %554 = arith.cmpf ogt, %552, %553 : vector<8x128xf32>
    %555 = arith.select %554, %550, %519 : vector<8x128xi1>, vector<8x128xf32>
    %556 = arith.select %554, %548, %520 : vector<8x128xi1>, vector<8x128xf32>
    %c48_207 = arith.constant 48 : index
    %c0_208 = arith.constant 0 : index
    %557 = vector.load %arg18[%c48_207, %c0_208] : memref<64x512xf32, #tpu.memory_space<vmem>>, vector<8x512xf32>
    %558 = arith.truncf %555 : vector<8x128xf32> to vector<8x128xbf16>
    %c0_209 = arith.constant 0 : index
    %c0_210 = arith.constant 0 : index
    %559 = vector.load %arg14[%c0_209, %c0_210] : memref<128x512xbf16, #tpu.memory_space<vmem>>, vector<128x512xbf16>
    %cst_211 = arith.constant dense<0.000000e+00> : vector<8x512xf32>
    %560 = tpu.matmul %558, %559, %cst_211 {dimension_numbers = #tpu.dot_dimension_numbers<[1], [0], [0], [1], [0, 0, 1, 1], [], []>} : vector<8x128xbf16>, vector<128x512xbf16>, vector<8x512xf32> -> vector<8x512xf32>
    %561 = arith.addf %557, %560 : vector<8x512xf32>
    %562 = vector.extract_strided_slice %561 {offsets = [0, 0], sizes = [8, 128], strides = [1, 1]} : vector<8x512xf32> to vector<8x128xf32>
    %563 = arith.negf %562 : vector<8x128xf32>
    %564 = math.exp %563 : vector<8x128xf32>
    %cst_212 = arith.constant 1.000000e+00 : f32
    %565 = vector.broadcast %cst_212 : f32 to vector<8x128xf32>
    %566 = arith.addf %565, %564 : vector<8x128xf32>
    %567 = arith.divf %565, %566 : vector<8x128xf32>
    %568 = vector.extract_strided_slice %561 {offsets = [0, 128], sizes = [8, 128], strides = [1, 1]} : vector<8x512xf32> to vector<8x128xf32>
    %569 = arith.negf %568 : vector<8x128xf32>
    %570 = math.exp %569 : vector<8x128xf32>
    %cst_213 = arith.constant 1.000000e+00 : f32
    %571 = vector.broadcast %cst_213 : f32 to vector<8x128xf32>
    %572 = arith.addf %571, %570 : vector<8x128xf32>
    %573 = arith.divf %571, %572 : vector<8x128xf32>
    %574 = vector.extract_strided_slice %561 {offsets = [0, 256], sizes = [8, 128], strides = [1, 1]} : vector<8x512xf32> to vector<8x128xf32>
    %575 = math.tanh %574 : vector<8x128xf32>
    %576 = vector.extract_strided_slice %561 {offsets = [0, 384], sizes = [8, 128], strides = [1, 1]} : vector<8x512xf32> to vector<8x128xf32>
    %577 = arith.negf %576 : vector<8x128xf32>
    %578 = math.exp %577 : vector<8x128xf32>
    %cst_214 = arith.constant 1.000000e+00 : f32
    %579 = vector.broadcast %cst_214 : f32 to vector<8x128xf32>
    %580 = arith.addf %579, %578 : vector<8x128xf32>
    %581 = arith.divf %579, %580 : vector<8x128xf32>
    %582 = arith.mulf %573, %556 : vector<8x128xf32>
    %583 = arith.mulf %567, %575 : vector<8x128xf32>
    %584 = arith.addf %582, %583 : vector<8x128xf32>
    %585 = math.tanh %584 : vector<8x128xf32>
    %586 = arith.mulf %581, %585 : vector<8x128xf32>
    %c6_215 = arith.constant 6 : index
    %c0_216 = arith.constant 0 : index
    %c0_217 = arith.constant 0 : index
    %587 = vector.load %arg1[%c6_215, %c0_216, %c0_217] : memref<8x8x128xf32, #tpu.memory_space<vmem>>, vector<1x8x128xf32>
    %588 = vector.shape_cast %587 : vector<1x8x128xf32> to vector<8x128xf32>
    %cst_218 = arith.constant 5.000000e-01 : f32
    %589 = vector.broadcast %cst_218 : f32 to vector<8x128xf32>
    %590 = arith.cmpf ogt, %588, %589 : vector<8x128xf32>
    %591 = arith.select %590, %586, %555 : vector<8x128xi1>, vector<8x128xf32>
    %592 = arith.select %590, %584, %556 : vector<8x128xi1>, vector<8x128xf32>
    %c56_219 = arith.constant 56 : index
    %c0_220 = arith.constant 0 : index
    %593 = vector.load %arg18[%c56_219, %c0_220] : memref<64x512xf32, #tpu.memory_space<vmem>>, vector<8x512xf32>
    %594 = arith.truncf %591 : vector<8x128xf32> to vector<8x128xbf16>
    %c0_221 = arith.constant 0 : index
    %c0_222 = arith.constant 0 : index
    %595 = vector.load %arg14[%c0_221, %c0_222] : memref<128x512xbf16, #tpu.memory_space<vmem>>, vector<128x512xbf16>
    %cst_223 = arith.constant dense<0.000000e+00> : vector<8x512xf32>
    %596 = tpu.matmul %594, %595, %cst_223 {dimension_numbers = #tpu.dot_dimension_numbers<[1], [0], [0], [1], [0, 0, 1, 1], [], []>} : vector<8x128xbf16>, vector<128x512xbf16>, vector<8x512xf32> -> vector<8x512xf32>
    %597 = arith.addf %593, %596 : vector<8x512xf32>
    %598 = vector.extract_strided_slice %597 {offsets = [0, 0], sizes = [8, 128], strides = [1, 1]} : vector<8x512xf32> to vector<8x128xf32>
    %599 = arith.negf %598 : vector<8x128xf32>
    %600 = math.exp %599 : vector<8x128xf32>
    %cst_224 = arith.constant 1.000000e+00 : f32
    %601 = vector.broadcast %cst_224 : f32 to vector<8x128xf32>
    %602 = arith.addf %601, %600 : vector<8x128xf32>
    %603 = arith.divf %601, %602 : vector<8x128xf32>
    %604 = vector.extract_strided_slice %597 {offsets = [0, 128], sizes = [8, 128], strides = [1, 1]} : vector<8x512xf32> to vector<8x128xf32>
    %605 = arith.negf %604 : vector<8x128xf32>
    %606 = math.exp %605 : vector<8x128xf32>
    %cst_225 = arith.constant 1.000000e+00 : f32
    %607 = vector.broadcast %cst_225 : f32 to vector<8x128xf32>
    %608 = arith.addf %607, %606 : vector<8x128xf32>
    %609 = arith.divf %607, %608 : vector<8x128xf32>
    %610 = vector.extract_strided_slice %597 {offsets = [0, 256], sizes = [8, 128], strides = [1, 1]} : vector<8x512xf32> to vector<8x128xf32>
    %611 = math.tanh %610 : vector<8x128xf32>
    %612 = vector.extract_strided_slice %597 {offsets = [0, 384], sizes = [8, 128], strides = [1, 1]} : vector<8x512xf32> to vector<8x128xf32>
    %613 = arith.negf %612 : vector<8x128xf32>
    %614 = math.exp %613 : vector<8x128xf32>
    %cst_226 = arith.constant 1.000000e+00 : f32
    %615 = vector.broadcast %cst_226 : f32 to vector<8x128xf32>
    %616 = arith.addf %615, %614 : vector<8x128xf32>
    %617 = arith.divf %615, %616 : vector<8x128xf32>
    %618 = arith.mulf %609, %592 : vector<8x128xf32>
    %619 = arith.mulf %603, %611 : vector<8x128xf32>
    %620 = arith.addf %618, %619 : vector<8x128xf32>
    %621 = math.tanh %620 : vector<8x128xf32>
    %622 = arith.mulf %617, %621 : vector<8x128xf32>
    %c7_227 = arith.constant 7 : index
    %c0_228 = arith.constant 0 : index
    %c0_229 = arith.constant 0 : index
    %623 = vector.load %arg1[%c7_227, %c0_228, %c0_229] : memref<8x8x128xf32, #tpu.memory_space<vmem>>, vector<1x8x128xf32>
    %624 = vector.shape_cast %623 : vector<1x8x128xf32> to vector<8x128xf32>
    %cst_230 = arith.constant 5.000000e-01 : f32
    %625 = vector.broadcast %cst_230 : f32 to vector<8x128xf32>
    %626 = arith.cmpf ogt, %624, %625 : vector<8x128xf32>
    %627 = arith.select %626, %622, %591 : vector<8x128xi1>, vector<8x128xf32>
    %c2_i32_231 = arith.constant 2 : i32
    %628 = tpu.memref_slice %arg19[%c2_i32_231] : memref<4x!tpu.dma_semaphore, #tpu.memory_space<semaphore_mem>> -> memref<1x!tpu.dma_semaphore, #tpu.memory_space<semaphore_mem>>
    %629 = tpu.memref_squeeze %628 : memref<1x!tpu.dma_semaphore, #tpu.memory_space<semaphore_mem>> -> memref<!tpu.dma_semaphore, #tpu.memory_space<semaphore_mem>>
    tpu.wait_dma2 semaphore(%629 : memref<!tpu.dma_semaphore, #tpu.memory_space<semaphore_mem>>) src(%arg8 : memref<128x128xf32, #tpu.memory_space<any>>) dst(%arg15 : memref<128x128xf32, #tpu.memory_space<vmem>>)
    %c0_232 = arith.constant 0 : index
    %c0_233 = arith.constant 0 : index
    %630 = vector.load %arg15[%c0_232, %c0_233] : memref<128x128xf32, #tpu.memory_space<vmem>>, vector<128x128xf32>
    %cst_234 = arith.constant dense<0.000000e+00> : vector<8x128xf32>
    %631 = tpu.matmul %627, %630, %cst_234 {dimension_numbers = #tpu.dot_dimension_numbers<[1], [0], [0], [1], [0, 0, 1, 1], [], []>} : vector<8x128xf32>, vector<128x128xf32>, vector<8x128xf32> -> vector<8x128xf32>
    %c0_235 = arith.constant 0 : index
    %c0_236 = arith.constant 0 : index
    %632 = vector.load %arg9[%c0_235, %c0_236] : memref<1x128xf32, #tpu.memory_space<vmem>>, vector<1x128xf32>
    %633 = vector.broadcast %632 : vector<1x128xf32> to vector<8x128xf32>
    %634 = arith.addf %631, %633 : vector<8x128xf32>
    %635 = math.tanh %634 : vector<8x128xf32>
    %c3_i32_237 = arith.constant 3 : i32
    %636 = tpu.memref_slice %arg19[%c3_i32_237] : memref<4x!tpu.dma_semaphore, #tpu.memory_space<semaphore_mem>> -> memref<1x!tpu.dma_semaphore, #tpu.memory_space<semaphore_mem>>
    %637 = tpu.memref_squeeze %636 : memref<1x!tpu.dma_semaphore, #tpu.memory_space<semaphore_mem>> -> memref<!tpu.dma_semaphore, #tpu.memory_space<semaphore_mem>>
    tpu.wait_dma2 semaphore(%637 : memref<!tpu.dma_semaphore, #tpu.memory_space<semaphore_mem>>) src(%arg10 : memref<128x128xf32, #tpu.memory_space<any>>) dst(%arg16 : memref<128x128xf32, #tpu.memory_space<vmem>>)
    %c0_238 = arith.constant 0 : index
    %c0_239 = arith.constant 0 : index
    %638 = vector.load %arg16[%c0_238, %c0_239] : memref<128x128xf32, #tpu.memory_space<vmem>>, vector<128x128xf32>
    %cst_240 = arith.constant dense<0.000000e+00> : vector<8x128xf32>
    %639 = tpu.matmul %635, %638, %cst_240 {dimension_numbers = #tpu.dot_dimension_numbers<[1], [0], [0], [1], [0, 0, 1, 1], [], []>} : vector<8x128xf32>, vector<128x128xf32>, vector<8x128xf32> -> vector<8x128xf32>
    %c0_241 = arith.constant 0 : index
    %c0_242 = arith.constant 0 : index
    %640 = vector.load %arg11[%c0_241, %c0_242] : memref<1x128xf32, #tpu.memory_space<vmem>>, vector<1x128xf32>
    %641 = vector.broadcast %640 : vector<1x128xf32> to vector<8x128xf32>
    %642 = arith.addf %639, %641 : vector<8x128xf32>
    %c0_243 = arith.constant 0 : index
    %c0_244 = arith.constant 0 : index
    %643 = vector.load %arg12[%c0_243, %c0_244] : memref<8x128xf32, #tpu.memory_space<vmem>>, vector<8x128xf32>
    tpu.vector_store %arg12[%c0_243, %c0_244], %642 {strides = array<i32>} : memref<8x128xf32, #tpu.memory_space<vmem>>, vector<8x128xf32>,
    return
  }
}

</mosaic_0001>

<llo_original>
// kernel: pmr_clf_forward.1
$region0: #{pmr_clf_forward.1}
  #allocation0 [shape = 'u32[]', space=smem, size = 0x4, offset = 0x4, fixed_abs, tag = 'smem constant byte address 0x4 - core index']
  #allocation1 [shape = 'u32[144,128]{1,0:T(1,128)}', space=vmem, size = 0x12000, scoped, tag = 'internal scratch']
  #allocation2 [shape = 'bf16[256,512]{1,0:T(16,128)(2,1)}', space=vmem, size = 0x40000, scoped, tag = 'scratch operand']
  #allocation3 [shape = 'bf16[128,512]{1,0:T(16,128)(2,1)}', space=vmem, size = 0x20000, scoped, tag = 'scratch operand']
  #allocation4 [shape = 'f32[128,128]{1,0:T(8,128)}', space=vmem, size = 0x10000, scoped, tag = 'scratch operand']
  #allocation5 [shape = 'f32[128,128]{1,0:T(8,128)}', space=vmem, size = 0x10000, scoped, tag = 'scratch operand']
  #allocation6 [shape = 'bf16[64,256]{1,0:T(16,128)(2,1)}', space=vmem, size = 0x8000, scoped, tag = 'scratch operand']
  #allocation7 [shape = 'f32[64,512]{1,0:T(8,128)}', space=vmem, size = 0x20000, scoped, tag = 'scratch operand']
  #allocation8 [shape = 's32[4]{0}', space=sflag, size = 0x10, scoped, tag = 'scratch operand']
  #allocation13 [shape = 's32[]', space=sflag, size = 0x4, offset = 0, fixed_abs, tag = 'sflag constant byte address 0x0 - dummy sync flag']
  #allocation14 [shape = 's32[]', space=sflag, size = 0x4, offset = 0, fixed_abs, tag = 'sflag constant byte address 0x0 - dummy sync flag']
  #allocation16 [shape = 's32[]', space=sflag, size = 0x4, offset = 0, fixed_abs, tag = 'sflag constant byte address 0x0 - dummy sync flag']
  #allocation17 [shape = 's32[]', space=sflag, size = 0x4, offset = 0, fixed_abs, tag = 'sflag constant byte address 0x0 - dummy sync flag']
  #allocation18 [shape = 's32[]', space=sflag, size = 0x4, offset = 0, fixed_abs, tag = 'sflag constant byte address 0x0 - dummy sync flag']
  #allocation19 [shape = 'u32[]', space=smem, size = 0x4, offset = 0x44, fixed_abs, tag = 'smem constant byte address 0x44 - assertion arg 0']
  #allocation20 [shape = 'u32[]', space=smem, size = 0x4, offset = 0x48, fixed_abs, tag = 'smem constant byte address 0x48 - assertion arg 1']
  %s0 = inlined_call_operand.vmem [shape: bf16[64,128], index: 0, kind: input, shape index: {}]
  %s1 = inlined_call_operand.vmem [shape: f32[8,8,128], index: 1, kind: input, shape index: {}]
  %s2 = inlined_call_operand.hbm [shape: bf16[128,512], index: 2, kind: input, shape index: {}]
  %s3 = inlined_call_operand.vmem [shape: f32[1,512], index: 3, kind: input, shape index: {}]
  %s4 = inlined_call_operand.hbm [shape: bf16[128,512], index: 4, kind: input, shape index: {}]
  %s5 = inlined_call_operand.vmem [shape: bf16[256,512], index: 5, kind: input, shape index: {}]
  %s6 = inlined_call_operand.hbm [shape: bf16[128,512], index: 6, kind: input, shape index: {}]
  %s7 = inlined_call_operand.vmem [shape: f32[1,512], index: 7, kind: input, shape index: {}]
  %s8 = inlined_call_operand.vmem [shape: f32[128,128], index: 8, kind: input, shape index: {}]
  %s9 = inlined_call_operand.vmem [shape: f32[1,128], index: 9, kind: input, shape index: {}]
  %s10 = inlined_call_operand.hbm [shape: f32[128,128], index: 10, kind: input, shape index: {}]
  %s11 = inlined_call_operand.vmem [shape: f32[1,128], index: 11, kind: input, shape index: {}]
  %s12 = inlined_call_operand.vmem [shape: f32[8,128], index: 12, kind: output, shape index: {}]
  %s13 = sld [smem:[#allocation0]]
  $region125: #{pmr_clf_forward.1} parent=0
    _
  %s15 = ssub.s32 1, %s13
  %s16 = scalar_select 0, %s15, %s13
  $region1: #{pmr_clf_forward.1} parent=0
    #allocation9 [shape = 'u8[131072]{0}', space=vmem, size = 0x20000, scoped, tag = 'input window, operand 2, single buffered']
    #allocation10 [shape = 's32[1]{0}', space=sflag, size = 0x4, scoped, tag = 'scoped memory for pmr_clf_forward.1']
    #allocation11 [shape = 'u8[131072]{0}', space=vmem, size = 0x20000, scoped, tag = 'input window, operand 4, single buffered']
    #allocation12 [shape = 's32[1]{0}', space=sflag, size = 0x4, scoped, tag = 'scoped memory for pmr_clf_forward.1']
    #allocation15 [shape = 'u32[9]{0}', space=smem, size = 0x24, scoped, tag = 'DMA stride descriptor']
    %17 = vsyncpa [#allocation10], 0
    %18 = vsyncpa [#allocation12], 0
    // Predicated region
    $region2: #{pmr_clf_forward.1} parent=1 // pred_check
      _
    $region3: #{pmr_clf_forward.1} parent=1 // pred_check_branch
      %20 = sbr.rel (0) target = $region5
    $region4: #{pmr_clf_forward.1} parent=1 // pred_region
      _
    $region5: #{pmr_clf_forward.1} parent=1 // pred_fallthru
      _
    // Predicated region
    $region6: #{pmr_clf_forward.1} parent=1 // pred_check
      _
    $region7: #{pmr_clf_forward.1} parent=1 // pred_check_branch
      %22 = sbr.rel (0) target = $region9
    $region8: #{pmr_clf_forward.1} parent=1 // pred_region
      _
    $region9: #{pmr_clf_forward.1} parent=1 // pred_fallthru
      _
    // Predicated region
    $region10: #{pmr_clf_forward.1} parent=1 // pred_check
      _
    $region11: #{pmr_clf_forward.1} parent=1 // pred_check_branch
      %24 = sbr.rel (0) target = $region13
    $region12: #{pmr_clf_forward.1} parent=1 // pred_region
      %s26 = ssub.s32 4096, 4096
      %27 = vsyncadd [#allocation10], %s26
      %s28 = sshll.u32 [#allocation9], 4
      %s29 = int_to_ptr.vmem [resolvable:$true] %s28
      %34 = dma.hbm_to_vmem [thread:$0]  %s2, 4096, %s29, [#allocation10], 256, 256, 16
    $region13: #{pmr_clf_forward.1} parent=1 // pred_fallthru
      _
    // Predicated region
    $region14: #{pmr_clf_forward.1} parent=1 // pred_check
      _
    $region15: #{pmr_clf_forward.1} parent=1 // pred_check_branch
      %36 = sbr.rel (0) target = $region17
    $region16: #{pmr_clf_forward.1} parent=1 // pred_region
      _
    $region17: #{pmr_clf_forward.1} parent=1 // pred_fallthru
      _
    // Predicated region
    $region18: #{pmr_clf_forward.1} parent=1 // pred_check
      _
    $region19: #{pmr_clf_forward.1} parent=1 // pred_check_branch
      %38 = sbr.rel (0) target = $region21
    $region20: #{pmr_clf_forward.1} parent=1 // pred_region
      %s40 = ssub.s32 4096, 4096
      %41 = vsyncadd [#allocation12], %s40
      %s42 = sshll.u32 [#allocation11], 4
      %s43 = int_to_ptr.vmem [resolvable:$true] %s42
      %48 = dma.hbm_to_vmem [thread:$0]  %s4, 4096, %s43, [#allocation12], 256, 256, 16
    $region21: #{pmr_clf_forward.1} parent=1 // pred_fallthru
      _
    // Predicated region
    $region22: #{pmr_clf_forward.1} parent=1 // pred_check
      _
    $region23: #{pmr_clf_forward.1} parent=1 // pred_check_branch
      %50 = sbr.rel (0) target = $region25
    $region24: #{pmr_clf_forward.1} parent=1 // pred_region
      _
    $region25: #{pmr_clf_forward.1} parent=1 // pred_fallthru
      _
    // Predicated region
    $region26: #{pmr_clf_forward.1} parent=1 // pred_check
      _
    $region27: #{pmr_clf_forward.1} parent=1 // pred_check_branch
      %52 = sbr.rel (0) target = $region29
    $region28: #{pmr_clf_forward.1} parent=1 // pred_region
      _
    $region29: #{pmr_clf_forward.1} parent=1 // pred_fallthru
      _
    // Predicated region
    $region30: #{pmr_clf_forward.1} parent=1 // pred_check
      _
    $region31: #{pmr_clf_forward.1} parent=1 // pred_check_branch
      %54 = sbr.rel (0) target = $region33
    $region32: #{pmr_clf_forward.1} parent=1 // pred_region
      _
    $region33: #{pmr_clf_forward.1} parent=1 // pred_fallthru
      _
    // Predicated region
    $region34: #{pmr_clf_forward.1} parent=1 // pred_check
      _
    $region35: #{pmr_clf_forward.1} parent=1 // pred_check_branch
      %56 = sbr.rel (0) target = $region37
    $region36: #{pmr_clf_forward.1} parent=1 // pred_region
      %57 = dma.done [#allocation10], 4096
    $region37: #{pmr_clf_forward.1} parent=1 // pred_fallthru
      _
    // Predicated region
    $region38: #{pmr_clf_forward.1} parent=1 // pred_check
      _
    $region39: #{pmr_clf_forward.1} parent=1 // pred_check_branch
      %59 = sbr.rel (0) target = $region41
    $region40: #{pmr_clf_forward.1} parent=1 // pred_region
      %60 = dma.done [#allocation12], 4096
    $region41: #{pmr_clf_forward.1} parent=1 // pred_fallthru
      _
    %p63 = scmp.lt.u32.totalorder 4, 8
    %p64 = pneg %p63
    // Predicated region
    $region42: #{pmr_clf_forward.1} parent=1 // pred_check
      _
    $region43: #{pmr_clf_forward.1} parent=1 // pred_check_branch
      %66 = sbr.rel (%p63) target = $region45
    $region44: #{pmr_clf_forward.1} parent=1 // pred_region
      %s335 = sand.u32 4, 7
      %p336 = scmp.eq.s32.totalorder %s335, 0
      %p337 = pneg %p336
      // Predicated region
      $region57: #{pmr_clf_forward.1} parent=44 // pred_check
        _
      $region58: #{pmr_clf_forward.1} parent=44 // pred_check_branch
        %339 = sbr.rel (%p336) target = $region60
      $region59: #{pmr_clf_forward.1} parent=44 // pred_region
        %s340 = sand.u32 4, 7
        %s341 = ssub.s32 4, %s340
        %s342 = scalar_lea.vmem %s5, %s341
        %s343 = ssub.s32 4, %s340
        %s344 = scalar_lea.vmem [#allocation2], %s343
        loop: start=0, step=1, limit=1
        $region61: #{pmr_clf_forward.1} parent=59 // loop_pre_header
          _
        $region62: #{pmr_clf_forward.1} parent=59 // loop_header
          %s346 = sphi 0, %s350
          %p347 = scmp.ge.s32.totalorder %s346, 1
          %s351 = sphi %s5, %s5
          %s352 = sphi [#allocation2], [#allocation2]
        $region63: #{pmr_clf_forward.1} parent=59 // loop_header_branch
          %349 = sbr.rel (%p347) target = $region67
        $region64: #{pmr_clf_forward.1} parent=59 // loop_body
          _
        $region65: #{pmr_clf_forward.1} parent=59 // loop_footer
          %s350 = sadd.s32 1, %s346
        $region66: #{pmr_clf_forward.1} parent=59 // loop_footer_branch
          %345 = sbr.rel target = $region62
        $region67: #{pmr_clf_forward.1} parent=59 // loop_exit
          _
        %s353 = sshllo.u32 0, %s340
        loop: start=0, step=1, limit=1
        $region68: #{pmr_clf_forward.1} parent=59 // loop_pre_header
          _
        $region69: #{pmr_clf_forward.1} parent=59 // loop_header
          %s355 = sphi 0, %s359
          %p356 = scmp.ge.s32.totalorder %s355, 1
          %s360 = sphi %s342, %s342
          %s361 = sphi %s344, %s344
        $region70: #{pmr_clf_forward.1} parent=59 // loop_header_branch
          %358 = sbr.rel (%p356) target = $region74
        $region71: #{pmr_clf_forward.1} parent=59 // loop_body
          %v362 = vld [vmem:[%s360] sm:%s353]
          %363 = vst [vmem:[%s361] sm:%s353] %v362
          %v364 = vld [vmem:[%s360 + $0x10] sm:%s353]
          %365 = vst [vmem:[%s361 + $0x4] sm:%s353] %v364
          %v366 = vld [vmem:[%s360 + $0x4] sm:%s353]
          %367 = vst [vmem:[%s361 + $0x8] sm:%s353] %v366
          %v368 = vld [vmem:[%s360 + $0x14] sm:%s353]
          %369 = vst [vmem:[%s361 + $0xc] sm:%s353] %v368
          %v370 = vld [vmem:[%s360 + $0x8] sm:%s353]
          %371 = vst [vmem:[%s361 + $0x10] sm:%s353] %v370
          %v372 = vld [vmem:[%s360 + $0x18] sm:%s353]
          %373 = vst [vmem:[%s361 + $0x14] sm:%s353] %v372
          %v374 = vld [vmem:[%s360 + $0xc] sm:%s353]
          %375 = vst [vmem:[%s361 + $0x18] sm:%s353] %v374
          %v376 = vld [vmem:[%s360 + $0x1c] sm:%s353]
          %377 = vst [vmem:[%s361 + $0x1c] sm:%s353] %v376
          %v378 = vld [vmem:[%s360 + $0x20] sm:%s353]
          %379 = vst [vmem:[%s361 + $0x20] sm:%s353] %v378
          %v380 = vld [vmem:[%s360 + $0x30] sm:%s353]
          %381 = vst [vmem:[%s361 + $0x24] sm:%s353] %v380
          %v382 = vld [vmem:[%s360 + $0x24] sm:%s353]
          %383 = vst [vmem:[%s361 + $0x28] sm:%s353] %v382
          %v384 = vld [vmem:[%s360 + $0x34] sm:%s353]
          %385 = vst [vmem:[%s361 + $0x2c] sm:%s353] %v384
          %v386 = vld [vmem:[%s360 + $0x28] sm:%s353]
          %387 = vst [vmem:[%s361 + $0x30] sm:%s353] %v386
          %v388 = vld [vmem:[%s360 + $0x38] sm:%s353]
          %389 = vst [vmem:[%s361 + $0x34] sm:%s353] %v388
          %v390 = vld [vmem:[%s360 + $0x2c] sm:%s353]
          %391 = vst [vmem:[%s361 + $0x38] sm:%s353] %v390
          %v392 = vld [vmem:[%s360 + $0x3c] sm:%s353]
          %393 = vst [vmem:[%s361 + $0x3c] sm:%s353] %v392
          %v394 = vld [vmem:[%s360 + $0x40] sm:%s353]
          %395 = vst [vmem:[%s361 + $0x40] sm:%s353] %v394
          %v396 = vld [vmem:[%s360 + $0x50] sm:%s353]
          %397 = vst [vmem:[%s361 + $0x44] sm:%s353] %v396
          %v398 = vld [vmem:[%s360 + $0x44] sm:%s353]
          %399 = vst [vmem:[%s361 + $0x48] sm:%s353] %v398
          %v400 = vld [vmem:[%s360 + $0x54] sm:%s353]
          %401 = vst [vmem:[%s361 + $0x4c] sm:%s353] %v400
          %v402 = vld [vmem:[%s360 + $0x48] sm:%s353]
          %403 = vst [vmem:[%s361 + $0x50] sm:%s353] %v402
          %v404 = vld [vmem:[%s360 + $0x58] sm:%s353]
          %405 = vst [vmem:[%s361 + $0x54] sm:%s353] %v404
          %v406 = vld [vmem:[%s360 + $0x4c] sm:%s353]
          %407 = vst [vmem:[%s361 + $0x58] sm:%s353] %v406
          %v408 = vld [vmem:[%s360 + $0x5c] sm:%s353]
          %409 = vst [vmem:[%s361 + $0x5c] sm:%s353] %v408
          %v410 = vld [vmem:[%s360 + $0x60] sm:%s353]
          %411 = vst [vmem:[%s361 + $0x60] sm:%s353] %v410
          %v412 = vld [vmem:[%s360 + $0x70] sm:%s353]
          %413 = vst [vmem:[%s361 + $0x64] sm:%s353] %v412
          %v414 = vld [vmem:[%s360 + $0x64] sm:%s353]
          %415 = vst [vmem:[%s361 + $0x68] sm:%s353] %v414
          %v416 = vld [vmem:[%s360 + $0x74] sm:%s353]
          %417 = vst [vmem:[%s361 + $0x6c] sm:%s353] %v416
          %v418 = vld [vmem:[%s360 + $0x68] sm:%s353]
          %419 = vst [vmem:[%s361 + $0x70] sm:%s353] %v418
          %v420 = vld [vmem:[%s360 + $0x78] sm:%s353]
          %421 = vst [vmem:[%s361 + $0x74] sm:%s353] %v420
          %v422 = vld [vmem:[%s360 + $0x6c] sm:%s353]
          %423 = vst [vmem:[%s361 + $0x78] sm:%s353] %v422
          %v424 = vld [vmem:[%s360 + $0x7c] sm:%s353]
          %425 = vst [vmem:[%s361 + $0x7c] sm:%s353] %v424
          %v426 = vld [vmem:[%s360 + $0x80] sm:%s353]
          %427 = vst [vmem:[%s361 + $0x80] sm:%s353] %v426
          %v428 = vld [vmem:[%s360 + $0x90] sm:%s353]
          %429 = vst [vmem:[%s361 + $0x84] sm:%s353] %v428
          %v430 = vld [vmem:[%s360 + $0x84] sm:%s353]
          %431 = vst [vmem:[%s361 + $0x88] sm:%s353] %v430
          %v432 = vld [vmem:[%s360 + $0x94] sm:%s353]
          %433 = vst [vmem:[%s361 + $0x8c] sm:%s353] %v432
          %v434 = vld [vmem:[%s360 + $0x88] sm:%s353]
          %435 = vst [vmem:[%s361 + $0x90] sm:%s353] %v434
          %v436 = vld [vmem:[%s360 + $0x98] sm:%s353]
          %437 = vst [vmem:[%s361 + $0x94] sm:%s353] %v436
          %v438 = vld [vmem:[%s360 + $0x8c] sm:%s353]
          %439 = vst [vmem:[%s361 + $0x98] sm:%s353] %v438
          %v440 = vld [vmem:[%s360 + $0x9c] sm:%s353]
          %441 = vst [vmem:[%s361 + $0x9c] sm:%s353] %v440
          %v442 = vld [vmem:[%s360 + $0xa0] sm:%s353]
          %443 = vst [vmem:[%s361 + $0xa0] sm:%s353] %v442
          %v444 = vld [vmem:[%s360 + $0xb0] sm:%s353]
          %445 = vst [vmem:[%s361 + $0xa4] sm:%s353] %v444
          %v446 = vld [vmem:[%s360 + $0xa4] sm:%s353]
          %447 = vst [vmem:[%s361 + $0xa8] sm:%s353] %v446
          %v448 = vld [vmem:[%s360 + $0xb4] sm:%s353]
          %449 = vst [vmem:[%s361 + $0xac] sm:%s353] %v448
          %v450 = vld [vmem:[%s360 + $0xa8] sm:%s353]
          %451 = vst [vmem:[%s361 + $0xb0] sm:%s353] %v450
          %v452 = vld [vmem:[%s360 + $0xb8] sm:%s353]
          %453 = vst [vmem:[%s361 + $0xb4] sm:%s353] %v452
          %v454 = vld [vmem:[%s360 + $0xac] sm:%s353]
          %455 = vst [vmem:[%s361 + $0xb8] sm:%s353] %v454
          %v456 = vld [vmem:[%s360 + $0xbc] sm:%s353]
          %457 = vst [vmem:[%s361 + $0xbc] sm:%s353] %v456
          %v458 = vld [vmem:[%s360 + $0xc0] sm:%s353]
          %459 = vst [vmem:[%s361 + $0xc0] sm:%s353] %v458
          %v460 = vld [vmem:[%s360 + $0xd0] sm:%s353]
          %461 = vst [vmem:[%s361 + $0xc4] sm:%s353] %v460
          %v462 = vld [vmem:[%s360 + $0xc4] sm:%s353]
          %463 = vst [vmem:[%s361 + $0xc8] sm:%s353] %v462
          %v464 = vld [vmem:[%s360 + $0xd4] sm:%s353]
          %465 = vst [vmem:[%s361 + $0xcc] sm:%s353] %v464
          %v466 = vld [vmem:[%s360 + $0xc8] sm:%s353]
          %467 = vst [vmem:[%s361 + $0xd0] sm:%s353] %v466
          %v468 = vld [vmem:[%s360 + $0xd8] sm:%s353]
          %469 = vst [vmem:[%s361 + $0xd4] sm:%s353] %v468
          %v470 = vld [vmem:[%s360 + $0xcc] sm:%s353]
          %471 = vst [vmem:[%s361 + $0xd8] sm:%s353] %v470
          %v472 = vld [vmem:[%s360 + $0xdc] sm:%s353]
          %473 = vst [vmem:[%s361 + $0xdc] sm:%s353] %v472
          %v474 = vld [vmem:[%s360 + $0xe0] sm:%s353]
          %475 = vst [vmem:[%s361 + $0xe0] sm:%s353] %v474
          %v476 = vld [vmem:[%s360 + $0xf0] sm:%s353]
          %477 = vst [vmem:[%s361 + $0xe4] sm:%s353] %v476
          %v478 = vld [vmem:[%s360 + $0xe4] sm:%s353]
          %479 = vst [vmem:[%s361 + $0xe8] sm:%s353] %v478
          %v480 = vld [vmem:[%s360 + $0xf4] sm:%s353]
          %481 = vst [vmem:[%s361 + $0xec] sm:%s353] %v480
          %v482 = vld [vmem:[%s360 + $0xe8] sm:%s353]
          %483 = vst [vmem:[%s361 + $0xf0] sm:%s353] %v482
          %v484 = vld [vmem:[%s360 + $0xf8] sm:%s353]
          %485 = vst [vmem:[%s361 + $0xf4] sm:%s353] %v484
          %v486 = vld [vmem:[%s360 + $0xec] sm:%s353]
          %487 = vst [vmem:[%s361 + $0xf8] sm:%s353] %v486
          %v488 = vld [vmem:[%s360 + $0xfc] sm:%s353]
          %489 = vst [vmem:[%s361 + $0xfc] sm:%s353] %v488
          %v490 = vld [vmem:[%s360 + $0x100] sm:%s353]
          %491 = vst [vmem:[%s361 + $0x100] sm:%s353] %v490
          %v492 = vld [vmem:[%s360 + $0x110] sm:%s353]
          %493 = vst [vmem:[%s361 + $0x104] sm:%s353] %v492
          %v494 = vld [vmem:[%s360 + $0x104] sm:%s353]
          %495 = vst [vmem:[%s361 + $0x108] sm:%s353] %v494
          %v496 = vld [vmem:[%s360 + $0x114] sm:%s353]
          %497 = vst [vmem:[%s361 + $0x10c] sm:%s353] %v496
          %v498 = vld [vmem:[%s360 + $0x108] sm:%s353]
          %499 = vst [vmem:[%s361 + $0x110] sm:%s353] %v498
          %v500 = vld [vmem:[%s360 + $0x118] sm:%s353]
          %501 = vst [vmem:[%s361 + $0x114] sm:%s353] %v500
          %v502 = vld [vmem:[%s360 + $0x10c] sm:%s353]
          %503 = vst [vmem:[%s361 + $0x118] sm:%s353] %v502
          %v504 = vld [vmem:[%s360 + $0x11c] sm:%s353]
          %505 = vst [vmem:[%s361 + $0x11c] sm:%s353] %v504
          %v506 = vld [vmem:[%s360 + $0x120] sm:%s353]
          %507 = vst [vmem:[%s361 + $0x120] sm:%s353] %v506
          %v508 = vld [vmem:[%s360 + $0x130] sm:%s353]
          %509 = vst [vmem:[%s361 + $0x124] sm:%s353] %v508
          %v510 = vld [vmem:[%s360 + $0x124] sm:%s353]
          %511 = vst [vmem:[%s361 + $0x128] sm:%s353] %v510
          %v512 = vld [vmem:[%s360 + $0x134] sm:%s353]
          %513 = vst [vmem:[%s361 + $0x12c] sm:%s353] %v512
          %v514 = vld [vmem:[%s360 + $0x128] sm:%s353]
          %515 = vst [vmem:[%s361 + $0x130] sm:%s353] %v514
          %v516 = vld [vmem:[%s360 + $0x138] sm:%s353]
          %517 = vst [vmem:[%s361 + $0x134] sm:%s353] %v516
          %v518 = vld [vmem:[%s360 + $0x12c] sm:%s353]
          %519 = vst [vmem:[%s361 + $0x138] sm:%s353] %v518
          %v520 = vld [vmem:[%s360 + $0x13c] sm:%s353]
          %521 = vst [vmem:[%s361 + $0x13c] sm:%s353] %v520
          %v522 = vld [vmem:[%s360 + $0x140] sm:%s353]
          %523 = vst [vmem:[%s361 + $0x140] sm:%s353] %v522
          %v524 = vld [vmem:[%s360 + $0x150] sm:%s353]
          %525 = vst [vmem:[%s361 + $0x144] sm:%s353] %v524
          %v526 = vld [vmem:[%s360 + $0x144] sm:%s353]
          %527 = vst [vmem:[%s361 + $0x148] sm:%s353] %v526
          %v528 = vld [vmem:[%s360 + $0x154] sm:%s353]
          %529 = vst [vmem:[%s361 + $0x14c] sm:%s353] %v528
          %v530 = vld [vmem:[%s360 + $0x148] sm:%s353]
          %531 = vst [vmem:[%s361 + $0x150] sm:%s353] %v530
          %v532 = vld [vmem:[%s360 + $0x158] sm:%s353]
          %533 = vst [vmem:[%s361 + $0x154] sm:%s353] %v532
          %v534 = vld [vmem:[%s360 + $0x14c] sm:%s353]
          %535 = vst [vmem:[%s361 + $0x158] sm:%s353] %v534
          %v536 = vld [vmem:[%s360 + $0x15c] sm:%s353]
          %537 = vst [vmem:[%s361 + $0x15c] sm:%s353] %v536
          %v538 = vld [vmem:[%s360 + $0x160] sm:%s353]
          %539 = vst [vmem:[%s361 + $0x160] sm:%s353] %v538
          %v540 = vld [vmem:[%s360 + $0x170] sm:%s353]
          %541 = vst [vmem:[%s361 + $0x164] sm:%s353] %v540
          %v542 = vld [vmem:[%s360 + $0x164] sm:%s353]
          %543 = vst [vmem:[%s361 + $0x168] sm:%s353] %v542
          %v544 = vld [vmem:[%s360 + $0x174] sm:%s353]
          %545 = vst [vmem:[%s361 + $0x16c] sm:%s353] %v544
          %v546 = vld [vmem:[%s360 + $0x168] sm:%s353]
          %547 = vst [vmem:[%s361 + $0x170] sm:%s353] %v546
          %v548 = vld [vmem:[%s360 + $0x178] sm:%s353]
          %549 = vst [vmem:[%s361 + $0x174] sm:%s353] %v548
          %v550 = vld [vmem:[%s360 + $0x16c] sm:%s353]
          %551 = vst [vmem:[%s361 + $0x178] sm:%s353] %v550
          %v552 = vld [vmem:[%s360 + $0x17c] sm:%s353]
          %553 = vst [vmem:[%s361 + $0x17c] sm:%s353] %v552
          %v554 = vld [vmem:[%s360 + $0x180] sm:%s353]
          %555 = vst [vmem:[%s361 + $0x180] sm:%s353] %v554
          %v556 = vld [vmem:[%s360 + $0x190] sm:%s353]
          %557 = vst [vmem:[%s361 + $0x184] sm:%s353] %v556
          %v558 = vld [vmem:[%s360 + $0x184] sm:%s353]
          %559 = vst [vmem:[%s361 + $0x188] sm:%s353] %v558
          %v560 = vld [vmem:[%s360 + $0x194] sm:%s353]
          %561 = vst [vmem:[%s361 + $0x18c] sm:%s353] %v560
          %v562 = vld [vmem:[%s360 + $0x188] sm:%s353]
          %563 = vst [vmem:[%s361 + $0x190] sm:%s353] %v562
          %v564 = vld [vmem:[%s360 + $0x198] sm:%s353]
          %565 = vst [vmem:[%s361 + $0x194] sm:%s353] %v564
          %v566 = vld [vmem:[%s360 + $0x18c] sm:%s353]
          %567 = vst [vmem:[%s361 + $0x198] sm:%s353] %v566
          %v568 = vld [vmem:[%s360 + $0x19c] sm:%s353]
          %569 = vst [vmem:[%s361 + $0x19c] sm:%s353] %v568
          %v570 = vld [vmem:[%s360 + $0x1a0] sm:%s353]
          %571 = vst [vmem:[%s361 + $0x1a0] sm:%s353] %v570
          %v572 = vld [vmem:[%s360 + $0x1b0] sm:%s353]
          %573 = vst [vmem:[%s361 + $0x1a4] sm:%s353] %v572
          %v574 = vld [vmem:[%s360 + $0x1a4] sm:%s353]
          %575 = vst [vmem:[%s361 + $0x1a8] sm:%s353] %v574
          %v576 = vld [vmem:[%s360 + $0x1b4] sm:%s353]
          %577 = vst [vmem:[%s361 + $0x1ac] sm:%s353] %v576
          %v578 = vld [vmem:[%s360 + $0x1a8] sm:%s353]
          %579 = vst [vmem:[%s361 + $0x1b0] sm:%s353] %v578
          %v580 = vld [vmem:[%s360 + $0x1b8] sm:%s353]
          %581 = vst [vmem:[%s361 + $0x1b4] sm:%s353] %v580
          %v582 = vld [vmem:[%s360 + $0x1ac] sm:%s353]
          %583 = vst [vmem:[%s361 + $0x1b8] sm:%s353] %v582
          %v584 = vld [vmem:[%s360 + $0x1bc] sm:%s353]
          %585 = vst [vmem:[%s361 + $0x1bc] sm:%s353] %v584
          %v586 = vld [vmem:[%s360 + $0x1c0] sm:%s353]
          %587 = vst [vmem:[%s361 + $0x1c0] sm:%s353] %v586
          %v588 = vld [vmem:[%s360 + $0x1d0] sm:%s353]
          %589 = vst [vmem:[%s361 + $0x1c4] sm:%s353] %v588
          %v590 = vld [vmem:[%s360 + $0x1c4] sm:%s353]
          %591 = vst [vmem:[%s361 + $0x1c8] sm:%s353] %v590
          %v592 = vld [vmem:[%s360 + $0x1d4] sm:%s353]
          %593 = vst [vmem:[%s361 + $0x1cc] sm:%s353] %v592
          %v594 = vld [vmem:[%s360 + $0x1c8] sm:%s353]
          %595 = vst [vmem:[%s361 + $0x1d0] sm:%s353] %v594
          %v596 = vld [vmem:[%s360 + $0x1d8] sm:%s353]
          %597 = vst [vmem:[%s361 + $0x1d4] sm:%s353] %v596
          %v598 = vld [vmem:[%s360 + $0x1cc] sm:%s353]
          %599 = vst [vmem:[%s361 + $0x1d8] sm:%s353] %v598
          %v600 = vld [vmem:[%s360 + $0x1dc] sm:%s353]
          %601 = vst [vmem:[%s361 + $0x1dc] sm:%s353] %v600
          %v602 = vld [vmem:[%s360 + $0x1e0] sm:%s353]
          %603 = vst [vmem:[%s361 + $0x1e0] sm:%s353] %v602
          %v604 = vld [vmem:[%s360 + $0x1f0] sm:%s353]
          %605 = vst [vmem:[%s361 + $0x1e4] sm:%s353] %v604
          %v606 = vld [vmem:[%s360 + $0x1e4] sm:%s353]
          %607 = vst [vmem:[%s361 + $0x1e8] sm:%s353] %v606
          %v608 = vld [vmem:[%s360 + $0x1f4] sm:%s353]
          %609 = vst [vmem:[%s361 + $0x1ec] sm:%s353] %v608
          %v610 = vld [vmem:[%s360 + $0x1e8] sm:%s353]
          %611 = vst [vmem:[%s361 + $0x1f0] sm:%s353] %v610
          %v612 = vld [vmem:[%s360 + $0x1f8] sm:%s353]
          %613 = vst [vmem:[%s361 + $0x1f4] sm:%s353] %v612
          %v614 = vld [vmem:[%s360 + $0x1ec] sm:%s353]
          %615 = vst [vmem:[%s361 + $0x1f8] sm:%s353] %v614
          %v616 = vld [vmem:[%s360 + $0x1fc] sm:%s353]
          %617 = vst [vmem:[%s361 + $0x1fc] sm:%s353] %v616
        $region72: #{pmr_clf_forward.1} parent=59 // loop_footer
          %s359 = sadd.s32 1, %s355
        $region73: #{pmr_clf_forward.1} parent=59 // loop_footer_branch
          %354 = sbr.rel target = $region69
        $region74: #{pmr_clf_forward.1} parent=59 // loop_exit
          _
      $region60: #{pmr_clf_forward.1} parent=44 // pred_fallthru
        _
    $region45: #{pmr_clf_forward.1} parent=1 // pred_fallthru
      _
    // Predicated region
    $region46: #{pmr_clf_forward.1} parent=1 // pred_check
      %p67 = pneg %p63
    $region47: #{pmr_clf_forward.1} parent=1 // pred_check_branch
      %69 = sbr.rel (%p67) target = $region49
    $region48: #{pmr_clf_forward.1} parent=1 // pred_region
      %s70 = sshllo.u32 0, 4
      loop: start=0, step=1, limit=1
      $region50: #{pmr_clf_forward.1} parent=48 // loop_pre_header
        _
      $region51: #{pmr_clf_forward.1} parent=48 // loop_header
        %s72 = sphi 0, %s76
        %p73 = scmp.ge.s32.totalorder %s72, 1
        %s77 = sphi %s5, %s5
        %s78 = sphi [#allocation2], [#allocation2]
      $region52: #{pmr_clf_forward.1} parent=48 // loop_header_branch
        %75 = sbr.rel (%p73) target = $region56
      $region53: #{pmr_clf_forward.1} parent=48 // loop_body
        %v79 = vld [vmem:[%s77] sm:%s70]
        %80 = vst [vmem:[%s78] sm:%s70] %v79
        %v81 = vld [vmem:[%s77 + $0x10] sm:%s70]
        %82 = vst [vmem:[%s78 + $0x4] sm:%s70] %v81
        %v83 = vld [vmem:[%s77 + $0x4] sm:%s70]
        %84 = vst [vmem:[%s78 + $0x8] sm:%s70] %v83
        %v85 = vld [vmem:[%s77 + $0x14] sm:%s70]
        %86 = vst [vmem:[%s78 + $0xc] sm:%s70] %v85
        %v87 = vld [vmem:[%s77 + $0x8] sm:%s70]
        %88 = vst [vmem:[%s78 + $0x10] sm:%s70] %v87
        %v89 = vld [vmem:[%s77 + $0x18] sm:%s70]
        %90 = vst [vmem:[%s78 + $0x14] sm:%s70] %v89
        %v91 = vld [vmem:[%s77 + $0xc] sm:%s70]
        %92 = vst [vmem:[%s78 + $0x18] sm:%s70] %v91
        %v93 = vld [vmem:[%s77 + $0x1c] sm:%s70]
        %94 = vst [vmem:[%s78 + $0x1c] sm:%s70] %v93
        %v95 = vld [vmem:[%s77 + $0x20] sm:%s70]
        %96 = vst [vmem:[%s78 + $0x20] sm:%s70] %v95
        %v97 = vld [vmem:[%s77 + $0x30] sm:%s70]
        %98 = vst [vmem:[%s78 + $0x24] sm:%s70] %v97
        %v99 = vld [vmem:[%s77 + $0x24] sm:%s70]
        %100 = vst [vmem:[%s78 + $0x28] sm:%s70] %v99
        %v101 = vld [vmem:[%s77 + $0x34] sm:%s70]
        %102 = vst [vmem:[%s78 + $0x2c] sm:%s70] %v101
        %v103 = vld [vmem:[%s77 + $0x28] sm:%s70]
        %104 = vst [vmem:[%s78 + $0x30] sm:%s70] %v103
        %v105 = vld [vmem:[%s77 + $0x38] sm:%s70]
        %106 = vst [vmem:[%s78 + $0x34] sm:%s70] %v105
        %v107 = vld [vmem:[%s77 + $0x2c] sm:%s70]
        %108 = vst [vmem:[%s78 + $0x38] sm:%s70] %v107
        %v109 = vld [vmem:[%s77 + $0x3c] sm:%s70]
        %110 = vst [vmem:[%s78 + $0x3c] sm:%s70] %v109
        %v111 = vld [vmem:[%s77 + $0x40] sm:%s70]
        %112 = vst [vmem:[%s78 + $0x40] sm:%s70] %v111
        %v113 = vld [vmem:[%s77 + $0x50] sm:%s70]
        %114 = vst [vmem:[%s78 + $0x44] sm:%s70] %v113
        %v115 = vld [vmem:[%s77 + $0x44] sm:%s70]
        %116 = vst [vmem:[%s78 + $0x48] sm:%s70] %v115
        %v117 = vld [vmem:[%s77 + $0x54] sm:%s70]
        %118 = vst [vmem:[%s78 + $0x4c] sm:%s70] %v117
        %v119 = vld [vmem:[%s77 + $0x48] sm:%s70]
        %120 = vst [vmem:[%s78 + $0x50] sm:%s70] %v119
        %v121 = vld [vmem:[%s77 + $0x58] sm:%s70]
        %122 = vst [vmem:[%s78 + $0x54] sm:%s70] %v121
        %v123 = vld [vmem:[%s77 + $0x4c] sm:%s70]
        %124 = vst [vmem:[%s78 + $0x58] sm:%s70] %v123
        %v125 = vld [vmem:[%s77 + $0x5c] sm:%s70]
        %126 = vst [vmem:[%s78 + $0x5c] sm:%s70] %v125
        %v127 = vld [vmem:[%s77 + $0x60] sm:%s70]
        %128 = vst [vmem:[%s78 + $0x60] sm:%s70] %v127
        %v129 = vld [vmem:[%s77 + $0x70] sm:%s70]
        %130 = vst [vmem:[%s78 + $0x64] sm:%s70] %v129
        %v131 = vld [vmem:[%s77 + $0x64] sm:%s70]
        %132 = vst [vmem:[%s78 + $0x68] sm:%s70] %v131
        %v133 = vld [vmem:[%s77 + $0x74] sm:%s70]
        %134 = vst [vmem:[%s78 + $0x6c] sm:%s70] %v133
        %v135 = vld [vmem:[%s77 + $0x68] sm:%s70]
        %136 = vst [vmem:[%s78 + $0x70] sm:%s70] %v135
        %v137 = vld [vmem:[%s77 + $0x78] sm:%s70]
        %138 = vst [vmem:[%s78 + $0x74] sm:%s70] %v137
        %v139 = vld [vmem:[%s77 + $0x6c] sm:%s70]
        %140 = vst [vmem:[%s78 + $0x78] sm:%s70] %v139
        %v141 = vld [vmem:[%s77 + $0x7c] sm:%s70]
        %142 = vst [vmem:[%s78 + $0x7c] sm:%s70] %v141
        %v143 = vld [vmem:[%s77 + $0x80] sm:%s70]
        %144 = vst [vmem:[%s78 + $0x80] sm:%s70] %v143
        %v145 = vld [vmem:[%s77 + $0x90] sm:%s70]
        %146 = vst [vmem:[%s78 + $0x84] sm:%s70] %v145
        %v147 = vld [vmem:[%s77 + $0x84] sm:%s70]
        %148 = vst [vmem:[%s78 + $0x88] sm:%s70] %v147
        %v149 = vld [vmem:[%s77 + $0x94] sm:%s70]
        %150 = vst [vmem:[%s78 + $0x8c] sm:%s70] %v149
        %v151 = vld [vmem:[%s77 + $0x88] sm:%s70]
        %152 = vst [vmem:[%s78 + $0x90] sm:%s70] %v151
        %v153 = vld [vmem:[%s77 + $0x98] sm:%s70]
        %154 = vst [vmem:[%s78 + $0x94] sm:%s70] %v153
        %v155 = vld [vmem:[%s77 + $0x8c] sm:%s70]
        %156 = vst [vmem:[%s78 + $0x98] sm:%s70] %v155
        %v157 = vld [vmem:[%s77 + $0x9c] sm:%s70]
        %158 = vst [vmem:[%s78 + $0x9c] sm:%s70] %v157
        %v159 = vld [vmem:[%s77 + $0xa0] sm:%s70]
        %160 = vst [vmem:[%s78 + $0xa0] sm:%s70] %v159
        %v161 = vld [vmem:[%s77 + $0xb0] sm:%s70]
        %162 = vst [vmem:[%s78 + $0xa4] sm:%s70] %v161
        %v163 = vld [vmem:[%s77 + $0xa4] sm:%s70]
        %164 = vst [vmem:[%s78 + $0xa8] sm:%s70] %v163
        %v165 = vld [vmem:[%s77 + $0xb4] sm:%s70]
        %166 = vst [vmem:[%s78 + $0xac] sm:%s70] %v165
        %v167 = vld [vmem:[%s77 + $0xa8] sm:%s70]
        %168 = vst [vmem:[%s78 + $0xb0] sm:%s70] %v167
        %v169 = vld [vmem:[%s77 + $0xb8] sm:%s70]
        %170 = vst [vmem:[%s78 + $0xb4] sm:%s70] %v169
        %v171 = vld [vmem:[%s77 + $0xac] sm:%s70]
        %172 = vst [vmem:[%s78 + $0xb8] sm:%s70] %v171
        %v173 = vld [vmem:[%s77 + $0xbc] sm:%s70]
        %174 = vst [vmem:[%s78 + $0xbc] sm:%s70] %v173
        %v175 = vld [vmem:[%s77 + $0xc0] sm:%s70]
        %176 = vst [vmem:[%s78 + $0xc0] sm:%s70] %v175
        %v177 = vld [vmem:[%s77 + $0xd0] sm:%s70]
        %178 = vst [vmem:[%s78 + $0xc4] sm:%s70] %v177
        %v179 = vld [vmem:[%s77 + $0xc4] sm:%s70]
        %180 = vst [vmem:[%s78 + $0xc8] sm:%s70] %v179
        %v181 = vld [vmem:[%s77 + $0xd4] sm:%s70]
        %182 = vst [vmem:[%s78 + $0xcc] sm:%s70] %v181
        %v183 = vld [vmem:[%s77 + $0xc8] sm:%s70]
        %184 = vst [vmem:[%s78 + $0xd0] sm:%s70] %v183
        %v185 = vld [vmem:[%s77 + $0xd8] sm:%s70]
        %186 = vst [vmem:[%s78 + $0xd4] sm:%s70] %v185
        %v187 = vld [vmem:[%s77 + $0xcc] sm:%s70]
        %188 = vst [vmem:[%s78 + $0xd8] sm:%s70] %v187
        %v189 = vld [vmem:[%s77 + $0xdc] sm:%s70]
        %190 = vst [vmem:[%s78 + $0xdc] sm:%s70] %v189
        %v191 = vld [vmem:[%s77 + $0xe0] sm:%s70]
        %192 = vst [vmem:[%s78 + $0xe0] sm:%s70] %v191
        %v193 = vld [vmem:[%s77 + $0xf0] sm:%s70]
        %194 = vst [vmem:[%s78 + $0xe4] sm:%s70] %v193
        %v195 = vld [vmem:[%s77 + $0xe4] sm:%s70]
        %196 = vst [vmem:[%s78 + $0xe8] sm:%s70] %v195
        %v197 = vld [vmem:[%s77 + $0xf4] sm:%s70]
        %198 = vst [vmem:[%s78 + $0xec] sm:%s70] %v197
        %v199 = vld [vmem:[%s77 + $0xe8] sm:%s70]
        %200 = vst [vmem:[%s78 + $0xf0] sm:%s70] %v199
        %v201 = vld [vmem:[%s77 + $0xf8] sm:%s70]
        %202 = vst [vmem:[%s78 + $0xf4] sm:%s70] %v201
        %v203 = vld [vmem:[%s77 + $0xec] sm:%s70]
        %204 = vst [vmem:[%s78 + $0xf8] sm:%s70] %v203
        %v205 = vld [vmem:[%s77 + $0xfc] sm:%s70]
        %206 = vst [vmem:[%s78 + $0xfc] sm:%s70] %v205
        %v207 = vld [vmem:[%s77 + $0x100] sm:%s70]
        %208 = vst [vmem:[%s78 + $0x100] sm:%s70] %v207
        %v209 = vld [vmem:[%s77 + $0x110] sm:%s70]
        %210 = vst [vmem:[%s78 + $0x104] sm:%s70] %v209
        %v211 = vld [vmem:[%s77 + $0x104] sm:%s70]
        %212 = vst [vmem:[%s78 + $0x108] sm:%s70] %v211
        %v213 = vld [vmem:[%s77 + $0x114] sm:%s70]
        %214 = vst [vmem:[%s78 + $0x10c] sm:%s70] %v213
        %v215 = vld [vmem:[%s77 + $0x108] sm:%s70]
        %216 = vst [vmem:[%s78 + $0x110] sm:%s70] %v215
        %v217 = vld [vmem:[%s77 + $0x118] sm:%s70]
        %218 = vst [vmem:[%s78 + $0x114] sm:%s70] %v217
        %v219 = vld [vmem:[%s77 + $0x10c] sm:%s70]
        %220 = vst [vmem:[%s78 + $0x118] sm:%s70] %v219
        %v221 = vld [vmem:[%s77 + $0x11c] sm:%s70]
        %222 = vst [vmem:[%s78 + $0x11c] sm:%s70] %v221
        %v223 = vld [vmem:[%s77 + $0x120] sm:%s70]
        %224 = vst [vmem:[%s78 + $0x120] sm:%s70] %v223
        %v225 = vld [vmem:[%s77 + $0x130] sm:%s70]
        %226 = vst [vmem:[%s78 + $0x124] sm:%s70] %v225
        %v227 = vld [vmem:[%s77 + $0x124] sm:%s70]
        %228 = vst [vmem:[%s78 + $0x128] sm:%s70] %v227
        %v229 = vld [vmem:[%s77 + $0x134] sm:%s70]
        %230 = vst [vmem:[%s78 + $0x12c] sm:%s70] %v229
        %v231 = vld [vmem:[%s77 + $0x128] sm:%s70]
        %232 = vst [vmem:[%s78 + $0x130] sm:%s70] %v231
        %v233 = vld [vmem:[%s77 + $0x138] sm:%s70]
        %234 = vst [vmem:[%s78 + $0x134] sm:%s70] %v233
        %v235 = vld [vmem:[%s77 + $0x12c] sm:%s70]
        %236 = vst [vmem:[%s78 + $0x138] sm:%s70] %v235
        %v237 = vld [vmem:[%s77 + $0x13c] sm:%s70]
        %238 = vst [vmem:[%s78 + $0x13c] sm:%s70] %v237
        %v239 = vld [vmem:[%s77 + $0x140] sm:%s70]
        %240 = vst [vmem:[%s78 + $0x140] sm:%s70] %v239
        %v241 = vld [vmem:[%s77 + $0x150] sm:%s70]
        %242 = vst [vmem:[%s78 + $0x144] sm:%s70] %v241
        %v243 = vld [vmem:[%s77 + $0x144] sm:%s70]
        %244 = vst [vmem:[%s78 + $0x148] sm:%s70] %v243
        %v245 = vld [vmem:[%s77 + $0x154] sm:%s70]
        %246 = vst [vmem:[%s78 + $0x14c] sm:%s70] %v245
        %v247 = vld [vmem:[%s77 + $0x148] sm:%s70]
        %248 = vst [vmem:[%s78 + $0x150] sm:%s70] %v247
        %v249 = vld [vmem:[%s77 + $0x158] sm:%s70]
        %250 = vst [vmem:[%s78 + $0x154] sm:%s70] %v249
        %v251 = vld [vmem:[%s77 + $0x14c] sm:%s70]
        %252 = vst [vmem:[%s78 + $0x158] sm:%s70] %v251
        %v253 = vld [vmem:[%s77 + $0x15c] sm:%s70]
        %254 = vst [vmem:[%s78 + $0x15c] sm:%s70] %v253
        %v255 = vld [vmem:[%s77 + $0x160] sm:%s70]
        %256 = vst [vmem:[%s78 + $0x160] sm:%s70] %v255
        %v257 = vld [vmem:[%s77 + $0x170] sm:%s70]
        %258 = vst [vmem:[%s78 + $0x164] sm:%s70] %v257
        %v259 = vld [vmem:[%s77 + $0x164] sm:%s70]
        %260 = vst [vmem:[%s78 + $0x168] sm:%s70] %v259
        %v261 = vld [vmem:[%s77 + $0x174] sm:%s70]
        %262 = vst [vmem:[%s78 + $0x16c] sm:%s70] %v261
        %v263 = vld [vmem:[%s77 + $0x168] sm:%s70]
        %264 = vst [vmem:[%s78 + $0x170] sm:%s70] %v263
        %v265 = vld [vmem:[%s77 + $0x178] sm:%s70]
        %266 = vst [vmem:[%s78 + $0x174] sm:%s70] %v265
        %v267 = vld [vmem:[%s77 + $0x16c] sm:%s70]
        %268 = vst [vmem:[%s78 + $0x178] sm:%s70] %v267
        %v269 = vld [vmem:[%s77 + $0x17c] sm:%s70]
        %270 = vst [vmem:[%s78 + $0x17c] sm:%s70] %v269
        %v271 = vld [vmem:[%s77 + $0x180] sm:%s70]
        %272 = vst [vmem:[%s78 + $0x180] sm:%s70] %v271
        %v273 = vld [vmem:[%s77 + $0x190] sm:%s70]
        %274 = vst [vmem:[%s78 + $0x184] sm:%s70] %v273
        %v275 = vld [vmem:[%s77 + $0x184] sm:%s70]
        %276 = vst [vmem:[%s78 + $0x188] sm:%s70] %v275
        %v277 = vld [vmem:[%s77 + $0x194] sm:%s70]
        %278 = vst [vmem:[%s78 + $0x18c] sm:%s70] %v277
        %v279 = vld [vmem:[%s77 + $0x188] sm:%s70]
        %280 = vst [vmem:[%s78 + $0x190] sm:%s70] %v279
        %v281 = vld [vmem:[%s77 + $0x198] sm:%s70]
        %282 = vst [vmem:[%s78 + $0x194] sm:%s70] %v281
        %v283 = vld [vmem:[%s77 + $0x18c] sm:%s70]
        %284 = vst [vmem:[%s78 + $0x198] sm:%s70] %v283
        %v285 = vld [vmem:[%s77 + $0x19c] sm:%s70]
        %286 = vst [vmem:[%s78 + $0x19c] sm:%s70] %v285
        %v287 = vld [vmem:[%s77 + $0x1a0] sm:%s70]
        %288 = vst [vmem:[%s78 + $0x1a0] sm:%s70] %v287
        %v289 = vld [vmem:[%s77 + $0x1b0] sm:%s70]
        %290 = vst [vmem:[%s78 + $0x1a4] sm:%s70] %v289
        %v291 = vld [vmem:[%s77 + $0x1a4] sm:%s70]
        %292 = vst [vmem:[%s78 + $0x1a8] sm:%s70] %v291
        %v293 = vld [vmem:[%s77 + $0x1b4] sm:%s70]
        %294 = vst [vmem:[%s78 + $0x1ac] sm:%s70] %v293
        %v295 = vld [vmem:[%s77 + $0x1a8] sm:%s70]
        %296 = vst [vmem:[%s78 + $0x1b0] sm:%s70] %v295
        %v297 = vld [vmem:[%s77 + $0x1b8] sm:%s70]
        %298 = vst [vmem:[%s78 + $0x1b4] sm:%s70] %v297
        %v299 = vld [vmem:[%s77 + $0x1ac] sm:%s70]
        %300 = vst [vmem:[%s78 + $0x1b8] sm:%s70] %v299
        %v301 = vld [vmem:[%s77 + $0x1bc] sm:%s70]
        %302 = vst [vmem:[%s78 + $0x1bc] sm:%s70] %v301
        %v303 = vld [vmem:[%s77 + $0x1c0] sm:%s70]
        %304 = vst [vmem:[%s78 + $0x1c0] sm:%s70] %v303
        %v305 = vld [vmem:[%s77 + $0x1d0] sm:%s70]
        %306 = vst [vmem:[%s78 + $0x1c4] sm:%s70] %v305
        %v307 = vld [vmem:[%s77 + $0x1c4] sm:%s70]
        %308 = vst [vmem:[%s78 + $0x1c8] sm:%s70] %v307
        %v309 = vld [vmem:[%s77 + $0x1d4] sm:%s70]
        %310 = vst [vmem:[%s78 + $0x1cc] sm:%s70] %v309
        %v311 = vld [vmem:[%s77 + $0x1c8] sm:%s70]
        %312 = vst [vmem:[%s78 + $0x1d0] sm:%s70] %v311
        %v313 = vld [vmem:[%s77 + $0x1d8] sm:%s70]
        %314 = vst [vmem:[%s78 + $0x1d4] sm:%s70] %v313
        %v315 = vld [vmem:[%s77 + $0x1cc] sm:%s70]
        %316 = vst [vmem:[%s78 + $0x1d8] sm:%s70] %v315
        %v317 = vld [vmem:[%s77 + $0x1dc] sm:%s70]
        %318 = vst [vmem:[%s78 + $0x1dc] sm:%s70] %v317
        %v319 = vld [vmem:[%s77 + $0x1e0] sm:%s70]
        %320 = vst [vmem:[%s78 + $0x1e0] sm:%s70] %v319
        %v321 = vld [vmem:[%s77 + $0x1f0] sm:%s70]
        %322 = vst [vmem:[%s78 + $0x1e4] sm:%s70] %v321
        %v323 = vld [vmem:[%s77 + $0x1e4] sm:%s70]
        %324 = vst [vmem:[%s78 + $0x1e8] sm:%s70] %v323
        %v325 = vld [vmem:[%s77 + $0x1f4] sm:%s70]
        %326 = vst [vmem:[%s78 + $0x1ec] sm:%s70] %v325
        %v327 = vld [vmem:[%s77 + $0x1e8] sm:%s70]
        %328 = vst [vmem:[%s78 + $0x1f0] sm:%s70] %v327
        %v329 = vld [vmem:[%s77 + $0x1f8] sm:%s70]
        %330 = vst [vmem:[%s78 + $0x1f4] sm:%s70] %v329
        %v331 = vld [vmem:[%s77 + $0x1ec] sm:%s70]
        %332 = vst [vmem:[%s78 + $0x1f8] sm:%s70] %v331
        %v333 = vld [vmem:[%s77 + $0x1fc] sm:%s70]
        %334 = vst [vmem:[%s78 + $0x1fc] sm:%s70] %v333
      $region54: #{pmr_clf_forward.1} parent=48 // loop_footer
        %s76 = sadd.s32 1, %s72
      $region55: #{pmr_clf_forward.1} parent=48 // loop_footer_branch
        %71 = sbr.rel target = $region51
      $region56: #{pmr_clf_forward.1} parent=48 // loop_exit
        _
    $region49: #{pmr_clf_forward.1} parent=1 // pred_fallthru
      _
    // Predicated region
    $region75: #{pmr_clf_forward.1} parent=1 // pred_check
      _
    $region76: #{pmr_clf_forward.1} parent=1 // pred_check_branch
      %620 = sbr.rel (0) target = $region78
    $region77: #{pmr_clf_forward.1} parent=1 // pred_region
      %621 = vsyncadd [#allocation8], 8192
    $region78: #{pmr_clf_forward.1} parent=1 // pred_fallthru
      _
    %s622 = scalar_lea.sflag [#allocation8], 1
    %s624 = sshll.u32 1, 14
    %s625 = sxor.u32 4294967295, %s624
    %s627 = sld [smem:[#allocation0]]
    %s628 = sadd.s32 2, %s627
    %s630 = sshll.u32 7, 26
    %s631 = sxor.u32 4294967295, %s630
    %s632 = sand.u32 0, %s631
    %s633 = sshll.u32 %s628, 26
    %s634 = sor.u32 %s632, %s633
    %s635 = sshll.u32 [#allocation3], 4
    %s636 = int_to_ptr.vmem [resolvable:$true] %s635
    %639 = sst [smem:[#allocation15]] 512
    %s640 = scalar_lea.smem [#allocation15], 1
    %641 = sst [smem:[%s640]] 512
    %s642 = scalar_lea.smem [#allocation15], 2
    %643 = sst [smem:[%s642]] 4
    %s644 = scalar_lea.smem [#allocation15], 3
    %645 = sst [smem:[%s644]] 64
    %s646 = scalar_lea.smem [#allocation15], 4
    %647 = sst [smem:[%s646]] 128
    %s648 = scalar_lea.smem [#allocation15], 5
    %649 = sst [smem:[%s648]] 2
    %s650 = scalar_lea.smem [#allocation15], 6
    %651 = sst [smem:[%s650]] 256
    %s652 = scalar_lea.smem [#allocation15], 7
    %653 = sst [smem:[%s652]] 64
    %s654 = scalar_lea.smem [#allocation15], 8
    %655 = sst [smem:[%s654]] 4
    %657 = dma.general %s6, 4096, %s636, %s622, [#allocation14], [#allocation15], %s634, 0
    %s658 = scalar_lea.sflag [#allocation8], 2
    %p660 = scmp.lt.u32.totalorder 128, 8
    %p661 = pneg %p660
    // Predicated region
    $region79: #{pmr_clf_forward.1} parent=1 // pred_check
      _
    $region80: #{pmr_clf_forward.1} parent=1 // pred_check_branch
      %663 = sbr.rel (%p660) target = $region82
    $region81: #{pmr_clf_forward.1} parent=1 // pred_region
      %s678 = sand.u32 128, 7
      %p679 = scmp.eq.s32.totalorder %s678, 0
      // Predicated region
      $region94: #{pmr_clf_forward.1} parent=81 // pred_check
        %p680 = pneg %p679
      $region95: #{pmr_clf_forward.1} parent=81 // pred_check_branch
        %682 = sbr.rel (%p680) target = $region97
      $region96: #{pmr_clf_forward.1} parent=81 // pred_region
        loop: start=0, step=1, limit=1
        $region98: #{pmr_clf_forward.1} parent=96 // loop_pre_header
          _
        $region99: #{pmr_clf_forward.1} parent=96 // loop_header
          %s684 = sphi 0, %s688
          %p685 = scmp.ge.s32.totalorder %s684, 1
          %s689 = sphi %s8, %s8
          %s690 = sphi [#allocation4], [#allocation4]
        $region100: #{pmr_clf_forward.1} parent=96 // loop_header_branch
          %687 = sbr.rel (%p685) target = $region104
        $region101: #{pmr_clf_forward.1} parent=96 // loop_body
          %v691 = vld [vmem:[%s689] sm:$0xff]
          %692 = vst [vmem:[%s690] sm:$0xff] %v691
          %v693 = vld [vmem:[%s689 + $0x8] sm:$0xff]
          %694 = vst [vmem:[%s690 + $0x8] sm:$0xff] %v693
          %v695 = vld [vmem:[%s689 + $0x10] sm:$0xff]
          %696 = vst [vmem:[%s690 + $0x10] sm:$0xff] %v695
          %v697 = vld [vmem:[%s689 + $0x18] sm:$0xff]
          %698 = vst [vmem:[%s690 + $0x18] sm:$0xff] %v697
          %v699 = vld [vmem:[%s689 + $0x20] sm:$0xff]
          %700 = vst [vmem:[%s690 + $0x20] sm:$0xff] %v699
          %v701 = vld [vmem:[%s689 + $0x28] sm:$0xff]
          %702 = vst [vmem:[%s690 + $0x28] sm:$0xff] %v701
          %v703 = vld [vmem:[%s689 + $0x30] sm:$0xff]
          %704 = vst [vmem:[%s690 + $0x30] sm:$0xff] %v703
          %v705 = vld [vmem:[%s689 + $0x38] sm:$0xff]
          %706 = vst [vmem:[%s690 + $0x38] sm:$0xff] %v705
          %v707 = vld [vmem:[%s689 + $0x40] sm:$0xff]
          %708 = vst [vmem:[%s690 + $0x40] sm:$0xff] %v707
          %v709 = vld [vmem:[%s689 + $0x48] sm:$0xff]
          %710 = vst [vmem:[%s690 + $0x48] sm:$0xff] %v709
          %v711 = vld [vmem:[%s689 + $0x50] sm:$0xff]
          %712 = vst [vmem:[%s690 + $0x50] sm:$0xff] %v711
          %v713 = vld [vmem:[%s689 + $0x58] sm:$0xff]
          %714 = vst [vmem:[%s690 + $0x58] sm:$0xff] %v713
          %v715 = vld [vmem:[%s689 + $0x60] sm:$0xff]
          %716 = vst [vmem:[%s690 + $0x60] sm:$0xff] %v715
          %v717 = vld [vmem:[%s689 + $0x68] sm:$0xff]
          %718 = vst [vmem:[%s690 + $0x68] sm:$0xff] %v717
          %v719 = vld [vmem:[%s689 + $0x70] sm:$0xff]
          %720 = vst [vmem:[%s690 + $0x70] sm:$0xff] %v719
          %v721 = vld [vmem:[%s689 + $0x78] sm:$0xff]
          %722 = vst [vmem:[%s690 + $0x78] sm:$0xff] %v721
        $region102: #{pmr_clf_forward.1} parent=96 // loop_footer
          %s688 = sadd.s32 1, %s684
        $region103: #{pmr_clf_forward.1} parent=96 // loop_footer_branch
          %683 = sbr.rel target = $region99
        $region104: #{pmr_clf_forward.1} parent=96 // loop_exit
          _
      $region97: #{pmr_clf_forward.1} parent=81 // pred_fallthru
        _
      %p723 = pneg %p679
      // Predicated region
      $region105: #{pmr_clf_forward.1} parent=81 // pred_check
        _
      $region106: #{pmr_clf_forward.1} parent=81 // pred_check_branch
        %725 = sbr.rel (%p679) target = $region108
      $region107: #{pmr_clf_forward.1} parent=81 // pred_region
        %s726 = sand.u32 128, 7
      $region108: #{pmr_clf_forward.1} parent=81 // pred_fallthru
        _
    $region82: #{pmr_clf_forward.1} parent=1 // pred_fallthru
      _
    // Predicated region
    $region83: #{pmr_clf_forward.1} parent=1 // pred_check
      %p664 = pneg %p660
    $region84: #{pmr_clf_forward.1} parent=1 // pred_check_branch
      %666 = sbr.rel (%p664) target = $region86
    $region85: #{pmr_clf_forward.1} parent=1 // pred_region
      %s667 = sshllo.u32 0, 128
      loop: start=0, step=1, limit=1
      $region87: #{pmr_clf_forward.1} parent=85 // loop_pre_header
        _
      $region88: #{pmr_clf_forward.1} parent=85 // loop_header
        %s669 = sphi 0, %s673
        %p670 = scmp.ge.s32.totalorder %s669, 1
        %s674 = sphi %s8, %s8
        %s675 = sphi [#allocation4], [#allocation4]
      $region89: #{pmr_clf_forward.1} parent=85 // loop_header_branch
        %672 = sbr.rel (%p670) target = $region93
      $region90: #{pmr_clf_forward.1} parent=85 // loop_body
        %v676 = vld [vmem:[%s674] sm:%s667]
        %677 = vst [vmem:[%s675] sm:%s667] %v676
      $region91: #{pmr_clf_forward.1} parent=85 // loop_footer
        %s673 = sadd.s32 1, %s669
      $region92: #{pmr_clf_forward.1} parent=85 // loop_footer_branch
        %668 = sbr.rel target = $region88
      $region93: #{pmr_clf_forward.1} parent=85 // loop_exit
        _
    $region86: #{pmr_clf_forward.1} parent=1 // pred_fallthru
      _
    // Predicated region
    $region109: #{pmr_clf_forward.1} parent=1 // pred_check
      _
    $region110: #{pmr_clf_forward.1} parent=1 // pred_check_branch
      %729 = sbr.rel (0) target = $region112
    $region111: #{pmr_clf_forward.1} parent=1 // pred_region
      %730 = vsyncadd %s658, 2048
    $region112: #{pmr_clf_forward.1} parent=1 // pred_fallthru
      _
    %s731 = scalar_lea.sflag [#allocation8], 3
    // Predicated region
    $region113: #{pmr_clf_forward.1} parent=1 // pred_check
      _
    $region114: #{pmr_clf_forward.1} parent=1 // pred_check_branch
      %733 = sbr.rel target = $region116
    $region115: #{pmr_clf_forward.1} parent=1 // pred_region
      %734 = sst [smem:[#allocation19]] [#allocation18]
      %735 = sst [smem:[#allocation20]] [#allocation17]
    $region116: #{pmr_clf_forward.1} parent=1 // pred_fallthru
      _
    %737 = shalt.err (0)
    %s739 = sshll.u32 [#allocation5], 4
    %s740 = int_to_ptr.vmem [resolvable:$true] %s739
    %742 = dma.hbm_to_vmem [thread:$0]  %s10, 2048, %s740, %s731
    %v743 = vld [vmem:[%s0] sm:$0xf]
    %v744 = vld [vmem:[%s0 + $0x4] sm:$0xf]
    %v745 = vld [vmem:[%s0 + $0x8] sm:$0xf]
    %v746 = vld [vmem:[%s0 + $0xc] sm:$0xf]
    %v747 = vld [vmem:[%s0 + $0x10] sm:$0xf]
    %v748 = vld [vmem:[%s0 + $0x14] sm:$0xf]
    %v749 = vld [vmem:[%s0 + $0x18] sm:$0xf]
    %v750 = vld [vmem:[%s0 + $0x1c] sm:$0xf]
    %v751 = vld [vmem:[#allocation9] sm:$0xff]
    %v752 = vld [vmem:[#allocation9 + $0x8] sm:$0xff]
    %v753 = vld [vmem:[#allocation9 + $0x10] sm:$0xff]
    %v754 = vld [vmem:[#allocation9 + $0x18] sm:$0xff]
    %v755 = vld [vmem:[#allocation9 + $0x20] sm:$0xff]
    %v756 = vld [vmem:[#allocation9 + $0x28] sm:$0xff]
    %v757 = vld [vmem:[#allocation9 + $0x30] sm:$0xff]
    %v758 = vld [vmem:[#allocation9 + $0x38] sm:$0xff]
    %v759 = vld [vmem:[#allocation9 + $0x40] sm:$0xff]
    %v760 = vld [vmem:[#allocation9 + $0x48] sm:$0xff]
    %v761 = vld [vmem:[#allocation9 + $0x50] sm:$0xff]
    %v762 = vld [vmem:[#allocation9 + $0x58] sm:$0xff]
    %v763 = vld [vmem:[#allocation9 + $0x60] sm:$0xff]
    %v764 = vld [vmem:[#allocation9 + $0x68] sm:$0xff]
    %v765 = vld [vmem:[#allocation9 + $0x70] sm:$0xff]
    %v766 = vld [vmem:[#allocation9 + $0x78] sm:$0xff]
    %v767 = vld [vmem:[#allocation9 + $0x80] sm:$0xff]
    %v768 = vld [vmem:[#allocation9 + $0x88] sm:$0xff]
    %v769 = vld [vmem:[#allocation9 + $0x90] sm:$0xff]
    %v770 = vld [vmem:[#allocation9 + $0x98] sm:$0xff]
    %v771 = vld [vmem:[#allocation9 + $0xa0] sm:$0xff]
    %v772 = vld [vmem:[#allocation9 + $0xa8] sm:$0xff]
    %v773 = vld [vmem:[#allocation9 + $0xb0] sm:$0xff]
    %v774 = vld [vmem:[#allocation9 + $0xb8] sm:$0xff]
    %v775 = vld [vmem:[#allocation9 + $0xc0] sm:$0xff]
    %v776 = vld [vmem:[#allocation9 + $0xc8] sm:$0xff]
    %v777 = vld [vmem:[#allocation9 + $0xd0] sm:$0xff]
    %v778 = vld [vmem:[#allocation9 + $0xd8] sm:$0xff]
    %v779 = vld [vmem:[#allocation9 + $0xe0] sm:$0xff]
    %v780 = vld [vmem:[#allocation9 + $0xe8] sm:$0xff]
    %v781 = vld [vmem:[#allocation9 + $0xf0] sm:$0xff]
    %v782 = vld [vmem:[#allocation9 + $0xf8] sm:$0xff]
    %v783 = vld [vmem:[%s3] sm:$0xf]
    %v785 = vlaneseq
    %v786 = vshrl.u32 %v785, 7
    %v787 = vsub.s32 0, %v786
    %v788 = vrot.slane %v783, %v787
    %v789 = vlaneseq
    %v790 = vshrl.u32 %v789, 7
    %v791 = vsub.s32 1, %v790
    %v792 = vrot.slane %v783, %v791
    %v793 = vlaneseq
    %v794 = vshrl.u32 %v793, 7
    %v795 = vsub.s32 2, %v794
    %v796 = vrot.slane %v783, %v795
    %v797 = vlaneseq
    %v798 = vshrl.u32 %v797, 7
    %v799 = vsub.s32 3, %v798
    %v800 = vrot.slane %v783, %v799
    %v813 = vunpack.c.l.b16 %v743
    %v814 = vunpack.c.l.b16 %v744
    %v815 = vunpack.c.l.b16 %v745
    %v816 = vunpack.c.l.b16 %v746
    %v817 = vunpack.c.l.b16 %v747
    %v818 = vunpack.c.l.b16 %v748
    %v819 = vunpack.c.l.b16 %v749
    %v820 = vunpack.c.l.b16 %v750
    %v821 = vpack.c.b16 %v814, %v813
    %v822 = vpack.c.b16 %v816, %v815
    %v823 = vpack.c.b16 %v818, %v817
    %v824 = vpack.c.b16 %v820, %v819
    %v861 = vunpack.c.l.b16 %v751
    %v862 = vunpack.c.h.b16 %v751
    %v863 = vunpack.c.l.b16 %v752
    %v864 = vunpack.c.h.b16 %v752
    %v865 = vunpack.c.l.b16 %v753
    %v866 = vunpack.c.h.b16 %v753
    %v867 = vunpack.c.l.b16 %v754
    %v868 = vunpack.c.h.b16 %v754
    %v869 = vunpack.c.l.b16 %v755
    %v870 = vunpack.c.h.b16 %v755
    %v871 = vunpack.c.l.b16 %v756
    %v872 = vunpack.c.h.b16 %v756
    %v873 = vunpack.c.l.b16 %v757
    %v874 = vunpack.c.h.b16 %v757
    %v875 = vunpack.c.l.b16 %v758
    %v876 = vunpack.c.h.b16 %v758
    %v877 = vunpack.c.l.b16 %v759
    %v878 = vunpack.c.h.b16 %v759
    %v879 = vunpack.c.l.b16 %v760
    %v880 = vunpack.c.h.b16 %v760
    %v881 = vunpack.c.l.b16 %v761
    %v882 = vunpack.c.h.b16 %v761
    %v883 = vunpack.c.l.b16 %v762
    %v884 = vunpack.c.h.b16 %v762
    %v885 = vunpack.c.l.b16 %v763
    %v886 = vunpack.c.h.b16 %v763
    %v887 = vunpack.c.l.b16 %v764
    %v888 = vunpack.c.h.b16 %v764
    %v889 = vunpack.c.l.b16 %v765
    %v890 = vunpack.c.h.b16 %v765
    %v891 = vunpack.c.l.b16 %v766
    %v892 = vunpack.c.h.b16 %v766
    %v893 = vunpack.c.l.b16 %v767
    %v894 = vunpack.c.h.b16 %v767
    %v895 = vunpack.c.l.b16 %v768
    %v896 = vunpack.c.h.b16 %v768
    %v897 = vunpack.c.l.b16 %v769
    %v898 = vunpack.c.h.b16 %v769
    %v899 = vunpack.c.l.b16 %v770
    %v900 = vunpack.c.h.b16 %v770
    %v901 = vunpack.c.l.b16 %v771
    %v902 = vunpack.c.h.b16 %v771
    %v903 = vunpack.c.l.b16 %v772
    %v904 = vunpack.c.h.b16 %v772
    %v905 = vunpack.c.l.b16 %v773
    %v906 = vunpack.c.h.b16 %v773
    %v907 = vunpack.c.l.b16 %v774
    %v908 = vunpack.c.h.b16 %v774
    %v909 = vunpack.c.l.b16 %v775
    %v910 = vunpack.c.h.b16 %v775
    %v911 = vunpack.c.l.b16 %v776
    %v912 = vunpack.c.h.b16 %v776
    %v913 = vunpack.c.l.b16 %v777
    %v914 = vunpack.c.h.b16 %v777
    %v915 = vunpack.c.l.b16 %v778
    %v916 = vunpack.c.h.b16 %v778
    %v917 = vunpack.c.l.b16 %v779
    %v918 = vunpack.c.h.b16 %v779
    %v919 = vunpack.c.l.b16 %v780
    %v920 = vunpack.c.h.b16 %v780
    %v921 = vunpack.c.l.b16 %v781
    %v922 = vunpack.c.h.b16 %v781
    %v923 = vunpack.c.l.b16 %v782
    %v924 = vunpack.c.h.b16 %v782
    %v925 = vpack.c.b16 %v865, %v861
    %v926 = vpack.c.b16 %v866, %v862
    %v927 = vpack.c.b16 %v867, %v863
    %v928 = vpack.c.b16 %v868, %v864
    %v929 = vpack.c.b16 %v873, %v869
    %v930 = vpack.c.b16 %v874, %v870
    %v931 = vpack.c.b16 %v875, %v871
    %v932 = vpack.c.b16 %v876, %v872
    %v933 = vpack.c.b16 %v881, %v877
    %v934 = vpack.c.b16 %v882, %v878
    %v935 = vpack.c.b16 %v883, %v879
    %v936 = vpack.c.b16 %v884, %v880
    %v937 = vpack.c.b16 %v889, %v885
    %v938 = vpack.c.b16 %v890, %v886
    %v939 = vpack.c.b16 %v891, %v887
    %v940 = vpack.c.b16 %v892, %v888
    %v941 = vpack.c.b16 %v897, %v893
    %v942 = vpack.c.b16 %v898, %v894
    %v943 = vpack.c.b16 %v899, %v895
    %v944 = vpack.c.b16 %v900, %v896
    %v945 = vpack.c.b16 %v905, %v901
    %v946 = vpack.c.b16 %v906, %v902
    %v947 = vpack.c.b16 %v907, %v903
    %v948 = vpack.c.b16 %v908, %v904
    %v949 = vpack.c.b16 %v913, %v909
    %v950 = vpack.c.b16 %v914, %v910
    %v951 = vpack.c.b16 %v915, %v911
    %v952 = vpack.c.b16 %v916, %v912
    %v953 = vpack.c.b16 %v921, %v917
    %v954 = vpack.c.b16 %v922, %v918
    %v955 = vpack.c.b16 %v923, %v919
    %v956 = vpack.c.b16 %v924, %v920
    %989 = vmatprep.subr.bf16.mxu0 %v926
    %990 = vmatpush1.bf16.msra.mxu0 %v925
    %991 = vmatprep.subr.bf16.mxu0 %v930
    %992 = vmatpush1.bf16.msra.mxu0 %v929
    %993 = vmatprep.subr.bf16.mxu0 %v934
    %994 = vmatpush1.bf16.msra.mxu0 %v933
    %995 = vmatprep.subr.bf16.mxu0 %v938
    %996 = vmatpush1.bf16.msra.mxu0 %v937
    %997 = vmatprep.subr.bf16.mxu0 %v942
    %998 = vmatpush1.bf16.msra.mxu0 %v941
    %999 = vmatprep.subr.bf16.mxu0 %v946
    %1000 = vmatpush1.bf16.msra.mxu0 %v945
    %1001 = vmatprep.subr.bf16.mxu0 %v950
    %1002 = vmatpush1.bf16.msra.mxu0 %v949
    %1003 = vmatprep.subr.bf16.mxu0 %v954
    %1004 = vmatpush1.bf16.msra.mxu0 %v953
    %1005 = vmatprep.subr.bf16.mxu0 0
    %1006 = vmatpush1.bf16.msra.mxu0 0
    %1007 = vmatprep.subr.bf16.mxu0 0
    %1008 = vmatpush1.bf16.msra.mxu0 0
    %1009 = vmatprep.subr.bf16.mxu0 0
    %1010 = vmatpush1.bf16.msra.mxu0 0
    %1011 = vmatprep.subr.bf16.mxu0 0
    %1012 = vmatpush1.bf16.msra.mxu0 0
    %1013 = vmatprep.subr.bf16.mxu0 0
    %1014 = vmatpush1.bf16.msra.mxu0 0
    %1015 = vmatprep.subr.bf16.mxu0 0
    %1016 = vmatpush1.bf16.msra.mxu0 0
    %1017 = vmatprep.subr.bf16.mxu0 0
    %1018 = vmatpush1.bf16.msra.mxu0 0
    %1019 = vmatprep.subr.bf16.mxu0 0
    %1020 = vmatpush1.bf16.msra.mxu0 0
    %1021 = vmatprep.mubr.bf16.mxu0 0
    %1022 = vmatmul.mubr.bf16.gmra.mrb[0].mxu0 %v821
    %v1023 = vpop.f32.mrb[0].mxu0
    %v1024 = vadd.f32 %v788, %v1023
    %v1025 = vpop.f32.mrb[0].mxu0
    %v1026 = vadd.f32 %v792, %v1025
    %v1027 = vpop.f32.mrb[0].mxu0
    %v1028 = vadd.f32 %v788, %v1027
    %v1029 = vpop.f32.mrb[0].mxu0
    %v1030 = vadd.f32 %v792, %v1029
    %1031 = vmatprep.mubr.bf16.mxu0 0
    %1032 = vmatmul.mubr.bf16.gmra.mrb[0].mxu0 %v822
    %v1033 = vpop.f32.mrb[0].mxu0
    %v1034 = vadd.f32 %v788, %v1033
    %v1035 = vpop.f32.mrb[0].mxu0
    %v1036 = vadd.f32 %v792, %v1035
    %v1037 = vpop.f32.mrb[0].mxu0
    %v1038 = vadd.f32 %v788, %v1037
    %v1039 = vpop.f32.mrb[0].mxu0
    %v1040 = vadd.f32 %v792, %v1039
    %1041 = vmatprep.mubr.bf16.mxu0 0
    %1042 = vmatmul.mubr.bf16.gmra.mrb[0].mxu0 %v823
    %v1043 = vpop.f32.mrb[0].mxu0
    %v1044 = vadd.f32 %v788, %v1043
    %v1045 = vpop.f32.mrb[0].mxu0
    %v1046 = vadd.f32 %v792, %v1045
    %v1047 = vpop.f32.mrb[0].mxu0
    %v1048 = vadd.f32 %v788, %v1047
    %v1049 = vpop.f32.mrb[0].mxu0
    %v1050 = vadd.f32 %v792, %v1049
    %1051 = vmatprep.mubr.bf16.mxu0 0
    %1052 = vmatmul.mubr.bf16.gmra.mrb[0].mxu0 %v824
    %v1053 = vpop.f32.mrb[0].mxu0
    %v1054 = vadd.f32 %v788, %v1053
    %v1055 = vpop.f32.mrb[0].mxu0
    %v1056 = vadd.f32 %v792, %v1055
    %v1057 = vpop.f32.mrb[0].mxu0
    %v1058 = vadd.f32 %v788, %v1057
    %v1059 = vpop.f32.mrb[0].mxu0
    %v1060 = vadd.f32 %v792, %v1059
    %1061 = vdwg.mxu0
    %1062 = vmatprep.subr.bf16.mxu0 %v928
    %1063 = vmatpush1.bf16.msra.mxu0 %v927
    %1064 = vmatprep.subr.bf16.mxu0 %v932
    %1065 = vmatpush1.bf16.msra.mxu0 %v931
    %1066 = vmatprep.subr.bf16.mxu0 %v936
    %1067 = vmatpush1.bf16.msra.mxu0 %v935
    %1068 = vmatprep.subr.bf16.mxu0 %v940
    %1069 = vmatpush1.bf16.msra.mxu0 %v939
    %1070 = vmatprep.subr.bf16.mxu0 %v944
    %1071 = vmatpush1.bf16.msra.mxu0 %v943
    %1072 = vmatprep.subr.bf16.mxu0 %v948
    %1073 = vmatpush1.bf16.msra.mxu0 %v947
    %1074 = vmatprep.subr.bf16.mxu0 %v952
    %1075 = vmatpush1.bf16.msra.mxu0 %v951
    %1076 = vmatprep.subr.bf16.mxu0 %v956
    %1077 = vmatpush1.bf16.msra.mxu0 %v955
    %1078 = vmatprep.subr.bf16.mxu0 0
    %1079 = vmatpush1.bf16.msra.mxu0 0
    %1080 = vmatprep.subr.bf16.mxu0 0
    %1081 = vmatpush1.bf16.msra.mxu0 0
    %1082 = vmatprep.subr.bf16.mxu0 0
    %1083 = vmatpush1.bf16.msra.mxu0 0
    %1084 = vmatprep.subr.bf16.mxu0 0
    %1085 = vmatpush1.bf16.msra.mxu0 0
    %1086 = vmatprep.subr.bf16.mxu0 0
    %1087 = vmatpush1.bf16.msra.mxu0 0
    %1088 = vmatprep.subr.bf16.mxu0 0
    %1089 = vmatpush1.bf16.msra.mxu0 0
    %1090 = vmatprep.subr.bf16.mxu0 0
    %1091 = vmatpush1.bf16.msra.mxu0 0
    %1092 = vmatprep.subr.bf16.mxu0 0
    %1093 = vmatpush1.bf16.msra.mxu0 0
    %1094 = vmatprep.mubr.bf16.mxu0 0
    %1095 = vmatmul.mubr.bf16.gmra.mrb[0].mxu0 %v821
    %v1096 = vpop.f32.mrb[0].mxu0
    %v1097 = vadd.f32 %v796, %v1096
    %v1098 = vpop.f32.mrb[0].mxu0
    %v1099 = vadd.f32 %v800, %v1098
    %v1100 = vpop.f32.mrb[0].mxu0
    %v1101 = vadd.f32 %v796, %v1100
    %v1102 = vpop.f32.mrb[0].mxu0
    %v1103 = vadd.f32 %v800, %v1102
    %1104 = vmatprep.mubr.bf16.mxu0 0
    %1105 = vmatmul.mubr.bf16.gmra.mrb[0].mxu0 %v822
    %v1106 = vpop.f32.mrb[0].mxu0
    %v1107 = vadd.f32 %v796, %v1106
    %v1108 = vpop.f32.mrb[0].mxu0
    %v1109 = vadd.f32 %v800, %v1108
    %v1110 = vpop.f32.mrb[0].mxu0
    %v1111 = vadd.f32 %v796, %v1110
    %v1112 = vpop.f32.mrb[0].mxu0
    %v1113 = vadd.f32 %v800, %v1112
    %1114 = vmatprep.mubr.bf16.mxu0 0
    %1115 = vmatmul.mubr.bf16.gmra.mrb[0].mxu0 %v823
    %v1116 = vpop.f32.mrb[0].mxu0
    %v1117 = vadd.f32 %v796, %v1116
    %v1118 = vpop.f32.mrb[0].mxu0
    %v1119 = vadd.f32 %v800, %v1118
    %v1120 = vpop.f32.mrb[0].mxu0
    %v1121 = vadd.f32 %v796, %v1120
    %v1122 = vpop.f32.mrb[0].mxu0
    %v1123 = vadd.f32 %v800, %v1122
    %1124 = vmatprep.mubr.bf16.mxu0 0
    %1125 = vmatmul.mubr.bf16.gmra.mrb[0].mxu0 %v824
    %v1126 = vpop.f32.mrb[0].mxu0
    %v1127 = vadd.f32 %v796, %v1126
    %v1128 = vpop.f32.mrb[0].mxu0
    %v1129 = vadd.f32 %v800, %v1128
    %v1130 = vpop.f32.mrb[0].mxu0
    %v1131 = vadd.f32 %v796, %v1130
    %v1132 = vpop.f32.mrb[0].mxu0
    %v1133 = vadd.f32 %v800, %v1132
    %1134 = vdwg.mxu0
    %1135 = vst [vmem:[#allocation7] sm:$0xff] %v1024
    %1136 = vst [vmem:[#allocation7 + $0x8] sm:$0xff] %v1026
    %1137 = vst [vmem:[#allocation7 + $0x10] sm:$0xff] %v1097
    %1138 = vst [vmem:[#allocation7 + $0x18] sm:$0xff] %v1099
    %1139 = vst [vmem:[#allocation7 + $0x20] sm:$0xff] %v1028
    %1140 = vst [vmem:[#allocation7 + $0x28] sm:$0xff] %v1030
    %1141 = vst [vmem:[#allocation7 + $0x30] sm:$0xff] %v1101
    %1142 = vst [vmem:[#allocation7 + $0x38] sm:$0xff] %v1103
    %1143 = vst [vmem:[#allocation7 + $0x40] sm:$0xff] %v1034
    %1144 = vst [vmem:[#allocation7 + $0x48] sm:$0xff] %v1036
    %1145 = vst [vmem:[#allocation7 + $0x50] sm:$0xff] %v1107
    %1146 = vst [vmem:[#allocation7 + $0x58] sm:$0xff] %v1109
    %1147 = vst [vmem:[#allocation7 + $0x60] sm:$0xff] %v1038
    %1148 = vst [vmem:[#allocation7 + $0x68] sm:$0xff] %v1040
    %1149 = vst [vmem:[#allocation7 + $0x70] sm:$0xff] %v1111
    %1150 = vst [vmem:[#allocation7 + $0x78] sm:$0xff] %v1113
    %1151 = vst [vmem:[#allocation7 + $0x80] sm:$0xff] %v1044
    %1152 = vst [vmem:[#allocation7 + $0x88] sm:$0xff] %v1046
    %1153 = vst [vmem:[#allocation7 + $0x90] sm:$0xff] %v1117
    %1154 = vst [vmem:[#allocation7 + $0x98] sm:$0xff] %v1119
    %1155 = vst [vmem:[#allocation7 + $0xa0] sm:$0xff] %v1048
    %1156 = vst [vmem:[#allocation7 + $0xa8] sm:$0xff] %v1050
    %1157 = vst [vmem:[#allocation7 + $0xb0] sm:$0xff] %v1121
    %1158 = vst [vmem:[#allocation7 + $0xb8] sm:$0xff] %v1123
    %1159 = vst [vmem:[#allocation7 + $0xc0] sm:$0xff] %v1054
    %1160 = vst [vmem:[#allocation7 + $0xc8] sm:$0xff] %v1056
    %1161 = vst [vmem:[#allocation7 + $0xd0] sm:$0xff] %v1127
    %1162 = vst [vmem:[#allocation7 + $0xd8] sm:$0xff] %v1129
    %1163 = vst [vmem:[#allocation7 + $0xe0] sm:$0xff] %v1058
    %1164 = vst [vmem:[#allocation7 + $0xe8] sm:$0xff] %v1060
    %1165 = vst [vmem:[#allocation7 + $0xf0] sm:$0xff] %v1131
    %1166 = vst [vmem:[#allocation7 + $0xf8] sm:$0xff] %v1133
    %v1167 = vld [vmem:[#allocation7] sm:$0xff]
    %v1168 = vld [vmem:[#allocation7 + $0x8] sm:$0xff]
    %v1169 = vld [vmem:[#allocation7 + $0x10] sm:$0xff]
    %v1170 = vld [vmem:[#allocation7 + $0x18] sm:$0xff]
    %v1171 = vld [vmem:[#allocation11] sm:$0xff]
    %v1172 = vld [vmem:[#allocation11 + $0x8] sm:$0xff]
    %v1173 = vld [vmem:[#allocation11 + $0x10] sm:$0xff]
    %v1174 = vld [vmem:[#allocation11 + $0x18] sm:$0xff]
    %v1175 = vld [vmem:[#allocation11 + $0x20] sm:$0xff]
    %v1176 = vld [vmem:[#allocation11 + $0x28] sm:$0xff]
    %v1177 = vld [vmem:[#allocation11 + $0x30] sm:$0xff]
    %v1178 = vld [vmem:[#allocation11 + $0x38] sm:$0xff]
    %v1179 = vld [vmem:[#allocation11 + $0x40] sm:$0xff]
    %v1180 = vld [vmem:[#allocation11 + $0x48] sm:$0xff]
    %v1181 = vld [vmem:[#allocation11 + $0x50] sm:$0xff]
    %v1182 = vld [vmem:[#allocation11 + $0x58] sm:$0xff]
    %v1183 = vld [vmem:[#allocation11 + $0x60] sm:$0xff]
    %v1184 = vld [vmem:[#allocation11 + $0x68] sm:$0xff]
    %v1185 = vld [vmem:[#allocation11 + $0x70] sm:$0xff]
    %v1186 = vld [vmem:[#allocation11 + $0x78] sm:$0xff]
    %v1187 = vld [vmem:[#allocation11 + $0x80] sm:$0xff]
    %v1188 = vld [vmem:[#allocation11 + $0x88] sm:$0xff]
    %v1189 = vld [vmem:[#allocation11 + $0x90] sm:$0xff]
    %v1190 = vld [vmem:[#allocation11 + $0x98] sm:$0xff]
    %v1191 = vld [vmem:[#allocation11 + $0xa0] sm:$0xff]
    %v1192 = vld [vmem:[#allocation11 + $0xa8] sm:$0xff]
    %v1193 = vld [vmem:[#allocation11 + $0xb0] sm:$0xff]
    %v1194 = vld [vmem:[#allocation11 + $0xb8] sm:$0xff]
    %v1195 = vld [vmem:[#allocation11 + $0xc0] sm:$0xff]
    %v1196 = vld [vmem:[#allocation11 + $0xc8] sm:$0xff]
    %v1197 = vld [vmem:[#allocation11 + $0xd0] sm:$0xff]
    %v1198 = vld [vmem:[#allocation11 + $0xd8] sm:$0xff]
    %v1199 = vld [vmem:[#allocation11 + $0xe0] sm:$0xff]
    %v1200 = vld [vmem:[#allocation11 + $0xe8] sm:$0xff]
    %v1201 = vld [vmem:[#allocation11 + $0xf0] sm:$0xff]
    %v1202 = vld [vmem:[#allocation11 + $0xf8] sm:$0xff]
    %v1235 = vunpack.c.l.b16 %v1171
    %v1236 = vunpack.c.h.b16 %v1171
    %v1237 = vunpack.c.l.b16 %v1172
    %v1238 = vunpack.c.h.b16 %v1172
    %v1239 = vunpack.c.l.b16 %v1173
    %v1240 = vunpack.c.h.b16 %v1173
    %v1241 = vunpack.c.l.b16 %v1174
    %v1242 = vunpack.c.h.b16 %v1174
    %v1243 = vunpack.c.l.b16 %v1175
    %v1244 = vunpack.c.h.b16 %v1175
    %v1245 = vunpack.c.l.b16 %v1176
    %v1246 = vunpack.c.h.b16 %v1176
    %v1247 = vunpack.c.l.b16 %v1177
    %v1248 = vunpack.c.h.b16 %v1177
    %v1249 = vunpack.c.l.b16 %v1178
    %v1250 = vunpack.c.h.b16 %v1178
    %v1251 = vunpack.c.l.b16 %v1179
    %v1252 = vunpack.c.h.b16 %v1179
    %v1253 = vunpack.c.l.b16 %v1180
    %v1254 = vunpack.c.h.b16 %v1180
    %v1255 = vunpack.c.l.b16 %v1181
    %v1256 = vunpack.c.h.b16 %v1181
    %v1257 = vunpack.c.l.b16 %v1182
    %v1258 = vunpack.c.h.b16 %v1182
    %v1259 = vunpack.c.l.b16 %v1183
    %v1260 = vunpack.c.h.b16 %v1183
    %v1261 = vunpack.c.l.b16 %v1184
    %v1262 = vunpack.c.h.b16 %v1184
    %v1263 = vunpack.c.l.b16 %v1185
    %v1264 = vunpack.c.h.b16 %v1185
    %v1265 = vunpack.c.l.b16 %v1186
    %v1266 = vunpack.c.h.b16 %v1186
    %v1267 = vunpack.c.l.b16 %v1187
    %v1268 = vunpack.c.h.b16 %v1187
    %v1269 = vunpack.c.l.b16 %v1188
    %v1270 = vunpack.c.h.b16 %v1188
    %v1271 = vunpack.c.l.b16 %v1189
    %v1272 = vunpack.c.h.b16 %v1189
    %v1273 = vunpack.c.l.b16 %v1190
    %v1274 = vunpack.c.h.b16 %v1190
    %v1275 = vunpack.c.l.b16 %v1191
    %v1276 = vunpack.c.h.b16 %v1191
    %v1277 = vunpack.c.l.b16 %v1192
    %v1278 = vunpack.c.h.b16 %v1192
    %v1279 = vunpack.c.l.b16 %v1193
    %v1280 = vunpack.c.h.b16 %v1193
    %v1281 = vunpack.c.l.b16 %v1194
    %v1282 = vunpack.c.h.b16 %v1194
    %v1283 = vunpack.c.l.b16 %v1195
    %v1284 = vunpack.c.h.b16 %v1195
    %v1285 = vunpack.c.l.b16 %v1196
    %v1286 = vunpack.c.h.b16 %v1196
    %v1287 = vunpack.c.l.b16 %v1197
    %v1288 = vunpack.c.h.b16 %v1197
    %v1289 = vunpack.c.l.b16 %v1198
    %v1290 = vunpack.c.h.b16 %v1198
    %v1291 = vunpack.c.l.b16 %v1199
    %v1292 = vunpack.c.h.b16 %v1199
    %v1293 = vunpack.c.l.b16 %v1200
    %v1294 = vunpack.c.h.b16 %v1200
    %v1295 = vunpack.c.l.b16 %v1201
    %v1296 = vunpack.c.h.b16 %v1201
    %v1297 = vunpack.c.l.b16 %v1202
    %v1298 = vunpack.c.h.b16 %v1202
    %v1299 = vpack.c.b16 %v1239, %v1235
    %v1300 = vpack.c.b16 %v1240, %v1236
    %v1301 = vpack.c.b16 %v1241, %v1237
    %v1302 = vpack.c.b16 %v1242, %v1238
    %v1303 = vpack.c.b16 %v1247, %v1243
    %v1304 = vpack.c.b16 %v1248, %v1244
    %v1305 = vpack.c.b16 %v1249, %v1245
    %v1306 = vpack.c.b16 %v1250, %v1246
    %v1307 = vpack.c.b16 %v1255, %v1251
    %v1308 = vpack.c.b16 %v1256, %v1252
    %v1309 = vpack.c.b16 %v1257, %v1253
    %v1310 = vpack.c.b16 %v1258, %v1254
    %v1311 = vpack.c.b16 %v1263, %v1259
    %v1312 = vpack.c.b16 %v1264, %v1260
    %v1313 = vpack.c.b16 %v1265, %v1261
    %v1314 = vpack.c.b16 %v1266, %v1262
    %v1315 = vpack.c.b16 %v1271, %v1267
    %v1316 = vpack.c.b16 %v1272, %v1268
    %v1317 = vpack.c.b16 %v1273, %v1269
    %v1318 = vpack.c.b16 %v1274, %v1270
    %v1319 = vpack.c.b16 %v1279, %v1275
    %v1320 = vpack.c.b16 %v1280, %v1276
    %v1321 = vpack.c.b16 %v1281, %v1277
    %v1322 = vpack.c.b16 %v1282, %v1278
    %v1323 = vpack.c.b16 %v1287, %v1283
    %v1324 = vpack.c.b16 %v1288, %v1284
    %v1325 = vpack.c.b16 %v1289, %v1285
    %v1326 = vpack.c.b16 %v1290, %v1286
    %v1327 = vpack.c.b16 %v1295, %v1291
    %v1328 = vpack.c.b16 %v1296, %v1292
    %v1329 = vpack.c.b16 %v1297, %v1293
    %v1330 = vpack.c.b16 %v1298, %v1294
    %1363 = vmatprep.subr.bf16.mxu0 %v1300
    %1364 = vmatpush1.bf16.msra.mxu0 %v1299
    %1365 = vmatprep.subr.bf16.mxu0 %v1304
    %1366 = vmatpush1.bf16.msra.mxu0 %v1303
    %1367 = vmatprep.subr.bf16.mxu0 %v1308
    %1368 = vmatpush1.bf16.msra.mxu0 %v1307
    %1369 = vmatprep.subr.bf16.mxu0 %v1312
    %1370 = vmatpush1.bf16.msra.mxu0 %v1311
    %1371 = vmatprep.subr.bf16.mxu0 %v1316
    %1372 = vmatpush1.bf16.msra.mxu0 %v1315
    %1373 = vmatprep.subr.bf16.mxu0 %v1320
    %1374 = vmatpush1.bf16.msra.mxu0 %v1319
    %1375 = vmatprep.subr.bf16.mxu0 %v1324
    %1376 = vmatpush1.bf16.msra.mxu0 %v1323
    %1377 = vmatprep.subr.bf16.mxu0 %v1328
    %1378 = vmatpush1.bf16.msra.mxu0 %v1327
    %1379 = vmatprep.subr.bf16.mxu0 0
    %1380 = vmatpush1.bf16.msra.mxu0 0
    %1381 = vmatprep.subr.bf16.mxu0 0
    %1382 = vmatpush1.bf16.msra.mxu0 0
    %1383 = vmatprep.subr.bf16.mxu0 0
    %1384 = vmatpush1.bf16.msra.mxu0 0
    %1385 = vmatprep.subr.bf16.mxu0 0
    %1386 = vmatpush1.bf16.msra.mxu0 0
    %1387 = vmatprep.subr.bf16.mxu0 0
    %1388 = vmatpush1.bf16.msra.mxu0 0
    %1389 = vmatprep.subr.bf16.mxu0 0
    %1390 = vmatpush1.bf16.msra.mxu0 0
    %1391 = vmatprep.subr.bf16.mxu0 0
    %1392 = vmatpush1.bf16.msra.mxu0 0
    %1393 = vmatprep.subr.bf16.mxu0 0
    %1394 = vmatpush1.bf16.msra.mxu0 0
    %1395 = vmatprep.mubr.bf16.mxu0 0
    %1396 = vmatmul.mubr.bf16.gmra.mrb[0].mxu0 0
    %v1397 = vpop.f32.mrb[0].mxu0
    %v1398 = vadd.f32 0.0, %v1397
    %v1399 = vpop.f32.mrb[0].mxu0
    %v1400 = vadd.f32 0.0, %v1399
    %v1401 = vpop.f32.mrb[0].mxu0
    %v1402 = vpop.f32.mrb[0].mxu0
    %1403 = vdwg.mxu0
    %1404 = vmatprep.subr.bf16.mxu0 %v1302
    %1405 = vmatpush1.bf16.msra.mxu0 %v1301
    %1406 = vmatprep.subr.bf16.mxu0 %v1306
    %1407 = vmatpush1.bf16.msra.mxu0 %v1305
    %1408 = vmatprep.subr.bf16.mxu0 %v1310
    %1409 = vmatpush1.bf16.msra.mxu0 %v1309
    %1410 = vmatprep.subr.bf16.mxu0 %v1314
    %1411 = vmatpush1.bf16.msra.mxu0 %v1313
    %1412 = vmatprep.subr.bf16.mxu0 %v1318
    %1413 = vmatpush1.bf16.msra.mxu0 %v1317
    %1414 = vmatprep.subr.bf16.mxu0 %v1322
    %1415 = vmatpush1.bf16.msra.mxu0 %v1321
    %1416 = vmatprep.subr.bf16.mxu0 %v1326
    %1417 = vmatpush1.bf16.msra.mxu0 %v1325
    %1418 = vmatprep.subr.bf16.mxu0 %v1330
    %1419 = vmatpush1.bf16.msra.mxu0 %v1329
    %1420 = vmatprep.subr.bf16.mxu0 0
    %1421 = vmatpush1.bf16.msra.mxu0 0
    %1422 = vmatprep.subr.bf16.mxu0 0
    %1423 = vmatpush1.bf16.msra.mxu0 0
    %1424 = vmatprep.subr.bf16.mxu0 0
    %1425 = vmatpush1.bf16.msra.mxu0 0
    %1426 = vmatprep.subr.bf16.mxu0 0
    %1427 = vmatpush1.bf16.msra.mxu0 0
    %1428 = vmatprep.subr.bf16.mxu0 0
    %1429 = vmatpush1.bf16.msra.mxu0 0
    %1430 = vmatprep.subr.bf16.mxu0 0
    %1431 = vmatpush1.bf16.msra.mxu0 0
    %1432 = vmatprep.subr.bf16.mxu0 0
    %1433 = vmatpush1.bf16.msra.mxu0 0
    %1434 = vmatprep.subr.bf16.mxu0 0
    %1435 = vmatpush1.bf16.msra.mxu0 0
    %1436 = vmatprep.mubr.bf16.mxu0 0
    %1437 = vmatmul.mubr.bf16.gmra.mrb[0].mxu0 0
    %v1438 = vpop.f32.mrb[0].mxu0
    %v1439 = vadd.f32 0.0, %v1438
    %v1440 = vpop.f32.mrb[0].mxu0
    %v1441 = vadd.f32 0.0, %v1440
    %v1442 = vpop.f32.mrb[0].mxu0
    %v1443 = vpop.f32.mrb[0].mxu0
    %1444 = vdwg.mxu0
    %v1445 = vadd.f32 %v1167, %v1398
    %v1446 = vadd.f32 %v1168, %v1400
    %v1447 = vadd.f32 %v1169, %v1439
    %v1448 = vadd.f32 %v1170, %v1441
    %v1449 = vxor.u32 %v1445, 2147483648
    %v1450 = vmul.f32 %v1449, 1.442695
    %v1451 = vpow.pop %v1450
    %v1452 = vadd.f32 %v1451, 1.0
    %v1453 = vrcp.pop %v1452
    %v1454 = vmul.f32 1.0, %v1453
    %v1455 = vxor.u32 %v1446, 2147483648
    %v1456 = vmul.f32 %v1455, 1.442695
    %v1457 = vpow.pop %v1456
    %v1458 = vadd.f32 %v1457, 1.0
    %v1459 = vrcp.pop %v1458
    %v1460 = vmul.f32 1.0, %v1459
    %v1461 = vtanh.pop %v1447
    %v1462 = vxor.u32 %v1448, 2147483648
    %v1463 = vmul.f32 %v1462, 1.442695
    %v1464 = vpow.pop %v1463
    %v1465 = vadd.f32 %v1464, 1.0
    %v1466 = vrcp.pop %v1465
    %v1467 = vmul.f32 1.0, %v1466
    %v1468 = vmul.f32 %v1460, 0.0
    %v1469 = vmul.f32 %v1454, %v1461
    %v1470 = vadd.f32 %v1468, %v1469
    %v1471 = vtanh.pop %v1470
    %v1472 = vmul.f32 %v1467, %v1471
    %v1473 = vld [vmem:[%s1] sm:$0xff]
    %vm1474 = vcmp.gt.f32.partialorder %v1473, 0.5
    %v1475 = vsel %vm1474, %v1472, 0.0
    %v1476 = vsel %vm1474, %v1470, 0.0
    %v1477 = vpack.c.bf16 %v1475, %v1475
    %1478 = vst [vmem:[#allocation6] sm:$0xf] %v1477
    %v1480 = vrot.slane %v1477, 4
    %1482 = vst [vmem:[#allocation6 + $0x38] sm:$0xf0] %v1480
    %v1483 = vld [vmem:[#allocation7 + $0x20] sm:$0xff]
    %v1484 = vld [vmem:[#allocation7 + $0x28] sm:$0xff]
    %v1485 = vld [vmem:[#allocation7 + $0x30] sm:$0xff]
    %v1486 = vld [vmem:[#allocation7 + $0x38] sm:$0xff]
    %v1487 = vld [vmem:[#allocation11] sm:$0xff]
    %v1488 = vld [vmem:[#allocation11 + $0x8] sm:$0xff]
    %v1489 = vld [vmem:[#allocation11 + $0x10] sm:$0xff]
    %v1490 = vld [vmem:[#allocation11 + $0x18] sm:$0xff]
    %v1491 = vld [vmem:[#allocation11 + $0x20] sm:$0xff]
    %v1492 = vld [vmem:[#allocation11 + $0x28] sm:$0xff]
    %v1493 = vld [vmem:[#allocation11 + $0x30] sm:$0xff]
    %v1494 = vld [vmem:[#allocation11 + $0x38] sm:$0xff]
    %v1495 = vld [vmem:[#allocation11 + $0x40] sm:$0xff]
    %v1496 = vld [vmem:[#allocation11 + $0x48] sm:$0xff]
    %v1497 = vld [vmem:[#allocation11 + $0x50] sm:$0xff]
    %v1498 = vld [vmem:[#allocation11 + $0x58] sm:$0xff]
    %v1499 = vld [vmem:[#allocation11 + $0x60] sm:$0xff]
    %v1500 = vld [vmem:[#allocation11 + $0x68] sm:$0xff]
    %v1501 = vld [vmem:[#allocation11 + $0x70] sm:$0xff]
    %v1502 = vld [vmem:[#allocation11 + $0x78] sm:$0xff]
    %v1503 = vld [vmem:[#allocation11 + $0x80] sm:$0xff]
    %v1504 = vld [vmem:[#allocation11 + $0x88] sm:$0xff]
    %v1505 = vld [vmem:[#allocation11 + $0x90] sm:$0xff]
    %v1506 = vld [vmem:[#allocation11 + $0x98] sm:$0xff]
    %v1507 = vld [vmem:[#allocation11 + $0xa0] sm:$0xff]
    %v1508 = vld [vmem:[#allocation11 + $0xa8] sm:$0xff]
    %v1509 = vld [vmem:[#allocation11 + $0xb0] sm:$0xff]
    %v1510 = vld [vmem:[#allocation11 + $0xb8] sm:$0xff]
    %v1511 = vld [vmem:[#allocation11 + $0xc0] sm:$0xff]
    %v1512 = vld [vmem:[#allocation11 + $0xc8] sm:$0xff]
    %v1513 = vld [vmem:[#allocation11 + $0xd0] sm:$0xff]
    %v1514 = vld [vmem:[#allocation11 + $0xd8] sm:$0xff]
    %v1515 = vld [vmem:[#allocation11 + $0xe0] sm:$0xff]
    %v1516 = vld [vmem:[#allocation11 + $0xe8] sm:$0xff]
    %v1517 = vld [vmem:[#allocation11 + $0xf0] sm:$0xff]
    %v1518 = vld [vmem:[#allocation11 + $0xf8] sm:$0xff]
    %v1551 = vunpack.c.l.b16 %v1487
    %v1552 = vunpack.c.h.b16 %v1487
    %v1553 = vunpack.c.l.b16 %v1488
    %v1554 = vunpack.c.h.b16 %v1488
    %v1555 = vunpack.c.l.b16 %v1489
    %v1556 = vunpack.c.h.b16 %v1489
    %v1557 = vunpack.c.l.b16 %v1490
    %v1558 = vunpack.c.h.b16 %v1490
    %v1559 = vunpack.c.l.b16 %v1491
    %v1560 = vunpack.c.h.b16 %v1491
    %v1561 = vunpack.c.l.b16 %v1492
    %v1562 = vunpack.c.h.b16 %v1492
    %v1563 = vunpack.c.l.b16 %v1493
    %v1564 = vunpack.c.h.b16 %v1493
    %v1565 = vunpack.c.l.b16 %v1494
    %v1566 = vunpack.c.h.b16 %v1494
    %v1567 = vunpack.c.l.b16 %v1495
    %v1568 = vunpack.c.h.b16 %v1495
    %v1569 = vunpack.c.l.b16 %v1496
    %v1570 = vunpack.c.h.b16 %v1496
    %v1571 = vunpack.c.l.b16 %v1497
    %v1572 = vunpack.c.h.b16 %v1497
    %v1573 = vunpack.c.l.b16 %v1498
    %v1574 = vunpack.c.h.b16 %v1498
    %v1575 = vunpack.c.l.b16 %v1499
    %v1576 = vunpack.c.h.b16 %v1499
    %v1577 = vunpack.c.l.b16 %v1500
    %v1578 = vunpack.c.h.b16 %v1500
    %v1579 = vunpack.c.l.b16 %v1501
    %v1580 = vunpack.c.h.b16 %v1501
    %v1581 = vunpack.c.l.b16 %v1502
    %v1582 = vunpack.c.h.b16 %v1502
    %v1583 = vunpack.c.l.b16 %v1503
    %v1584 = vunpack.c.h.b16 %v1503
    %v1585 = vunpack.c.l.b16 %v1504
    %v1586 = vunpack.c.h.b16 %v1504
    %v1587 = vunpack.c.l.b16 %v1505
    %v1588 = vunpack.c.h.b16 %v1505
    %v1589 = vunpack.c.l.b16 %v1506
    %v1590 = vunpack.c.h.b16 %v1506
    %v1591 = vunpack.c.l.b16 %v1507
    %v1592 = vunpack.c.h.b16 %v1507
    %v1593 = vunpack.c.l.b16 %v1508
    %v1594 = vunpack.c.h.b16 %v1508
    %v1595 = vunpack.c.l.b16 %v1509
    %v1596 = vunpack.c.h.b16 %v1509
    %v1597 = vunpack.c.l.b16 %v1510
    %v1598 = vunpack.c.h.b16 %v1510
    %v1599 = vunpack.c.l.b16 %v1511
    %v1600 = vunpack.c.h.b16 %v1511
    %v1601 = vunpack.c.l.b16 %v1512
    %v1602 = vunpack.c.h.b16 %v1512
    %v1603 = vunpack.c.l.b16 %v1513
    %v1604 = vunpack.c.h.b16 %v1513
    %v1605 = vunpack.c.l.b16 %v1514
    %v1606 = vunpack.c.h.b16 %v1514
    %v1607 = vunpack.c.l.b16 %v1515
    %v1608 = vunpack.c.h.b16 %v1515
    %v1609 = vunpack.c.l.b16 %v1516
    %v1610 = vunpack.c.h.b16 %v1516
    %v1611 = vunpack.c.l.b16 %v1517
    %v1612 = vunpack.c.h.b16 %v1517
    %v1613 = vunpack.c.l.b16 %v1518
    %v1614 = vunpack.c.h.b16 %v1518
    %v1615 = vpack.c.b16 %v1555, %v1551
    %v1616 = vpack.c.b16 %v1556, %v1552
    %v1617 = vpack.c.b16 %v1557, %v1553
    %v1618 = vpack.c.b16 %v1558, %v1554
    %v1619 = vpack.c.b16 %v1563, %v1559
    %v1620 = vpack.c.b16 %v1564, %v1560
    %v1621 = vpack.c.b16 %v1565, %v1561
    %v1622 = vpack.c.b16 %v1566, %v1562
    %v1623 = vpack.c.b16 %v1571, %v1567
    %v1624 = vpack.c.b16 %v1572, %v1568
    %v1625 = vpack.c.b16 %v1573, %v1569
    %v1626 = vpack.c.b16 %v1574, %v1570
    %v1627 = vpack.c.b16 %v1579, %v1575
    %v1628 = vpack.c.b16 %v1580, %v1576
    %v1629 = vpack.c.b16 %v1581, %v1577
    %v1630 = vpack.c.b16 %v1582, %v1578
    %v1631 = vpack.c.b16 %v1587, %v1583
    %v1632 = vpack.c.b16 %v1588, %v1584
    %v1633 = vpack.c.b16 %v1589, %v1585
    %v1634 = vpack.c.b16 %v1590, %v1586
    %v1635 = vpack.c.b16 %v1595, %v1591
    %v1636 = vpack.c.b16 %v1596, %v1592
    %v1637 = vpack.c.b16 %v1597, %v1593
    %v1638 = vpack.c.b16 %v1598, %v1594
    %v1639 = vpack.c.b16 %v1603, %v1599
    %v1640 = vpack.c.b16 %v1604, %v1600
    %v1641 = vpack.c.b16 %v1605, %v1601
    %v1642 = vpack.c.b16 %v1606, %v1602
    %v1643 = vpack.c.b16 %v1611, %v1607
    %v1644 = vpack.c.b16 %v1612, %v1608
    %v1645 = vpack.c.b16 %v1613, %v1609
    %v1646 = vpack.c.b16 %v1614, %v1610
    %1679 = vmatprep.subr.bf16.mxu0 %v1616
    %1680 = vmatpush1.bf16.msra.mxu0 %v1615
    %1681 = vmatprep.subr.bf16.mxu0 %v1620
    %1682 = vmatpush1.bf16.msra.mxu0 %v1619
    %1683 = vmatprep.subr.bf16.mxu0 %v1624
    %1684 = vmatpush1.bf16.msra.mxu0 %v1623
    %1685 = vmatprep.subr.bf16.mxu0 %v1628
    %1686 = vmatpush1.bf16.msra.mxu0 %v1627
    %1687 = vmatprep.subr.bf16.mxu0 %v1632
    %1688 = vmatpush1.bf16.msra.mxu0 %v1631
    %1689 = vmatprep.subr.bf16.mxu0 %v1636
    %1690 = vmatpush1.bf16.msra.mxu0 %v1635
    %1691 = vmatprep.subr.bf16.mxu0 %v1640
    %1692 = vmatpush1.bf16.msra.mxu0 %v1639
    %1693 = vmatprep.subr.bf16.mxu0 %v1644
    %1694 = vmatpush1.bf16.msra.mxu0 %v1643
    %1695 = vmatprep.subr.bf16.mxu0 0
    %1696 = vmatpush1.bf16.msra.mxu0 0
    %1697 = vmatprep.subr.bf16.mxu0 0
    %1698 = vmatpush1.bf16.msra.mxu0 0
    %1699 = vmatprep.subr.bf16.mxu0 0
    %1700 = vmatpush1.bf16.msra.mxu0 0
    %1701 = vmatprep.subr.bf16.mxu0 0
    %1702 = vmatpush1.bf16.msra.mxu0 0
    %1703 = vmatprep.subr.bf16.mxu0 0
    %1704 = vmatpush1.bf16.msra.mxu0 0
    %1705 = vmatprep.subr.bf16.mxu0 0
    %1706 = vmatpush1.bf16.msra.mxu0 0
    %1707 = vmatprep.subr.bf16.mxu0 0
    %1708 = vmatpush1.bf16.msra.mxu0 0
    %1709 = vmatprep.subr.bf16.mxu0 0
    %1710 = vmatpush1.bf16.msra.mxu0 0
    %1711 = vmatprep.mubr.bf16.mxu0 0
    %1712 = vmatmul.mubr.bf16.gmra.mrb[0].mxu0 %v1477
    %v1713 = vpop.f32.mrb[0].mxu0
    %v1714 = vadd.f32 0.0, %v1713
    %v1715 = vpop.f32.mrb[0].mxu0
    %v1716 = vadd.f32 0.0, %v1715
    %v1717 = vpop.f32.mrb[0].mxu0
    %v1718 = vpop.f32.mrb[0].mxu0
    %1719 = vdwg.mxu0
    %1720 = vmatprep.subr.bf16.mxu0 %v1618
    %1721 = vmatpush1.bf16.msra.mxu0 %v1617
    %1722 = vmatprep.subr.bf16.mxu0 %v1622
    %1723 = vmatpush1.bf16.msra.mxu0 %v1621
    %1724 = vmatprep.subr.bf16.mxu0 %v1626
    %1725 = vmatpush1.bf16.msra.mxu0 %v1625
    %1726 = vmatprep.subr.bf16.mxu0 %v1630
    %1727 = vmatpush1.bf16.msra.mxu0 %v1629
    %1728 = vmatprep.subr.bf16.mxu0 %v1634
    %1729 = vmatpush1.bf16.msra.mxu0 %v1633
    %1730 = vmatprep.subr.bf16.mxu0 %v1638
    %1731 = vmatpush1.bf16.msra.mxu0 %v1637
    %1732 = vmatprep.subr.bf16.mxu0 %v1642
    %1733 = vmatpush1.bf16.msra.mxu0 %v1641
    %1734 = vmatprep.subr.bf16.mxu0 %v1646
    %1735 = vmatpush1.bf16.msra.mxu0 %v1645
    %1736 = vmatprep.subr.bf16.mxu0 0
    %1737 = vmatpush1.bf16.msra.mxu0 0
    %1738 = vmatprep.subr.bf16.mxu0 0
    %1739 = vmatpush1.bf16.msra.mxu0 0
    %1740 = vmatprep.subr.bf16.mxu0 0
    %1741 = vmatpush1.bf16.msra.mxu0 0
    %1742 = vmatprep.subr.bf16.mxu0 0
    %1743 = vmatpush1.bf16.msra.mxu0 0
    %1744 = vmatprep.subr.bf16.mxu0 0
    %1745 = vmatpush1.bf16.msra.mxu0 0
    %1746 = vmatprep.subr.bf16.mxu0 0
    %1747 = vmatpush1.bf16.msra.mxu0 0
    %1748 = vmatprep.subr.bf16.mxu0 0
    %1749 = vmatpush1.bf16.msra.mxu0 0
    %1750 = vmatprep.subr.bf16.mxu0 0
    %1751 = vmatpush1.bf16.msra.mxu0 0
    %1752 = vmatprep.mubr.bf16.mxu0 0
    %1753 = vmatmul.mubr.bf16.gmra.mrb[0].mxu0 %v1477
    %v1754 = vpop.f32.mrb[0].mxu0
    %v1755 = vadd.f32 0.0, %v1754
    %v1756 = vpop.f32.mrb[0].mxu0
    %v1757 = vadd.f32 0.0, %v1756
    %v1758 = vpop.f32.mrb[0].mxu0
    %v1759 = vpop.f32.mrb[0].mxu0
    %1760 = vdwg.mxu0
    %v1761 = vadd.f32 %v1483, %v1714
    %v1762 = vadd.f32 %v1484, %v1716
    %v1763 = vadd.f32 %v1485, %v1755
    %v1764 = vadd.f32 %v1486, %v1757
    %v1765 = vxor.u32 %v1761, 2147483648
    %v1766 = vmul.f32 %v1765, 1.442695
    %v1767 = vpow.pop %v1766
    %v1768 = vadd.f32 %v1767, 1.0
    %v1769 = vrcp.pop %v1768
    %v1770 = vmul.f32 1.0, %v1769
    %v1771 = vxor.u32 %v1762, 2147483648
    %v1772 = vmul.f32 %v1771, 1.442695
    %v1773 = vpow.pop %v1772
    %v1774 = vadd.f32 %v1773, 1.0
    %v1775 = vrcp.pop %v1774
    %v1776 = vmul.f32 1.0, %v1775
    %v1777 = vtanh.pop %v1763
    %v1778 = vxor.u32 %v1764, 2147483648
    %v1779 = vmul.f32 %v1778, 1.442695
    %v1780 = vpow.pop %v1779
    %v1781 = vadd.f32 %v1780, 1.0
    %v1782 = vrcp.pop %v1781
    %v1783 = vmul.f32 1.0, %v1782
    %v1784 = vmul.f32 %v1776, %v1476
    %v1785 = vmul.f32 %v1770, %v1777
    %v1786 = vadd.f32 %v1784, %v1785
    %v1787 = vtanh.pop %v1786
    %v1788 = vmul.f32 %v1783, %v1787
    %s1789 = scalar_lea.vmem %s1, 8
    %v1790 = vld [vmem:[%s1789] sm:$0xff]
    %vm1791 = vcmp.gt.f32.partialorder %v1790, 0.5
    %v1792 = vsel %vm1791, %v1788, %v1475
    %v1793 = vsel %vm1791, %v1786, %v1476
    %v1794 = vpack.c.bf16 %v1792, %v1792
    %v1796 = vrot.slane %v1794, 4
    %1798 = vst [vmem:[#allocation6] sm:$0xf0] %v1796
    %1799 = vst [vmem:[#allocation6 + $0x38] sm:$0xf] %v1794
    %v1800 = vld [vmem:[#allocation7 + $0x40] sm:$0xff]
    %v1801 = vld [vmem:[#allocation7 + $0x48] sm:$0xff]
    %v1802 = vld [vmem:[#allocation7 + $0x50] sm:$0xff]
    %v1803 = vld [vmem:[#allocation7 + $0x58] sm:$0xff]
    %v1804 = vld [vmem:[#allocation11] sm:$0xff]
    %v1805 = vld [vmem:[#allocation11 + $0x8] sm:$0xff]
    %v1806 = vld [vmem:[#allocation11 + $0x10] sm:$0xff]
    %v1807 = vld [vmem:[#allocation11 + $0x18] sm:$0xff]
    %v1808 = vld [vmem:[#allocation11 + $0x20] sm:$0xff]
    %v1809 = vld [vmem:[#allocation11 + $0x28] sm:$0xff]
    %v1810 = vld [vmem:[#allocation11 + $0x30] sm:$0xff]
    %v1811 = vld [vmem:[#allocation11 + $0x38] sm:$0xff]
    %v1812 = vld [vmem:[#allocation11 + $0x40] sm:$0xff]
    %v1813 = vld [vmem:[#allocation11 + $0x48] sm:$0xff]
    %v1814 = vld [vmem:[#allocation11 + $0x50] sm:$0xff]
    %v1815 = vld [vmem:[#allocation11 + $0x58] sm:$0xff]
    %v1816 = vld [vmem:[#allocation11 + $0x60] sm:$0xff]
    %v1817 = vld [vmem:[#allocation11 + $0x68] sm:$0xff]
    %v1818 = vld [vmem:[#allocation11 + $0x70] sm:$0xff]
    %v1819 = vld [vmem:[#allocation11 + $0x78] sm:$0xff]
    %v1820 = vld [vmem:[#allocation11 + $0x80] sm:$0xff]
    %v1821 = vld [vmem:[#allocation11 + $0x88] sm:$0xff]
    %v1822 = vld [vmem:[#allocation11 + $0x90] sm:$0xff]
    %v1823 = vld [vmem:[#allocation11 + $0x98] sm:$0xff]
    %v1824 = vld [vmem:[#allocation11 + $0xa0] sm:$0xff]
    %v1825 = vld [vmem:[#allocation11 + $0xa8] sm:$0xff]
    %v1826 = vld [vmem:[#allocation11 + $0xb0] sm:$0xff]
    %v1827 = vld [vmem:[#allocation11 + $0xb8] sm:$0xff]
    %v1828 = vld [vmem:[#allocation11 + $0xc0] sm:$0xff]
    %v1829 = vld [vmem:[#allocation11 + $0xc8] sm:$0xff]
    %v1830 = vld [vmem:[#allocation11 + $0xd0] sm:$0xff]
    %v1831 = vld [vmem:[#allocation11 + $0xd8] sm:$0xff]
    %v1832 = vld [vmem:[#allocation11 + $0xe0] sm:$0xff]
    %v1833 = vld [vmem:[#allocation11 + $0xe8] sm:$0xff]
    %v1834 = vld [vmem:[#allocation11 + $0xf0] sm:$0xff]
    %v1835 = vld [vmem:[#allocation11 + $0xf8] sm:$0xff]
    %v1868 = vunpack.c.l.b16 %v1804
    %v1869 = vunpack.c.h.b16 %v1804
    %v1870 = vunpack.c.l.b16 %v1805
    %v1871 = vunpack.c.h.b16 %v1805
    %v1872 = vunpack.c.l.b16 %v1806
    %v1873 = vunpack.c.h.b16 %v1806
    %v1874 = vunpack.c.l.b16 %v1807
    %v1875 = vunpack.c.h.b16 %v1807
    %v1876 = vunpack.c.l.b16 %v1808
    %v1877 = vunpack.c.h.b16 %v1808
    %v1878 = vunpack.c.l.b16 %v1809
    %v1879 = vunpack.c.h.b16 %v1809
    %v1880 = vunpack.c.l.b16 %v1810
    %v1881 = vunpack.c.h.b16 %v1810
    %v1882 = vunpack.c.l.b16 %v1811
    %v1883 = vunpack.c.h.b16 %v1811
    %v1884 = vunpack.c.l.b16 %v1812
    %v1885 = vunpack.c.h.b16 %v1812
    %v1886 = vunpack.c.l.b16 %v1813
    %v1887 = vunpack.c.h.b16 %v1813
    %v1888 = vunpack.c.l.b16 %v1814
    %v1889 = vunpack.c.h.b16 %v1814
    %v1890 = vunpack.c.l.b16 %v1815
    %v1891 = vunpack.c.h.b16 %v1815
    %v1892 = vunpack.c.l.b16 %v1816
    %v1893 = vunpack.c.h.b16 %v1816
    %v1894 = vunpack.c.l.b16 %v1817
    %v1895 = vunpack.c.h.b16 %v1817
    %v1896 = vunpack.c.l.b16 %v1818
    %v1897 = vunpack.c.h.b16 %v1818
    %v1898 = vunpack.c.l.b16 %v1819
    %v1899 = vunpack.c.h.b16 %v1819
    %v1900 = vunpack.c.l.b16 %v1820
    %v1901 = vunpack.c.h.b16 %v1820
    %v1902 = vunpack.c.l.b16 %v1821
    %v1903 = vunpack.c.h.b16 %v1821
    %v1904 = vunpack.c.l.b16 %v1822
    %v1905 = vunpack.c.h.b16 %v1822
    %v1906 = vunpack.c.l.b16 %v1823
    %v1907 = vunpack.c.h.b16 %v1823
    %v1908 = vunpack.c.l.b16 %v1824
    %v1909 = vunpack.c.h.b16 %v1824
    %v1910 = vunpack.c.l.b16 %v1825
    %v1911 = vunpack.c.h.b16 %v1825
    %v1912 = vunpack.c.l.b16 %v1826
    %v1913 = vunpack.c.h.b16 %v1826
    %v1914 = vunpack.c.l.b16 %v1827
    %v1915 = vunpack.c.h.b16 %v1827
    %v1916 = vunpack.c.l.b16 %v1828
    %v1917 = vunpack.c.h.b16 %v1828
    %v1918 = vunpack.c.l.b16 %v1829
    %v1919 = vunpack.c.h.b16 %v1829
    %v1920 = vunpack.c.l.b16 %v1830
    %v1921 = vunpack.c.h.b16 %v1830
    %v1922 = vunpack.c.l.b16 %v1831
    %v1923 = vunpack.c.h.b16 %v1831
    %v1924 = vunpack.c.l.b16 %v1832
    %v1925 = vunpack.c.h.b16 %v1832
    %v1926 = vunpack.c.l.b16 %v1833
    %v1927 = vunpack.c.h.b16 %v1833
    %v1928 = vunpack.c.l.b16 %v1834
    %v1929 = vunpack.c.h.b16 %v1834
    %v1930 = vunpack.c.l.b16 %v1835
    %v1931 = vunpack.c.h.b16 %v1835
    %v1932 = vpack.c.b16 %v1872, %v1868
    %v1933 = vpack.c.b16 %v1873, %v1869
    %v1934 = vpack.c.b16 %v1874, %v1870
    %v1935 = vpack.c.b16 %v1875, %v1871
    %v1936 = vpack.c.b16 %v1880, %v1876
    %v1937 = vpack.c.b16 %v1881, %v1877
    %v1938 = vpack.c.b16 %v1882, %v1878
    %v1939 = vpack.c.b16 %v1883, %v1879
    %v1940 = vpack.c.b16 %v1888, %v1884
    %v1941 = vpack.c.b16 %v1889, %v1885
    %v1942 = vpack.c.b16 %v1890, %v1886
    %v1943 = vpack.c.b16 %v1891, %v1887
    %v1944 = vpack.c.b16 %v1896, %v1892
    %v1945 = vpack.c.b16 %v1897, %v1893
    %v1946 = vpack.c.b16 %v1898, %v1894
    %v1947 = vpack.c.b16 %v1899, %v1895
    %v1948 = vpack.c.b16 %v1904, %v1900
    %v1949 = vpack.c.b16 %v1905, %v1901
    %v1950 = vpack.c.b16 %v1906, %v1902
    %v1951 = vpack.c.b16 %v1907, %v1903
    %v1952 = vpack.c.b16 %v1912, %v1908
    %v1953 = vpack.c.b16 %v1913, %v1909
    %v1954 = vpack.c.b16 %v1914, %v1910
    %v1955 = vpack.c.b16 %v1915, %v1911
    %v1956 = vpack.c.b16 %v1920, %v1916
    %v1957 = vpack.c.b16 %v1921, %v1917
    %v1958 = vpack.c.b16 %v1922, %v1918
    %v1959 = vpack.c.b16 %v1923, %v1919
    %v1960 = vpack.c.b16 %v1928, %v1924
    %v1961 = vpack.c.b16 %v1929, %v1925
    %v1962 = vpack.c.b16 %v1930, %v1926
    %v1963 = vpack.c.b16 %v1931, %v1927
    %1996 = vmatprep.subr.bf16.mxu0 %v1933
    %1997 = vmatpush1.bf16.msra.mxu0 %v1932
    %1998 = vmatprep.subr.bf16.mxu0 %v1937
    %1999 = vmatpush1.bf16.msra.mxu0 %v1936
    %2000 = vmatprep.subr.bf16.mxu0 %v1941
    %2001 = vmatpush1.bf16.msra.mxu0 %v1940
    %2002 = vmatprep.subr.bf16.mxu0 %v1945
    %2003 = vmatpush1.bf16.msra.mxu0 %v1944
    %2004 = vmatprep.subr.bf16.mxu0 %v1949
    %2005 = vmatpush1.bf16.msra.mxu0 %v1948
    %2006 = vmatprep.subr.bf16.mxu0 %v1953
    %2007 = vmatpush1.bf16.msra.mxu0 %v1952
    %2008 = vmatprep.subr.bf16.mxu0 %v1957
    %2009 = vmatpush1.bf16.msra.mxu0 %v1956
    %2010 = vmatprep.subr.bf16.mxu0 %v1961
    %2011 = vmatpush1.bf16.msra.mxu0 %v1960
    %2012 = vmatprep.subr.bf16.mxu0 0
    %2013 = vmatpush1.bf16.msra.mxu0 0
    %2014 = vmatprep.subr.bf16.mxu0 0
    %2015 = vmatpush1.bf16.msra.mxu0 0
    %2016 = vmatprep.subr.bf16.mxu0 0
    %2017 = vmatpush1.bf16.msra.mxu0 0
    %2018 = vmatprep.subr.bf16.mxu0 0
    %2019 = vmatpush1.bf16.msra.mxu0 0
    %2020 = vmatprep.subr.bf16.mxu0 0
    %2021 = vmatpush1.bf16.msra.mxu0 0
    %2022 = vmatprep.subr.bf16.mxu0 0
    %2023 = vmatpush1.bf16.msra.mxu0 0
    %2024 = vmatprep.subr.bf16.mxu0 0
    %2025 = vmatpush1.bf16.msra.mxu0 0
    %2026 = vmatprep.subr.bf16.mxu0 0
    %2027 = vmatpush1.bf16.msra.mxu0 0
    %2028 = vmatprep.mubr.bf16.mxu0 0
    %2029 = vmatmul.mubr.bf16.gmra.mrb[0].mxu0 %v1794
    %v2030 = vpop.f32.mrb[0].mxu0
    %v2031 = vadd.f32 0.0, %v2030
    %v2032 = vpop.f32.mrb[0].mxu0
    %v2033 = vadd.f32 0.0, %v2032
    %v2034 = vpop.f32.mrb[0].mxu0
    %v2035 = vpop.f32.mrb[0].mxu0
    %2036 = vdwg.mxu0
    %2037 = vmatprep.subr.bf16.mxu0 %v1935
    %2038 = vmatpush1.bf16.msra.mxu0 %v1934
    %2039 = vmatprep.subr.bf16.mxu0 %v1939
    %2040 = vmatpush1.bf16.msra.mxu0 %v1938
    %2041 = vmatprep.subr.bf16.mxu0 %v1943
    %2042 = vmatpush1.bf16.msra.mxu0 %v1942
    %2043 = vmatprep.subr.bf16.mxu0 %v1947
    %2044 = vmatpush1.bf16.msra.mxu0 %v1946
    %2045 = vmatprep.subr.bf16.mxu0 %v1951
    %2046 = vmatpush1.bf16.msra.mxu0 %v1950
    %2047 = vmatprep.subr.bf16.mxu0 %v1955
    %2048 = vmatpush1.bf16.msra.mxu0 %v1954
    %2049 = vmatprep.subr.bf16.mxu0 %v1959
    %2050 = vmatpush1.bf16.msra.mxu0 %v1958
    %2051 = vmatprep.subr.bf16.mxu0 %v1963
    %2052 = vmatpush1.bf16.msra.mxu0 %v1962
    %2053 = vmatprep.subr.bf16.mxu0 0
    %2054 = vmatpush1.bf16.msra.mxu0 0
    %2055 = vmatprep.subr.bf16.mxu0 0
    %2056 = vmatpush1.bf16.msra.mxu0 0
    %2057 = vmatprep.subr.bf16.mxu0 0
    %2058 = vmatpush1.bf16.msra.mxu0 0
    %2059 = vmatprep.subr.bf16.mxu0 0
    %2060 = vmatpush1.bf16.msra.mxu0 0
    %2061 = vmatprep.subr.bf16.mxu0 0
    %2062 = vmatpush1.bf16.msra.mxu0 0
    %2063 = vmatprep.subr.bf16.mxu0 0
    %2064 = vmatpush1.bf16.msra.mxu0 0
    %2065 = vmatprep.subr.bf16.mxu0 0
    %2066 = vmatpush1.bf16.msra.mxu0 0
    %2067 = vmatprep.subr.bf16.mxu0 0
    %2068 = vmatpush1.bf16.msra.mxu0 0
    %2069 = vmatprep.mubr.bf16.mxu0 0
    %2070 = vmatmul.mubr.bf16.gmra.mrb[0].mxu0 %v1794
    %v2071 = vpop.f32.mrb[0].mxu0
    %v2072 = vadd.f32 0.0, %v2071
    %v2073 = vpop.f32.mrb[0].mxu0
    %v2074 = vadd.f32 0.0, %v2073
    %v2075 = vpop.f32.mrb[0].mxu0
    %v2076 = vpop.f32.mrb[0].mxu0
    %2077 = vdwg.mxu0
    %v2078 = vadd.f32 %v1800, %v2031
    %v2079 = vadd.f32 %v1801, %v2033
    %v2080 = vadd.f32 %v1802, %v2072
    %v2081 = vadd.f32 %v1803, %v2074
    %v2082 = vxor.u32 %v2078, 2147483648
    %v2083 = vmul.f32 %v2082, 1.442695
    %v2084 = vpow.pop %v2083
    %v2085 = vadd.f32 %v2084, 1.0
    %v2086 = vrcp.pop %v2085
    %v2087 = vmul.f32 1.0, %v2086
    %v2088 = vxor.u32 %v2079, 2147483648
    %v2089 = vmul.f32 %v2088, 1.442695
    %v2090 = vpow.pop %v2089
    %v2091 = vadd.f32 %v2090, 1.0
    %v2092 = vrcp.pop %v2091
    %v2093 = vmul.f32 1.0, %v2092
    %v2094 = vtanh.pop %v2080
    %v2095 = vxor.u32 %v2081, 2147483648
    %v2096 = vmul.f32 %v2095, 1.442695
    %v2097 = vpow.pop %v2096
    %v2098 = vadd.f32 %v2097, 1.0
    %v2099 = vrcp.pop %v2098
    %v2100 = vmul.f32 1.0, %v2099
    %v2101 = vmul.f32 %v2093, %v1793
    %v2102 = vmul.f32 %v2087, %v2094
    %v2103 = vadd.f32 %v2101, %v2102
    %v2104 = vtanh.pop %v2103
    %v2105 = vmul.f32 %v2100, %v2104
    %s2106 = scalar_lea.vmem %s1, 16
    %v2107 = vld [vmem:[%s2106] sm:$0xff]
    %vm2108 = vcmp.gt.f32.partialorder %v2107, 0.5
    %v2109 = vsel %vm2108, %v2105, %v1792
    %v2110 = vsel %vm2108, %v2103, %v1793
    %v2111 = vpack.c.bf16 %v2109, %v2109
    %2112 = vst [vmem:[#allocation6 + $0x10] sm:$0xf] %v2111
    %v2114 = vrot.slane %v2111, 4
    %2116 = vst [vmem:[#allocation6 + $0x28] sm:$0xf0] %v2114
    %v2117 = vld [vmem:[#allocation7 + $0x60] sm:$0xff]
    %v2118 = vld [vmem:[#allocation7 + $0x68] sm:$0xff]
    %v2119 = vld [vmem:[#allocation7 + $0x70] sm:$0xff]
    %v2120 = vld [vmem:[#allocation7 + $0x78] sm:$0xff]
    %v2121 = vld [vmem:[#allocation11] sm:$0xff]
    %v2122 = vld [vmem:[#allocation11 + $0x8] sm:$0xff]
    %v2123 = vld [vmem:[#allocation11 + $0x10] sm:$0xff]
    %v2124 = vld [vmem:[#allocation11 + $0x18] sm:$0xff]
    %v2125 = vld [vmem:[#allocation11 + $0x20] sm:$0xff]
    %v2126 = vld [vmem:[#allocation11 + $0x28] sm:$0xff]
    %v2127 = vld [vmem:[#allocation11 + $0x30] sm:$0xff]
    %v2128 = vld [vmem:[#allocation11 + $0x38] sm:$0xff]
    %v2129 = vld [vmem:[#allocation11 + $0x40] sm:$0xff]
    %v2130 = vld [vmem:[#allocation11 + $0x48] sm:$0xff]
    %v2131 = vld [vmem:[#allocation11 + $0x50] sm:$0xff]
    %v2132 = vld [vmem:[#allocation11 + $0x58] sm:$0xff]
    %v2133 = vld [vmem:[#allocation11 + $0x60] sm:$0xff]
    %v2134 = vld [vmem:[#allocation11 + $0x68] sm:$0xff]
    %v2135 = vld [vmem:[#allocation11 + $0x70] sm:$0xff]
    %v2136 = vld [vmem:[#allocation11 + $0x78] sm:$0xff]
    %v2137 = vld [vmem:[#allocation11 + $0x80] sm:$0xff]
    %v2138 = vld [vmem:[#allocation11 + $0x88] sm:$0xff]
    %v2139 = vld [vmem:[#allocation11 + $0x90] sm:$0xff]
    %v2140 = vld [vmem:[#allocation11 + $0x98] sm:$0xff]
    %v2141 = vld [vmem:[#allocation11 + $0xa0] sm:$0xff]
    %v2142 = vld [vmem:[#allocation11 + $0xa8] sm:$0xff]
    %v2143 = vld [vmem:[#allocation11 + $0xb0] sm:$0xff]
    %v2144 = vld [vmem:[#allocation11 + $0xb8] sm:$0xff]
    %v2145 = vld [vmem:[#allocation11 + $0xc0] sm:$0xff]
    %v2146 = vld [vmem:[#allocation11 + $0xc8] sm:$0xff]
    %v2147 = vld [vmem:[#allocation11 + $0xd0] sm:$0xff]
    %v2148 = vld [vmem:[#allocation11 + $0xd8] sm:$0xff]
    %v2149 = vld [vmem:[#allocation11 + $0xe0] sm:$0xff]
    %v2150 = vld [vmem:[#allocation11 + $0xe8] sm:$0xff]
    %v2151 = vld [vmem:[#allocation11 + $0xf0] sm:$0xff]
    %v2152 = vld [vmem:[#allocation11 + $0xf8] sm:$0xff]
    %v2185 = vunpack.c.l.b16 %v2121
    %v2186 = vunpack.c.h.b16 %v2121
    %v2187 = vunpack.c.l.b16 %v2122
    %v2188 = vunpack.c.h.b16 %v2122
    %v2189 = vunpack.c.l.b16 %v2123
    %v2190 = vunpack.c.h.b16 %v2123
    %v2191 = vunpack.c.l.b16 %v2124
    %v2192 = vunpack.c.h.b16 %v2124
    %v2193 = vunpack.c.l.b16 %v2125
    %v2194 = vunpack.c.h.b16 %v2125
    %v2195 = vunpack.c.l.b16 %v2126
    %v2196 = vunpack.c.h.b16 %v2126
    %v2197 = vunpack.c.l.b16 %v2127
    %v2198 = vunpack.c.h.b16 %v2127
    %v2199 = vunpack.c.l.b16 %v2128
    %v2200 = vunpack.c.h.b16 %v2128
    %v2201 = vunpack.c.l.b16 %v2129
    %v2202 = vunpack.c.h.b16 %v2129
    %v2203 = vunpack.c.l.b16 %v2130
    %v2204 = vunpack.c.h.b16 %v2130
    %v2205 = vunpack.c.l.b16 %v2131
    %v2206 = vunpack.c.h.b16 %v2131
    %v2207 = vunpack.c.l.b16 %v2132
    %v2208 = vunpack.c.h.b16 %v2132
    %v2209 = vunpack.c.l.b16 %v2133
    %v2210 = vunpack.c.h.b16 %v2133
    %v2211 = vunpack.c.l.b16 %v2134
    %v2212 = vunpack.c.h.b16 %v2134
    %v2213 = vunpack.c.l.b16 %v2135
    %v2214 = vunpack.c.h.b16 %v2135
    %v2215 = vunpack.c.l.b16 %v2136
    %v2216 = vunpack.c.h.b16 %v2136
    %v2217 = vunpack.c.l.b16 %v2137
    %v2218 = vunpack.c.h.b16 %v2137
    %v2219 = vunpack.c.l.b16 %v2138
    %v2220 = vunpack.c.h.b16 %v2138
    %v2221 = vunpack.c.l.b16 %v2139
    %v2222 = vunpack.c.h.b16 %v2139
    %v2223 = vunpack.c.l.b16 %v2140
    %v2224 = vunpack.c.h.b16 %v2140
    %v2225 = vunpack.c.l.b16 %v2141
    %v2226 = vunpack.c.h.b16 %v2141
    %v2227 = vunpack.c.l.b16 %v2142
    %v2228 = vunpack.c.h.b16 %v2142
    %v2229 = vunpack.c.l.b16 %v2143
    %v2230 = vunpack.c.h.b16 %v2143
    %v2231 = vunpack.c.l.b16 %v2144
    %v2232 = vunpack.c.h.b16 %v2144
    %v2233 = vunpack.c.l.b16 %v2145
    %v2234 = vunpack.c.h.b16 %v2145
    %v2235 = vunpack.c.l.b16 %v2146
    %v2236 = vunpack.c.h.b16 %v2146
    %v2237 = vunpack.c.l.b16 %v2147
    %v2238 = vunpack.c.h.b16 %v2147
    %v2239 = vunpack.c.l.b16 %v2148
    %v2240 = vunpack.c.h.b16 %v2148
    %v2241 = vunpack.c.l.b16 %v2149
    %v2242 = vunpack.c.h.b16 %v2149
    %v2243 = vunpack.c.l.b16 %v2150
    %v2244 = vunpack.c.h.b16 %v2150
    %v2245 = vunpack.c.l.b16 %v2151
    %v2246 = vunpack.c.h.b16 %v2151
    %v2247 = vunpack.c.l.b16 %v2152
    %v2248 = vunpack.c.h.b16 %v2152
    %v2249 = vpack.c.b16 %v2189, %v2185
    %v2250 = vpack.c.b16 %v2190, %v2186
    %v2251 = vpack.c.b16 %v2191, %v2187
    %v2252 = vpack.c.b16 %v2192, %v2188
    %v2253 = vpack.c.b16 %v2197, %v2193
    %v2254 = vpack.c.b16 %v2198, %v2194
    %v2255 = vpack.c.b16 %v2199, %v2195
    %v2256 = vpack.c.b16 %v2200, %v2196
    %v2257 = vpack.c.b16 %v2205, %v2201
    %v2258 = vpack.c.b16 %v2206, %v2202
    %v2259 = vpack.c.b16 %v2207, %v2203
    %v2260 = vpack.c.b16 %v2208, %v2204
    %v2261 = vpack.c.b16 %v2213, %v2209
    %v2262 = vpack.c.b16 %v2214, %v2210
    %v2263 = vpack.c.b16 %v2215, %v2211
    %v2264 = vpack.c.b16 %v2216, %v2212
    %v2265 = vpack.c.b16 %v2221, %v2217
    %v2266 = vpack.c.b16 %v2222, %v2218
    %v2267 = vpack.c.b16 %v2223, %v2219
    %v2268 = vpack.c.b16 %v2224, %v2220
    %v2269 = vpack.c.b16 %v2229, %v2225
    %v2270 = vpack.c.b16 %v2230, %v2226
    %v2271 = vpack.c.b16 %v2231, %v2227
    %v2272 = vpack.c.b16 %v2232, %v2228
    %v2273 = vpack.c.b16 %v2237, %v2233
    %v2274 = vpack.c.b16 %v2238, %v2234
    %v2275 = vpack.c.b16 %v2239, %v2235
    %v2276 = vpack.c.b16 %v2240, %v2236
    %v2277 = vpack.c.b16 %v2245, %v2241
    %v2278 = vpack.c.b16 %v2246, %v2242
    %v2279 = vpack.c.b16 %v2247, %v2243
    %v2280 = vpack.c.b16 %v2248, %v2244
    %2313 = vmatprep.subr.bf16.mxu0 %v2250
    %2314 = vmatpush1.bf16.msra.mxu0 %v2249
    %2315 = vmatprep.subr.bf16.mxu0 %v2254
    %2316 = vmatpush1.bf16.msra.mxu0 %v2253
    %2317 = vmatprep.subr.bf16.mxu0 %v2258
    %2318 = vmatpush1.bf16.msra.mxu0 %v2257
    %2319 = vmatprep.subr.bf16.mxu0 %v2262
    %2320 = vmatpush1.bf16.msra.mxu0 %v2261
    %2321 = vmatprep.subr.bf16.mxu0 %v2266
    %2322 = vmatpush1.bf16.msra.mxu0 %v2265
    %2323 = vmatprep.subr.bf16.mxu0 %v2270
    %2324 = vmatpush1.bf16.msra.mxu0 %v2269
    %2325 = vmatprep.subr.bf16.mxu0 %v2274
    %2326 = vmatpush1.bf16.msra.mxu0 %v2273
    %2327 = vmatprep.subr.bf16.mxu0 %v2278
    %2328 = vmatpush1.bf16.msra.mxu0 %v2277
    %2329 = vmatprep.subr.bf16.mxu0 0
    %2330 = vmatpush1.bf16.msra.mxu0 0
    %2331 = vmatprep.subr.bf16.mxu0 0
    %2332 = vmatpush1.bf16.msra.mxu0 0
    %2333 = vmatprep.subr.bf16.mxu0 0
    %2334 = vmatpush1.bf16.msra.mxu0 0
    %2335 = vmatprep.subr.bf16.mxu0 0
    %2336 = vmatpush1.bf16.msra.mxu0 0
    %2337 = vmatprep.subr.bf16.mxu0 0
    %2338 = vmatpush1.bf16.msra.mxu0 0
    %2339 = vmatprep.subr.bf16.mxu0 0
    %2340 = vmatpush1.bf16.msra.mxu0 0
    %2341 = vmatprep.subr.bf16.mxu0 0
    %2342 = vmatpush1.bf16.msra.mxu0 0
    %2343 = vmatprep.subr.bf16.mxu0 0
    %2344 = vmatpush1.bf16.msra.mxu0 0
    %2345 = vmatprep.mubr.bf16.mxu0 0
    %2346 = vmatmul.mubr.bf16.gmra.mrb[0].mxu0 %v2111
    %v2347 = vpop.f32.mrb[0].mxu0
    %v2348 = vadd.f32 0.0, %v2347
    %v2349 = vpop.f32.mrb[0].mxu0
    %v2350 = vadd.f32 0.0, %v2349
    %v2351 = vpop.f32.mrb[0].mxu0
    %v2352 = vpop.f32.mrb[0].mxu0
    %2353 = vdwg.mxu0
    %2354 = vmatprep.subr.bf16.mxu0 %v2252
    %2355 = vmatpush1.bf16.msra.mxu0 %v2251
    %2356 = vmatprep.subr.bf16.mxu0 %v2256
    %2357 = vmatpush1.bf16.msra.mxu0 %v2255
    %2358 = vmatprep.subr.bf16.mxu0 %v2260
    %2359 = vmatpush1.bf16.msra.mxu0 %v2259
    %2360 = vmatprep.subr.bf16.mxu0 %v2264
    %2361 = vmatpush1.bf16.msra.mxu0 %v2263
    %2362 = vmatprep.subr.bf16.mxu0 %v2268
    %2363 = vmatpush1.bf16.msra.mxu0 %v2267
    %2364 = vmatprep.subr.bf16.mxu0 %v2272
    %2365 = vmatpush1.bf16.msra.mxu0 %v2271
    %2366 = vmatprep.subr.bf16.mxu0 %v2276
    %2367 = vmatpush1.bf16.msra.mxu0 %v2275
    %2368 = vmatprep.subr.bf16.mxu0 %v2280
    %2369 = vmatpush1.bf16.msra.mxu0 %v2279
    %2370 = vmatprep.subr.bf16.mxu0 0
    %2371 = vmatpush1.bf16.msra.mxu0 0
    %2372 = vmatprep.subr.bf16.mxu0 0
    %2373 = vmatpush1.bf16.msra.mxu0 0
    %2374 = vmatprep.subr.bf16.mxu0 0
    %2375 = vmatpush1.bf16.msra.mxu0 0
    %2376 = vmatprep.subr.bf16.mxu0 0
    %2377 = vmatpush1.bf16.msra.mxu0 0
    %2378 = vmatprep.subr.bf16.mxu0 0
    %2379 = vmatpush1.bf16.msra.mxu0 0
    %2380 = vmatprep.subr.bf16.mxu0 0
    %2381 = vmatpush1.bf16.msra.mxu0 0
    %2382 = vmatprep.subr.bf16.mxu0 0
    %2383 = vmatpush1.bf16.msra.mxu0 0
    %2384 = vmatprep.subr.bf16.mxu0 0
    %2385 = vmatpush1.bf16.msra.mxu0 0
    %2386 = vmatprep.mubr.bf16.mxu0 0
    %2387 = vmatmul.mubr.bf16.gmra.mrb[0].mxu0 %v2111
    %v2388 = vpop.f32.mrb[0].mxu0
    %v2389 = vadd.f32 0.0, %v2388
    %v2390 = vpop.f32.mrb[0].mxu0
    %v2391 = vadd.f32 0.0, %v2390
    %v2392 = vpop.f32.mrb[0].mxu0
    %v2393 = vpop.f32.mrb[0].mxu0
    %2394 = vdwg.mxu0
    %v2395 = vadd.f32 %v2117, %v2348
    %v2396 = vadd.f32 %v2118, %v2350
    %v2397 = vadd.f32 %v2119, %v2389
    %v2398 = vadd.f32 %v2120, %v2391
    %v2399 = vxor.u32 %v2395, 2147483648
    %v2400 = vmul.f32 %v2399, 1.442695
    %v2401 = vpow.pop %v2400
    %v2402 = vadd.f32 %v2401, 1.0
    %v2403 = vrcp.pop %v2402
    %v2404 = vmul.f32 1.0, %v2403
    %v2405 = vxor.u32 %v2396, 2147483648
    %v2406 = vmul.f32 %v2405, 1.442695
    %v2407 = vpow.pop %v2406
    %v2408 = vadd.f32 %v2407, 1.0
    %v2409 = vrcp.pop %v2408
    %v2410 = vmul.f32 1.0, %v2409
    %v2411 = vtanh.pop %v2397
    %v2412 = vxor.u32 %v2398, 2147483648
    %v2413 = vmul.f32 %v2412, 1.442695
    %v2414 = vpow.pop %v2413
    %v2415 = vadd.f32 %v2414, 1.0
    %v2416 = vrcp.pop %v2415
    %v2417 = vmul.f32 1.0, %v2416
    %v2418 = vmul.f32 %v2410, %v2110
    %v2419 = vmul.f32 %v2404, %v2411
    %v2420 = vadd.f32 %v2418, %v2419
    %v2421 = vtanh.pop %v2420
    %v2422 = vmul.f32 %v2417, %v2421
    %s2423 = scalar_lea.vmem %s1, 24
    %v2424 = vld [vmem:[%s2423] sm:$0xff]
    %vm2425 = vcmp.gt.f32.partialorder %v2424, 0.5
    %v2426 = vsel %vm2425, %v2422, %v2109
    %v2427 = vsel %vm2425, %v2420, %v2110
    %v2428 = vpack.c.bf16 %v2426, %v2426
    %v2430 = vrot.slane %v2428, 4
    %2432 = vst [vmem:[#allocation6 + $0x10] sm:$0xf0] %v2430
    %2433 = vst [vmem:[#allocation6 + $0x28] sm:$0xf] %v2428
    %v2434 = vld [vmem:[#allocation7 + $0x80] sm:$0xff]
    %v2435 = vld [vmem:[#allocation7 + $0x88] sm:$0xff]
    %v2436 = vld [vmem:[#allocation7 + $0x90] sm:$0xff]
    %v2437 = vld [vmem:[#allocation7 + $0x98] sm:$0xff]
    %v2438 = vld [vmem:[#allocation11] sm:$0xff]
    %v2439 = vld [vmem:[#allocation11 + $0x8] sm:$0xff]
    %v2440 = vld [vmem:[#allocation11 + $0x10] sm:$0xff]
    %v2441 = vld [vmem:[#allocation11 + $0x18] sm:$0xff]
    %v2442 = vld [vmem:[#allocation11 + $0x20] sm:$0xff]
    %v2443 = vld [vmem:[#allocation11 + $0x28] sm:$0xff]
    %v2444 = vld [vmem:[#allocation11 + $0x30] sm:$0xff]
    %v2445 = vld [vmem:[#allocation11 + $0x38] sm:$0xff]
    %v2446 = vld [vmem:[#allocation11 + $0x40] sm:$0xff]
    %v2447 = vld [vmem:[#allocation11 + $0x48] sm:$0xff]
    %v2448 = vld [vmem:[#allocation11 + $0x50] sm:$0xff]
    %v2449 = vld [vmem:[#allocation11 + $0x58] sm:$0xff]
    %v2450 = vld [vmem:[#allocation11 + $0x60] sm:$0xff]
    %v2451 = vld [vmem:[#allocation11 + $0x68] sm:$0xff]
    %v2452 = vld [vmem:[#allocation11 + $0x70] sm:$0xff]
    %v2453 = vld [vmem:[#allocation11 + $0x78] sm:$0xff]
    %v2454 = vld [vmem:[#allocation11 + $0x80] sm:$0xff]
    %v2455 = vld [vmem:[#allocation11 + $0x88] sm:$0xff]
    %v2456 = vld [vmem:[#allocation11 + $0x90] sm:$0xff]
    %v2457 = vld [vmem:[#allocation11 + $0x98] sm:$0xff]
    %v2458 = vld [vmem:[#allocation11 + $0xa0] sm:$0xff]
    %v2459 = vld [vmem:[#allocation11 + $0xa8] sm:$0xff]
    %v2460 = vld [vmem:[#allocation11 + $0xb0] sm:$0xff]
    %v2461 = vld [vmem:[#allocation11 + $0xb8] sm:$0xff]
    %v2462 = vld [vmem:[#allocation11 + $0xc0] sm:$0xff]
    %v2463 = vld [vmem:[#allocation11 + $0xc8] sm:$0xff]
    %v2464 = vld [vmem:[#allocation11 + $0xd0] sm:$0xff]
    %v2465 = vld [vmem:[#allocation11 + $0xd8] sm:$0xff]
    %v2466 = vld [vmem:[#allocation11 + $0xe0] sm:$0xff]
    %v2467 = vld [vmem:[#allocation11 + $0xe8] sm:$0xff]
    %v2468 = vld [vmem:[#allocation11 + $0xf0] sm:$0xff]
    %v2469 = vld [vmem:[#allocation11 + $0xf8] sm:$0xff]
    %v2502 = vunpack.c.l.b16 %v2438
    %v2503 = vunpack.c.h.b16 %v2438
    %v2504 = vunpack.c.l.b16 %v2439
    %v2505 = vunpack.c.h.b16 %v2439
    %v2506 = vunpack.c.l.b16 %v2440
    %v2507 = vunpack.c.h.b16 %v2440
    %v2508 = vunpack.c.l.b16 %v2441
    %v2509 = vunpack.c.h.b16 %v2441
    %v2510 = vunpack.c.l.b16 %v2442
    %v2511 = vunpack.c.h.b16 %v2442
    %v2512 = vunpack.c.l.b16 %v2443
    %v2513 = vunpack.c.h.b16 %v2443
    %v2514 = vunpack.c.l.b16 %v2444
    %v2515 = vunpack.c.h.b16 %v2444
    %v2516 = vunpack.c.l.b16 %v2445
    %v2517 = vunpack.c.h.b16 %v2445
    %v2518 = vunpack.c.l.b16 %v2446
    %v2519 = vunpack.c.h.b16 %v2446
    %v2520 = vunpack.c.l.b16 %v2447
    %v2521 = vunpack.c.h.b16 %v2447
    %v2522 = vunpack.c.l.b16 %v2448
    %v2523 = vunpack.c.h.b16 %v2448
    %v2524 = vunpack.c.l.b16 %v2449
    %v2525 = vunpack.c.h.b16 %v2449
    %v2526 = vunpack.c.l.b16 %v2450
    %v2527 = vunpack.c.h.b16 %v2450
    %v2528 = vunpack.c.l.b16 %v2451
    %v2529 = vunpack.c.h.b16 %v2451
    %v2530 = vunpack.c.l.b16 %v2452
    %v2531 = vunpack.c.h.b16 %v2452
    %v2532 = vunpack.c.l.b16 %v2453
    %v2533 = vunpack.c.h.b16 %v2453
    %v2534 = vunpack.c.l.b16 %v2454
    %v2535 = vunpack.c.h.b16 %v2454
    %v2536 = vunpack.c.l.b16 %v2455
    %v2537 = vunpack.c.h.b16 %v2455
    %v2538 = vunpack.c.l.b16 %v2456
    %v2539 = vunpack.c.h.b16 %v2456
    %v2540 = vunpack.c.l.b16 %v2457
    %v2541 = vunpack.c.h.b16 %v2457
    %v2542 = vunpack.c.l.b16 %v2458
    %v2543 = vunpack.c.h.b16 %v2458
    %v2544 = vunpack.c.l.b16 %v2459
    %v2545 = vunpack.c.h.b16 %v2459
    %v2546 = vunpack.c.l.b16 %v2460
    %v2547 = vunpack.c.h.b16 %v2460
    %v2548 = vunpack.c.l.b16 %v2461
    %v2549 = vunpack.c.h.b16 %v2461
    %v2550 = vunpack.c.l.b16 %v2462
    %v2551 = vunpack.c.h.b16 %v2462
    %v2552 = vunpack.c.l.b16 %v2463
    %v2553 = vunpack.c.h.b16 %v2463
    %v2554 = vunpack.c.l.b16 %v2464
    %v2555 = vunpack.c.h.b16 %v2464
    %v2556 = vunpack.c.l.b16 %v2465
    %v2557 = vunpack.c.h.b16 %v2465
    %v2558 = vunpack.c.l.b16 %v2466
    %v2559 = vunpack.c.h.b16 %v2466
    %v2560 = vunpack.c.l.b16 %v2467
    %v2561 = vunpack.c.h.b16 %v2467
    %v2562 = vunpack.c.l.b16 %v2468
    %v2563 = vunpack.c.h.b16 %v2468
    %v2564 = vunpack.c.l.b16 %v2469
    %v2565 = vunpack.c.h.b16 %v2469
    %v2566 = vpack.c.b16 %v2506, %v2502
    %v2567 = vpack.c.b16 %v2507, %v2503
    %v2568 = vpack.c.b16 %v2508, %v2504
    %v2569 = vpack.c.b16 %v2509, %v2505
    %v2570 = vpack.c.b16 %v2514, %v2510
    %v2571 = vpack.c.b16 %v2515, %v2511
    %v2572 = vpack.c.b16 %v2516, %v2512
    %v2573 = vpack.c.b16 %v2517, %v2513
    %v2574 = vpack.c.b16 %v2522, %v2518
    %v2575 = vpack.c.b16 %v2523, %v2519
    %v2576 = vpack.c.b16 %v2524, %v2520
    %v2577 = vpack.c.b16 %v2525, %v2521
    %v2578 = vpack.c.b16 %v2530, %v2526
    %v2579 = vpack.c.b16 %v2531, %v2527
    %v2580 = vpack.c.b16 %v2532, %v2528
    %v2581 = vpack.c.b16 %v2533, %v2529
    %v2582 = vpack.c.b16 %v2538, %v2534
    %v2583 = vpack.c.b16 %v2539, %v2535
    %v2584 = vpack.c.b16 %v2540, %v2536
    %v2585 = vpack.c.b16 %v2541, %v2537
    %v2586 = vpack.c.b16 %v2546, %v2542
    %v2587 = vpack.c.b16 %v2547, %v2543
    %v2588 = vpack.c.b16 %v2548, %v2544
    %v2589 = vpack.c.b16 %v2549, %v2545
    %v2590 = vpack.c.b16 %v2554, %v2550
    %v2591 = vpack.c.b16 %v2555, %v2551
    %v2592 = vpack.c.b16 %v2556, %v2552
    %v2593 = vpack.c.b16 %v2557, %v2553
    %v2594 = vpack.c.b16 %v2562, %v2558
    %v2595 = vpack.c.b16 %v2563, %v2559
    %v2596 = vpack.c.b16 %v2564, %v2560
    %v2597 = vpack.c.b16 %v2565, %v2561
    %2630 = vmatprep.subr.bf16.mxu0 %v2567
    %2631 = vmatpush1.bf16.msra.mxu0 %v2566
    %2632 = vmatprep.subr.bf16.mxu0 %v2571
    %2633 = vmatpush1.bf16.msra.mxu0 %v2570
    %2634 = vmatprep.subr.bf16.mxu0 %v2575
    %2635 = vmatpush1.bf16.msra.mxu0 %v2574
    %2636 = vmatprep.subr.bf16.mxu0 %v2579
    %2637 = vmatpush1.bf16.msra.mxu0 %v2578
    %2638 = vmatprep.subr.bf16.mxu0 %v2583
    %2639 = vmatpush1.bf16.msra.mxu0 %v2582
    %2640 = vmatprep.subr.bf16.mxu0 %v2587
    %2641 = vmatpush1.bf16.msra.mxu0 %v2586
    %2642 = vmatprep.subr.bf16.mxu0 %v2591
    %2643 = vmatpush1.bf16.msra.mxu0 %v2590
    %2644 = vmatprep.subr.bf16.mxu0 %v2595
    %2645 = vmatpush1.bf16.msra.mxu0 %v2594
    %2646 = vmatprep.subr.bf16.mxu0 0
    %2647 = vmatpush1.bf16.msra.mxu0 0
    %2648 = vmatprep.subr.bf16.mxu0 0
    %2649 = vmatpush1.bf16.msra.mxu0 0
    %2650 = vmatprep.subr.bf16.mxu0 0
    %2651 = vmatpush1.bf16.msra.mxu0 0
    %2652 = vmatprep.subr.bf16.mxu0 0
    %2653 = vmatpush1.bf16.msra.mxu0 0
    %2654 = vmatprep.subr.bf16.mxu0 0
    %2655 = vmatpush1.bf16.msra.mxu0 0
    %2656 = vmatprep.subr.bf16.mxu0 0
    %2657 = vmatpush1.bf16.msra.mxu0 0
    %2658 = vmatprep.subr.bf16.mxu0 0
    %2659 = vmatpush1.bf16.msra.mxu0 0
    %2660 = vmatprep.subr.bf16.mxu0 0
    %2661 = vmatpush1.bf16.msra.mxu0 0
    %2662 = vmatprep.mubr.bf16.mxu0 0
    %2663 = vmatmul.mubr.bf16.gmra.mrb[0].mxu0 %v2428
    %v2664 = vpop.f32.mrb[0].mxu0
    %v2665 = vadd.f32 0.0, %v2664
    %v2666 = vpop.f32.mrb[0].mxu0
    %v2667 = vadd.f32 0.0, %v2666
    %v2668 = vpop.f32.mrb[0].mxu0
    %v2669 = vpop.f32.mrb[0].mxu0
    %2670 = vdwg.mxu0
    %2671 = vmatprep.subr.bf16.mxu0 %v2569
    %2672 = vmatpush1.bf16.msra.mxu0 %v2568
    %2673 = vmatprep.subr.bf16.mxu0 %v2573
    %2674 = vmatpush1.bf16.msra.mxu0 %v2572
    %2675 = vmatprep.subr.bf16.mxu0 %v2577
    %2676 = vmatpush1.bf16.msra.mxu0 %v2576
    %2677 = vmatprep.subr.bf16.mxu0 %v2581
    %2678 = vmatpush1.bf16.msra.mxu0 %v2580
    %2679 = vmatprep.subr.bf16.mxu0 %v2585
    %2680 = vmatpush1.bf16.msra.mxu0 %v2584
    %2681 = vmatprep.subr.bf16.mxu0 %v2589
    %2682 = vmatpush1.bf16.msra.mxu0 %v2588
    %2683 = vmatprep.subr.bf16.mxu0 %v2593
    %2684 = vmatpush1.bf16.msra.mxu0 %v2592
    %2685 = vmatprep.subr.bf16.mxu0 %v2597
    %2686 = vmatpush1.bf16.msra.mxu0 %v2596
    %2687 = vmatprep.subr.bf16.mxu0 0
    %2688 = vmatpush1.bf16.msra.mxu0 0
    %2689 = vmatprep.subr.bf16.mxu0 0
    %2690 = vmatpush1.bf16.msra.mxu0 0
    %2691 = vmatprep.subr.bf16.mxu0 0
    %2692 = vmatpush1.bf16.msra.mxu0 0
    %2693 = vmatprep.subr.bf16.mxu0 0
    %2694 = vmatpush1.bf16.msra.mxu0 0
    %2695 = vmatprep.subr.bf16.mxu0 0
    %2696 = vmatpush1.bf16.msra.mxu0 0
    %2697 = vmatprep.subr.bf16.mxu0 0
    %2698 = vmatpush1.bf16.msra.mxu0 0
    %2699 = vmatprep.subr.bf16.mxu0 0
    %2700 = vmatpush1.bf16.msra.mxu0 0
    %2701 = vmatprep.subr.bf16.mxu0 0
    %2702 = vmatpush1.bf16.msra.mxu0 0
    %2703 = vmatprep.mubr.bf16.mxu0 0
    %2704 = vmatmul.mubr.bf16.gmra.mrb[0].mxu0 %v2428
    %v2705 = vpop.f32.mrb[0].mxu0
    %v2706 = vadd.f32 0.0, %v2705
    %v2707 = vpop.f32.mrb[0].mxu0
    %v2708 = vadd.f32 0.0, %v2707
    %v2709 = vpop.f32.mrb[0].mxu0
    %v2710 = vpop.f32.mrb[0].mxu0
    %2711 = vdwg.mxu0
    %v2712 = vadd.f32 %v2434, %v2665
    %v2713 = vadd.f32 %v2435, %v2667
    %v2714 = vadd.f32 %v2436, %v2706
    %v2715 = vadd.f32 %v2437, %v2708
    %v2716 = vxor.u32 %v2712, 2147483648
    %v2717 = vmul.f32 %v2716, 1.442695
    %v2718 = vpow.pop %v2717
    %v2719 = vadd.f32 %v2718, 1.0
    %v2720 = vrcp.pop %v2719
    %v2721 = vmul.f32 1.0, %v2720
    %v2722 = vxor.u32 %v2713, 2147483648
    %v2723 = vmul.f32 %v2722, 1.442695
    %v2724 = vpow.pop %v2723
    %v2725 = vadd.f32 %v2724, 1.0
    %v2726 = vrcp.pop %v2725
    %v2727 = vmul.f32 1.0, %v2726
    %v2728 = vtanh.pop %v2714
    %v2729 = vxor.u32 %v2715, 2147483648
    %v2730 = vmul.f32 %v2729, 1.442695
    %v2731 = vpow.pop %v2730
    %v2732 = vadd.f32 %v2731, 1.0
    %v2733 = vrcp.pop %v2732
    %v2734 = vmul.f32 1.0, %v2733
    %v2735 = vmul.f32 %v2727, %v2427
    %v2736 = vmul.f32 %v2721, %v2728
    %v2737 = vadd.f32 %v2735, %v2736
    %v2738 = vtanh.pop %v2737
    %v2739 = vmul.f32 %v2734, %v2738
    %s2740 = scalar_lea.vmem %s1, 32
    %v2741 = vld [vmem:[%s2740] sm:$0xff]
    %vm2742 = vcmp.gt.f32.partialorder %v2741, 0.5
    %v2743 = vsel %vm2742, %v2739, %v2426
    %v2744 = vsel %vm2742, %v2737, %v2427
    %v2745 = vpack.c.bf16 %v2743, %v2743
    %2746 = vst [vmem:[#allocation6 + $0x20] sm:$0xf] %v2745
    %v2748 = vrot.slane %v2745, 4
    %2750 = vst [vmem:[#allocation6 + $0x18] sm:$0xf0] %v2748
    %v2751 = vld [vmem:[#allocation7 + $0xa0] sm:$0xff]
    %v2752 = vld [vmem:[#allocation7 + $0xa8] sm:$0xff]
    %v2753 = vld [vmem:[#allocation7 + $0xb0] sm:$0xff]
    %v2754 = vld [vmem:[#allocation7 + $0xb8] sm:$0xff]
    %v2755 = vld [vmem:[#allocation11] sm:$0xff]
    %v2756 = vld [vmem:[#allocation11 + $0x8] sm:$0xff]
    %v2757 = vld [vmem:[#allocation11 + $0x10] sm:$0xff]
    %v2758 = vld [vmem:[#allocation11 + $0x18] sm:$0xff]
    %v2759 = vld [vmem:[#allocation11 + $0x20] sm:$0xff]
    %v2760 = vld [vmem:[#allocation11 + $0x28] sm:$0xff]
    %v2761 = vld [vmem:[#allocation11 + $0x30] sm:$0xff]
    %v2762 = vld [vmem:[#allocation11 + $0x38] sm:$0xff]
    %v2763 = vld [vmem:[#allocation11 + $0x40] sm:$0xff]
    %v2764 = vld [vmem:[#allocation11 + $0x48] sm:$0xff]
    %v2765 = vld [vmem:[#allocation11 + $0x50] sm:$0xff]
    %v2766 = vld [vmem:[#allocation11 + $0x58] sm:$0xff]
    %v2767 = vld [vmem:[#allocation11 + $0x60] sm:$0xff]
    %v2768 = vld [vmem:[#allocation11 + $0x68] sm:$0xff]
    %v2769 = vld [vmem:[#allocation11 + $0x70] sm:$0xff]
    %v2770 = vld [vmem:[#allocation11 + $0x78] sm:$0xff]
    %v2771 = vld [vmem:[#allocation11 + $0x80] sm:$0xff]
    %v2772 = vld [vmem:[#allocation11 + $0x88] sm:$0xff]
    %v2773 = vld [vmem:[#allocation11 + $0x90] sm:$0xff]
    %v2774 = vld [vmem:[#allocation11 + $0x98] sm:$0xff]
    %v2775 = vld [vmem:[#allocation11 + $0xa0] sm:$0xff]
    %v2776 = vld [vmem:[#allocation11 + $0xa8] sm:$0xff]
    %v2777 = vld [vmem:[#allocation11 + $0xb0] sm:$0xff]
    %v2778 = vld [vmem:[#allocation11 + $0xb8] sm:$0xff]
    %v2779 = vld [vmem:[#allocation11 + $0xc0] sm:$0xff]
    %v2780 = vld [vmem:[#allocation11 + $0xc8] sm:$0xff]
    %v2781 = vld [vmem:[#allocation11 + $0xd0] sm:$0xff]
    %v2782 = vld [vmem:[#allocation11 + $0xd8] sm:$0xff]
    %v2783 = vld [vmem:[#allocation11 + $0xe0] sm:$0xff]
    %v2784 = vld [vmem:[#allocation11 + $0xe8] sm:$0xff]
    %v2785 = vld [vmem:[#allocation11 + $0xf0] sm:$0xff]
    %v2786 = vld [vmem:[#allocation11 + $0xf8] sm:$0xff]
    %v2819 = vunpack.c.l.b16 %v2755
    %v2820 = vunpack.c.h.b16 %v2755
    %v2821 = vunpack.c.l.b16 %v2756
    %v2822 = vunpack.c.h.b16 %v2756
    %v2823 = vunpack.c.l.b16 %v2757
    %v2824 = vunpack.c.h.b16 %v2757
    %v2825 = vunpack.c.l.b16 %v2758
    %v2826 = vunpack.c.h.b16 %v2758
    %v2827 = vunpack.c.l.b16 %v2759
    %v2828 = vunpack.c.h.b16 %v2759
    %v2829 = vunpack.c.l.b16 %v2760
    %v2830 = vunpack.c.h.b16 %v2760
    %v2831 = vunpack.c.l.b16 %v2761
    %v2832 = vunpack.c.h.b16 %v2761
    %v2833 = vunpack.c.l.b16 %v2762
    %v2834 = vunpack.c.h.b16 %v2762
    %v2835 = vunpack.c.l.b16 %v2763
    %v2836 = vunpack.c.h.b16 %v2763
    %v2837 = vunpack.c.l.b16 %v2764
    %v2838 = vunpack.c.h.b16 %v2764
    %v2839 = vunpack.c.l.b16 %v2765
    %v2840 = vunpack.c.h.b16 %v2765
    %v2841 = vunpack.c.l.b16 %v2766
    %v2842 = vunpack.c.h.b16 %v2766
    %v2843 = vunpack.c.l.b16 %v2767
    %v2844 = vunpack.c.h.b16 %v2767
    %v2845 = vunpack.c.l.b16 %v2768
    %v2846 = vunpack.c.h.b16 %v2768
    %v2847 = vunpack.c.l.b16 %v2769
    %v2848 = vunpack.c.h.b16 %v2769
    %v2849 = vunpack.c.l.b16 %v2770
    %v2850 = vunpack.c.h.b16 %v2770
    %v2851 = vunpack.c.l.b16 %v2771
    %v2852 = vunpack.c.h.b16 %v2771
    %v2853 = vunpack.c.l.b16 %v2772
    %v2854 = vunpack.c.h.b16 %v2772
    %v2855 = vunpack.c.l.b16 %v2773
    %v2856 = vunpack.c.h.b16 %v2773
    %v2857 = vunpack.c.l.b16 %v2774
    %v2858 = vunpack.c.h.b16 %v2774
    %v2859 = vunpack.c.l.b16 %v2775
    %v2860 = vunpack.c.h.b16 %v2775
    %v2861 = vunpack.c.l.b16 %v2776
    %v2862 = vunpack.c.h.b16 %v2776
    %v2863 = vunpack.c.l.b16 %v2777
    %v2864 = vunpack.c.h.b16 %v2777
    %v2865 = vunpack.c.l.b16 %v2778
    %v2866 = vunpack.c.h.b16 %v2778
    %v2867 = vunpack.c.l.b16 %v2779
    %v2868 = vunpack.c.h.b16 %v2779
    %v2869 = vunpack.c.l.b16 %v2780
    %v2870 = vunpack.c.h.b16 %v2780
    %v2871 = vunpack.c.l.b16 %v2781
    %v2872 = vunpack.c.h.b16 %v2781
    %v2873 = vunpack.c.l.b16 %v2782
    %v2874 = vunpack.c.h.b16 %v2782
    %v2875 = vunpack.c.l.b16 %v2783
    %v2876 = vunpack.c.h.b16 %v2783
    %v2877 = vunpack.c.l.b16 %v2784
    %v2878 = vunpack.c.h.b16 %v2784
    %v2879 = vunpack.c.l.b16 %v2785
    %v2880 = vunpack.c.h.b16 %v2785
    %v2881 = vunpack.c.l.b16 %v2786
    %v2882 = vunpack.c.h.b16 %v2786
    %v2883 = vpack.c.b16 %v2823, %v2819
    %v2884 = vpack.c.b16 %v2824, %v2820
    %v2885 = vpack.c.b16 %v2825, %v2821
    %v2886 = vpack.c.b16 %v2826, %v2822
    %v2887 = vpack.c.b16 %v2831, %v2827
    %v2888 = vpack.c.b16 %v2832, %v2828
    %v2889 = vpack.c.b16 %v2833, %v2829
    %v2890 = vpack.c.b16 %v2834, %v2830
    %v2891 = vpack.c.b16 %v2839, %v2835
    %v2892 = vpack.c.b16 %v2840, %v2836
    %v2893 = vpack.c.b16 %v2841, %v2837
    %v2894 = vpack.c.b16 %v2842, %v2838
    %v2895 = vpack.c.b16 %v2847, %v2843
    %v2896 = vpack.c.b16 %v2848, %v2844
    %v2897 = vpack.c.b16 %v2849, %v2845
    %v2898 = vpack.c.b16 %v2850, %v2846
    %v2899 = vpack.c.b16 %v2855, %v2851
    %v2900 = vpack.c.b16 %v2856, %v2852
    %v2901 = vpack.c.b16 %v2857, %v2853
    %v2902 = vpack.c.b16 %v2858, %v2854
    %v2903 = vpack.c.b16 %v2863, %v2859
    %v2904 = vpack.c.b16 %v2864, %v2860
    %v2905 = vpack.c.b16 %v2865, %v2861
    %v2906 = vpack.c.b16 %v2866, %v2862
    %v2907 = vpack.c.b16 %v2871, %v2867
    %v2908 = vpack.c.b16 %v2872, %v2868
    %v2909 = vpack.c.b16 %v2873, %v2869
    %v2910 = vpack.c.b16 %v2874, %v2870
    %v2911 = vpack.c.b16 %v2879, %v2875
    %v2912 = vpack.c.b16 %v2880, %v2876
    %v2913 = vpack.c.b16 %v2881, %v2877
    %v2914 = vpack.c.b16 %v2882, %v2878
    %2947 = vmatprep.subr.bf16.mxu0 %v2884
    %2948 = vmatpush1.bf16.msra.mxu0 %v2883
    %2949 = vmatprep.subr.bf16.mxu0 %v2888
    %2950 = vmatpush1.bf16.msra.mxu0 %v2887
    %2951 = vmatprep.subr.bf16.mxu0 %v2892
    %2952 = vmatpush1.bf16.msra.mxu0 %v2891
    %2953 = vmatprep.subr.bf16.mxu0 %v2896
    %2954 = vmatpush1.bf16.msra.mxu0 %v2895
    %2955 = vmatprep.subr.bf16.mxu0 %v2900
    %2956 = vmatpush1.bf16.msra.mxu0 %v2899
    %2957 = vmatprep.subr.bf16.mxu0 %v2904
    %2958 = vmatpush1.bf16.msra.mxu0 %v2903
    %2959 = vmatprep.subr.bf16.mxu0 %v2908
    %2960 = vmatpush1.bf16.msra.mxu0 %v2907
    %2961 = vmatprep.subr.bf16.mxu0 %v2912
    %2962 = vmatpush1.bf16.msra.mxu0 %v2911
    %2963 = vmatprep.subr.bf16.mxu0 0
    %2964 = vmatpush1.bf16.msra.mxu0 0
    %2965 = vmatprep.subr.bf16.mxu0 0
    %2966 = vmatpush1.bf16.msra.mxu0 0
    %2967 = vmatprep.subr.bf16.mxu0 0
    %2968 = vmatpush1.bf16.msra.mxu0 0
    %2969 = vmatprep.subr.bf16.mxu0 0
    %2970 = vmatpush1.bf16.msra.mxu0 0
    %2971 = vmatprep.subr.bf16.mxu0 0
    %2972 = vmatpush1.bf16.msra.mxu0 0
    %2973 = vmatprep.subr.bf16.mxu0 0
    %2974 = vmatpush1.bf16.msra.mxu0 0
    %2975 = vmatprep.subr.bf16.mxu0 0
    %2976 = vmatpush1.bf16.msra.mxu0 0
    %2977 = vmatprep.subr.bf16.mxu0 0
    %2978 = vmatpush1.bf16.msra.mxu0 0
    %2979 = vmatprep.mubr.bf16.mxu0 0
    %2980 = vmatmul.mubr.bf16.gmra.mrb[0].mxu0 %v2745
    %v2981 = vpop.f32.mrb[0].mxu0
    %v2982 = vadd.f32 0.0, %v2981
    %v2983 = vpop.f32.mrb[0].mxu0
    %v2984 = vadd.f32 0.0, %v2983
    %v2985 = vpop.f32.mrb[0].mxu0
    %v2986 = vpop.f32.mrb[0].mxu0
    %2987 = vdwg.mxu0
    %2988 = vmatprep.subr.bf16.mxu0 %v2886
    %2989 = vmatpush1.bf16.msra.mxu0 %v2885
    %2990 = vmatprep.subr.bf16.mxu0 %v2890
    %2991 = vmatpush1.bf16.msra.mxu0 %v2889
    %2992 = vmatprep.subr.bf16.mxu0 %v2894
    %2993 = vmatpush1.bf16.msra.mxu0 %v2893
    %2994 = vmatprep.subr.bf16.mxu0 %v2898
    %2995 = vmatpush1.bf16.msra.mxu0 %v2897
    %2996 = vmatprep.subr.bf16.mxu0 %v2902
    %2997 = vmatpush1.bf16.msra.mxu0 %v2901
    %2998 = vmatprep.subr.bf16.mxu0 %v2906
    %2999 = vmatpush1.bf16.msra.mxu0 %v2905
    %3000 = vmatprep.subr.bf16.mxu0 %v2910
    %3001 = vmatpush1.bf16.msra.mxu0 %v2909
    %3002 = vmatprep.subr.bf16.mxu0 %v2914
    %3003 = vmatpush1.bf16.msra.mxu0 %v2913
    %3004 = vmatprep.subr.bf16.mxu0 0
    %3005 = vmatpush1.bf16.msra.mxu0 0
    %3006 = vmatprep.subr.bf16.mxu0 0
    %3007 = vmatpush1.bf16.msra.mxu0 0
    %3008 = vmatprep.subr.bf16.mxu0 0
    %3009 = vmatpush1.bf16.msra.mxu0 0
    %3010 = vmatprep.subr.bf16.mxu0 0
    %3011 = vmatpush1.bf16.msra.mxu0 0
    %3012 = vmatprep.subr.bf16.mxu0 0
    %3013 = vmatpush1.bf16.msra.mxu0 0
    %3014 = vmatprep.subr.bf16.mxu0 0
    %3015 = vmatpush1.bf16.msra.mxu0 0
    %3016 = vmatprep.subr.bf16.mxu0 0
    %3017 = vmatpush1.bf16.msra.mxu0 0
    %3018 = vmatprep.subr.bf16.mxu0 0
    %3019 = vmatpush1.bf16.msra.mxu0 0
    %3020 = vmatprep.mubr.bf16.mxu0 0
    %3021 = vmatmul.mubr.bf16.gmra.mrb[0].mxu0 %v2745
    %v3022 = vpop.f32.mrb[0].mxu0
    %v3023 = vadd.f32 0.0, %v3022
    %v3024 = vpop.f32.mrb[0].mxu0
    %v3025 = vadd.f32 0.0, %v3024
    %v3026 = vpop.f32.mrb[0].mxu0
    %v3027 = vpop.f32.mrb[0].mxu0
    %3028 = vdwg.mxu0
    %v3029 = vadd.f32 %v2751, %v2982
    %v3030 = vadd.f32 %v2752, %v2984
    %v3031 = vadd.f32 %v2753, %v3023
    %v3032 = vadd.f32 %v2754, %v3025
    %v3033 = vxor.u32 %v3029, 2147483648
    %v3034 = vmul.f32 %v3033, 1.442695
    %v3035 = vpow.pop %v3034
    %v3036 = vadd.f32 %v3035, 1.0
    %v3037 = vrcp.pop %v3036
    %v3038 = vmul.f32 1.0, %v3037
    %v3039 = vxor.u32 %v3030, 2147483648
    %v3040 = vmul.f32 %v3039, 1.442695
    %v3041 = vpow.pop %v3040
    %v3042 = vadd.f32 %v3041, 1.0
    %v3043 = vrcp.pop %v3042
    %v3044 = vmul.f32 1.0, %v3043
    %v3045 = vtanh.pop %v3031
    %v3046 = vxor.u32 %v3032, 2147483648
    %v3047 = vmul.f32 %v3046, 1.442695
    %v3048 = vpow.pop %v3047
    %v3049 = vadd.f32 %v3048, 1.0
    %v3050 = vrcp.pop %v3049
    %v3051 = vmul.f32 1.0, %v3050
    %v3052 = vmul.f32 %v3044, %v2744
    %v3053 = vmul.f32 %v3038, %v3045
    %v3054 = vadd.f32 %v3052, %v3053
    %v3055 = vtanh.pop %v3054
    %v3056 = vmul.f32 %v3051, %v3055
    %s3057 = scalar_lea.vmem %s1, 40
    %v3058 = vld [vmem:[%s3057] sm:$0xff]
    %vm3059 = vcmp.gt.f32.partialorder %v3058, 0.5
    %v3060 = vsel %vm3059, %v3056, %v2743
    %v3061 = vsel %vm3059, %v3054, %v2744
    %v3062 = vpack.c.bf16 %v3060, %v3060
    %v3064 = vrot.slane %v3062, 4
    %3066 = vst [vmem:[#allocation6 + $0x20] sm:$0xf0] %v3064
    %3067 = vst [vmem:[#allocation6 + $0x18] sm:$0xf] %v3062
    %v3068 = vld [vmem:[#allocation7 + $0xc0] sm:$0xff]
    %v3069 = vld [vmem:[#allocation7 + $0xc8] sm:$0xff]
    %v3070 = vld [vmem:[#allocation7 + $0xd0] sm:$0xff]
    %v3071 = vld [vmem:[#allocation7 + $0xd8] sm:$0xff]
    %v3072 = vld [vmem:[#allocation11] sm:$0xff]
    %v3073 = vld [vmem:[#allocation11 + $0x8] sm:$0xff]
    %v3074 = vld [vmem:[#allocation11 + $0x10] sm:$0xff]
    %v3075 = vld [vmem:[#allocation11 + $0x18] sm:$0xff]
    %v3076 = vld [vmem:[#allocation11 + $0x20] sm:$0xff]
    %v3077 = vld [vmem:[#allocation11 + $0x28] sm:$0xff]
    %v3078 = vld [vmem:[#allocation11 + $0x30] sm:$0xff]
    %v3079 = vld [vmem:[#allocation11 + $0x38] sm:$0xff]
    %v3080 = vld [vmem:[#allocation11 + $0x40] sm:$0xff]
    %v3081 = vld [vmem:[#allocation11 + $0x48] sm:$0xff]
    %v3082 = vld [vmem:[#allocation11 + $0x50] sm:$0xff]
    %v3083 = vld [vmem:[#allocation11 + $0x58] sm:$0xff]
    %v3084 = vld [vmem:[#allocation11 + $0x60] sm:$0xff]
    %v3085 = vld [vmem:[#allocation11 + $0x68] sm:$0xff]
    %v3086 = vld [vmem:[#allocation11 + $0x70] sm:$0xff]
    %v3087 = vld [vmem:[#allocation11 + $0x78] sm:$0xff]
    %v3088 = vld [vmem:[#allocation11 + $0x80] sm:$0xff]
    %v3089 = vld [vmem:[#allocation11 + $0x88] sm:$0xff]
    %v3090 = vld [vmem:[#allocation11 + $0x90] sm:$0xff]
    %v3091 = vld [vmem:[#allocation11 + $0x98] sm:$0xff]
    %v3092 = vld [vmem:[#allocation11 + $0xa0] sm:$0xff]
    %v3093 = vld [vmem:[#allocation11 + $0xa8] sm:$0xff]
    %v3094 = vld [vmem:[#allocation11 + $0xb0] sm:$0xff]
    %v3095 = vld [vmem:[#allocation11 + $0xb8] sm:$0xff]
    %v3096 = vld [vmem:[#allocation11 + $0xc0] sm:$0xff]
    %v3097 = vld [vmem:[#allocation11 + $0xc8] sm:$0xff]
    %v3098 = vld [vmem:[#allocation11 + $0xd0] sm:$0xff]
    %v3099 = vld [vmem:[#allocation11 + $0xd8] sm:$0xff]
    %v3100 = vld [vmem:[#allocation11 + $0xe0] sm:$0xff]
    %v3101 = vld [vmem:[#allocation11 + $0xe8] sm:$0xff]
    %v3102 = vld [vmem:[#allocation11 + $0xf0] sm:$0xff]
    %v3103 = vld [vmem:[#allocation11 + $0xf8] sm:$0xff]
    %v3136 = vunpack.c.l.b16 %v3072
    %v3137 = vunpack.c.h.b16 %v3072
    %v3138 = vunpack.c.l.b16 %v3073
    %v3139 = vunpack.c.h.b16 %v3073
    %v3140 = vunpack.c.l.b16 %v3074
    %v3141 = vunpack.c.h.b16 %v3074
    %v3142 = vunpack.c.l.b16 %v3075
    %v3143 = vunpack.c.h.b16 %v3075
    %v3144 = vunpack.c.l.b16 %v3076
    %v3145 = vunpack.c.h.b16 %v3076
    %v3146 = vunpack.c.l.b16 %v3077
    %v3147 = vunpack.c.h.b16 %v3077
    %v3148 = vunpack.c.l.b16 %v3078
    %v3149 = vunpack.c.h.b16 %v3078
    %v3150 = vunpack.c.l.b16 %v3079
    %v3151 = vunpack.c.h.b16 %v3079
    %v3152 = vunpack.c.l.b16 %v3080
    %v3153 = vunpack.c.h.b16 %v3080
    %v3154 = vunpack.c.l.b16 %v3081
    %v3155 = vunpack.c.h.b16 %v3081
    %v3156 = vunpack.c.l.b16 %v3082
    %v3157 = vunpack.c.h.b16 %v3082
    %v3158 = vunpack.c.l.b16 %v3083
    %v3159 = vunpack.c.h.b16 %v3083
    %v3160 = vunpack.c.l.b16 %v3084
    %v3161 = vunpack.c.h.b16 %v3084
    %v3162 = vunpack.c.l.b16 %v3085
    %v3163 = vunpack.c.h.b16 %v3085
    %v3164 = vunpack.c.l.b16 %v3086
    %v3165 = vunpack.c.h.b16 %v3086
    %v3166 = vunpack.c.l.b16 %v3087
    %v3167 = vunpack.c.h.b16 %v3087
    %v3168 = vunpack.c.l.b16 %v3088
    %v3169 = vunpack.c.h.b16 %v3088
    %v3170 = vunpack.c.l.b16 %v3089
    %v3171 = vunpack.c.h.b16 %v3089
    %v3172 = vunpack.c.l.b16 %v3090
    %v3173 = vunpack.c.h.b16 %v3090
    %v3174 = vunpack.c.l.b16 %v3091
    %v3175 = vunpack.c.h.b16 %v3091
    %v3176 = vunpack.c.l.b16 %v3092
    %v3177 = vunpack.c.h.b16 %v3092
    %v3178 = vunpack.c.l.b16 %v3093
    %v3179 = vunpack.c.h.b16 %v3093
    %v3180 = vunpack.c.l.b16 %v3094
    %v3181 = vunpack.c.h.b16 %v3094
    %v3182 = vunpack.c.l.b16 %v3095
    %v3183 = vunpack.c.h.b16 %v3095
    %v3184 = vunpack.c.l.b16 %v3096
    %v3185 = vunpack.c.h.b16 %v3096
    %v3186 = vunpack.c.l.b16 %v3097
    %v3187 = vunpack.c.h.b16 %v3097
    %v3188 = vunpack.c.l.b16 %v3098
    %v3189 = vunpack.c.h.b16 %v3098
    %v3190 = vunpack.c.l.b16 %v3099
    %v3191 = vunpack.c.h.b16 %v3099
    %v3192 = vunpack.c.l.b16 %v3100
    %v3193 = vunpack.c.h.b16 %v3100
    %v3194 = vunpack.c.l.b16 %v3101
    %v3195 = vunpack.c.h.b16 %v3101
    %v3196 = vunpack.c.l.b16 %v3102
    %v3197 = vunpack.c.h.b16 %v3102
    %v3198 = vunpack.c.l.b16 %v3103
    %v3199 = vunpack.c.h.b16 %v3103
    %v3200 = vpack.c.b16 %v3140, %v3136
    %v3201 = vpack.c.b16 %v3141, %v3137
    %v3202 = vpack.c.b16 %v3142, %v3138
    %v3203 = vpack.c.b16 %v3143, %v3139
    %v3204 = vpack.c.b16 %v3148, %v3144
    %v3205 = vpack.c.b16 %v3149, %v3145
    %v3206 = vpack.c.b16 %v3150, %v3146
    %v3207 = vpack.c.b16 %v3151, %v3147
    %v3208 = vpack.c.b16 %v3156, %v3152
    %v3209 = vpack.c.b16 %v3157, %v3153
    %v3210 = vpack.c.b16 %v3158, %v3154
    %v3211 = vpack.c.b16 %v3159, %v3155
    %v3212 = vpack.c.b16 %v3164, %v3160
    %v3213 = vpack.c.b16 %v3165, %v3161
    %v3214 = vpack.c.b16 %v3166, %v3162
    %v3215 = vpack.c.b16 %v3167, %v3163
    %v3216 = vpack.c.b16 %v3172, %v3168
    %v3217 = vpack.c.b16 %v3173, %v3169
    %v3218 = vpack.c.b16 %v3174, %v3170
    %v3219 = vpack.c.b16 %v3175, %v3171
    %v3220 = vpack.c.b16 %v3180, %v3176
    %v3221 = vpack.c.b16 %v3181, %v3177
    %v3222 = vpack.c.b16 %v3182, %v3178
    %v3223 = vpack.c.b16 %v3183, %v3179
    %v3224 = vpack.c.b16 %v3188, %v3184
    %v3225 = vpack.c.b16 %v3189, %v3185
    %v3226 = vpack.c.b16 %v3190, %v3186
    %v3227 = vpack.c.b16 %v3191, %v3187
    %v3228 = vpack.c.b16 %v3196, %v3192
    %v3229 = vpack.c.b16 %v3197, %v3193
    %v3230 = vpack.c.b16 %v3198, %v3194
    %v3231 = vpack.c.b16 %v3199, %v3195
    %3264 = vmatprep.subr.bf16.mxu0 %v3201
    %3265 = vmatpush1.bf16.msra.mxu0 %v3200
    %3266 = vmatprep.subr.bf16.mxu0 %v3205
    %3267 = vmatpush1.bf16.msra.mxu0 %v3204
    %3268 = vmatprep.subr.bf16.mxu0 %v3209
    %3269 = vmatpush1.bf16.msra.mxu0 %v3208
    %3270 = vmatprep.subr.bf16.mxu0 %v3213
    %3271 = vmatpush1.bf16.msra.mxu0 %v3212
    %3272 = vmatprep.subr.bf16.mxu0 %v3217
    %3273 = vmatpush1.bf16.msra.mxu0 %v3216
    %3274 = vmatprep.subr.bf16.mxu0 %v3221
    %3275 = vmatpush1.bf16.msra.mxu0 %v3220
    %3276 = vmatprep.subr.bf16.mxu0 %v3225
    %3277 = vmatpush1.bf16.msra.mxu0 %v3224
    %3278 = vmatprep.subr.bf16.mxu0 %v3229
    %3279 = vmatpush1.bf16.msra.mxu0 %v3228
    %3280 = vmatprep.subr.bf16.mxu0 0
    %3281 = vmatpush1.bf16.msra.mxu0 0
    %3282 = vmatprep.subr.bf16.mxu0 0
    %3283 = vmatpush1.bf16.msra.mxu0 0
    %3284 = vmatprep.subr.bf16.mxu0 0
    %3285 = vmatpush1.bf16.msra.mxu0 0
    %3286 = vmatprep.subr.bf16.mxu0 0
    %3287 = vmatpush1.bf16.msra.mxu0 0
    %3288 = vmatprep.subr.bf16.mxu0 0
    %3289 = vmatpush1.bf16.msra.mxu0 0
    %3290 = vmatprep.subr.bf16.mxu0 0
    %3291 = vmatpush1.bf16.msra.mxu0 0
    %3292 = vmatprep.subr.bf16.mxu0 0
    %3293 = vmatpush1.bf16.msra.mxu0 0
    %3294 = vmatprep.subr.bf16.mxu0 0
    %3295 = vmatpush1.bf16.msra.mxu0 0
    %3296 = vmatprep.mubr.bf16.mxu0 0
    %3297 = vmatmul.mubr.bf16.gmra.mrb[0].mxu0 %v3062
    %v3298 = vpop.f32.mrb[0].mxu0
    %v3299 = vadd.f32 0.0, %v3298
    %v3300 = vpop.f32.mrb[0].mxu0
    %v3301 = vadd.f32 0.0, %v3300
    %v3302 = vpop.f32.mrb[0].mxu0
    %v3303 = vpop.f32.mrb[0].mxu0
    %3304 = vdwg.mxu0
    %3305 = vmatprep.subr.bf16.mxu0 %v3203
    %3306 = vmatpush1.bf16.msra.mxu0 %v3202
    %3307 = vmatprep.subr.bf16.mxu0 %v3207
    %3308 = vmatpush1.bf16.msra.mxu0 %v3206
    %3309 = vmatprep.subr.bf16.mxu0 %v3211
    %3310 = vmatpush1.bf16.msra.mxu0 %v3210
    %3311 = vmatprep.subr.bf16.mxu0 %v3215
    %3312 = vmatpush1.bf16.msra.mxu0 %v3214
    %3313 = vmatprep.subr.bf16.mxu0 %v3219
    %3314 = vmatpush1.bf16.msra.mxu0 %v3218
    %3315 = vmatprep.subr.bf16.mxu0 %v3223
    %3316 = vmatpush1.bf16.msra.mxu0 %v3222
    %3317 = vmatprep.subr.bf16.mxu0 %v3227
    %3318 = vmatpush1.bf16.msra.mxu0 %v3226
    %3319 = vmatprep.subr.bf16.mxu0 %v3231
    %3320 = vmatpush1.bf16.msra.mxu0 %v3230
    %3321 = vmatprep.subr.bf16.mxu0 0
    %3322 = vmatpush1.bf16.msra.mxu0 0
    %3323 = vmatprep.subr.bf16.mxu0 0
    %3324 = vmatpush1.bf16.msra.mxu0 0
    %3325 = vmatprep.subr.bf16.mxu0 0
    %3326 = vmatpush1.bf16.msra.mxu0 0
    %3327 = vmatprep.subr.bf16.mxu0 0
    %3328 = vmatpush1.bf16.msra.mxu0 0
    %3329 = vmatprep.subr.bf16.mxu0 0
    %3330 = vmatpush1.bf16.msra.mxu0 0
    %3331 = vmatprep.subr.bf16.mxu0 0
    %3332 = vmatpush1.bf16.msra.mxu0 0
    %3333 = vmatprep.subr.bf16.mxu0 0
    %3334 = vmatpush1.bf16.msra.mxu0 0
    %3335 = vmatprep.subr.bf16.mxu0 0
    %3336 = vmatpush1.bf16.msra.mxu0 0
    %3337 = vmatprep.mubr.bf16.mxu0 0
    %3338 = vmatmul.mubr.bf16.gmra.mrb[0].mxu0 %v3062
    %v3339 = vpop.f32.mrb[0].mxu0
    %v3340 = vadd.f32 0.0, %v3339
    %v3341 = vpop.f32.mrb[0].mxu0
    %v3342 = vadd.f32 0.0, %v3341
    %v3343 = vpop.f32.mrb[0].mxu0
    %v3344 = vpop.f32.mrb[0].mxu0
    %3345 = vdwg.mxu0
    %v3346 = vadd.f32 %v3068, %v3299
    %v3347 = vadd.f32 %v3069, %v3301
    %v3348 = vadd.f32 %v3070, %v3340
    %v3349 = vadd.f32 %v3071, %v3342
    %v3350 = vxor.u32 %v3346, 2147483648
    %v3351 = vmul.f32 %v3350, 1.442695
    %v3352 = vpow.pop %v3351
    %v3353 = vadd.f32 %v3352, 1.0
    %v3354 = vrcp.pop %v3353
    %v3355 = vmul.f32 1.0, %v3354
    %v3356 = vxor.u32 %v3347, 2147483648
    %v3357 = vmul.f32 %v3356, 1.442695
    %v3358 = vpow.pop %v3357
    %v3359 = vadd.f32 %v3358, 1.0
    %v3360 = vrcp.pop %v3359
    %v3361 = vmul.f32 1.0, %v3360
    %v3362 = vtanh.pop %v3348
    %v3363 = vxor.u32 %v3349, 2147483648
    %v3364 = vmul.f32 %v3363, 1.442695
    %v3365 = vpow.pop %v3364
    %v3366 = vadd.f32 %v3365, 1.0
    %v3367 = vrcp.pop %v3366
    %v3368 = vmul.f32 1.0, %v3367
    %v3369 = vmul.f32 %v3361, %v3061
    %v3370 = vmul.f32 %v3355, %v3362
    %v3371 = vadd.f32 %v3369, %v3370
    %v3372 = vtanh.pop %v3371
    %v3373 = vmul.f32 %v3368, %v3372
    %s3374 = scalar_lea.vmem %s1, 48
    %v3375 = vld [vmem:[%s3374] sm:$0xff]
    %vm3376 = vcmp.gt.f32.partialorder %v3375, 0.5
    %v3377 = vsel %vm3376, %v3373, %v3060
    %v3378 = vsel %vm3376, %v3371, %v3061
    %v3379 = vpack.c.bf16 %v3377, %v3377
    %3380 = vst [vmem:[#allocation6 + $0x30] sm:$0xf] %v3379
    %v3382 = vrot.slane %v3379, 4
    %3384 = vst [vmem:[#allocation6 + $0x8] sm:$0xf0] %v3382
    %v3385 = vld [vmem:[#allocation7 + $0xe0] sm:$0xff]
    %v3386 = vld [vmem:[#allocation7 + $0xe8] sm:$0xff]
    %v3387 = vld [vmem:[#allocation7 + $0xf0] sm:$0xff]
    %v3388 = vld [vmem:[#allocation7 + $0xf8] sm:$0xff]
    %v3389 = vld [vmem:[#allocation11] sm:$0xff]
    %v3390 = vld [vmem:[#allocation11 + $0x8] sm:$0xff]
    %v3391 = vld [vmem:[#allocation11 + $0x10] sm:$0xff]
    %v3392 = vld [vmem:[#allocation11 + $0x18] sm:$0xff]
    %v3393 = vld [vmem:[#allocation11 + $0x20] sm:$0xff]
    %v3394 = vld [vmem:[#allocation11 + $0x28] sm:$0xff]
    %v3395 = vld [vmem:[#allocation11 + $0x30] sm:$0xff]
    %v3396 = vld [vmem:[#allocation11 + $0x38] sm:$0xff]
    %v3397 = vld [vmem:[#allocation11 + $0x40] sm:$0xff]
    %v3398 = vld [vmem:[#allocation11 + $0x48] sm:$0xff]
    %v3399 = vld [vmem:[#allocation11 + $0x50] sm:$0xff]
    %v3400 = vld [vmem:[#allocation11 + $0x58] sm:$0xff]
    %v3401 = vld [vmem:[#allocation11 + $0x60] sm:$0xff]
    %v3402 = vld [vmem:[#allocation11 + $0x68] sm:$0xff]
    %v3403 = vld [vmem:[#allocation11 + $0x70] sm:$0xff]
    %v3404 = vld [vmem:[#allocation11 + $0x78] sm:$0xff]
    %v3405 = vld [vmem:[#allocation11 + $0x80] sm:$0xff]
    %v3406 = vld [vmem:[#allocation11 + $0x88] sm:$0xff]
    %v3407 = vld [vmem:[#allocation11 + $0x90] sm:$0xff]
    %v3408 = vld [vmem:[#allocation11 + $0x98] sm:$0xff]
    %v3409 = vld [vmem:[#allocation11 + $0xa0] sm:$0xff]
    %v3410 = vld [vmem:[#allocation11 + $0xa8] sm:$0xff]
    %v3411 = vld [vmem:[#allocation11 + $0xb0] sm:$0xff]
    %v3412 = vld [vmem:[#allocation11 + $0xb8] sm:$0xff]
    %v3413 = vld [vmem:[#allocation11 + $0xc0] sm:$0xff]
    %v3414 = vld [vmem:[#allocation11 + $0xc8] sm:$0xff]
    %v3415 = vld [vmem:[#allocation11 + $0xd0] sm:$0xff]
    %v3416 = vld [vmem:[#allocation11 + $0xd8] sm:$0xff]
    %v3417 = vld [vmem:[#allocation11 + $0xe0] sm:$0xff]
    %v3418 = vld [vmem:[#allocation11 + $0xe8] sm:$0xff]
    %v3419 = vld [vmem:[#allocation11 + $0xf0] sm:$0xff]
    %v3420 = vld [vmem:[#allocation11 + $0xf8] sm:$0xff]
    %v3453 = vunpack.c.l.b16 %v3389
    %v3454 = vunpack.c.h.b16 %v3389
    %v3455 = vunpack.c.l.b16 %v3390
    %v3456 = vunpack.c.h.b16 %v3390
    %v3457 = vunpack.c.l.b16 %v3391
    %v3458 = vunpack.c.h.b16 %v3391
    %v3459 = vunpack.c.l.b16 %v3392
    %v3460 = vunpack.c.h.b16 %v3392
    %v3461 = vunpack.c.l.b16 %v3393
    %v3462 = vunpack.c.h.b16 %v3393
    %v3463 = vunpack.c.l.b16 %v3394
    %v3464 = vunpack.c.h.b16 %v3394
    %v3465 = vunpack.c.l.b16 %v3395
    %v3466 = vunpack.c.h.b16 %v3395
    %v3467 = vunpack.c.l.b16 %v3396
    %v3468 = vunpack.c.h.b16 %v3396
    %v3469 = vunpack.c.l.b16 %v3397
    %v3470 = vunpack.c.h.b16 %v3397
    %v3471 = vunpack.c.l.b16 %v3398
    %v3472 = vunpack.c.h.b16 %v3398
    %v3473 = vunpack.c.l.b16 %v3399
    %v3474 = vunpack.c.h.b16 %v3399
    %v3475 = vunpack.c.l.b16 %v3400
    %v3476 = vunpack.c.h.b16 %v3400
    %v3477 = vunpack.c.l.b16 %v3401
    %v3478 = vunpack.c.h.b16 %v3401
    %v3479 = vunpack.c.l.b16 %v3402
    %v3480 = vunpack.c.h.b16 %v3402
    %v3481 = vunpack.c.l.b16 %v3403
    %v3482 = vunpack.c.h.b16 %v3403
    %v3483 = vunpack.c.l.b16 %v3404
    %v3484 = vunpack.c.h.b16 %v3404
    %v3485 = vunpack.c.l.b16 %v3405
    %v3486 = vunpack.c.h.b16 %v3405
    %v3487 = vunpack.c.l.b16 %v3406
    %v3488 = vunpack.c.h.b16 %v3406
    %v3489 = vunpack.c.l.b16 %v3407
    %v3490 = vunpack.c.h.b16 %v3407
    %v3491 = vunpack.c.l.b16 %v3408
    %v3492 = vunpack.c.h.b16 %v3408
    %v3493 = vunpack.c.l.b16 %v3409
    %v3494 = vunpack.c.h.b16 %v3409
    %v3495 = vunpack.c.l.b16 %v3410
    %v3496 = vunpack.c.h.b16 %v3410
    %v3497 = vunpack.c.l.b16 %v3411
    %v3498 = vunpack.c.h.b16 %v3411
    %v3499 = vunpack.c.l.b16 %v3412
    %v3500 = vunpack.c.h.b16 %v3412
    %v3501 = vunpack.c.l.b16 %v3413
    %v3502 = vunpack.c.h.b16 %v3413
    %v3503 = vunpack.c.l.b16 %v3414
    %v3504 = vunpack.c.h.b16 %v3414
    %v3505 = vunpack.c.l.b16 %v3415
    %v3506 = vunpack.c.h.b16 %v3415
    %v3507 = vunpack.c.l.b16 %v3416
    %v3508 = vunpack.c.h.b16 %v3416
    %v3509 = vunpack.c.l.b16 %v3417
    %v3510 = vunpack.c.h.b16 %v3417
    %v3511 = vunpack.c.l.b16 %v3418
    %v3512 = vunpack.c.h.b16 %v3418
    %v3513 = vunpack.c.l.b16 %v3419
    %v3514 = vunpack.c.h.b16 %v3419
    %v3515 = vunpack.c.l.b16 %v3420
    %v3516 = vunpack.c.h.b16 %v3420
    %v3517 = vpack.c.b16 %v3457, %v3453
    %v3518 = vpack.c.b16 %v3458, %v3454
    %v3519 = vpack.c.b16 %v3459, %v3455
    %v3520 = vpack.c.b16 %v3460, %v3456
    %v3521 = vpack.c.b16 %v3465, %v3461
    %v3522 = vpack.c.b16 %v3466, %v3462
    %v3523 = vpack.c.b16 %v3467, %v3463
    %v3524 = vpack.c.b16 %v3468, %v3464
    %v3525 = vpack.c.b16 %v3473, %v3469
    %v3526 = vpack.c.b16 %v3474, %v3470
    %v3527 = vpack.c.b16 %v3475, %v3471
    %v3528 = vpack.c.b16 %v3476, %v3472
    %v3529 = vpack.c.b16 %v3481, %v3477
    %v3530 = vpack.c.b16 %v3482, %v3478
    %v3531 = vpack.c.b16 %v3483, %v3479
    %v3532 = vpack.c.b16 %v3484, %v3480
    %v3533 = vpack.c.b16 %v3489, %v3485
    %v3534 = vpack.c.b16 %v3490, %v3486
    %v3535 = vpack.c.b16 %v3491, %v3487
    %v3536 = vpack.c.b16 %v3492, %v3488
    %v3537 = vpack.c.b16 %v3497, %v3493
    %v3538 = vpack.c.b16 %v3498, %v3494
    %v3539 = vpack.c.b16 %v3499, %v3495
    %v3540 = vpack.c.b16 %v3500, %v3496
    %v3541 = vpack.c.b16 %v3505, %v3501
    %v3542 = vpack.c.b16 %v3506, %v3502
    %v3543 = vpack.c.b16 %v3507, %v3503
    %v3544 = vpack.c.b16 %v3508, %v3504
    %v3545 = vpack.c.b16 %v3513, %v3509
    %v3546 = vpack.c.b16 %v3514, %v3510
    %v3547 = vpack.c.b16 %v3515, %v3511
    %v3548 = vpack.c.b16 %v3516, %v3512
    %3581 = vmatprep.subr.bf16.mxu0 %v3518
    %3582 = vmatpush1.bf16.msra.mxu0 %v3517
    %3583 = vmatprep.subr.bf16.mxu0 %v3522
    %3584 = vmatpush1.bf16.msra.mxu0 %v3521
    %3585 = vmatprep.subr.bf16.mxu0 %v3526
    %3586 = vmatpush1.bf16.msra.mxu0 %v3525
    %3587 = vmatprep.subr.bf16.mxu0 %v3530
    %3588 = vmatpush1.bf16.msra.mxu0 %v3529
    %3589 = vmatprep.subr.bf16.mxu0 %v3534
    %3590 = vmatpush1.bf16.msra.mxu0 %v3533
    %3591 = vmatprep.subr.bf16.mxu0 %v3538
    %3592 = vmatpush1.bf16.msra.mxu0 %v3537
    %3593 = vmatprep.subr.bf16.mxu0 %v3542
    %3594 = vmatpush1.bf16.msra.mxu0 %v3541
    %3595 = vmatprep.subr.bf16.mxu0 %v3546
    %3596 = vmatpush1.bf16.msra.mxu0 %v3545
    %3597 = vmatprep.subr.bf16.mxu0 0
    %3598 = vmatpush1.bf16.msra.mxu0 0
    %3599 = vmatprep.subr.bf16.mxu0 0
    %3600 = vmatpush1.bf16.msra.mxu0 0
    %3601 = vmatprep.subr.bf16.mxu0 0
    %3602 = vmatpush1.bf16.msra.mxu0 0
    %3603 = vmatprep.subr.bf16.mxu0 0
    %3604 = vmatpush1.bf16.msra.mxu0 0
    %3605 = vmatprep.subr.bf16.mxu0 0
    %3606 = vmatpush1.bf16.msra.mxu0 0
    %3607 = vmatprep.subr.bf16.mxu0 0
    %3608 = vmatpush1.bf16.msra.mxu0 0
    %3609 = vmatprep.subr.bf16.mxu0 0
    %3610 = vmatpush1.bf16.msra.mxu0 0
    %3611 = vmatprep.subr.bf16.mxu0 0
    %3612 = vmatpush1.bf16.msra.mxu0 0
    %3613 = vmatprep.mubr.bf16.mxu0 0
    %3614 = vmatmul.mubr.bf16.gmra.mrb[0].mxu0 %v3379
    %v3615 = vpop.f32.mrb[0].mxu0
    %v3616 = vadd.f32 0.0, %v3615
    %v3617 = vpop.f32.mrb[0].mxu0
    %v3618 = vadd.f32 0.0, %v3617
    %v3619 = vpop.f32.mrb[0].mxu0
    %v3620 = vpop.f32.mrb[0].mxu0
    %3621 = vdwg.mxu0
    %3622 = vmatprep.subr.bf16.mxu0 %v3520
    %3623 = vmatpush1.bf16.msra.mxu0 %v3519
    %3624 = vmatprep.subr.bf16.mxu0 %v3524
    %3625 = vmatpush1.bf16.msra.mxu0 %v3523
    %3626 = vmatprep.subr.bf16.mxu0 %v3528
    %3627 = vmatpush1.bf16.msra.mxu0 %v3527
    %3628 = vmatprep.subr.bf16.mxu0 %v3532
    %3629 = vmatpush1.bf16.msra.mxu0 %v3531
    %3630 = vmatprep.subr.bf16.mxu0 %v3536
    %3631 = vmatpush1.bf16.msra.mxu0 %v3535
    %3632 = vmatprep.subr.bf16.mxu0 %v3540
    %3633 = vmatpush1.bf16.msra.mxu0 %v3539
    %3634 = vmatprep.subr.bf16.mxu0 %v3544
    %3635 = vmatpush1.bf16.msra.mxu0 %v3543
    %3636 = vmatprep.subr.bf16.mxu0 %v3548
    %3637 = vmatpush1.bf16.msra.mxu0 %v3547
    %3638 = vmatprep.subr.bf16.mxu0 0
    %3639 = vmatpush1.bf16.msra.mxu0 0
    %3640 = vmatprep.subr.bf16.mxu0 0
    %3641 = vmatpush1.bf16.msra.mxu0 0
    %3642 = vmatprep.subr.bf16.mxu0 0
    %3643 = vmatpush1.bf16.msra.mxu0 0
    %3644 = vmatprep.subr.bf16.mxu0 0
    %3645 = vmatpush1.bf16.msra.mxu0 0
    %3646 = vmatprep.subr.bf16.mxu0 0
    %3647 = vmatpush1.bf16.msra.mxu0 0
    %3648 = vmatprep.subr.bf16.mxu0 0
    %3649 = vmatpush1.bf16.msra.mxu0 0
    %3650 = vmatprep.subr.bf16.mxu0 0
    %3651 = vmatpush1.bf16.msra.mxu0 0
    %3652 = vmatprep.subr.bf16.mxu0 0
    %3653 = vmatpush1.bf16.msra.mxu0 0
    %3654 = vmatprep.mubr.bf16.mxu0 0
    %3655 = vmatmul.mubr.bf16.gmra.mrb[0].mxu0 %v3379
    %v3656 = vpop.f32.mrb[0].mxu0
    %v3657 = vadd.f32 0.0, %v3656
    %v3658 = vpop.f32.mrb[0].mxu0
    %v3659 = vadd.f32 0.0, %v3658
    %v3660 = vpop.f32.mrb[0].mxu0
    %v3661 = vpop.f32.mrb[0].mxu0
    %3662 = vdwg.mxu0
    %v3663 = vadd.f32 %v3385, %v3616
    %v3664 = vadd.f32 %v3386, %v3618
    %v3665 = vadd.f32 %v3387, %v3657
    %v3666 = vadd.f32 %v3388, %v3659
    %v3667 = vxor.u32 %v3663, 2147483648
    %v3668 = vmul.f32 %v3667, 1.442695
    %v3669 = vpow.pop %v3668
    %v3670 = vadd.f32 %v3669, 1.0
    %v3671 = vrcp.pop %v3670
    %v3672 = vmul.f32 1.0, %v3671
    %v3673 = vxor.u32 %v3664, 2147483648
    %v3674 = vmul.f32 %v3673, 1.442695
    %v3675 = vpow.pop %v3674
    %v3676 = vadd.f32 %v3675, 1.0
    %v3677 = vrcp.pop %v3676
    %v3678 = vmul.f32 1.0, %v3677
    %v3679 = vtanh.pop %v3665
    %v3680 = vxor.u32 %v3666, 2147483648
    %v3681 = vmul.f32 %v3680, 1.442695
    %v3682 = vpow.pop %v3681
    %v3683 = vadd.f32 %v3682, 1.0
    %v3684 = vrcp.pop %v3683
    %v3685 = vmul.f32 1.0, %v3684
    %v3686 = vmul.f32 %v3678, %v3378
    %v3687 = vmul.f32 %v3672, %v3679
    %v3688 = vadd.f32 %v3686, %v3687
    %v3689 = vtanh.pop %v3688
    %v3690 = vmul.f32 %v3685, %v3689
    %s3691 = scalar_lea.vmem %s1, 56
    %v3692 = vld [vmem:[%s3691] sm:$0xff]
    %vm3693 = vcmp.gt.f32.partialorder %v3692, 0.5
    %v3694 = vsel %vm3693, %v3690, %v3377
    %v3695 = vpack.c.bf16 %v3694, %v3694
    %v3697 = vrot.slane %v3695, 4
    %3699 = vst [vmem:[#allocation6 + $0x30] sm:$0xf0] %v3697
    %3700 = vst [vmem:[#allocation6 + $0x8] sm:$0xf] %v3695
    %s3701 = smul.u32 4, 32
    %s3702 = smul.u32 %s3701, 4
    %s3703 = sshll.u32 %s3702, 4
    %3704 = dma.done [#allocation8], %s3703
    %v3705 = vld [vmem:[#allocation6] sm:$0xff]
    %v3706 = vld [vmem:[#allocation6 + $0x8] sm:$0xff]
    %v3707 = vld [vmem:[#allocation6 + $0x10] sm:$0xff]
    %v3708 = vld [vmem:[#allocation6 + $0x18] sm:$0xff]
    %v3709 = vld [vmem:[#allocation6 + $0x20] sm:$0xff]
    %v3710 = vld [vmem:[#allocation6 + $0x28] sm:$0xff]
    %v3711 = vld [vmem:[#allocation6 + $0x30] sm:$0xff]
    %v3712 = vld [vmem:[#allocation6 + $0x38] sm:$0xff]
    %v3713 = vld [vmem:[#allocation2] sm:$0xff]
    %v3714 = vld [vmem:[#allocation2 + $0x8] sm:$0xff]
    %v3715 = vld [vmem:[#allocation2 + $0x10] sm:$0xff]
    %v3716 = vld [vmem:[#allocation2 + $0x18] sm:$0xff]
    %v3717 = vld [vmem:[#allocation2 + $0x20] sm:$0xff]
    %v3718 = vld [vmem:[#allocation2 + $0x28] sm:$0xff]
    %v3719 = vld [vmem:[#allocation2 + $0x30] sm:$0xff]
    %v3720 = vld [vmem:[#allocation2 + $0x38] sm:$0xff]
    %v3721 = vld [vmem:[#allocation2 + $0x40] sm:$0xff]
    %v3722 = vld [vmem:[#allocation2 + $0x48] sm:$0xff]
    %v3723 = vld [vmem:[#allocation2 + $0x50] sm:$0xff]
    %v3724 = vld [vmem:[#allocation2 + $0x58] sm:$0xff]
    %v3725 = vld [vmem:[#allocation2 + $0x60] sm:$0xff]
    %v3726 = vld [vmem:[#allocation2 + $0x68] sm:$0xff]
    %v3727 = vld [vmem:[#allocation2 + $0x70] sm:$0xff]
    %v3728 = vld [vmem:[#allocation2 + $0x78] sm:$0xff]
    %v3729 = vld [vmem:[#allocation2 + $0x80] sm:$0xff]
    %v3730 = vld [vmem:[#allocation2 + $0x88] sm:$0xff]
    %v3731 = vld [vmem:[#allocation2 + $0x90] sm:$0xff]
    %v3732 = vld [vmem:[#allocation2 + $0x98] sm:$0xff]
    %v3733 = vld [vmem:[#allocation2 + $0xa0] sm:$0xff]
    %v3734 = vld [vmem:[#allocation2 + $0xa8] sm:$0xff]
    %v3735 = vld [vmem:[#allocation2 + $0xb0] sm:$0xff]
    %v3736 = vld [vmem:[#allocation2 + $0xb8] sm:$0xff]
    %v3737 = vld [vmem:[#allocation2 + $0xc0] sm:$0xff]
    %v3738 = vld [vmem:[#allocation2 + $0xc8] sm:$0xff]
    %v3739 = vld [vmem:[#allocation2 + $0xd0] sm:$0xff]
    %v3740 = vld [vmem:[#allocation2 + $0xd8] sm:$0xff]
    %v3741 = vld [vmem:[#allocation2 + $0xe0] sm:$0xff]
    %v3742 = vld [vmem:[#allocation2 + $0xe8] sm:$0xff]
    %v3743 = vld [vmem:[#allocation2 + $0xf0] sm:$0xff]
    %v3744 = vld [vmem:[#allocation2 + $0xf8] sm:$0xff]
    %v3745 = vld [vmem:[#allocation2 + $0x100] sm:$0xff]
    %v3746 = vld [vmem:[#allocation2 + $0x108] sm:$0xff]
    %v3747 = vld [vmem:[#allocation2 + $0x110] sm:$0xff]
    %v3748 = vld [vmem:[#allocation2 + $0x118] sm:$0xff]
    %v3749 = vld [vmem:[#allocation2 + $0x120] sm:$0xff]
    %v3750 = vld [vmem:[#allocation2 + $0x128] sm:$0xff]
    %v3751 = vld [vmem:[#allocation2 + $0x130] sm:$0xff]
    %v3752 = vld [vmem:[#allocation2 + $0x138] sm:$0xff]
    %v3753 = vld [vmem:[#allocation2 + $0x140] sm:$0xff]
    %v3754 = vld [vmem:[#allocation2 + $0x148] sm:$0xff]
    %v3755 = vld [vmem:[#allocation2 + $0x150] sm:$0xff]
    %v3756 = vld [vmem:[#allocation2 + $0x158] sm:$0xff]
    %v3757 = vld [vmem:[#allocation2 + $0x160] sm:$0xff]
    %v3758 = vld [vmem:[#allocation2 + $0x168] sm:$0xff]
    %v3759 = vld [vmem:[#allocation2 + $0x170] sm:$0xff]
    %v3760 = vld [vmem:[#allocation2 + $0x178] sm:$0xff]
    %v3761 = vld [vmem:[#allocation2 + $0x180] sm:$0xff]
    %v3762 = vld [vmem:[#allocation2 + $0x188] sm:$0xff]
    %v3763 = vld [vmem:[#allocation2 + $0x190] sm:$0xff]
    %v3764 = vld [vmem:[#allocation2 + $0x198] sm:$0xff]
    %v3765 = vld [vmem:[#allocation2 + $0x1a0] sm:$0xff]
    %v3766 = vld [vmem:[#allocation2 + $0x1a8] sm:$0xff]
    %v3767 = vld [vmem:[#allocation2 + $0x1b0] sm:$0xff]
    %v3768 = vld [vmem:[#allocation2 + $0x1b8] sm:$0xff]
    %v3769 = vld [vmem:[#allocation2 + $0x1c0] sm:$0xff]
    %v3770 = vld [vmem:[#allocation2 + $0x1c8] sm:$0xff]
    %v3771 = vld [vmem:[#allocation2 + $0x1d0] sm:$0xff]
    %v3772 = vld [vmem:[#allocation2 + $0x1d8] sm:$0xff]
    %v3773 = vld [vmem:[#allocation2 + $0x1e0] sm:$0xff]
    %v3774 = vld [vmem:[#allocation2 + $0x1e8] sm:$0xff]
    %v3775 = vld [vmem:[#allocation2 + $0x1f0] sm:$0xff]
    %v3776 = vld [vmem:[#allocation2 + $0x1f8] sm:$0xff]
    %v3777 = vld [vmem:[%s7] sm:$0xf]
    %v3779 = vlaneseq
    %v3780 = vshrl.u32 %v3779, 7
    %v3781 = vsub.s32 0, %v3780
    %v3782 = vrot.slane %v3777, %v3781
    %v3783 = vlaneseq
    %v3784 = vshrl.u32 %v3783, 7
    %v3785 = vsub.s32 1, %v3784
    %v3786 = vrot.slane %v3777, %v3785
    %v3787 = vlaneseq
    %v3788 = vshrl.u32 %v3787, 7
    %v3789 = vsub.s32 2, %v3788
    %v3790 = vrot.slane %v3777, %v3789
    %v3791 = vlaneseq
    %v3792 = vshrl.u32 %v3791, 7
    %v3793 = vsub.s32 3, %v3792
    %v3794 = vrot.slane %v3777, %v3793
    %3799 = vmatprep.subr.bf16.mxu0 %v3714
    %3800 = vmatpush1.bf16.msra.mxu0 %v3713
    %3801 = vmatprep.subr.bf16.mxu0 %v3718
    %3802 = vmatpush1.bf16.msra.mxu0 %v3717
    %3803 = vmatprep.subr.bf16.mxu0 %v3722
    %3804 = vmatpush1.bf16.msra.mxu0 %v3721
    %3805 = vmatprep.subr.bf16.mxu0 %v3726
    %3806 = vmatpush1.bf16.msra.mxu0 %v3725
    %3807 = vmatprep.subr.bf16.mxu0 %v3730
    %3808 = vmatpush1.bf16.msra.mxu0 %v3729
    %3809 = vmatprep.subr.bf16.mxu0 %v3734
    %3810 = vmatpush1.bf16.msra.mxu0 %v3733
    %3811 = vmatprep.subr.bf16.mxu0 %v3738
    %3812 = vmatpush1.bf16.msra.mxu0 %v3737
    %3813 = vmatprep.subr.bf16.mxu0 %v3742
    %3814 = vmatpush1.bf16.msra.mxu0 %v3741
    %3815 = vmatprep.subr.bf16.mxu0 %v3746
    %3816 = vmatpush1.bf16.msra.mxu0 %v3745
    %3817 = vmatprep.subr.bf16.mxu0 %v3750
    %3818 = vmatpush1.bf16.msra.mxu0 %v3749
    %3819 = vmatprep.subr.bf16.mxu0 %v3754
    %3820 = vmatpush1.bf16.msra.mxu0 %v3753
    %3821 = vmatprep.subr.bf16.mxu0 %v3758
    %3822 = vmatpush1.bf16.msra.mxu0 %v3757
    %3823 = vmatprep.subr.bf16.mxu0 %v3762
    %3824 = vmatpush1.bf16.msra.mxu0 %v3761
    %3825 = vmatprep.subr.bf16.mxu0 %v3766
    %3826 = vmatpush1.bf16.msra.mxu0 %v3765
    %3827 = vmatprep.subr.bf16.mxu0 %v3770
    %3828 = vmatpush1.bf16.msra.mxu0 %v3769
    %3829 = vmatprep.subr.bf16.mxu0 %v3774
    %3830 = vmatpush1.bf16.msra.mxu0 %v3773
    %3831 = vmatprep.mubr.bf16.mxu0 %v3706
    %3832 = vmatmul.mubr.bf16.gmra.mrb[0].mxu0 %v3705
    %v3833 = vpop.f32.mrb[0].mxu0
    %v3834 = vadd.f32 %v3782, %v3833
    %v3835 = vpop.f32.mrb[0].mxu0
    %v3836 = vadd.f32 %v3786, %v3835
    %v3837 = vpop.f32.mrb[0].mxu0
    %v3838 = vadd.f32 %v3782, %v3837
    %v3839 = vpop.f32.mrb[0].mxu0
    %v3840 = vadd.f32 %v3786, %v3839
    %3841 = vmatprep.mubr.bf16.mxu0 %v3708
    %3842 = vmatmul.mubr.bf16.gmra.mrb[0].mxu0 %v3707
    %v3843 = vpop.f32.mrb[0].mxu0
    %v3844 = vadd.f32 %v3782, %v3843
    %v3845 = vpop.f32.mrb[0].mxu0
    %v3846 = vadd.f32 %v3786, %v3845
    %v3847 = vpop.f32.mrb[0].mxu0
    %v3848 = vadd.f32 %v3782, %v3847
    %v3849 = vpop.f32.mrb[0].mxu0
    %v3850 = vadd.f32 %v3786, %v3849
    %3851 = vmatprep.mubr.bf16.mxu0 %v3710
    %3852 = vmatmul.mubr.bf16.gmra.mrb[0].mxu0 %v3709
    %v3853 = vpop.f32.mrb[0].mxu0
    %v3854 = vadd.f32 %v3782, %v3853
    %v3855 = vpop.f32.mrb[0].mxu0
    %v3856 = vadd.f32 %v3786, %v3855
    %v3857 = vpop.f32.mrb[0].mxu0
    %v3858 = vadd.f32 %v3782, %v3857
    %v3859 = vpop.f32.mrb[0].mxu0
    %v3860 = vadd.f32 %v3786, %v3859
    %3861 = vmatprep.mubr.bf16.mxu0 %v3712
    %3862 = vmatmul.mubr.bf16.gmra.mrb[0].mxu0 %v3711
    %v3863 = vpop.f32.mrb[0].mxu0
    %v3864 = vadd.f32 %v3782, %v3863
    %v3865 = vpop.f32.mrb[0].mxu0
    %v3866 = vadd.f32 %v3786, %v3865
    %v3867 = vpop.f32.mrb[0].mxu0
    %v3868 = vadd.f32 %v3782, %v3867
    %v3869 = vpop.f32.mrb[0].mxu0
    %v3870 = vadd.f32 %v3786, %v3869
    %3871 = vdwg.mxu0
    %3872 = vmatprep.subr.bf16.mxu0 %v3716
    %3873 = vmatpush1.bf16.msra.mxu0 %v3715
    %3874 = vmatprep.subr.bf16.mxu0 %v3720
    %3875 = vmatpush1.bf16.msra.mxu0 %v3719
    %3876 = vmatprep.subr.bf16.mxu0 %v3724
    %3877 = vmatpush1.bf16.msra.mxu0 %v3723
    %3878 = vmatprep.subr.bf16.mxu0 %v3728
    %3879 = vmatpush1.bf16.msra.mxu0 %v3727
    %3880 = vmatprep.subr.bf16.mxu0 %v3732
    %3881 = vmatpush1.bf16.msra.mxu0 %v3731
    %3882 = vmatprep.subr.bf16.mxu0 %v3736
    %3883 = vmatpush1.bf16.msra.mxu0 %v3735
    %3884 = vmatprep.subr.bf16.mxu0 %v3740
    %3885 = vmatpush1.bf16.msra.mxu0 %v3739
    %3886 = vmatprep.subr.bf16.mxu0 %v3744
    %3887 = vmatpush1.bf16.msra.mxu0 %v3743
    %3888 = vmatprep.subr.bf16.mxu0 %v3748
    %3889 = vmatpush1.bf16.msra.mxu0 %v3747
    %3890 = vmatprep.subr.bf16.mxu0 %v3752
    %3891 = vmatpush1.bf16.msra.mxu0 %v3751
    %3892 = vmatprep.subr.bf16.mxu0 %v3756
    %3893 = vmatpush1.bf16.msra.mxu0 %v3755
    %3894 = vmatprep.subr.bf16.mxu0 %v3760
    %3895 = vmatpush1.bf16.msra.mxu0 %v3759
    %3896 = vmatprep.subr.bf16.mxu0 %v3764
    %3897 = vmatpush1.bf16.msra.mxu0 %v3763
    %3898 = vmatprep.subr.bf16.mxu0 %v3768
    %3899 = vmatpush1.bf16.msra.mxu0 %v3767
    %3900 = vmatprep.subr.bf16.mxu0 %v3772
    %3901 = vmatpush1.bf16.msra.mxu0 %v3771
    %3902 = vmatprep.subr.bf16.mxu0 %v3776
    %3903 = vmatpush1.bf16.msra.mxu0 %v3775
    %3904 = vmatprep.mubr.bf16.mxu0 %v3706
    %3905 = vmatmul.mubr.bf16.gmra.mrb[0].mxu0 %v3705
    %v3906 = vpop.f32.mrb[0].mxu0
    %v3907 = vadd.f32 %v3790, %v3906
    %v3908 = vpop.f32.mrb[0].mxu0
    %v3909 = vadd.f32 %v3794, %v3908
    %v3910 = vpop.f32.mrb[0].mxu0
    %v3911 = vadd.f32 %v3790, %v3910
    %v3912 = vpop.f32.mrb[0].mxu0
    %v3913 = vadd.f32 %v3794, %v3912
    %3914 = vmatprep.mubr.bf16.mxu0 %v3708
    %3915 = vmatmul.mubr.bf16.gmra.mrb[0].mxu0 %v3707
    %v3916 = vpop.f32.mrb[0].mxu0
    %v3917 = vadd.f32 %v3790, %v3916
    %v3918 = vpop.f32.mrb[0].mxu0
    %v3919 = vadd.f32 %v3794, %v3918
    %v3920 = vpop.f32.mrb[0].mxu0
    %v3921 = vadd.f32 %v3790, %v3920
    %v3922 = vpop.f32.mrb[0].mxu0
    %v3923 = vadd.f32 %v3794, %v3922
    %3924 = vmatprep.mubr.bf16.mxu0 %v3710
    %3925 = vmatmul.mubr.bf16.gmra.mrb[0].mxu0 %v3709
    %v3926 = vpop.f32.mrb[0].mxu0
    %v3927 = vadd.f32 %v3790, %v3926
    %v3928 = vpop.f32.mrb[0].mxu0
    %v3929 = vadd.f32 %v3794, %v3928
    %v3930 = vpop.f32.mrb[0].mxu0
    %v3931 = vadd.f32 %v3790, %v3930
    %v3932 = vpop.f32.mrb[0].mxu0
    %v3933 = vadd.f32 %v3794, %v3932
    %3934 = vmatprep.mubr.bf16.mxu0 %v3712
    %3935 = vmatmul.mubr.bf16.gmra.mrb[0].mxu0 %v3711
    %v3936 = vpop.f32.mrb[0].mxu0
    %v3937 = vadd.f32 %v3790, %v3936
    %v3938 = vpop.f32.mrb[0].mxu0
    %v3939 = vadd.f32 %v3794, %v3938
    %v3940 = vpop.f32.mrb[0].mxu0
    %v3941 = vadd.f32 %v3790, %v3940
    %v3942 = vpop.f32.mrb[0].mxu0
    %v3943 = vadd.f32 %v3794, %v3942
    %3944 = vdwg.mxu0
    %3945 = vst [vmem:[#allocation7] sm:$0xff] %v3834
    %3946 = vst [vmem:[#allocation7 + $0x8] sm:$0xff] %v3836
    %3947 = vst [vmem:[#allocation7 + $0x10] sm:$0xff] %v3907
    %3948 = vst [vmem:[#allocation7 + $0x18] sm:$0xff] %v3909
    %3949 = vst [vmem:[#allocation7 + $0x20] sm:$0xff] %v3838
    %3950 = vst [vmem:[#allocation7 + $0x28] sm:$0xff] %v3840
    %3951 = vst [vmem:[#allocation7 + $0x30] sm:$0xff] %v3911
    %3952 = vst [vmem:[#allocation7 + $0x38] sm:$0xff] %v3913
    %3953 = vst [vmem:[#allocation7 + $0x40] sm:$0xff] %v3844
    %3954 = vst [vmem:[#allocation7 + $0x48] sm:$0xff] %v3846
    %3955 = vst [vmem:[#allocation7 + $0x50] sm:$0xff] %v3917
    %3956 = vst [vmem:[#allocation7 + $0x58] sm:$0xff] %v3919
    %3957 = vst [vmem:[#allocation7 + $0x60] sm:$0xff] %v3848
    %3958 = vst [vmem:[#allocation7 + $0x68] sm:$0xff] %v3850
    %3959 = vst [vmem:[#allocation7 + $0x70] sm:$0xff] %v3921
    %3960 = vst [vmem:[#allocation7 + $0x78] sm:$0xff] %v3923
    %3961 = vst [vmem:[#allocation7 + $0x80] sm:$0xff] %v3854
    %3962 = vst [vmem:[#allocation7 + $0x88] sm:$0xff] %v3856
    %3963 = vst [vmem:[#allocation7 + $0x90] sm:$0xff] %v3927
    %3964 = vst [vmem:[#allocation7 + $0x98] sm:$0xff] %v3929
    %3965 = vst [vmem:[#allocation7 + $0xa0] sm:$0xff] %v3858
    %3966 = vst [vmem:[#allocation7 + $0xa8] sm:$0xff] %v3860
    %3967 = vst [vmem:[#allocation7 + $0xb0] sm:$0xff] %v3931
    %3968 = vst [vmem:[#allocation7 + $0xb8] sm:$0xff] %v3933
    %3969 = vst [vmem:[#allocation7 + $0xc0] sm:$0xff] %v3864
    %3970 = vst [vmem:[#allocation7 + $0xc8] sm:$0xff] %v3866
    %3971 = vst [vmem:[#allocation7 + $0xd0] sm:$0xff] %v3937
    %3972 = vst [vmem:[#allocation7 + $0xd8] sm:$0xff] %v3939
    %3973 = vst [vmem:[#allocation7 + $0xe0] sm:$0xff] %v3868
    %3974 = vst [vmem:[#allocation7 + $0xe8] sm:$0xff] %v3870
    %3975 = vst [vmem:[#allocation7 + $0xf0] sm:$0xff] %v3941
    %3976 = vst [vmem:[#allocation7 + $0xf8] sm:$0xff] %v3943
    %s3977 = smul.u32 4, 16
    %s3978 = smul.u32 %s3977, 4
    %s3979 = sshll.u32 %s3978, 4
    %3980 = dma.done %s622, %s3979
    %v3981 = vld [vmem:[#allocation7] sm:$0xff]
    %v3982 = vld [vmem:[#allocation7 + $0x8] sm:$0xff]
    %v3983 = vld [vmem:[#allocation7 + $0x10] sm:$0xff]
    %v3984 = vld [vmem:[#allocation7 + $0x18] sm:$0xff]
    %v3985 = vld [vmem:[#allocation3] sm:$0xff]
    %v3986 = vld [vmem:[#allocation3 + $0x8] sm:$0xff]
    %v3987 = vld [vmem:[#allocation3 + $0x10] sm:$0xff]
    %v3988 = vld [vmem:[#allocation3 + $0x18] sm:$0xff]
    %v3989 = vld [vmem:[#allocation3 + $0x20] sm:$0xff]
    %v3990 = vld [vmem:[#allocation3 + $0x28] sm:$0xff]
    %v3991 = vld [vmem:[#allocation3 + $0x30] sm:$0xff]
    %v3992 = vld [vmem:[#allocation3 + $0x38] sm:$0xff]
    %v3993 = vld [vmem:[#allocation3 + $0x40] sm:$0xff]
    %v3994 = vld [vmem:[#allocation3 + $0x48] sm:$0xff]
    %v3995 = vld [vmem:[#allocation3 + $0x50] sm:$0xff]
    %v3996 = vld [vmem:[#allocation3 + $0x58] sm:$0xff]
    %v3997 = vld [vmem:[#allocation3 + $0x60] sm:$0xff]
    %v3998 = vld [vmem:[#allocation3 + $0x68] sm:$0xff]
    %v3999 = vld [vmem:[#allocation3 + $0x70] sm:$0xff]
    %v4000 = vld [vmem:[#allocation3 + $0x78] sm:$0xff]
    %v4001 = vld [vmem:[#allocation3 + $0x80] sm:$0xff]
    %v4002 = vld [vmem:[#allocation3 + $0x88] sm:$0xff]
    %v4003 = vld [vmem:[#allocation3 + $0x90] sm:$0xff]
    %v4004 = vld [vmem:[#allocation3 + $0x98] sm:$0xff]
    %v4005 = vld [vmem:[#allocation3 + $0xa0] sm:$0xff]
    %v4006 = vld [vmem:[#allocation3 + $0xa8] sm:$0xff]
    %v4007 = vld [vmem:[#allocation3 + $0xb0] sm:$0xff]
    %v4008 = vld [vmem:[#allocation3 + $0xb8] sm:$0xff]
    %v4009 = vld [vmem:[#allocation3 + $0xc0] sm:$0xff]
    %v4010 = vld [vmem:[#allocation3 + $0xc8] sm:$0xff]
    %v4011 = vld [vmem:[#allocation3 + $0xd0] sm:$0xff]
    %v4012 = vld [vmem:[#allocation3 + $0xd8] sm:$0xff]
    %v4013 = vld [vmem:[#allocation3 + $0xe0] sm:$0xff]
    %v4014 = vld [vmem:[#allocation3 + $0xe8] sm:$0xff]
    %v4015 = vld [vmem:[#allocation3 + $0xf0] sm:$0xff]
    %v4016 = vld [vmem:[#allocation3 + $0xf8] sm:$0xff]
    %4017 = vmatprep.subr.bf16.mxu0 %v3986
    %4018 = vmatpush1.bf16.msra.mxu0 %v3985
    %4019 = vmatprep.subr.bf16.mxu0 %v3990
    %4020 = vmatpush1.bf16.msra.mxu0 %v3989
    %4021 = vmatprep.subr.bf16.mxu0 %v3994
    %4022 = vmatpush1.bf16.msra.mxu0 %v3993
    %4023 = vmatprep.subr.bf16.mxu0 %v3998
    %4024 = vmatpush1.bf16.msra.mxu0 %v3997
    %4025 = vmatprep.subr.bf16.mxu0 %v4002
    %4026 = vmatpush1.bf16.msra.mxu0 %v4001
    %4027 = vmatprep.subr.bf16.mxu0 %v4006
    %4028 = vmatpush1.bf16.msra.mxu0 %v4005
    %4029 = vmatprep.subr.bf16.mxu0 %v4010
    %4030 = vmatpush1.bf16.msra.mxu0 %v4009
    %4031 = vmatprep.subr.bf16.mxu0 %v4014
    %4032 = vmatpush1.bf16.msra.mxu0 %v4013
    %4033 = vmatprep.subr.bf16.mxu0 0
    %4034 = vmatpush1.bf16.msra.mxu0 0
    %4035 = vmatprep.subr.bf16.mxu0 0
    %4036 = vmatpush1.bf16.msra.mxu0 0
    %4037 = vmatprep.subr.bf16.mxu0 0
    %4038 = vmatpush1.bf16.msra.mxu0 0
    %4039 = vmatprep.subr.bf16.mxu0 0
    %4040 = vmatpush1.bf16.msra.mxu0 0
    %4041 = vmatprep.subr.bf16.mxu0 0
    %4042 = vmatpush1.bf16.msra.mxu0 0
    %4043 = vmatprep.subr.bf16.mxu0 0
    %4044 = vmatpush1.bf16.msra.mxu0 0
    %4045 = vmatprep.subr.bf16.mxu0 0
    %4046 = vmatpush1.bf16.msra.mxu0 0
    %4047 = vmatprep.subr.bf16.mxu0 0
    %4048 = vmatpush1.bf16.msra.mxu0 0
    %4049 = vmatprep.mubr.bf16.mxu0 0
    %4050 = vmatmul.mubr.bf16.gmra.mrb[0].mxu0 0
    %v4051 = vpop.f32.mrb[0].mxu0
    %v4052 = vadd.f32 0.0, %v4051
    %v4053 = vpop.f32.mrb[0].mxu0
    %v4054 = vadd.f32 0.0, %v4053
    %v4055 = vpop.f32.mrb[0].mxu0
    %v4056 = vpop.f32.mrb[0].mxu0
    %4057 = vdwg.mxu0
    %4058 = vmatprep.subr.bf16.mxu0 %v3988
    %4059 = vmatpush1.bf16.msra.mxu0 %v3987
    %4060 = vmatprep.subr.bf16.mxu0 %v3992
    %4061 = vmatpush1.bf16.msra.mxu0 %v3991
    %4062 = vmatprep.subr.bf16.mxu0 %v3996
    %4063 = vmatpush1.bf16.msra.mxu0 %v3995
    %4064 = vmatprep.subr.bf16.mxu0 %v4000
    %4065 = vmatpush1.bf16.msra.mxu0 %v3999
    %4066 = vmatprep.subr.bf16.mxu0 %v4004
    %4067 = vmatpush1.bf16.msra.mxu0 %v4003
    %4068 = vmatprep.subr.bf16.mxu0 %v4008
    %4069 = vmatpush1.bf16.msra.mxu0 %v4007
    %4070 = vmatprep.subr.bf16.mxu0 %v4012
    %4071 = vmatpush1.bf16.msra.mxu0 %v4011
    %4072 = vmatprep.subr.bf16.mxu0 %v4016
    %4073 = vmatpush1.bf16.msra.mxu0 %v4015
    %4074 = vmatprep.subr.bf16.mxu0 0
    %4075 = vmatpush1.bf16.msra.mxu0 0
    %4076 = vmatprep.subr.bf16.mxu0 0
    %4077 = vmatpush1.bf16.msra.mxu0 0
    %4078 = vmatprep.subr.bf16.mxu0 0
    %4079 = vmatpush1.bf16.msra.mxu0 0
    %4080 = vmatprep.subr.bf16.mxu0 0
    %4081 = vmatpush1.bf16.msra.mxu0 0
    %4082 = vmatprep.subr.bf16.mxu0 0
    %4083 = vmatpush1.bf16.msra.mxu0 0
    %4084 = vmatprep.subr.bf16.mxu0 0
    %4085 = vmatpush1.bf16.msra.mxu0 0
    %4086 = vmatprep.subr.bf16.mxu0 0
    %4087 = vmatpush1.bf16.msra.mxu0 0
    %4088 = vmatprep.subr.bf16.mxu0 0
    %4089 = vmatpush1.bf16.msra.mxu0 0
    %4090 = vmatprep.mubr.bf16.mxu0 0
    %4091 = vmatmul.mubr.bf16.gmra.mrb[0].mxu0 0
    %v4092 = vpop.f32.mrb[0].mxu0
    %v4093 = vadd.f32 0.0, %v4092
    %v4094 = vpop.f32.mrb[0].mxu0
    %v4095 = vadd.f32 0.0, %v4094
    %v4096 = vpop.f32.mrb[0].mxu0
    %v4097 = vpop.f32.mrb[0].mxu0
    %4098 = vdwg.mxu0
    %v4099 = vadd.f32 %v3981, %v4052
    %v4100 = vadd.f32 %v3982, %v4054
    %v4101 = vadd.f32 %v3983, %v4093
    %v4102 = vadd.f32 %v3984, %v4095
    %v4103 = vxor.u32 %v4099, 2147483648
    %v4104 = vmul.f32 %v4103, 1.442695
    %v4105 = vpow.pop %v4104
    %v4106 = vadd.f32 %v4105, 1.0
    %v4107 = vrcp.pop %v4106
    %v4108 = vmul.f32 1.0, %v4107
    %v4109 = vxor.u32 %v4100, 2147483648
    %v4110 = vmul.f32 %v4109, 1.442695
    %v4111 = vpow.pop %v4110
    %v4112 = vadd.f32 %v4111, 1.0
    %v4113 = vrcp.pop %v4112
    %v4114 = vmul.f32 1.0, %v4113
    %v4115 = vtanh.pop %v4101
    %v4116 = vxor.u32 %v4102, 2147483648
    %v4117 = vmul.f32 %v4116, 1.442695
    %v4118 = vpow.pop %v4117
    %v4119 = vadd.f32 %v4118, 1.0
    %v4120 = vrcp.pop %v4119
    %v4121 = vmul.f32 1.0, %v4120
    %v4122 = vmul.f32 %v4114, 0.0
    %v4123 = vmul.f32 %v4108, %v4115
    %v4124 = vadd.f32 %v4122, %v4123
    %v4125 = vtanh.pop %v4124
    %v4126 = vmul.f32 %v4121, %v4125
    %v4127 = vld [vmem:[%s1] sm:$0xff]
    %vm4128 = vcmp.gt.f32.partialorder %v4127, 0.5
    %v4129 = vsel %vm4128, %v4126, 0.0
    %v4130 = vsel %vm4128, %v4124, 0.0
    %v4131 = vld [vmem:[#allocation7 + $0x20] sm:$0xff]
    %v4132 = vld [vmem:[#allocation7 + $0x28] sm:$0xff]
    %v4133 = vld [vmem:[#allocation7 + $0x30] sm:$0xff]
    %v4134 = vld [vmem:[#allocation7 + $0x38] sm:$0xff]
    %v4135 = vpack.c.bf16 %v4129, %v4129
    %4136 = vmatprep.subr.bf16.mxu0 %v3986
    %4137 = vmatpush1.bf16.msra.mxu0 %v3985
    %4138 = vmatprep.subr.bf16.mxu0 %v3990
    %4139 = vmatpush1.bf16.msra.mxu0 %v3989
    %4140 = vmatprep.subr.bf16.mxu0 %v3994
    %4141 = vmatpush1.bf16.msra.mxu0 %v3993
    %4142 = vmatprep.subr.bf16.mxu0 %v3998
    %4143 = vmatpush1.bf16.msra.mxu0 %v3997
    %4144 = vmatprep.subr.bf16.mxu0 %v4002
    %4145 = vmatpush1.bf16.msra.mxu0 %v4001
    %4146 = vmatprep.subr.bf16.mxu0 %v4006
    %4147 = vmatpush1.bf16.msra.mxu0 %v4005
    %4148 = vmatprep.subr.bf16.mxu0 %v4010
    %4149 = vmatpush1.bf16.msra.mxu0 %v4009
    %4150 = vmatprep.subr.bf16.mxu0 %v4014
    %4151 = vmatpush1.bf16.msra.mxu0 %v4013
    %4152 = vmatprep.subr.bf16.mxu0 0
    %4153 = vmatpush1.bf16.msra.mxu0 0
    %4154 = vmatprep.subr.bf16.mxu0 0
    %4155 = vmatpush1.bf16.msra.mxu0 0
    %4156 = vmatprep.subr.bf16.mxu0 0
    %4157 = vmatpush1.bf16.msra.mxu0 0
    %4158 = vmatprep.subr.bf16.mxu0 0
    %4159 = vmatpush1.bf16.msra.mxu0 0
    %4160 = vmatprep.subr.bf16.mxu0 0
    %4161 = vmatpush1.bf16.msra.mxu0 0
    %4162 = vmatprep.subr.bf16.mxu0 0
    %4163 = vmatpush1.bf16.msra.mxu0 0
    %4164 = vmatprep.subr.bf16.mxu0 0
    %4165 = vmatpush1.bf16.msra.mxu0 0
    %4166 = vmatprep.subr.bf16.mxu0 0
    %4167 = vmatpush1.bf16.msra.mxu0 0
    %4168 = vmatprep.mubr.bf16.mxu0 0
    %4169 = vmatmul.mubr.bf16.gmra.mrb[0].mxu0 %v4135
    %v4170 = vpop.f32.mrb[0].mxu0
    %v4171 = vadd.f32 0.0, %v4170
    %v4172 = vpop.f32.mrb[0].mxu0
    %v4173 = vadd.f32 0.0, %v4172
    %v4174 = vpop.f32.mrb[0].mxu0
    %v4175 = vpop.f32.mrb[0].mxu0
    %4176 = vdwg.mxu0
    %4177 = vmatprep.subr.bf16.mxu0 %v3988
    %4178 = vmatpush1.bf16.msra.mxu0 %v3987
    %4179 = vmatprep.subr.bf16.mxu0 %v3992
    %4180 = vmatpush1.bf16.msra.mxu0 %v3991
    %4181 = vmatprep.subr.bf16.mxu0 %v3996
    %4182 = vmatpush1.bf16.msra.mxu0 %v3995
    %4183 = vmatprep.subr.bf16.mxu0 %v4000
    %4184 = vmatpush1.bf16.msra.mxu0 %v3999
    %4185 = vmatprep.subr.bf16.mxu0 %v4004
    %4186 = vmatpush1.bf16.msra.mxu0 %v4003
    %4187 = vmatprep.subr.bf16.mxu0 %v4008
    %4188 = vmatpush1.bf16.msra.mxu0 %v4007
    %4189 = vmatprep.subr.bf16.mxu0 %v4012
    %4190 = vmatpush1.bf16.msra.mxu0 %v4011
    %4191 = vmatprep.subr.bf16.mxu0 %v4016
    %4192 = vmatpush1.bf16.msra.mxu0 %v4015
    %4193 = vmatprep.subr.bf16.mxu0 0
    %4194 = vmatpush1.bf16.msra.mxu0 0
    %4195 = vmatprep.subr.bf16.mxu0 0
    %4196 = vmatpush1.bf16.msra.mxu0 0
    %4197 = vmatprep.subr.bf16.mxu0 0
    %4198 = vmatpush1.bf16.msra.mxu0 0
    %4199 = vmatprep.subr.bf16.mxu0 0
    %4200 = vmatpush1.bf16.msra.mxu0 0
    %4201 = vmatprep.subr.bf16.mxu0 0
    %4202 = vmatpush1.bf16.msra.mxu0 0
    %4203 = vmatprep.subr.bf16.mxu0 0
    %4204 = vmatpush1.bf16.msra.mxu0 0
    %4205 = vmatprep.subr.bf16.mxu0 0
    %4206 = vmatpush1.bf16.msra.mxu0 0
    %4207 = vmatprep.subr.bf16.mxu0 0
    %4208 = vmatpush1.bf16.msra.mxu0 0
    %4209 = vmatprep.mubr.bf16.mxu0 0
    %4210 = vmatmul.mubr.bf16.gmra.mrb[0].mxu0 %v4135
    %v4211 = vpop.f32.mrb[0].mxu0
    %v4212 = vadd.f32 0.0, %v4211
    %v4213 = vpop.f32.mrb[0].mxu0
    %v4214 = vadd.f32 0.0, %v4213
    %v4215 = vpop.f32.mrb[0].mxu0
    %v4216 = vpop.f32.mrb[0].mxu0
    %4217 = vdwg.mxu0
    %v4218 = vadd.f32 %v4131, %v4171
    %v4219 = vadd.f32 %v4132, %v4173
    %v4220 = vadd.f32 %v4133, %v4212
    %v4221 = vadd.f32 %v4134, %v4214
    %v4222 = vxor.u32 %v4218, 2147483648
    %v4223 = vmul.f32 %v4222, 1.442695
    %v4224 = vpow.pop %v4223
    %v4225 = vadd.f32 %v4224, 1.0
    %v4226 = vrcp.pop %v4225
    %v4227 = vmul.f32 1.0, %v4226
    %v4228 = vxor.u32 %v4219, 2147483648
    %v4229 = vmul.f32 %v4228, 1.442695
    %v4230 = vpow.pop %v4229
    %v4231 = vadd.f32 %v4230, 1.0
    %v4232 = vrcp.pop %v4231
    %v4233 = vmul.f32 1.0, %v4232
    %v4234 = vtanh.pop %v4220
    %v4235 = vxor.u32 %v4221, 2147483648
    %v4236 = vmul.f32 %v4235, 1.442695
    %v4237 = vpow.pop %v4236
    %v4238 = vadd.f32 %v4237, 1.0
    %v4239 = vrcp.pop %v4238
    %v4240 = vmul.f32 1.0, %v4239
    %v4241 = vmul.f32 %v4233, %v4130
    %v4242 = vmul.f32 %v4227, %v4234
    %v4243 = vadd.f32 %v4241, %v4242
    %v4244 = vtanh.pop %v4243
    %v4245 = vmul.f32 %v4240, %v4244
    %v4246 = vld [vmem:[%s1789] sm:$0xff]
    %vm4247 = vcmp.gt.f32.partialorder %v4246, 0.5
    %v4248 = vsel %vm4247, %v4245, %v4129
    %v4249 = vsel %vm4247, %v4243, %v4130
    %v4250 = vld [vmem:[#allocation7 + $0x40] sm:$0xff]
    %v4251 = vld [vmem:[#allocation7 + $0x48] sm:$0xff]
    %v4252 = vld [vmem:[#allocation7 + $0x50] sm:$0xff]
    %v4253 = vld [vmem:[#allocation7 + $0x58] sm:$0xff]
    %v4254 = vpack.c.bf16 %v4248, %v4248
    %4255 = vmatprep.subr.bf16.mxu0 %v3986
    %4256 = vmatpush1.bf16.msra.mxu0 %v3985
    %4257 = vmatprep.subr.bf16.mxu0 %v3990
    %4258 = vmatpush1.bf16.msra.mxu0 %v3989
    %4259 = vmatprep.subr.bf16.mxu0 %v3994
    %4260 = vmatpush1.bf16.msra.mxu0 %v3993
    %4261 = vmatprep.subr.bf16.mxu0 %v3998
    %4262 = vmatpush1.bf16.msra.mxu0 %v3997
    %4263 = vmatprep.subr.bf16.mxu0 %v4002
    %4264 = vmatpush1.bf16.msra.mxu0 %v4001
    %4265 = vmatprep.subr.bf16.mxu0 %v4006
    %4266 = vmatpush1.bf16.msra.mxu0 %v4005
    %4267 = vmatprep.subr.bf16.mxu0 %v4010
    %4268 = vmatpush1.bf16.msra.mxu0 %v4009
    %4269 = vmatprep.subr.bf16.mxu0 %v4014
    %4270 = vmatpush1.bf16.msra.mxu0 %v4013
    %4271 = vmatprep.subr.bf16.mxu0 0
    %4272 = vmatpush1.bf16.msra.mxu0 0
    %4273 = vmatprep.subr.bf16.mxu0 0
    %4274 = vmatpush1.bf16.msra.mxu0 0
    %4275 = vmatprep.subr.bf16.mxu0 0
    %4276 = vmatpush1.bf16.msra.mxu0 0
    %4277 = vmatprep.subr.bf16.mxu0 0
    %4278 = vmatpush1.bf16.msra.mxu0 0
    %4279 = vmatprep.subr.bf16.mxu0 0
    %4280 = vmatpush1.bf16.msra.mxu0 0
    %4281 = vmatprep.subr.bf16.mxu0 0
    %4282 = vmatpush1.bf16.msra.mxu0 0
    %4283 = vmatprep.subr.bf16.mxu0 0
    %4284 = vmatpush1.bf16.msra.mxu0 0
    %4285 = vmatprep.subr.bf16.mxu0 0
    %4286 = vmatpush1.bf16.msra.mxu0 0
    %4287 = vmatprep.mubr.bf16.mxu0 0
    %4288 = vmatmul.mubr.bf16.gmra.mrb[0].mxu0 %v4254
    %v4289 = vpop.f32.mrb[0].mxu0
    %v4290 = vadd.f32 0.0, %v4289
    %v4291 = vpop.f32.mrb[0].mxu0
    %v4292 = vadd.f32 0.0, %v4291
    %v4293 = vpop.f32.mrb[0].mxu0
    %v4294 = vpop.f32.mrb[0].mxu0
    %4295 = vdwg.mxu0
    %4296 = vmatprep.subr.bf16.mxu0 %v3988
    %4297 = vmatpush1.bf16.msra.mxu0 %v3987
    %4298 = vmatprep.subr.bf16.mxu0 %v3992
    %4299 = vmatpush1.bf16.msra.mxu0 %v3991
    %4300 = vmatprep.subr.bf16.mxu0 %v3996
    %4301 = vmatpush1.bf16.msra.mxu0 %v3995
    %4302 = vmatprep.subr.bf16.mxu0 %v4000
    %4303 = vmatpush1.bf16.msra.mxu0 %v3999
    %4304 = vmatprep.subr.bf16.mxu0 %v4004
    %4305 = vmatpush1.bf16.msra.mxu0 %v4003
    %4306 = vmatprep.subr.bf16.mxu0 %v4008
    %4307 = vmatpush1.bf16.msra.mxu0 %v4007
    %4308 = vmatprep.subr.bf16.mxu0 %v4012
    %4309 = vmatpush1.bf16.msra.mxu0 %v4011
    %4310 = vmatprep.subr.bf16.mxu0 %v4016
    %4311 = vmatpush1.bf16.msra.mxu0 %v4015
    %4312 = vmatprep.subr.bf16.mxu0 0
    %4313 = vmatpush1.bf16.msra.mxu0 0
    %4314 = vmatprep.subr.bf16.mxu0 0
    %4315 = vmatpush1.bf16.msra.mxu0 0
    %4316 = vmatprep.subr.bf16.mxu0 0
    %4317 = vmatpush1.bf16.msra.mxu0 0
    %4318 = vmatprep.subr.bf16.mxu0 0
    %4319 = vmatpush1.bf16.msra.mxu0 0
    %4320 = vmatprep.subr.bf16.mxu0 0
    %4321 = vmatpush1.bf16.msra.mxu0 0
    %4322 = vmatprep.subr.bf16.mxu0 0
    %4323 = vmatpush1.bf16.msra.mxu0 0
    %4324 = vmatprep.subr.bf16.mxu0 0
    %4325 = vmatpush1.bf16.msra.mxu0 0
    %4326 = vmatprep.subr.bf16.mxu0 0
    %4327 = vmatpush1.bf16.msra.mxu0 0
    %4328 = vmatprep.mubr.bf16.mxu0 0
    %4329 = vmatmul.mubr.bf16.gmra.mrb[0].mxu0 %v4254
    %v4330 = vpop.f32.mrb[0].mxu0
    %v4331 = vadd.f32 0.0, %v4330
    %v4332 = vpop.f32.mrb[0].mxu0
    %v4333 = vadd.f32 0.0, %v4332
    %v4334 = vpop.f32.mrb[0].mxu0
    %v4335 = vpop.f32.mrb[0].mxu0
    %4336 = vdwg.mxu0
    %v4337 = vadd.f32 %v4250, %v4290
    %v4338 = vadd.f32 %v4251, %v4292
    %v4339 = vadd.f32 %v4252, %v4331
    %v4340 = vadd.f32 %v4253, %v4333
    %v4341 = vxor.u32 %v4337, 2147483648
    %v4342 = vmul.f32 %v4341, 1.442695
    %v4343 = vpow.pop %v4342
    %v4344 = vadd.f32 %v4343, 1.0
    %v4345 = vrcp.pop %v4344
    %v4346 = vmul.f32 1.0, %v4345
    %v4347 = vxor.u32 %v4338, 2147483648
    %v4348 = vmul.f32 %v4347, 1.442695
    %v4349 = vpow.pop %v4348
    %v4350 = vadd.f32 %v4349, 1.0
    %v4351 = vrcp.pop %v4350
    %v4352 = vmul.f32 1.0, %v4351
    %v4353 = vtanh.pop %v4339
    %v4354 = vxor.u32 %v4340, 2147483648
    %v4355 = vmul.f32 %v4354, 1.442695
    %v4356 = vpow.pop %v4355
    %v4357 = vadd.f32 %v4356, 1.0
    %v4358 = vrcp.pop %v4357
    %v4359 = vmul.f32 1.0, %v4358
    %v4360 = vmul.f32 %v4352, %v4249
    %v4361 = vmul.f32 %v4346, %v4353
    %v4362 = vadd.f32 %v4360, %v4361
    %v4363 = vtanh.pop %v4362
    %v4364 = vmul.f32 %v4359, %v4363
    %v4365 = vld [vmem:[%s2106] sm:$0xff]
    %vm4366 = vcmp.gt.f32.partialorder %v4365, 0.5
    %v4367 = vsel %vm4366, %v4364, %v4248
    %v4368 = vsel %vm4366, %v4362, %v4249
    %v4369 = vld [vmem:[#allocation7 + $0x60] sm:$0xff]
    %v4370 = vld [vmem:[#allocation7 + $0x68] sm:$0xff]
    %v4371 = vld [vmem:[#allocation7 + $0x70] sm:$0xff]
    %v4372 = vld [vmem:[#allocation7 + $0x78] sm:$0xff]
    %v4373 = vpack.c.bf16 %v4367, %v4367
    %4374 = vmatprep.subr.bf16.mxu0 %v3986
    %4375 = vmatpush1.bf16.msra.mxu0 %v3985
    %4376 = vmatprep.subr.bf16.mxu0 %v3990
    %4377 = vmatpush1.bf16.msra.mxu0 %v3989
    %4378 = vmatprep.subr.bf16.mxu0 %v3994
    %4379 = vmatpush1.bf16.msra.mxu0 %v3993
    %4380 = vmatprep.subr.bf16.mxu0 %v3998
    %4381 = vmatpush1.bf16.msra.mxu0 %v3997
    %4382 = vmatprep.subr.bf16.mxu0 %v4002
    %4383 = vmatpush1.bf16.msra.mxu0 %v4001
    %4384 = vmatprep.subr.bf16.mxu0 %v4006
    %4385 = vmatpush1.bf16.msra.mxu0 %v4005
    %4386 = vmatprep.subr.bf16.mxu0 %v4010
    %4387 = vmatpush1.bf16.msra.mxu0 %v4009
    %4388 = vmatprep.subr.bf16.mxu0 %v4014
    %4389 = vmatpush1.bf16.msra.mxu0 %v4013
    %4390 = vmatprep.subr.bf16.mxu0 0
    %4391 = vmatpush1.bf16.msra.mxu0 0
    %4392 = vmatprep.subr.bf16.mxu0 0
    %4393 = vmatpush1.bf16.msra.mxu0 0
    %4394 = vmatprep.subr.bf16.mxu0 0
    %4395 = vmatpush1.bf16.msra.mxu0 0
    %4396 = vmatprep.subr.bf16.mxu0 0
    %4397 = vmatpush1.bf16.msra.mxu0 0
    %4398 = vmatprep.subr.bf16.mxu0 0
    %4399 = vmatpush1.bf16.msra.mxu0 0
    %4400 = vmatprep.subr.bf16.mxu0 0
    %4401 = vmatpush1.bf16.msra.mxu0 0
    %4402 = vmatprep.subr.bf16.mxu0 0
    %4403 = vmatpush1.bf16.msra.mxu0 0
    %4404 = vmatprep.subr.bf16.mxu0 0
    %4405 = vmatpush1.bf16.msra.mxu0 0
    %4406 = vmatprep.mubr.bf16.mxu0 0
    %4407 = vmatmul.mubr.bf16.gmra.mrb[0].mxu0 %v4373
    %v4408 = vpop.f32.mrb[0].mxu0
    %v4409 = vadd.f32 0.0, %v4408
    %v4410 = vpop.f32.mrb[0].mxu0
    %v4411 = vadd.f32 0.0, %v4410
    %v4412 = vpop.f32.mrb[0].mxu0
    %v4413 = vpop.f32.mrb[0].mxu0
    %4414 = vdwg.mxu0
    %4415 = vmatprep.subr.bf16.mxu0 %v3988
    %4416 = vmatpush1.bf16.msra.mxu0 %v3987
    %4417 = vmatprep.subr.bf16.mxu0 %v3992
    %4418 = vmatpush1.bf16.msra.mxu0 %v3991
    %4419 = vmatprep.subr.bf16.mxu0 %v3996
    %4420 = vmatpush1.bf16.msra.mxu0 %v3995
    %4421 = vmatprep.subr.bf16.mxu0 %v4000
    %4422 = vmatpush1.bf16.msra.mxu0 %v3999
    %4423 = vmatprep.subr.bf16.mxu0 %v4004
    %4424 = vmatpush1.bf16.msra.mxu0 %v4003
    %4425 = vmatprep.subr.bf16.mxu0 %v4008
    %4426 = vmatpush1.bf16.msra.mxu0 %v4007
    %4427 = vmatprep.subr.bf16.mxu0 %v4012
    %4428 = vmatpush1.bf16.msra.mxu0 %v4011
    %4429 = vmatprep.subr.bf16.mxu0 %v4016
    %4430 = vmatpush1.bf16.msra.mxu0 %v4015
    %4431 = vmatprep.subr.bf16.mxu0 0
    %4432 = vmatpush1.bf16.msra.mxu0 0
    %4433 = vmatprep.subr.bf16.mxu0 0
    %4434 = vmatpush1.bf16.msra.mxu0 0
    %4435 = vmatprep.subr.bf16.mxu0 0
    %4436 = vmatpush1.bf16.msra.mxu0 0
    %4437 = vmatprep.subr.bf16.mxu0 0
    %4438 = vmatpush1.bf16.msra.mxu0 0
    %4439 = vmatprep.subr.bf16.mxu0 0
    %4440 = vmatpush1.bf16.msra.mxu0 0
    %4441 = vmatprep.subr.bf16.mxu0 0
    %4442 = vmatpush1.bf16.msra.mxu0 0
    %4443 = vmatprep.subr.bf16.mxu0 0
    %4444 = vmatpush1.bf16.msra.mxu0 0
    %4445 = vmatprep.subr.bf16.mxu0 0
    %4446 = vmatpush1.bf16.msra.mxu0 0
    %4447 = vmatprep.mubr.bf16.mxu0 0
    %4448 = vmatmul.mubr.bf16.gmra.mrb[0].mxu0 %v4373
    %v4449 = vpop.f32.mrb[0].mxu0
    %v4450 = vadd.f32 0.0, %v4449
    %v4451 = vpop.f32.mrb[0].mxu0
    %v4452 = vadd.f32 0.0, %v4451
    %v4453 = vpop.f32.mrb[0].mxu0
    %v4454 = vpop.f32.mrb[0].mxu0
    %4455 = vdwg.mxu0
    %v4456 = vadd.f32 %v4369, %v4409
    %v4457 = vadd.f32 %v4370, %v4411
    %v4458 = vadd.f32 %v4371, %v4450
    %v4459 = vadd.f32 %v4372, %v4452
    %v4460 = vxor.u32 %v4456, 2147483648
    %v4461 = vmul.f32 %v4460, 1.442695
    %v4462 = vpow.pop %v4461
    %v4463 = vadd.f32 %v4462, 1.0
    %v4464 = vrcp.pop %v4463
    %v4465 = vmul.f32 1.0, %v4464
    %v4466 = vxor.u32 %v4457, 2147483648
    %v4467 = vmul.f32 %v4466, 1.442695
    %v4468 = vpow.pop %v4467
    %v4469 = vadd.f32 %v4468, 1.0
    %v4470 = vrcp.pop %v4469
    %v4471 = vmul.f32 1.0, %v4470
    %v4472 = vtanh.pop %v4458
    %v4473 = vxor.u32 %v4459, 2147483648
    %v4474 = vmul.f32 %v4473, 1.442695
    %v4475 = vpow.pop %v4474
    %v4476 = vadd.f32 %v4475, 1.0
    %v4477 = vrcp.pop %v4476
    %v4478 = vmul.f32 1.0, %v4477
    %v4479 = vmul.f32 %v4471, %v4368
    %v4480 = vmul.f32 %v4465, %v4472
    %v4481 = vadd.f32 %v4479, %v4480
    %v4482 = vtanh.pop %v4481
    %v4483 = vmul.f32 %v4478, %v4482
    %v4484 = vld [vmem:[%s2423] sm:$0xff]
    %vm4485 = vcmp.gt.f32.partialorder %v4484, 0.5
    %v4486 = vsel %vm4485, %v4483, %v4367
    %v4487 = vsel %vm4485, %v4481, %v4368
    %v4488 = vld [vmem:[#allocation7 + $0x80] sm:$0xff]
    %v4489 = vld [vmem:[#allocation7 + $0x88] sm:$0xff]
    %v4490 = vld [vmem:[#allocation7 + $0x90] sm:$0xff]
    %v4491 = vld [vmem:[#allocation7 + $0x98] sm:$0xff]
    %v4492 = vpack.c.bf16 %v4486, %v4486
    %4493 = vmatprep.subr.bf16.mxu0 %v3986
    %4494 = vmatpush1.bf16.msra.mxu0 %v3985
    %4495 = vmatprep.subr.bf16.mxu0 %v3990
    %4496 = vmatpush1.bf16.msra.mxu0 %v3989
    %4497 = vmatprep.subr.bf16.mxu0 %v3994
    %4498 = vmatpush1.bf16.msra.mxu0 %v3993
    %4499 = vmatprep.subr.bf16.mxu0 %v3998
    %4500 = vmatpush1.bf16.msra.mxu0 %v3997
    %4501 = vmatprep.subr.bf16.mxu0 %v4002
    %4502 = vmatpush1.bf16.msra.mxu0 %v4001
    %4503 = vmatprep.subr.bf16.mxu0 %v4006
    %4504 = vmatpush1.bf16.msra.mxu0 %v4005
    %4505 = vmatprep.subr.bf16.mxu0 %v4010
    %4506 = vmatpush1.bf16.msra.mxu0 %v4009
    %4507 = vmatprep.subr.bf16.mxu0 %v4014
    %4508 = vmatpush1.bf16.msra.mxu0 %v4013
    %4509 = vmatprep.subr.bf16.mxu0 0
    %4510 = vmatpush1.bf16.msra.mxu0 0
    %4511 = vmatprep.subr.bf16.mxu0 0
    %4512 = vmatpush1.bf16.msra.mxu0 0
    %4513 = vmatprep.subr.bf16.mxu0 0
    %4514 = vmatpush1.bf16.msra.mxu0 0
    %4515 = vmatprep.subr.bf16.mxu0 0
    %4516 = vmatpush1.bf16.msra.mxu0 0
    %4517 = vmatprep.subr.bf16.mxu0 0
    %4518 = vmatpush1.bf16.msra.mxu0 0
    %4519 = vmatprep.subr.bf16.mxu0 0
    %4520 = vmatpush1.bf16.msra.mxu0 0
    %4521 = vmatprep.subr.bf16.mxu0 0
    %4522 = vmatpush1.bf16.msra.mxu0 0
    %4523 = vmatprep.subr.bf16.mxu0 0
    %4524 = vmatpush1.bf16.msra.mxu0 0
    %4525 = vmatprep.mubr.bf16.mxu0 0
    %4526 = vmatmul.mubr.bf16.gmra.mrb[0].mxu0 %v4492
    %v4527 = vpop.f32.mrb[0].mxu0
    %v4528 = vadd.f32 0.0, %v4527
    %v4529 = vpop.f32.mrb[0].mxu0
    %v4530 = vadd.f32 0.0, %v4529
    %v4531 = vpop.f32.mrb[0].mxu0
    %v4532 = vpop.f32.mrb[0].mxu0
    %4533 = vdwg.mxu0
    %4534 = vmatprep.subr.bf16.mxu0 %v3988
    %4535 = vmatpush1.bf16.msra.mxu0 %v3987
    %4536 = vmatprep.subr.bf16.mxu0 %v3992
    %4537 = vmatpush1.bf16.msra.mxu0 %v3991
    %4538 = vmatprep.subr.bf16.mxu0 %v3996
    %4539 = vmatpush1.bf16.msra.mxu0 %v3995
    %4540 = vmatprep.subr.bf16.mxu0 %v4000
    %4541 = vmatpush1.bf16.msra.mxu0 %v3999
    %4542 = vmatprep.subr.bf16.mxu0 %v4004
    %4543 = vmatpush1.bf16.msra.mxu0 %v4003
    %4544 = vmatprep.subr.bf16.mxu0 %v4008
    %4545 = vmatpush1.bf16.msra.mxu0 %v4007
    %4546 = vmatprep.subr.bf16.mxu0 %v4012
    %4547 = vmatpush1.bf16.msra.mxu0 %v4011
    %4548 = vmatprep.subr.bf16.mxu0 %v4016
    %4549 = vmatpush1.bf16.msra.mxu0 %v4015
    %4550 = vmatprep.subr.bf16.mxu0 0
    %4551 = vmatpush1.bf16.msra.mxu0 0
    %4552 = vmatprep.subr.bf16.mxu0 0
    %4553 = vmatpush1.bf16.msra.mxu0 0
    %4554 = vmatprep.subr.bf16.mxu0 0
    %4555 = vmatpush1.bf16.msra.mxu0 0
    %4556 = vmatprep.subr.bf16.mxu0 0
    %4557 = vmatpush1.bf16.msra.mxu0 0
    %4558 = vmatprep.subr.bf16.mxu0 0
    %4559 = vmatpush1.bf16.msra.mxu0 0
    %4560 = vmatprep.subr.bf16.mxu0 0
    %4561 = vmatpush1.bf16.msra.mxu0 0
    %4562 = vmatprep.subr.bf16.mxu0 0
    %4563 = vmatpush1.bf16.msra.mxu0 0
    %4564 = vmatprep.subr.bf16.mxu0 0
    %4565 = vmatpush1.bf16.msra.mxu0 0
    %4566 = vmatprep.mubr.bf16.mxu0 0
    %4567 = vmatmul.mubr.bf16.gmra.mrb[0].mxu0 %v4492
    %v4568 = vpop.f32.mrb[0].mxu0
    %v4569 = vadd.f32 0.0, %v4568
    %v4570 = vpop.f32.mrb[0].mxu0
    %v4571 = vadd.f32 0.0, %v4570
    %v4572 = vpop.f32.mrb[0].mxu0
    %v4573 = vpop.f32.mrb[0].mxu0
    %4574 = vdwg.mxu0
    %v4575 = vadd.f32 %v4488, %v4528
    %v4576 = vadd.f32 %v4489, %v4530
    %v4577 = vadd.f32 %v4490, %v4569
    %v4578 = vadd.f32 %v4491, %v4571
    %v4579 = vxor.u32 %v4575, 2147483648
    %v4580 = vmul.f32 %v4579, 1.442695
    %v4581 = vpow.pop %v4580
    %v4582 = vadd.f32 %v4581, 1.0
    %v4583 = vrcp.pop %v4582
    %v4584 = vmul.f32 1.0, %v4583
    %v4585 = vxor.u32 %v4576, 2147483648
    %v4586 = vmul.f32 %v4585, 1.442695
    %v4587 = vpow.pop %v4586
    %v4588 = vadd.f32 %v4587, 1.0
    %v4589 = vrcp.pop %v4588
    %v4590 = vmul.f32 1.0, %v4589
    %v4591 = vtanh.pop %v4577
    %v4592 = vxor.u32 %v4578, 2147483648
    %v4593 = vmul.f32 %v4592, 1.442695
    %v4594 = vpow.pop %v4593
    %v4595 = vadd.f32 %v4594, 1.0
    %v4596 = vrcp.pop %v4595
    %v4597 = vmul.f32 1.0, %v4596
    %v4598 = vmul.f32 %v4590, %v4487
    %v4599 = vmul.f32 %v4584, %v4591
    %v4600 = vadd.f32 %v4598, %v4599
    %v4601 = vtanh.pop %v4600
    %v4602 = vmul.f32 %v4597, %v4601
    %v4603 = vld [vmem:[%s2740] sm:$0xff]
    %vm4604 = vcmp.gt.f32.partialorder %v4603, 0.5
    %v4605 = vsel %vm4604, %v4602, %v4486
    %v4606 = vsel %vm4604, %v4600, %v4487
    %v4607 = vld [vmem:[#allocation7 + $0xa0] sm:$0xff]
    %v4608 = vld [vmem:[#allocation7 + $0xa8] sm:$0xff]
    %v4609 = vld [vmem:[#allocation7 + $0xb0] sm:$0xff]
    %v4610 = vld [vmem:[#allocation7 + $0xb8] sm:$0xff]
    %v4611 = vpack.c.bf16 %v4605, %v4605
    %4612 = vmatprep.subr.bf16.mxu0 %v3986
    %4613 = vmatpush1.bf16.msra.mxu0 %v3985
    %4614 = vmatprep.subr.bf16.mxu0 %v3990
    %4615 = vmatpush1.bf16.msra.mxu0 %v3989
    %4616 = vmatprep.subr.bf16.mxu0 %v3994
    %4617 = vmatpush1.bf16.msra.mxu0 %v3993
    %4618 = vmatprep.subr.bf16.mxu0 %v3998
    %4619 = vmatpush1.bf16.msra.mxu0 %v3997
    %4620 = vmatprep.subr.bf16.mxu0 %v4002
    %4621 = vmatpush1.bf16.msra.mxu0 %v4001
    %4622 = vmatprep.subr.bf16.mxu0 %v4006
    %4623 = vmatpush1.bf16.msra.mxu0 %v4005
    %4624 = vmatprep.subr.bf16.mxu0 %v4010
    %4625 = vmatpush1.bf16.msra.mxu0 %v4009
    %4626 = vmatprep.subr.bf16.mxu0 %v4014
    %4627 = vmatpush1.bf16.msra.mxu0 %v4013
    %4628 = vmatprep.subr.bf16.mxu0 0
    %4629 = vmatpush1.bf16.msra.mxu0 0
    %4630 = vmatprep.subr.bf16.mxu0 0
    %4631 = vmatpush1.bf16.msra.mxu0 0
    %4632 = vmatprep.subr.bf16.mxu0 0
    %4633 = vmatpush1.bf16.msra.mxu0 0
    %4634 = vmatprep.subr.bf16.mxu0 0
    %4635 = vmatpush1.bf16.msra.mxu0 0
    %4636 = vmatprep.subr.bf16.mxu0 0
    %4637 = vmatpush1.bf16.msra.mxu0 0
    %4638 = vmatprep.subr.bf16.mxu0 0
    %4639 = vmatpush1.bf16.msra.mxu0 0
    %4640 = vmatprep.subr.bf16.mxu0 0
    %4641 = vmatpush1.bf16.msra.mxu0 0
    %4642 = vmatprep.subr.bf16.mxu0 0
    %4643 = vmatpush1.bf16.msra.mxu0 0
    %4644 = vmatprep.mubr.bf16.mxu0 0
    %4645 = vmatmul.mubr.bf16.gmra.mrb[0].mxu0 %v4611
    %v4646 = vpop.f32.mrb[0].mxu0
    %v4647 = vadd.f32 0.0, %v4646
    %v4648 = vpop.f32.mrb[0].mxu0
    %v4649 = vadd.f32 0.0, %v4648
    %v4650 = vpop.f32.mrb[0].mxu0
    %v4651 = vpop.f32.mrb[0].mxu0
    %4652 = vdwg.mxu0
    %4653 = vmatprep.subr.bf16.mxu0 %v3988
    %4654 = vmatpush1.bf16.msra.mxu0 %v3987
    %4655 = vmatprep.subr.bf16.mxu0 %v3992
    %4656 = vmatpush1.bf16.msra.mxu0 %v3991
    %4657 = vmatprep.subr.bf16.mxu0 %v3996
    %4658 = vmatpush1.bf16.msra.mxu0 %v3995
    %4659 = vmatprep.subr.bf16.mxu0 %v4000
    %4660 = vmatpush1.bf16.msra.mxu0 %v3999
    %4661 = vmatprep.subr.bf16.mxu0 %v4004
    %4662 = vmatpush1.bf16.msra.mxu0 %v4003
    %4663 = vmatprep.subr.bf16.mxu0 %v4008
    %4664 = vmatpush1.bf16.msra.mxu0 %v4007
    %4665 = vmatprep.subr.bf16.mxu0 %v4012
    %4666 = vmatpush1.bf16.msra.mxu0 %v4011
    %4667 = vmatprep.subr.bf16.mxu0 %v4016
    %4668 = vmatpush1.bf16.msra.mxu0 %v4015
    %4669 = vmatprep.subr.bf16.mxu0 0
    %4670 = vmatpush1.bf16.msra.mxu0 0
    %4671 = vmatprep.subr.bf16.mxu0 0
    %4672 = vmatpush1.bf16.msra.mxu0 0
    %4673 = vmatprep.subr.bf16.mxu0 0
    %4674 = vmatpush1.bf16.msra.mxu0 0
    %4675 = vmatprep.subr.bf16.mxu0 0
    %4676 = vmatpush1.bf16.msra.mxu0 0
    %4677 = vmatprep.subr.bf16.mxu0 0
    %4678 = vmatpush1.bf16.msra.mxu0 0
    %4679 = vmatprep.subr.bf16.mxu0 0
    %4680 = vmatpush1.bf16.msra.mxu0 0
    %4681 = vmatprep.subr.bf16.mxu0 0
    %4682 = vmatpush1.bf16.msra.mxu0 0
    %4683 = vmatprep.subr.bf16.mxu0 0
    %4684 = vmatpush1.bf16.msra.mxu0 0
    %4685 = vmatprep.mubr.bf16.mxu0 0
    %4686 = vmatmul.mubr.bf16.gmra.mrb[0].mxu0 %v4611
    %v4687 = vpop.f32.mrb[0].mxu0
    %v4688 = vadd.f32 0.0, %v4687
    %v4689 = vpop.f32.mrb[0].mxu0
    %v4690 = vadd.f32 0.0, %v4689
    %v4691 = vpop.f32.mrb[0].mxu0
    %v4692 = vpop.f32.mrb[0].mxu0
    %4693 = vdwg.mxu0
    %v4694 = vadd.f32 %v4607, %v4647
    %v4695 = vadd.f32 %v4608, %v4649
    %v4696 = vadd.f32 %v4609, %v4688
    %v4697 = vadd.f32 %v4610, %v4690
    %v4698 = vxor.u32 %v4694, 2147483648
    %v4699 = vmul.f32 %v4698, 1.442695
    %v4700 = vpow.pop %v4699
    %v4701 = vadd.f32 %v4700, 1.0
    %v4702 = vrcp.pop %v4701
    %v4703 = vmul.f32 1.0, %v4702
    %v4704 = vxor.u32 %v4695, 2147483648
    %v4705 = vmul.f32 %v4704, 1.442695
    %v4706 = vpow.pop %v4705
    %v4707 = vadd.f32 %v4706, 1.0
    %v4708 = vrcp.pop %v4707
    %v4709 = vmul.f32 1.0, %v4708
    %v4710 = vtanh.pop %v4696
    %v4711 = vxor.u32 %v4697, 2147483648
    %v4712 = vmul.f32 %v4711, 1.442695
    %v4713 = vpow.pop %v4712
    %v4714 = vadd.f32 %v4713, 1.0
    %v4715 = vrcp.pop %v4714
    %v4716 = vmul.f32 1.0, %v4715
    %v4717 = vmul.f32 %v4709, %v4606
    %v4718 = vmul.f32 %v4703, %v4710
    %v4719 = vadd.f32 %v4717, %v4718
    %v4720 = vtanh.pop %v4719
    %v4721 = vmul.f32 %v4716, %v4720
    %v4722 = vld [vmem:[%s3057] sm:$0xff]
    %vm4723 = vcmp.gt.f32.partialorder %v4722, 0.5
    %v4724 = vsel %vm4723, %v4721, %v4605
    %v4725 = vsel %vm4723, %v4719, %v4606
    %v4726 = vld [vmem:[#allocation7 + $0xc0] sm:$0xff]
    %v4727 = vld [vmem:[#allocation7 + $0xc8] sm:$0xff]
    %v4728 = vld [vmem:[#allocation7 + $0xd0] sm:$0xff]
    %v4729 = vld [vmem:[#allocation7 + $0xd8] sm:$0xff]
    %v4730 = vpack.c.bf16 %v4724, %v4724
    %4731 = vmatprep.subr.bf16.mxu0 %v3986
    %4732 = vmatpush1.bf16.msra.mxu0 %v3985
    %4733 = vmatprep.subr.bf16.mxu0 %v3990
    %4734 = vmatpush1.bf16.msra.mxu0 %v3989
    %4735 = vmatprep.subr.bf16.mxu0 %v3994
    %4736 = vmatpush1.bf16.msra.mxu0 %v3993
    %4737 = vmatprep.subr.bf16.mxu0 %v3998
    %4738 = vmatpush1.bf16.msra.mxu0 %v3997
    %4739 = vmatprep.subr.bf16.mxu0 %v4002
    %4740 = vmatpush1.bf16.msra.mxu0 %v4001
    %4741 = vmatprep.subr.bf16.mxu0 %v4006
    %4742 = vmatpush1.bf16.msra.mxu0 %v4005
    %4743 = vmatprep.subr.bf16.mxu0 %v4010
    %4744 = vmatpush1.bf16.msra.mxu0 %v4009
    %4745 = vmatprep.subr.bf16.mxu0 %v4014
    %4746 = vmatpush1.bf16.msra.mxu0 %v4013
    %4747 = vmatprep.subr.bf16.mxu0 0
    %4748 = vmatpush1.bf16.msra.mxu0 0
    %4749 = vmatprep.subr.bf16.mxu0 0
    %4750 = vmatpush1.bf16.msra.mxu0 0
    %4751 = vmatprep.subr.bf16.mxu0 0
    %4752 = vmatpush1.bf16.msra.mxu0 0
    %4753 = vmatprep.subr.bf16.mxu0 0
    %4754 = vmatpush1.bf16.msra.mxu0 0
    %4755 = vmatprep.subr.bf16.mxu0 0
    %4756 = vmatpush1.bf16.msra.mxu0 0
    %4757 = vmatprep.subr.bf16.mxu0 0
    %4758 = vmatpush1.bf16.msra.mxu0 0
    %4759 = vmatprep.subr.bf16.mxu0 0
    %4760 = vmatpush1.bf16.msra.mxu0 0
    %4761 = vmatprep.subr.bf16.mxu0 0
    %4762 = vmatpush1.bf16.msra.mxu0 0
    %4763 = vmatprep.mubr.bf16.mxu0 0
    %4764 = vmatmul.mubr.bf16.gmra.mrb[0].mxu0 %v4730
    %v4765 = vpop.f32.mrb[0].mxu0
    %v4766 = vadd.f32 0.0, %v4765
    %v4767 = vpop.f32.mrb[0].mxu0
    %v4768 = vadd.f32 0.0, %v4767
    %v4769 = vpop.f32.mrb[0].mxu0
    %v4770 = vpop.f32.mrb[0].mxu0
    %4771 = vdwg.mxu0
    %4772 = vmatprep.subr.bf16.mxu0 %v3988
    %4773 = vmatpush1.bf16.msra.mxu0 %v3987
    %4774 = vmatprep.subr.bf16.mxu0 %v3992
    %4775 = vmatpush1.bf16.msra.mxu0 %v3991
    %4776 = vmatprep.subr.bf16.mxu0 %v3996
    %4777 = vmatpush1.bf16.msra.mxu0 %v3995
    %4778 = vmatprep.subr.bf16.mxu0 %v4000
    %4779 = vmatpush1.bf16.msra.mxu0 %v3999
    %4780 = vmatprep.subr.bf16.mxu0 %v4004
    %4781 = vmatpush1.bf16.msra.mxu0 %v4003
    %4782 = vmatprep.subr.bf16.mxu0 %v4008
    %4783 = vmatpush1.bf16.msra.mxu0 %v4007
    %4784 = vmatprep.subr.bf16.mxu0 %v4012
    %4785 = vmatpush1.bf16.msra.mxu0 %v4011
    %4786 = vmatprep.subr.bf16.mxu0 %v4016
    %4787 = vmatpush1.bf16.msra.mxu0 %v4015
    %4788 = vmatprep.subr.bf16.mxu0 0
    %4789 = vmatpush1.bf16.msra.mxu0 0
    %4790 = vmatprep.subr.bf16.mxu0 0
    %4791 = vmatpush1.bf16.msra.mxu0 0
    %4792 = vmatprep.subr.bf16.mxu0 0
    %4793 = vmatpush1.bf16.msra.mxu0 0
    %4794 = vmatprep.subr.bf16.mxu0 0
    %4795 = vmatpush1.bf16.msra.mxu0 0
    %4796 = vmatprep.subr.bf16.mxu0 0
    %4797 = vmatpush1.bf16.msra.mxu0 0
    %4798 = vmatprep.subr.bf16.mxu0 0
    %4799 = vmatpush1.bf16.msra.mxu0 0
    %4800 = vmatprep.subr.bf16.mxu0 0
    %4801 = vmatpush1.bf16.msra.mxu0 0
    %4802 = vmatprep.subr.bf16.mxu0 0
    %4803 = vmatpush1.bf16.msra.mxu0 0
    %4804 = vmatprep.mubr.bf16.mxu0 0
    %4805 = vmatmul.mubr.bf16.gmra.mrb[0].mxu0 %v4730
    %v4806 = vpop.f32.mrb[0].mxu0
    %v4807 = vadd.f32 0.0, %v4806
    %v4808 = vpop.f32.mrb[0].mxu0
    %v4809 = vadd.f32 0.0, %v4808
    %v4810 = vpop.f32.mrb[0].mxu0
    %v4811 = vpop.f32.mrb[0].mxu0
    %4812 = vdwg.mxu0
    %v4813 = vadd.f32 %v4726, %v4766
    %v4814 = vadd.f32 %v4727, %v4768
    %v4815 = vadd.f32 %v4728, %v4807
    %v4816 = vadd.f32 %v4729, %v4809
    %v4817 = vxor.u32 %v4813, 2147483648
    %v4818 = vmul.f32 %v4817, 1.442695
    %v4819 = vpow.pop %v4818
    %v4820 = vadd.f32 %v4819, 1.0
    %v4821 = vrcp.pop %v4820
    %v4822 = vmul.f32 1.0, %v4821
    %v4823 = vxor.u32 %v4814, 2147483648
    %v4824 = vmul.f32 %v4823, 1.442695
    %v4825 = vpow.pop %v4824
    %v4826 = vadd.f32 %v4825, 1.0
    %v4827 = vrcp.pop %v4826
    %v4828 = vmul.f32 1.0, %v4827
    %v4829 = vtanh.pop %v4815
    %v4830 = vxor.u32 %v4816, 2147483648
    %v4831 = vmul.f32 %v4830, 1.442695
    %v4832 = vpow.pop %v4831
    %v4833 = vadd.f32 %v4832, 1.0
    %v4834 = vrcp.pop %v4833
    %v4835 = vmul.f32 1.0, %v4834
    %v4836 = vmul.f32 %v4828, %v4725
    %v4837 = vmul.f32 %v4822, %v4829
    %v4838 = vadd.f32 %v4836, %v4837
    %v4839 = vtanh.pop %v4838
    %v4840 = vmul.f32 %v4835, %v4839
    %v4841 = vld [vmem:[%s3374] sm:$0xff]
    %vm4842 = vcmp.gt.f32.partialorder %v4841, 0.5
    %v4843 = vsel %vm4842, %v4840, %v4724
    %v4844 = vsel %vm4842, %v4838, %v4725
    %v4845 = vld [vmem:[#allocation7 + $0xe0] sm:$0xff]
    %v4846 = vld [vmem:[#allocation7 + $0xe8] sm:$0xff]
    %v4847 = vld [vmem:[#allocation7 + $0xf0] sm:$0xff]
    %v4848 = vld [vmem:[#allocation7 + $0xf8] sm:$0xff]
    %v4849 = vpack.c.bf16 %v4843, %v4843
    %4850 = vmatprep.subr.bf16.mxu0 %v3986
    %4851 = vmatpush1.bf16.msra.mxu0 %v3985
    %4852 = vmatprep.subr.bf16.mxu0 %v3990
    %4853 = vmatpush1.bf16.msra.mxu0 %v3989
    %4854 = vmatprep.subr.bf16.mxu0 %v3994
    %4855 = vmatpush1.bf16.msra.mxu0 %v3993
    %4856 = vmatprep.subr.bf16.mxu0 %v3998
    %4857 = vmatpush1.bf16.msra.mxu0 %v3997
    %4858 = vmatprep.subr.bf16.mxu0 %v4002
    %4859 = vmatpush1.bf16.msra.mxu0 %v4001
    %4860 = vmatprep.subr.bf16.mxu0 %v4006
    %4861 = vmatpush1.bf16.msra.mxu0 %v4005
    %4862 = vmatprep.subr.bf16.mxu0 %v4010
    %4863 = vmatpush1.bf16.msra.mxu0 %v4009
    %4864 = vmatprep.subr.bf16.mxu0 %v4014
    %4865 = vmatpush1.bf16.msra.mxu0 %v4013
    %4866 = vmatprep.subr.bf16.mxu0 0
    %4867 = vmatpush1.bf16.msra.mxu0 0
    %4868 = vmatprep.subr.bf16.mxu0 0
    %4869 = vmatpush1.bf16.msra.mxu0 0
    %4870 = vmatprep.subr.bf16.mxu0 0
    %4871 = vmatpush1.bf16.msra.mxu0 0
    %4872 = vmatprep.subr.bf16.mxu0 0
    %4873 = vmatpush1.bf16.msra.mxu0 0
    %4874 = vmatprep.subr.bf16.mxu0 0
    %4875 = vmatpush1.bf16.msra.mxu0 0
    %4876 = vmatprep.subr.bf16.mxu0 0
    %4877 = vmatpush1.bf16.msra.mxu0 0
    %4878 = vmatprep.subr.bf16.mxu0 0
    %4879 = vmatpush1.bf16.msra.mxu0 0
    %4880 = vmatprep.subr.bf16.mxu0 0
    %4881 = vmatpush1.bf16.msra.mxu0 0
    %4882 = vmatprep.mubr.bf16.mxu0 0
    %4883 = vmatmul.mubr.bf16.gmra.mrb[0].mxu0 %v4849
    %v4884 = vpop.f32.mrb[0].mxu0
    %v4885 = vadd.f32 0.0, %v4884
    %v4886 = vpop.f32.mrb[0].mxu0
    %v4887 = vadd.f32 0.0, %v4886
    %v4888 = vpop.f32.mrb[0].mxu0
    %v4889 = vpop.f32.mrb[0].mxu0
    %4890 = vdwg.mxu0
    %4891 = vmatprep.subr.bf16.mxu0 %v3988
    %4892 = vmatpush1.bf16.msra.mxu0 %v3987
    %4893 = vmatprep.subr.bf16.mxu0 %v3992
    %4894 = vmatpush1.bf16.msra.mxu0 %v3991
    %4895 = vmatprep.subr.bf16.mxu0 %v3996
    %4896 = vmatpush1.bf16.msra.mxu0 %v3995
    %4897 = vmatprep.subr.bf16.mxu0 %v4000
    %4898 = vmatpush1.bf16.msra.mxu0 %v3999
    %4899 = vmatprep.subr.bf16.mxu0 %v4004
    %4900 = vmatpush1.bf16.msra.mxu0 %v4003
    %4901 = vmatprep.subr.bf16.mxu0 %v4008
    %4902 = vmatpush1.bf16.msra.mxu0 %v4007
    %4903 = vmatprep.subr.bf16.mxu0 %v4012
    %4904 = vmatpush1.bf16.msra.mxu0 %v4011
    %4905 = vmatprep.subr.bf16.mxu0 %v4016
    %4906 = vmatpush1.bf16.msra.mxu0 %v4015
    %4907 = vmatprep.subr.bf16.mxu0 0
    %4908 = vmatpush1.bf16.msra.mxu0 0
    %4909 = vmatprep.subr.bf16.mxu0 0
    %4910 = vmatpush1.bf16.msra.mxu0 0
    %4911 = vmatprep.subr.bf16.mxu0 0
    %4912 = vmatpush1.bf16.msra.mxu0 0
    %4913 = vmatprep.subr.bf16.mxu0 0
    %4914 = vmatpush1.bf16.msra.mxu0 0
    %4915 = vmatprep.subr.bf16.mxu0 0
    %4916 = vmatpush1.bf16.msra.mxu0 0
    %4917 = vmatprep.subr.bf16.mxu0 0
    %4918 = vmatpush1.bf16.msra.mxu0 0
    %4919 = vmatprep.subr.bf16.mxu0 0
    %4920 = vmatpush1.bf16.msra.mxu0 0
    %4921 = vmatprep.subr.bf16.mxu0 0
    %4922 = vmatpush1.bf16.msra.mxu0 0
    %4923 = vmatprep.mubr.bf16.mxu0 0
    %4924 = vmatmul.mubr.bf16.gmra.mrb[0].mxu0 %v4849
    %v4925 = vpop.f32.mrb[0].mxu0
    %v4926 = vadd.f32 0.0, %v4925
    %v4927 = vpop.f32.mrb[0].mxu0
    %v4928 = vadd.f32 0.0, %v4927
    %v4929 = vpop.f32.mrb[0].mxu0
    %v4930 = vpop.f32.mrb[0].mxu0
    %4931 = vdwg.mxu0
    %v4932 = vadd.f32 %v4845, %v4885
    %v4933 = vadd.f32 %v4846, %v4887
    %v4934 = vadd.f32 %v4847, %v4926
    %v4935 = vadd.f32 %v4848, %v4928
    %v4936 = vxor.u32 %v4932, 2147483648
    %v4937 = vmul.f32 %v4936, 1.442695
    %v4938 = vpow.pop %v4937
    %v4939 = vadd.f32 %v4938, 1.0
    %v4940 = vrcp.pop %v4939
    %v4941 = vmul.f32 1.0, %v4940
    %v4942 = vxor.u32 %v4933, 2147483648
    %v4943 = vmul.f32 %v4942, 1.442695
    %v4944 = vpow.pop %v4943
    %v4945 = vadd.f32 %v4944, 1.0
    %v4946 = vrcp.pop %v4945
    %v4947 = vmul.f32 1.0, %v4946
    %v4948 = vtanh.pop %v4934
    %v4949 = vxor.u32 %v4935, 2147483648
    %v4950 = vmul.f32 %v4949, 1.442695
    %v4951 = vpow.pop %v4950
    %v4952 = vadd.f32 %v4951, 1.0
    %v4953 = vrcp.pop %v4952
    %v4954 = vmul.f32 1.0, %v4953
    %v4955 = vmul.f32 %v4947, %v4844
    %v4956 = vmul.f32 %v4941, %v4948
    %v4957 = vadd.f32 %v4955, %v4956
    %v4958 = vtanh.pop %v4957
    %v4959 = vmul.f32 %v4954, %v4958
    %v4960 = vld [vmem:[%s3691] sm:$0xff]
    %vm4961 = vcmp.gt.f32.partialorder %v4960, 0.5
    %v4962 = vsel %vm4961, %v4959, %v4843
    %s4963 = smul.u32 128, 1
    %s4964 = sshll.u32 %s4963, 4
    %4965 = dma.done %s658, %s4964
    %v4966 = vld [vmem:[#allocation4] sm:$0xff]
    %v4967 = vld [vmem:[#allocation4 + $0x8] sm:$0xff]
    %v4968 = vld [vmem:[#allocation4 + $0x10] sm:$0xff]
    %v4969 = vld [vmem:[#allocation4 + $0x18] sm:$0xff]
    %v4970 = vld [vmem:[#allocation4 + $0x20] sm:$0xff]
    %v4971 = vld [vmem:[#allocation4 + $0x28] sm:$0xff]
    %v4972 = vld [vmem:[#allocation4 + $0x30] sm:$0xff]
    %v4973 = vld [vmem:[#allocation4 + $0x38] sm:$0xff]
    %v4974 = vld [vmem:[#allocation4 + $0x40] sm:$0xff]
    %v4975 = vld [vmem:[#allocation4 + $0x48] sm:$0xff]
    %v4976 = vld [vmem:[#allocation4 + $0x50] sm:$0xff]
    %v4977 = vld [vmem:[#allocation4 + $0x58] sm:$0xff]
    %v4978 = vld [vmem:[#allocation4 + $0x60] sm:$0xff]
    %v4979 = vld [vmem:[#allocation4 + $0x68] sm:$0xff]
    %v4980 = vld [vmem:[#allocation4 + $0x70] sm:$0xff]
    %v4981 = vld [vmem:[#allocation4 + $0x78] sm:$0xff]
    %v4982 = vld [vmem:[%s9] sm:$0x1]
    %v4984 = vlaneseq
    %v4985 = vshrl.u32 %v4984, 7
    %v4986 = vsub.s32 0, %v4985
    %v4987 = vrot.slane %v4982, %v4986
    %4989 = vmatprep.subr.mxu0 0.0
    %4990 = vmatpush1.msra.mxu0 %v4966
    %4991 = vmatprep.subr.mxu0 0.0
    %4992 = vmatpush1.msra.mxu0 %v4967
    %4993 = vmatprep.subr.mxu0 0.0
    %4994 = vmatpush1.msra.mxu0 %v4968
    %4995 = vmatprep.subr.mxu0 0.0
    %4996 = vmatpush1.msra.mxu0 %v4969
    %4997 = vmatprep.subr.mxu0 0.0
    %4998 = vmatpush1.msra.mxu0 %v4970
    %4999 = vmatprep.subr.mxu0 0.0
    %5000 = vmatpush1.msra.mxu0 %v4971
    %5001 = vmatprep.subr.mxu0 0.0
    %5002 = vmatpush1.msra.mxu0 %v4972
    %5003 = vmatprep.subr.mxu0 0.0
    %5004 = vmatpush1.msra.mxu0 %v4973
    %5005 = vmatprep.subr.mxu0 0.0
    %5006 = vmatpush1.msra.mxu0 %v4974
    %5007 = vmatprep.subr.mxu0 0.0
    %5008 = vmatpush1.msra.mxu0 %v4975
    %5009 = vmatprep.subr.mxu0 0.0
    %5010 = vmatpush1.msra.mxu0 %v4976
    %5011 = vmatprep.subr.mxu0 0.0
    %5012 = vmatpush1.msra.mxu0 %v4977
    %5013 = vmatprep.subr.mxu0 0.0
    %5014 = vmatpush1.msra.mxu0 %v4978
    %5015 = vmatprep.subr.mxu0 0.0
    %5016 = vmatpush1.msra.mxu0 %v4979
    %5017 = vmatprep.subr.mxu0 0.0
    %5018 = vmatpush1.msra.mxu0 %v4980
    %5019 = vmatprep.subr.mxu0 0.0
    %5020 = vmatpush1.msra.mxu0 %v4981
    %5021 = vmatprep.subr.mxu0 0.0
    %5022 = vmatpush1.msra.mxu0 0.0
    %5023 = vmatprep.subr.mxu0 0.0
    %5024 = vmatpush1.msra.mxu0 0.0
    %5025 = vmatprep.subr.mxu0 0.0
    %5026 = vmatpush1.msra.mxu0 0.0
    %5027 = vmatprep.subr.mxu0 0.0
    %5028 = vmatpush1.msra.mxu0 0.0
    %5029 = vmatprep.subr.mxu0 0.0
    %5030 = vmatpush1.msra.mxu0 0.0
    %5031 = vmatprep.subr.mxu0 0.0
    %5032 = vmatpush1.msra.mxu0 0.0
    %5033 = vmatprep.subr.mxu0 0.0
    %5034 = vmatpush1.msra.mxu0 0.0
    %5035 = vmatprep.subr.mxu0 0.0
    %5036 = vmatpush1.msra.mxu0 0.0
    %5037 = vmatprep.subr.mxu0 0.0
    %5038 = vmatpush1.msra.mxu0 0.0
    %5039 = vmatprep.subr.mxu0 0.0
    %5040 = vmatpush1.msra.mxu0 0.0
    %5041 = vmatprep.subr.mxu0 0.0
    %5042 = vmatpush1.msra.mxu0 0.0
    %5043 = vmatprep.subr.mxu0 0.0
    %5044 = vmatpush1.msra.mxu0 0.0
    %5045 = vmatprep.subr.mxu0 0.0
    %5046 = vmatpush1.msra.mxu0 0.0
    %5047 = vmatprep.subr.mxu0 0.0
    %5048 = vmatpush1.msra.mxu0 0.0
    %5049 = vmatprep.subr.mxu0 0.0
    %5050 = vmatpush1.msra.mxu0 0.0
    %5051 = vmatprep.subr.mxu0 0.0
    %5052 = vmatpush1.msra.mxu0 0.0
    %5053 = vmatprep.mubr.f32.mxu0 0.0
    %5054 = vmatmul.mubr.f32.gmra.mrb[0].mxu0 %v4962
    %v5055 = vpop.f32.mrb[0].mxu0
    %v5056 = vadd.f32 %v4987, %v5055
    %v5057 = vpop.f32.mrb[0].mxu0
    %5058 = vdwg.mxu0
    %v5059 = vtanh.pop %v5056
    %s5060 = sshll.u32 %s4963, 4
    %5061 = dma.done %s731, %s5060
    %v5062 = vld [vmem:[#allocation5] sm:$0xff]
    %v5063 = vld [vmem:[#allocation5 + $0x8] sm:$0xff]
    %v5064 = vld [vmem:[#allocation5 + $0x10] sm:$0xff]
    %v5065 = vld [vmem:[#allocation5 + $0x18] sm:$0xff]
    %v5066 = vld [vmem:[#allocation5 + $0x20] sm:$0xff]
    %v5067 = vld [vmem:[#allocation5 + $0x28] sm:$0xff]
    %v5068 = vld [vmem:[#allocation5 + $0x30] sm:$0xff]
    %v5069 = vld [vmem:[#allocation5 + $0x38] sm:$0xff]
    %v5070 = vld [vmem:[#allocation5 + $0x40] sm:$0xff]
    %v5071 = vld [vmem:[#allocation5 + $0x48] sm:$0xff]
    %v5072 = vld [vmem:[#allocation5 + $0x50] sm:$0xff]
    %v5073 = vld [vmem:[#allocation5 + $0x58] sm:$0xff]
    %v5074 = vld [vmem:[#allocation5 + $0x60] sm:$0xff]
    %v5075 = vld [vmem:[#allocation5 + $0x68] sm:$0xff]
    %v5076 = vld [vmem:[#allocation5 + $0x70] sm:$0xff]
    %v5077 = vld [vmem:[#allocation5 + $0x78] sm:$0xff]
    %v5078 = vld [vmem:[%s11] sm:$0x1]
    %v5080 = vlaneseq
    %v5081 = vshrl.u32 %v5080, 7
    %v5082 = vsub.s32 0, %v5081
    %v5083 = vrot.slane %v5078, %v5082
    %5085 = vmatprep.subr.mxu0 0.0
    %5086 = vmatpush1.msra.mxu0 %v5062
    %5087 = vmatprep.subr.mxu0 0.0
    %5088 = vmatpush1.msra.mxu0 %v5063
    %5089 = vmatprep.subr.mxu0 0.0
    %5090 = vmatpush1.msra.mxu0 %v5064
    %5091 = vmatprep.subr.mxu0 0.0
    %5092 = vmatpush1.msra.mxu0 %v5065
    %5093 = vmatprep.subr.mxu0 0.0
    %5094 = vmatpush1.msra.mxu0 %v5066
    %5095 = vmatprep.subr.mxu0 0.0
    %5096 = vmatpush1.msra.mxu0 %v5067
    %5097 = vmatprep.subr.mxu0 0.0
    %5098 = vmatpush1.msra.mxu0 %v5068
    %5099 = vmatprep.subr.mxu0 0.0
    %5100 = vmatpush1.msra.mxu0 %v5069
    %5101 = vmatprep.subr.mxu0 0.0
    %5102 = vmatpush1.msra.mxu0 %v5070
    %5103 = vmatprep.subr.mxu0 0.0
    %5104 = vmatpush1.msra.mxu0 %v5071
    %5105 = vmatprep.subr.mxu0 0.0
    %5106 = vmatpush1.msra.mxu0 %v5072
    %5107 = vmatprep.subr.mxu0 0.0
    %5108 = vmatpush1.msra.mxu0 %v5073
    %5109 = vmatprep.subr.mxu0 0.0
    %5110 = vmatpush1.msra.mxu0 %v5074
    %5111 = vmatprep.subr.mxu0 0.0
    %5112 = vmatpush1.msra.mxu0 %v5075
    %5113 = vmatprep.subr.mxu0 0.0
    %5114 = vmatpush1.msra.mxu0 %v5076
    %5115 = vmatprep.subr.mxu0 0.0
    %5116 = vmatpush1.msra.mxu0 %v5077
    %5117 = vmatprep.subr.mxu0 0.0
    %5118 = vmatpush1.msra.mxu0 0.0
    %5119 = vmatprep.subr.mxu0 0.0
    %5120 = vmatpush1.msra.mxu0 0.0
    %5121 = vmatprep.subr.mxu0 0.0
    %5122 = vmatpush1.msra.mxu0 0.0
    %5123 = vmatprep.subr.mxu0 0.0
    %5124 = vmatpush1.msra.mxu0 0.0
    %5125 = vmatprep.subr.mxu0 0.0
    %5126 = vmatpush1.msra.mxu0 0.0
    %5127 = vmatprep.subr.mxu0 0.0
    %5128 = vmatpush1.msra.mxu0 0.0
    %5129 = vmatprep.subr.mxu0 0.0
    %5130 = vmatpush1.msra.mxu0 0.0
    %5131 = vmatprep.subr.mxu0 0.0
    %5132 = vmatpush1.msra.mxu0 0.0
    %5133 = vmatprep.subr.mxu0 0.0
    %5134 = vmatpush1.msra.mxu0 0.0
    %5135 = vmatprep.subr.mxu0 0.0
    %5136 = vmatpush1.msra.mxu0 0.0
    %5137 = vmatprep.subr.mxu0 0.0
    %5138 = vmatpush1.msra.mxu0 0.0
    %5139 = vmatprep.subr.mxu0 0.0
    %5140 = vmatpush1.msra.mxu0 0.0
    %5141 = vmatprep.subr.mxu0 0.0
    %5142 = vmatpush1.msra.mxu0 0.0
    %5143 = vmatprep.subr.mxu0 0.0
    %5144 = vmatpush1.msra.mxu0 0.0
    %5145 = vmatprep.subr.mxu0 0.0
    %5146 = vmatpush1.msra.mxu0 0.0
    %5147 = vmatprep.subr.mxu0 0.0
    %5148 = vmatpush1.msra.mxu0 0.0
    %5149 = vmatprep.mubr.f32.mxu0 0.0
    %5150 = vmatmul.mubr.f32.gmra.mrb[0].mxu0 %v5059
    %v5151 = vpop.f32.mrb[0].mxu0
    %v5152 = vadd.f32 %v5083, %v5151
    %v5153 = vpop.f32.mrb[0].mxu0
    %5154 = vdwg.mxu0
    %5155 = vst [vmem:[%s12] sm:$0xff] %v5152
    // Predicated region
    $region117: #{pmr_clf_forward.1} parent=1 // pred_check
      _
    $region118: #{pmr_clf_forward.1} parent=1 // pred_check_branch
      %5157 = sbr.rel (0) target = $region120
    $region119: #{pmr_clf_forward.1} parent=1 // pred_region
      _
    $region120: #{pmr_clf_forward.1} parent=1 // pred_fallthru
      _
    // Predicated region
    $region121: #{pmr_clf_forward.1} parent=1 // pred_check
      _
    $region122: #{pmr_clf_forward.1} parent=1 // pred_check_branch
      %5159 = sbr.rel (0) target = $region124
    $region123: #{pmr_clf_forward.1} parent=1 // pred_region
      _
    $region124: #{pmr_clf_forward.1} parent=1 // pred_fallthru
      _
    %5160 = vsyncpa [#allocation10], 1
    %5161 = vsyncpa [#allocation12], 1
  %5162 = vsyncmov [#allocation8]
  %s5163 = vpop.sfrf %5162
  %p5164 = scmp.eq.s32.totalorder %s5163, 0
  %p5165 = pneg %p5164
  %5167 = shalt.err (%p5165)
  %s5168 = scalar_lea.sflag [#allocation8], 1
  %5169 = vsyncmov %s5168
  %s5170 = vpop.sfrf %5169
  %p5171 = scmp.eq.s32.totalorder %s5170, 0
  %p5172 = pneg %p5171
  %5174 = shalt.err (%p5172)
  %s5175 = scalar_lea.sflag [#allocation8], 2
  %5176 = vsyncmov %s5175
  %s5177 = vpop.sfrf %5176
  %p5178 = scmp.eq.s32.totalorder %s5177, 0
  %p5179 = pneg %p5178
  %5181 = shalt.err (%p5179)
  %s5182 = scalar_lea.sflag [#allocation8], 3
  %5183 = vsyncmov %s5182
  %s5184 = vpop.sfrf %5183
  %p5185 = scmp.eq.s32.totalorder %s5184, 0
  %p5186 = pneg %p5185
  %5188 = shalt.err (%p5186)

</llo_original>
